<compile_context>
chip_gen: v6e
topology: v6e:2x2x1
jax: 0.10.0
libtpu: 0.0.40
codegen_flags: <defaults>
</compile_context>

<pallas_src>
import functools

import jax
import jax.numpy as jnp
from jax.experimental import pallas as pl
from jax.experimental.pallas import tpu as pltpu

NUM_LAYERS = 7
FEATURES = 10

# Module constructor defaults: activation='Sigmoid', norm_type=None, use_skip=False
ACTIVATION = "Sigmoid"
NORM_TYPE = None
USE_SKIP = False

BATCH_MULT = 2048          # rows per packed block: 16 sublanes x 128 lanes (bf16-safe)
TB_MAX = 32768             # max rows per grid step (multiple of BATCH_MULT)
VMEM_HEADROOM = 8 << 20


def _round_up(x, m):
    return (x + m - 1) // m * m


def _vmem_cap_bytes():
    try:
        return int(pltpu.get_tpu_info().vmem_capacity_bytes)
    except Exception:
        return 64 << 20    # v7x physical floor; v5e/v6e have 128 MiB


def _choose_tiling(batch, norm_type):
    """Pick (rows_per_tile, padded_batch); padded batch is an exact multiple of tile."""
    b_req = _round_up(max(batch, 1), BATCH_MULT)
    if norm_type == "CustomNorm" or b_req <= BATCH_MULT:
        # Full-batch statistics -> whole batch in one block.
        # TODO(synk): two-pass CustomNorm (per-layer sum/sumsq reduction pass, then a
        # normalize pass) for batches whose full block does not fit VMEM.
        tb = b_req
    elif b_req <= 2 * TB_MAX:
        tb = _round_up(b_req // 2, BATCH_MULT)   # grid >= 2 so both v7x TCs engage
    else:
        tb = TB_MAX
    return tb, _round_up(b_req, tb)


def _make_kernel(num_layers, features, activation, norm_type, use_skip, n_valid):
    F = features

    def apply_act(v):
        if activation == "Sigmoid":
            return 0.5 * jnp.tanh(0.5 * v) + 0.5        # one EUP push per element
        if activation == "Tanh":
            return jnp.tanh(v)
        if activation == "ReLU":
            return jnp.maximum(v, 0.0)
        return v

    def kernel(w_sref, b_sref, x_ref, o_ref):
        # x_ref block: (F, ntb, 128) — batch packed on sublanes AND lanes.
        # w_sref: (L*F*F,) f32 in SMEM, torch (out, in) order.  b_sref: (L*F,) f32.
        x = [x_ref[k].astype(jnp.float32) for k in range(F)]
        skip = list(x)

        if norm_type == "CustomNorm":
            # Batch index of each slab element; padded rows are masked from the stats.
            slab_shape = x[0].shape
            sub = jax.lax.broadcasted_iota(jnp.int32, slab_shape, 0)
            lane = jax.lax.broadcasted_iota(jnp.int32, slab_shape, 1)
            valid = (sub * 128 + lane) < n_valid
            n = jnp.float32(n_valid)

        for i in range(num_layers):                      # static unroll, 7 layers
            y = []
            for o in range(F):                           # scalar*vreg FMA chain (VPU)
                base = (i * F + o) * F
                acc = x[0] * w_sref[base] + b_sref[i * F + o]   # bias = accumulator init
                for k in range(1, F):
                    acc = acc + x[k] * w_sref[base + k]
                y.append(acc)

            if norm_type == "CustomNorm":
                # torch MyNormalization: mean / unbiased std over the batch, per feature.
                # Exact division (approx reciprocal compounds over 7 normalized layers).
                # NOTE: n_valid == 1 yields the same NaN torch.std would produce.
                for o in range(F):
                    v = y[o]
                    vm = jnp.where(valid, v, 0.0)
                    mean = jnp.sum(vm) / n
                    diff = jnp.where(valid, v - mean, 0.0)
                    var = jnp.sum(diff * diff) / (n - 1.0)
                    y[o] = (v - mean) / (jnp.sqrt(var) + 1e-5)
            # TODO(synk): BatchNorm1d (learned affine + running stats, train/eval
            # semantics) has no clean single-kernel equivalent here; not implemented.

            y = [apply_act(v) for v in y]

            if use_skip and i % 2 == 1:
                y = [y[j] + skip[j] for j in range(F)]
                skip = list(y)
            x = y

        for k in range(F):
            o_ref[k] = x[k].astype(o_ref.dtype)

    return kernel


def _forward_lanes(x3, w_flat, b_flat, *, tb, n_valid, activation, norm_type, use_skip):
    """Core kernel on the lane-major layout.

    x3: (F, bpad//128, 128), batch row r at (:, r//128, r%128).  Returns same layout.
    Callers that already hold activations as (F, batch) should use this directly and
    skip the wrapper transposes.
    """
    F, nblk, _ = x3.shape
    bpad = nblk * 128
    L = w_flat.shape[0] // (F * F)
    grid = bpad // tb
    itemsize = jnp.dtype(x3.dtype).itemsize

    # VMEM: double-buffered in/out tiles + f32 working slabs (x / y / skip).
    io_bytes = 4 * F * tb * itemsize
    work_bytes = 3 * F * tb * 4
    need = io_bytes + work_bytes + (4 << 20)
    cap = _vmem_cap_bytes() - VMEM_HEADROOM
    if need > cap:
        raise ValueError(
            f"SimpleNN Pallas kernel needs ~{need >> 20} MiB VMEM (cap {cap >> 20} MiB); "
            "CustomNorm currently requires the full batch in a single block.")
    vmem_limit = int(min(max(2 * need, 16 << 20), cap))

    cost = pl.CostEstimate(
        flops=2 * bpad * L * F * F,
        transcendentals=(bpad * L * F if activation in ("Sigmoid", "Tanh") else 0),
        bytes_accessed=2 * bpad * F * itemsize + int(w_flat.size + b_flat.size) * 4,
    )

    kernel = _make_kernel(L, F, activation, norm_type, use_skip, n_valid)
    return pl.pallas_call(
        kernel,
        out_shape=jax.ShapeDtypeStruct((F, nblk, 128), x3.dtype),
        grid_spec=pltpu.PrefetchScalarGridSpec(
            num_scalar_prefetch=2,                       # w_flat, b_flat -> SMEM
            grid=(grid,),
            in_specs=[pl.BlockSpec((F, tb // 128, 128), lambda i, *_: (0, i, 0))],
            out_specs=pl.BlockSpec((F, tb // 128, 128), lambda i, *_: (0, i, 0)),
        ),
        compiler_params=pltpu.CompilerParams(
            dimension_semantics=(("arbitrary",) if norm_type == "CustomNorm"
                                 else ("parallel",)),
            vmem_limit_bytes=vmem_limit,
        ),
        cost_estimate=cost,
    )(w_flat, b_flat, x3)


@functools.partial(jax.jit, static_argnames=("activation", "norm_type", "use_skip"))
def simple_nn_forward(x, weights, biases, *, activation=ACTIVATION,
                      norm_type=NORM_TYPE, use_skip=USE_SKIP):
    """x: (B, F), weights: (L, F, F) in torch (out, in) layout, biases: (L, F)."""
    if norm_type == "BatchNorm":
        # TODO(synk): BatchNorm1d (running stats, learned affine) not implemented.
        raise NotImplementedError("BatchNorm is not supported by this kernel")
    B, F = x.shape
    L = weights.shape[0]
    tb, bpad = _choose_tiling(B, norm_type)

    # Lane-major layout plumbing (two extra HBM passes; see _forward_lanes docstring).
    xt = jnp.pad(x.T, ((0, 0), (0, bpad - B)))
    x3 = xt.reshape(F, bpad // 128, 128)                  # free row-major reshape
    w_flat = weights.astype(jnp.float32).reshape(L * F * F)
    b_flat = biases.astype(jnp.float32).reshape(L * F)

    out3 = _forward_lanes(x3, w_flat, b_flat, tb=tb, n_valid=B,
                          activation=activation, norm_type=norm_type, use_skip=use_skip)
    return out3.reshape(F, bpad)[:, :B].T


def _reference(x, weights, biases, activation, norm_type, use_skip):
    x = x.astype(jnp.float32)
    skip = x
    for i in range(weights.shape[0]):
        x = jnp.dot(x, weights[i].T, precision=jax.lax.Precision.HIGHEST) + biases[i][None, :]
        if norm_type == "CustomNorm":
            mean = jnp.mean(x, axis=0, keepdims=True)
            std = jnp.std(x, axis=0, keepdims=True, ddof=1)
            x = (x - mean) / (std + 1e-5)
        if activation == "Sigmoid":
            x = jax.nn.sigmoid(x)
        elif activation == "Tanh":
            x = jnp.tanh(x)
        elif activation == "ReLU":
            x = jnp.maximum(x, 0.0)
        if use_skip and i % 2 == 1:
            x = x + skip
            skip = x
    return x


if __name__ == "__main__":
    key = jax.random.PRNGKey(0)
    kx, kw, kb, kx2 = jax.random.split(key, 4)

    batch = 8
    x = jax.random.normal(kx, (batch, FEATURES), dtype=jnp.float32)

    # Deterministic synthetic parameters (shapes of nn.Linear(10, 10) x 7), scaled to
    # avoid saturating the activations.
    weights = 0.5 * jax.random.normal(kw, (NUM_LAYERS, FEATURES, FEATURES), dtype=jnp.float32)
    biases = 0.1 * jax.random.normal(kb, (NUM_LAYERS, FEATURES), dtype=jnp.float32)

    # 1) Default module config: Sigmoid, no norm, no skip.
    out = jax.block_until_ready(simple_nn_forward(x, weights, biases))
    ref = _reference(x, weights, biases, "Sigmoid", None, False)
    assert out.shape == (batch, FEATURES)
    assert jnp.allclose(out, ref, atol=1e-4, rtol=1e-4), "mismatch (default config)"

    # 2) Tanh + skip connections, larger batch -> exercises the tiled (grid=2) path.
    batch2 = 4096
    x2 = jax.random.normal(kx2, (batch2, FEATURES), dtype=jnp.float32)
    out2 = jax.block_until_ready(
        simple_nn_forward(x2, weights, biases, activation="Tanh", use_skip=True))
    ref2 = _reference(x2, weights, biases, "Tanh", None, True)
    assert out2.shape == (batch2, FEATURES)
    assert jnp.allclose(out2, ref2, atol=1e-4, rtol=1e-4), "mismatch (tanh+skip)"

    # 3) CustomNorm (full-batch statistics, exact division in the norm path).
    out3 = jax.block_until_ready(
        simple_nn_forward(x, weights, biases, activation="ReLU", norm_type="CustomNorm"))
    ref3 = _reference(x, weights, biases, "ReLU", "CustomNorm", False)
    assert jnp.allclose(out3, ref3, atol=1e-4, rtol=1e-4), "mismatch (custom norm)"

    print("KERNEL_OK")
</pallas_src>

<mosaic_0001>
module attributes {stable_mosaic.version = 11 : i64} {
  func.func @kernel(%arg0: i32, %arg1: memref<700xf32, #tpu.memory_space<smem>>, %arg2: memref<70xf32, #tpu.memory_space<smem>>, %arg3: memref<10x16x128xf32, #tpu.memory_space<vmem>>, %arg4: memref<10x16x128xf32, #tpu.memory_space<vmem>>) attributes {dimension_semantics = [#tpu.dimension_semantics<parallel>], iteration_bounds = array<i64: 1>, scalar_prefetch = 2 : i64, scratch_operands = 0 : i64, tpu.core_type = #tpu.core_type<tc>, window_params = [{transform_indices = @transform_0, window_bounds = array<i64: 10, 16, 128>}, {transform_indices = @transform_1, window_bounds = array<i64: 10, 16, 128>}]} {
    %c0 = arith.constant 0 : index
    %c0_0 = arith.constant 0 : index
    %c0_1 = arith.constant 0 : index
    %0 = vector.load %arg3[%c0, %c0_0, %c0_1] : memref<10x16x128xf32, #tpu.memory_space<vmem>>, vector<1x16x128xf32>
    %1 = vector.shape_cast %0 : vector<1x16x128xf32> to vector<16x128xf32>
    %c1 = arith.constant 1 : index
    %c0_2 = arith.constant 0 : index
    %c0_3 = arith.constant 0 : index
    %2 = vector.load %arg3[%c1, %c0_2, %c0_3] : memref<10x16x128xf32, #tpu.memory_space<vmem>>, vector<1x16x128xf32>
    %3 = vector.shape_cast %2 : vector<1x16x128xf32> to vector<16x128xf32>
    %c2 = arith.constant 2 : index
    %c0_4 = arith.constant 0 : index
    %c0_5 = arith.constant 0 : index
    %4 = vector.load %arg3[%c2, %c0_4, %c0_5] : memref<10x16x128xf32, #tpu.memory_space<vmem>>, vector<1x16x128xf32>
    %5 = vector.shape_cast %4 : vector<1x16x128xf32> to vector<16x128xf32>
    %c3 = arith.constant 3 : index
    %c0_6 = arith.constant 0 : index
    %c0_7 = arith.constant 0 : index
    %6 = vector.load %arg3[%c3, %c0_6, %c0_7] : memref<10x16x128xf32, #tpu.memory_space<vmem>>, vector<1x16x128xf32>
    %7 = vector.shape_cast %6 : vector<1x16x128xf32> to vector<16x128xf32>
    %c4 = arith.constant 4 : index
    %c0_8 = arith.constant 0 : index
    %c0_9 = arith.constant 0 : index
    %8 = vector.load %arg3[%c4, %c0_8, %c0_9] : memref<10x16x128xf32, #tpu.memory_space<vmem>>, vector<1x16x128xf32>
    %9 = vector.shape_cast %8 : vector<1x16x128xf32> to vector<16x128xf32>
    %c5 = arith.constant 5 : index
    %c0_10 = arith.constant 0 : index
    %c0_11 = arith.constant 0 : index
    %10 = vector.load %arg3[%c5, %c0_10, %c0_11] : memref<10x16x128xf32, #tpu.memory_space<vmem>>, vector<1x16x128xf32>
    %11 = vector.shape_cast %10 : vector<1x16x128xf32> to vector<16x128xf32>
    %c6 = arith.constant 6 : index
    %c0_12 = arith.constant 0 : index
    %c0_13 = arith.constant 0 : index
    %12 = vector.load %arg3[%c6, %c0_12, %c0_13] : memref<10x16x128xf32, #tpu.memory_space<vmem>>, vector<1x16x128xf32>
    %13 = vector.shape_cast %12 : vector<1x16x128xf32> to vector<16x128xf32>
    %c7 = arith.constant 7 : index
    %c0_14 = arith.constant 0 : index
    %c0_15 = arith.constant 0 : index
    %14 = vector.load %arg3[%c7, %c0_14, %c0_15] : memref<10x16x128xf32, #tpu.memory_space<vmem>>, vector<1x16x128xf32>
    %15 = vector.shape_cast %14 : vector<1x16x128xf32> to vector<16x128xf32>
    %c8 = arith.constant 8 : index
    %c0_16 = arith.constant 0 : index
    %c0_17 = arith.constant 0 : index
    %16 = vector.load %arg3[%c8, %c0_16, %c0_17] : memref<10x16x128xf32, #tpu.memory_space<vmem>>, vector<1x16x128xf32>
    %17 = vector.shape_cast %16 : vector<1x16x128xf32> to vector<16x128xf32>
    %c9 = arith.constant 9 : index
    %c0_18 = arith.constant 0 : index
    %c0_19 = arith.constant 0 : index
    %18 = vector.load %arg3[%c9, %c0_18, %c0_19] : memref<10x16x128xf32, #tpu.memory_space<vmem>>, vector<1x16x128xf32>
    %19 = vector.shape_cast %18 : vector<1x16x128xf32> to vector<16x128xf32>
    %c0_20 = arith.constant 0 : index
    %20 = memref.load %arg1[%c0_20] : memref<700xf32, #tpu.memory_space<smem>>
    %21 = vector.broadcast %20 : f32 to vector<16x128xf32>
    %22 = arith.mulf %1, %21 : vector<16x128xf32>
    %c0_21 = arith.constant 0 : index
    %23 = memref.load %arg2[%c0_21] : memref<70xf32, #tpu.memory_space<smem>>
    %24 = vector.broadcast %23 : f32 to vector<16x128xf32>
    %25 = arith.addf %22, %24 : vector<16x128xf32>
    %c1_22 = arith.constant 1 : index
    %26 = memref.load %arg1[%c1_22] : memref<700xf32, #tpu.memory_space<smem>>
    %27 = vector.broadcast %26 : f32 to vector<16x128xf32>
    %28 = arith.mulf %3, %27 : vector<16x128xf32>
    %29 = arith.addf %25, %28 : vector<16x128xf32>
    %c2_23 = arith.constant 2 : index
    %30 = memref.load %arg1[%c2_23] : memref<700xf32, #tpu.memory_space<smem>>
    %31 = vector.broadcast %30 : f32 to vector<16x128xf32>
    %32 = arith.mulf %5, %31 : vector<16x128xf32>
    %33 = arith.addf %29, %32 : vector<16x128xf32>
    %c3_24 = arith.constant 3 : index
    %34 = memref.load %arg1[%c3_24] : memref<700xf32, #tpu.memory_space<smem>>
    %35 = vector.broadcast %34 : f32 to vector<16x128xf32>
    %36 = arith.mulf %7, %35 : vector<16x128xf32>
    %37 = arith.addf %33, %36 : vector<16x128xf32>
    %c4_25 = arith.constant 4 : index
    %38 = memref.load %arg1[%c4_25] : memref<700xf32, #tpu.memory_space<smem>>
    %39 = vector.broadcast %38 : f32 to vector<16x128xf32>
    %40 = arith.mulf %9, %39 : vector<16x128xf32>
    %41 = arith.addf %37, %40 : vector<16x128xf32>
    %c5_26 = arith.constant 5 : index
    %42 = memref.load %arg1[%c5_26] : memref<700xf32, #tpu.memory_space<smem>>
    %43 = vector.broadcast %42 : f32 to vector<16x128xf32>
    %44 = arith.mulf %11, %43 : vector<16x128xf32>
    %45 = arith.addf %41, %44 : vector<16x128xf32>
    %c6_27 = arith.constant 6 : index
    %46 = memref.load %arg1[%c6_27] : memref<700xf32, #tpu.memory_space<smem>>
    %47 = vector.broadcast %46 : f32 to vector<16x128xf32>
    %48 = arith.mulf %13, %47 : vector<16x128xf32>
    %49 = arith.addf %45, %48 : vector<16x128xf32>
    %c7_28 = arith.constant 7 : index
    %50 = memref.load %arg1[%c7_28] : memref<700xf32, #tpu.memory_space<smem>>
    %51 = vector.broadcast %50 : f32 to vector<16x128xf32>
    %52 = arith.mulf %15, %51 : vector<16x128xf32>
    %53 = arith.addf %49, %52 : vector<16x128xf32>
    %c8_29 = arith.constant 8 : index
    %54 = memref.load %arg1[%c8_29] : memref<700xf32, #tpu.memory_space<smem>>
    %55 = vector.broadcast %54 : f32 to vector<16x128xf32>
    %56 = arith.mulf %17, %55 : vector<16x128xf32>
    %57 = arith.addf %53, %56 : vector<16x128xf32>
    %c9_30 = arith.constant 9 : index
    %58 = memref.load %arg1[%c9_30] : memref<700xf32, #tpu.memory_space<smem>>
    %59 = vector.broadcast %58 : f32 to vector<16x128xf32>
    %60 = arith.mulf %19, %59 : vector<16x128xf32>
    %61 = arith.addf %57, %60 : vector<16x128xf32>
    %c10 = arith.constant 10 : index
    %62 = memref.load %arg1[%c10] : memref<700xf32, #tpu.memory_space<smem>>
    %63 = vector.broadcast %62 : f32 to vector<16x128xf32>
    %64 = arith.mulf %1, %63 : vector<16x128xf32>
    %c1_31 = arith.constant 1 : index
    %65 = memref.load %arg2[%c1_31] : memref<70xf32, #tpu.memory_space<smem>>
    %66 = vector.broadcast %65 : f32 to vector<16x128xf32>
    %67 = arith.addf %64, %66 : vector<16x128xf32>
    %c11 = arith.constant 11 : index
    %68 = memref.load %arg1[%c11] : memref<700xf32, #tpu.memory_space<smem>>
    %69 = vector.broadcast %68 : f32 to vector<16x128xf32>
    %70 = arith.mulf %3, %69 : vector<16x128xf32>
    %71 = arith.addf %67, %70 : vector<16x128xf32>
    %c12 = arith.constant 12 : index
    %72 = memref.load %arg1[%c12] : memref<700xf32, #tpu.memory_space<smem>>
    %73 = vector.broadcast %72 : f32 to vector<16x128xf32>
    %74 = arith.mulf %5, %73 : vector<16x128xf32>
    %75 = arith.addf %71, %74 : vector<16x128xf32>
    %c13 = arith.constant 13 : index
    %76 = memref.load %arg1[%c13] : memref<700xf32, #tpu.memory_space<smem>>
    %77 = vector.broadcast %76 : f32 to vector<16x128xf32>
    %78 = arith.mulf %7, %77 : vector<16x128xf32>
    %79 = arith.addf %75, %78 : vector<16x128xf32>
    %c14 = arith.constant 14 : index
    %80 = memref.load %arg1[%c14] : memref<700xf32, #tpu.memory_space<smem>>
    %81 = vector.broadcast %80 : f32 to vector<16x128xf32>
    %82 = arith.mulf %9, %81 : vector<16x128xf32>
    %83 = arith.addf %79, %82 : vector<16x128xf32>
    %c15 = arith.constant 15 : index
    %84 = memref.load %arg1[%c15] : memref<700xf32, #tpu.memory_space<smem>>
    %85 = vector.broadcast %84 : f32 to vector<16x128xf32>
    %86 = arith.mulf %11, %85 : vector<16x128xf32>
    %87 = arith.addf %83, %86 : vector<16x128xf32>
    %c16 = arith.constant 16 : index
    %88 = memref.load %arg1[%c16] : memref<700xf32, #tpu.memory_space<smem>>
    %89 = vector.broadcast %88 : f32 to vector<16x128xf32>
    %90 = arith.mulf %13, %89 : vector<16x128xf32>
    %91 = arith.addf %87, %90 : vector<16x128xf32>
    %c17 = arith.constant 17 : index
    %92 = memref.load %arg1[%c17] : memref<700xf32, #tpu.memory_space<smem>>
    %93 = vector.broadcast %92 : f32 to vector<16x128xf32>
    %94 = arith.mulf %15, %93 : vector<16x128xf32>
    %95 = arith.addf %91, %94 : vector<16x128xf32>
    %c18 = arith.constant 18 : index
    %96 = memref.load %arg1[%c18] : memref<700xf32, #tpu.memory_space<smem>>
    %97 = vector.broadcast %96 : f32 to vector<16x128xf32>
    %98 = arith.mulf %17, %97 : vector<16x128xf32>
    %99 = arith.addf %95, %98 : vector<16x128xf32>
    %c19 = arith.constant 19 : index
    %100 = memref.load %arg1[%c19] : memref<700xf32, #tpu.memory_space<smem>>
    %101 = vector.broadcast %100 : f32 to vector<16x128xf32>
    %102 = arith.mulf %19, %101 : vector<16x128xf32>
    %103 = arith.addf %99, %102 : vector<16x128xf32>
    %c20 = arith.constant 20 : index
    %104 = memref.load %arg1[%c20] : memref<700xf32, #tpu.memory_space<smem>>
    %105 = vector.broadcast %104 : f32 to vector<16x128xf32>
    %106 = arith.mulf %1, %105 : vector<16x128xf32>
    %c2_32 = arith.constant 2 : index
    %107 = memref.load %arg2[%c2_32] : memref<70xf32, #tpu.memory_space<smem>>
    %108 = vector.broadcast %107 : f32 to vector<16x128xf32>
    %109 = arith.addf %106, %108 : vector<16x128xf32>
    %c21 = arith.constant 21 : index
    %110 = memref.load %arg1[%c21] : memref<700xf32, #tpu.memory_space<smem>>
    %111 = vector.broadcast %110 : f32 to vector<16x128xf32>
    %112 = arith.mulf %3, %111 : vector<16x128xf32>
    %113 = arith.addf %109, %112 : vector<16x128xf32>
    %c22 = arith.constant 22 : index
    %114 = memref.load %arg1[%c22] : memref<700xf32, #tpu.memory_space<smem>>
    %115 = vector.broadcast %114 : f32 to vector<16x128xf32>
    %116 = arith.mulf %5, %115 : vector<16x128xf32>
    %117 = arith.addf %113, %116 : vector<16x128xf32>
    %c23 = arith.constant 23 : index
    %118 = memref.load %arg1[%c23] : memref<700xf32, #tpu.memory_space<smem>>
    %119 = vector.broadcast %118 : f32 to vector<16x128xf32>
    %120 = arith.mulf %7, %119 : vector<16x128xf32>
    %121 = arith.addf %117, %120 : vector<16x128xf32>
    %c24 = arith.constant 24 : index
    %122 = memref.load %arg1[%c24] : memref<700xf32, #tpu.memory_space<smem>>
    %123 = vector.broadcast %122 : f32 to vector<16x128xf32>
    %124 = arith.mulf %9, %123 : vector<16x128xf32>
    %125 = arith.addf %121, %124 : vector<16x128xf32>
    %c25 = arith.constant 25 : index
    %126 = memref.load %arg1[%c25] : memref<700xf32, #tpu.memory_space<smem>>
    %127 = vector.broadcast %126 : f32 to vector<16x128xf32>
    %128 = arith.mulf %11, %127 : vector<16x128xf32>
    %129 = arith.addf %125, %128 : vector<16x128xf32>
    %c26 = arith.constant 26 : index
    %130 = memref.load %arg1[%c26] : memref<700xf32, #tpu.memory_space<smem>>
    %131 = vector.broadcast %130 : f32 to vector<16x128xf32>
    %132 = arith.mulf %13, %131 : vector<16x128xf32>
    %133 = arith.addf %129, %132 : vector<16x128xf32>
    %c27 = arith.constant 27 : index
    %134 = memref.load %arg1[%c27] : memref<700xf32, #tpu.memory_space<smem>>
    %135 = vector.broadcast %134 : f32 to vector<16x128xf32>
    %136 = arith.mulf %15, %135 : vector<16x128xf32>
    %137 = arith.addf %133, %136 : vector<16x128xf32>
    %c28 = arith.constant 28 : index
    %138 = memref.load %arg1[%c28] : memref<700xf32, #tpu.memory_space<smem>>
    %139 = vector.broadcast %138 : f32 to vector<16x128xf32>
    %140 = arith.mulf %17, %139 : vector<16x128xf32>
    %141 = arith.addf %137, %140 : vector<16x128xf32>
    %c29 = arith.constant 29 : index
    %142 = memref.load %arg1[%c29] : memref<700xf32, #tpu.memory_space<smem>>
    %143 = vector.broadcast %142 : f32 to vector<16x128xf32>
    %144 = arith.mulf %19, %143 : vector<16x128xf32>
    %145 = arith.addf %141, %144 : vector<16x128xf32>
    %c30 = arith.constant 30 : index
    %146 = memref.load %arg1[%c30] : memref<700xf32, #tpu.memory_space<smem>>
    %147 = vector.broadcast %146 : f32 to vector<16x128xf32>
    %148 = arith.mulf %1, %147 : vector<16x128xf32>
    %c3_33 = arith.constant 3 : index
    %149 = memref.load %arg2[%c3_33] : memref<70xf32, #tpu.memory_space<smem>>
    %150 = vector.broadcast %149 : f32 to vector<16x128xf32>
    %151 = arith.addf %148, %150 : vector<16x128xf32>
    %c31 = arith.constant 31 : index
    %152 = memref.load %arg1[%c31] : memref<700xf32, #tpu.memory_space<smem>>
    %153 = vector.broadcast %152 : f32 to vector<16x128xf32>
    %154 = arith.mulf %3, %153 : vector<16x128xf32>
    %155 = arith.addf %151, %154 : vector<16x128xf32>
    %c32 = arith.constant 32 : index
    %156 = memref.load %arg1[%c32] : memref<700xf32, #tpu.memory_space<smem>>
    %157 = vector.broadcast %156 : f32 to vector<16x128xf32>
    %158 = arith.mulf %5, %157 : vector<16x128xf32>
    %159 = arith.addf %155, %158 : vector<16x128xf32>
    %c33 = arith.constant 33 : index
    %160 = memref.load %arg1[%c33] : memref<700xf32, #tpu.memory_space<smem>>
    %161 = vector.broadcast %160 : f32 to vector<16x128xf32>
    %162 = arith.mulf %7, %161 : vector<16x128xf32>
    %163 = arith.addf %159, %162 : vector<16x128xf32>
    %c34 = arith.constant 34 : index
    %164 = memref.load %arg1[%c34] : memref<700xf32, #tpu.memory_space<smem>>
    %165 = vector.broadcast %164 : f32 to vector<16x128xf32>
    %166 = arith.mulf %9, %165 : vector<16x128xf32>
    %167 = arith.addf %163, %166 : vector<16x128xf32>
    %c35 = arith.constant 35 : index
    %168 = memref.load %arg1[%c35] : memref<700xf32, #tpu.memory_space<smem>>
    %169 = vector.broadcast %168 : f32 to vector<16x128xf32>
    %170 = arith.mulf %11, %169 : vector<16x128xf32>
    %171 = arith.addf %167, %170 : vector<16x128xf32>
    %c36 = arith.constant 36 : index
    %172 = memref.load %arg1[%c36] : memref<700xf32, #tpu.memory_space<smem>>
    %173 = vector.broadcast %172 : f32 to vector<16x128xf32>
    %174 = arith.mulf %13, %173 : vector<16x128xf32>
    %175 = arith.addf %171, %174 : vector<16x128xf32>
    %c37 = arith.constant 37 : index
    %176 = memref.load %arg1[%c37] : memref<700xf32, #tpu.memory_space<smem>>
    %177 = vector.broadcast %176 : f32 to vector<16x128xf32>
    %178 = arith.mulf %15, %177 : vector<16x128xf32>
    %179 = arith.addf %175, %178 : vector<16x128xf32>
    %c38 = arith.constant 38 : index
    %180 = memref.load %arg1[%c38] : memref<700xf32, #tpu.memory_space<smem>>
    %181 = vector.broadcast %180 : f32 to vector<16x128xf32>
    %182 = arith.mulf %17, %181 : vector<16x128xf32>
    %183 = arith.addf %179, %182 : vector<16x128xf32>
    %c39 = arith.constant 39 : index
    %184 = memref.load %arg1[%c39] : memref<700xf32, #tpu.memory_space<smem>>
    %185 = vector.broadcast %184 : f32 to vector<16x128xf32>
    %186 = arith.mulf %19, %185 : vector<16x128xf32>
    %187 = arith.addf %183, %186 : vector<16x128xf32>
    %c40 = arith.constant 40 : index
    %188 = memref.load %arg1[%c40] : memref<700xf32, #tpu.memory_space<smem>>
    %189 = vector.broadcast %188 : f32 to vector<16x128xf32>
    %190 = arith.mulf %1, %189 : vector<16x128xf32>
    %c4_34 = arith.constant 4 : index
    %191 = memref.load %arg2[%c4_34] : memref<70xf32, #tpu.memory_space<smem>>
    %192 = vector.broadcast %191 : f32 to vector<16x128xf32>
    %193 = arith.addf %190, %192 : vector<16x128xf32>
    %c41 = arith.constant 41 : index
    %194 = memref.load %arg1[%c41] : memref<700xf32, #tpu.memory_space<smem>>
    %195 = vector.broadcast %194 : f32 to vector<16x128xf32>
    %196 = arith.mulf %3, %195 : vector<16x128xf32>
    %197 = arith.addf %193, %196 : vector<16x128xf32>
    %c42 = arith.constant 42 : index
    %198 = memref.load %arg1[%c42] : memref<700xf32, #tpu.memory_space<smem>>
    %199 = vector.broadcast %198 : f32 to vector<16x128xf32>
    %200 = arith.mulf %5, %199 : vector<16x128xf32>
    %201 = arith.addf %197, %200 : vector<16x128xf32>
    %c43 = arith.constant 43 : index
    %202 = memref.load %arg1[%c43] : memref<700xf32, #tpu.memory_space<smem>>
    %203 = vector.broadcast %202 : f32 to vector<16x128xf32>
    %204 = arith.mulf %7, %203 : vector<16x128xf32>
    %205 = arith.addf %201, %204 : vector<16x128xf32>
    %c44 = arith.constant 44 : index
    %206 = memref.load %arg1[%c44] : memref<700xf32, #tpu.memory_space<smem>>
    %207 = vector.broadcast %206 : f32 to vector<16x128xf32>
    %208 = arith.mulf %9, %207 : vector<16x128xf32>
    %209 = arith.addf %205, %208 : vector<16x128xf32>
    %c45 = arith.constant 45 : index
    %210 = memref.load %arg1[%c45] : memref<700xf32, #tpu.memory_space<smem>>
    %211 = vector.broadcast %210 : f32 to vector<16x128xf32>
    %212 = arith.mulf %11, %211 : vector<16x128xf32>
    %213 = arith.addf %209, %212 : vector<16x128xf32>
    %c46 = arith.constant 46 : index
    %214 = memref.load %arg1[%c46] : memref<700xf32, #tpu.memory_space<smem>>
    %215 = vector.broadcast %214 : f32 to vector<16x128xf32>
    %216 = arith.mulf %13, %215 : vector<16x128xf32>
    %217 = arith.addf %213, %216 : vector<16x128xf32>
    %c47 = arith.constant 47 : index
    %218 = memref.load %arg1[%c47] : memref<700xf32, #tpu.memory_space<smem>>
    %219 = vector.broadcast %218 : f32 to vector<16x128xf32>
    %220 = arith.mulf %15, %219 : vector<16x128xf32>
    %221 = arith.addf %217, %220 : vector<16x128xf32>
    %c48 = arith.constant 48 : index
    %222 = memref.load %arg1[%c48] : memref<700xf32, #tpu.memory_space<smem>>
    %223 = vector.broadcast %222 : f32 to vector<16x128xf32>
    %224 = arith.mulf %17, %223 : vector<16x128xf32>
    %225 = arith.addf %221, %224 : vector<16x128xf32>
    %c49 = arith.constant 49 : index
    %226 = memref.load %arg1[%c49] : memref<700xf32, #tpu.memory_space<smem>>
    %227 = vector.broadcast %226 : f32 to vector<16x128xf32>
    %228 = arith.mulf %19, %227 : vector<16x128xf32>
    %229 = arith.addf %225, %228 : vector<16x128xf32>
    %c50 = arith.constant 50 : index
    %230 = memref.load %arg1[%c50] : memref<700xf32, #tpu.memory_space<smem>>
    %231 = vector.broadcast %230 : f32 to vector<16x128xf32>
    %232 = arith.mulf %1, %231 : vector<16x128xf32>
    %c5_35 = arith.constant 5 : index
    %233 = memref.load %arg2[%c5_35] : memref<70xf32, #tpu.memory_space<smem>>
    %234 = vector.broadcast %233 : f32 to vector<16x128xf32>
    %235 = arith.addf %232, %234 : vector<16x128xf32>
    %c51 = arith.constant 51 : index
    %236 = memref.load %arg1[%c51] : memref<700xf32, #tpu.memory_space<smem>>
    %237 = vector.broadcast %236 : f32 to vector<16x128xf32>
    %238 = arith.mulf %3, %237 : vector<16x128xf32>
    %239 = arith.addf %235, %238 : vector<16x128xf32>
    %c52 = arith.constant 52 : index
    %240 = memref.load %arg1[%c52] : memref<700xf32, #tpu.memory_space<smem>>
    %241 = vector.broadcast %240 : f32 to vector<16x128xf32>
    %242 = arith.mulf %5, %241 : vector<16x128xf32>
    %243 = arith.addf %239, %242 : vector<16x128xf32>
    %c53 = arith.constant 53 : index
    %244 = memref.load %arg1[%c53] : memref<700xf32, #tpu.memory_space<smem>>
    %245 = vector.broadcast %244 : f32 to vector<16x128xf32>
    %246 = arith.mulf %7, %245 : vector<16x128xf32>
    %247 = arith.addf %243, %246 : vector<16x128xf32>
    %c54 = arith.constant 54 : index
    %248 = memref.load %arg1[%c54] : memref<700xf32, #tpu.memory_space<smem>>
    %249 = vector.broadcast %248 : f32 to vector<16x128xf32>
    %250 = arith.mulf %9, %249 : vector<16x128xf32>
    %251 = arith.addf %247, %250 : vector<16x128xf32>
    %c55 = arith.constant 55 : index
    %252 = memref.load %arg1[%c55] : memref<700xf32, #tpu.memory_space<smem>>
    %253 = vector.broadcast %252 : f32 to vector<16x128xf32>
    %254 = arith.mulf %11, %253 : vector<16x128xf32>
    %255 = arith.addf %251, %254 : vector<16x128xf32>
    %c56 = arith.constant 56 : index
    %256 = memref.load %arg1[%c56] : memref<700xf32, #tpu.memory_space<smem>>
    %257 = vector.broadcast %256 : f32 to vector<16x128xf32>
    %258 = arith.mulf %13, %257 : vector<16x128xf32>
    %259 = arith.addf %255, %258 : vector<16x128xf32>
    %c57 = arith.constant 57 : index
    %260 = memref.load %arg1[%c57] : memref<700xf32, #tpu.memory_space<smem>>
    %261 = vector.broadcast %260 : f32 to vector<16x128xf32>
    %262 = arith.mulf %15, %261 : vector<16x128xf32>
    %263 = arith.addf %259, %262 : vector<16x128xf32>
    %c58 = arith.constant 58 : index
    %264 = memref.load %arg1[%c58] : memref<700xf32, #tpu.memory_space<smem>>
    %265 = vector.broadcast %264 : f32 to vector<16x128xf32>
    %266 = arith.mulf %17, %265 : vector<16x128xf32>
    %267 = arith.addf %263, %266 : vector<16x128xf32>
    %c59 = arith.constant 59 : index
    %268 = memref.load %arg1[%c59] : memref<700xf32, #tpu.memory_space<smem>>
    %269 = vector.broadcast %268 : f32 to vector<16x128xf32>
    %270 = arith.mulf %19, %269 : vector<16x128xf32>
    %271 = arith.addf %267, %270 : vector<16x128xf32>
    %c60 = arith.constant 60 : index
    %272 = memref.load %arg1[%c60] : memref<700xf32, #tpu.memory_space<smem>>
    %273 = vector.broadcast %272 : f32 to vector<16x128xf32>
    %274 = arith.mulf %1, %273 : vector<16x128xf32>
    %c6_36 = arith.constant 6 : index
    %275 = memref.load %arg2[%c6_36] : memref<70xf32, #tpu.memory_space<smem>>
    %276 = vector.broadcast %275 : f32 to vector<16x128xf32>
    %277 = arith.addf %274, %276 : vector<16x128xf32>
    %c61 = arith.constant 61 : index
    %278 = memref.load %arg1[%c61] : memref<700xf32, #tpu.memory_space<smem>>
    %279 = vector.broadcast %278 : f32 to vector<16x128xf32>
    %280 = arith.mulf %3, %279 : vector<16x128xf32>
    %281 = arith.addf %277, %280 : vector<16x128xf32>
    %c62 = arith.constant 62 : index
    %282 = memref.load %arg1[%c62] : memref<700xf32, #tpu.memory_space<smem>>
    %283 = vector.broadcast %282 : f32 to vector<16x128xf32>
    %284 = arith.mulf %5, %283 : vector<16x128xf32>
    %285 = arith.addf %281, %284 : vector<16x128xf32>
    %c63 = arith.constant 63 : index
    %286 = memref.load %arg1[%c63] : memref<700xf32, #tpu.memory_space<smem>>
    %287 = vector.broadcast %286 : f32 to vector<16x128xf32>
    %288 = arith.mulf %7, %287 : vector<16x128xf32>
    %289 = arith.addf %285, %288 : vector<16x128xf32>
    %c64 = arith.constant 64 : index
    %290 = memref.load %arg1[%c64] : memref<700xf32, #tpu.memory_space<smem>>
    %291 = vector.broadcast %290 : f32 to vector<16x128xf32>
    %292 = arith.mulf %9, %291 : vector<16x128xf32>
    %293 = arith.addf %289, %292 : vector<16x128xf32>
    %c65 = arith.constant 65 : index
    %294 = memref.load %arg1[%c65] : memref<700xf32, #tpu.memory_space<smem>>
    %295 = vector.broadcast %294 : f32 to vector<16x128xf32>
    %296 = arith.mulf %11, %295 : vector<16x128xf32>
    %297 = arith.addf %293, %296 : vector<16x128xf32>
    %c66 = arith.constant 66 : index
    %298 = memref.load %arg1[%c66] : memref<700xf32, #tpu.memory_space<smem>>
    %299 = vector.broadcast %298 : f32 to vector<16x128xf32>
    %300 = arith.mulf %13, %299 : vector<16x128xf32>
    %301 = arith.addf %297, %300 : vector<16x128xf32>
    %c67 = arith.constant 67 : index
    %302 = memref.load %arg1[%c67] : memref<700xf32, #tpu.memory_space<smem>>
    %303 = vector.broadcast %302 : f32 to vector<16x128xf32>
    %304 = arith.mulf %15, %303 : vector<16x128xf32>
    %305 = arith.addf %301, %304 : vector<16x128xf32>
    %c68 = arith.constant 68 : index
    %306 = memref.load %arg1[%c68] : memref<700xf32, #tpu.memory_space<smem>>
    %307 = vector.broadcast %306 : f32 to vector<16x128xf32>
    %308 = arith.mulf %17, %307 : vector<16x128xf32>
    %309 = arith.addf %305, %308 : vector<16x128xf32>
    %c69 = arith.constant 69 : index
    %310 = memref.load %arg1[%c69] : memref<700xf32, #tpu.memory_space<smem>>
    %311 = vector.broadcast %310 : f32 to vector<16x128xf32>
    %312 = arith.mulf %19, %311 : vector<16x128xf32>
    %313 = arith.addf %309, %312 : vector<16x128xf32>
    %c70 = arith.constant 70 : index
    %314 = memref.load %arg1[%c70] : memref<700xf32, #tpu.memory_space<smem>>
    %315 = vector.broadcast %314 : f32 to vector<16x128xf32>
    %316 = arith.mulf %1, %315 : vector<16x128xf32>
    %c7_37 = arith.constant 7 : index
    %317 = memref.load %arg2[%c7_37] : memref<70xf32, #tpu.memory_space<smem>>
    %318 = vector.broadcast %317 : f32 to vector<16x128xf32>
    %319 = arith.addf %316, %318 : vector<16x128xf32>
    %c71 = arith.constant 71 : index
    %320 = memref.load %arg1[%c71] : memref<700xf32, #tpu.memory_space<smem>>
    %321 = vector.broadcast %320 : f32 to vector<16x128xf32>
    %322 = arith.mulf %3, %321 : vector<16x128xf32>
    %323 = arith.addf %319, %322 : vector<16x128xf32>
    %c72 = arith.constant 72 : index
    %324 = memref.load %arg1[%c72] : memref<700xf32, #tpu.memory_space<smem>>
    %325 = vector.broadcast %324 : f32 to vector<16x128xf32>
    %326 = arith.mulf %5, %325 : vector<16x128xf32>
    %327 = arith.addf %323, %326 : vector<16x128xf32>
    %c73 = arith.constant 73 : index
    %328 = memref.load %arg1[%c73] : memref<700xf32, #tpu.memory_space<smem>>
    %329 = vector.broadcast %328 : f32 to vector<16x128xf32>
    %330 = arith.mulf %7, %329 : vector<16x128xf32>
    %331 = arith.addf %327, %330 : vector<16x128xf32>
    %c74 = arith.constant 74 : index
    %332 = memref.load %arg1[%c74] : memref<700xf32, #tpu.memory_space<smem>>
    %333 = vector.broadcast %332 : f32 to vector<16x128xf32>
    %334 = arith.mulf %9, %333 : vector<16x128xf32>
    %335 = arith.addf %331, %334 : vector<16x128xf32>
    %c75 = arith.constant 75 : index
    %336 = memref.load %arg1[%c75] : memref<700xf32, #tpu.memory_space<smem>>
    %337 = vector.broadcast %336 : f32 to vector<16x128xf32>
    %338 = arith.mulf %11, %337 : vector<16x128xf32>
    %339 = arith.addf %335, %338 : vector<16x128xf32>
    %c76 = arith.constant 76 : index
    %340 = memref.load %arg1[%c76] : memref<700xf32, #tpu.memory_space<smem>>
    %341 = vector.broadcast %340 : f32 to vector<16x128xf32>
    %342 = arith.mulf %13, %341 : vector<16x128xf32>
    %343 = arith.addf %339, %342 : vector<16x128xf32>
    %c77 = arith.constant 77 : index
    %344 = memref.load %arg1[%c77] : memref<700xf32, #tpu.memory_space<smem>>
    %345 = vector.broadcast %344 : f32 to vector<16x128xf32>
    %346 = arith.mulf %15, %345 : vector<16x128xf32>
    %347 = arith.addf %343, %346 : vector<16x128xf32>
    %c78 = arith.constant 78 : index
    %348 = memref.load %arg1[%c78] : memref<700xf32, #tpu.memory_space<smem>>
    %349 = vector.broadcast %348 : f32 to vector<16x128xf32>
    %350 = arith.mulf %17, %349 : vector<16x128xf32>
    %351 = arith.addf %347, %350 : vector<16x128xf32>
    %c79 = arith.constant 79 : index
    %352 = memref.load %arg1[%c79] : memref<700xf32, #tpu.memory_space<smem>>
    %353 = vector.broadcast %352 : f32 to vector<16x128xf32>
    %354 = arith.mulf %19, %353 : vector<16x128xf32>
    %355 = arith.addf %351, %354 : vector<16x128xf32>
    %c80 = arith.constant 80 : index
    %356 = memref.load %arg1[%c80] : memref<700xf32, #tpu.memory_space<smem>>
    %357 = vector.broadcast %356 : f32 to vector<16x128xf32>
    %358 = arith.mulf %1, %357 : vector<16x128xf32>
    %c8_38 = arith.constant 8 : index
    %359 = memref.load %arg2[%c8_38] : memref<70xf32, #tpu.memory_space<smem>>
    %360 = vector.broadcast %359 : f32 to vector<16x128xf32>
    %361 = arith.addf %358, %360 : vector<16x128xf32>
    %c81 = arith.constant 81 : index
    %362 = memref.load %arg1[%c81] : memref<700xf32, #tpu.memory_space<smem>>
    %363 = vector.broadcast %362 : f32 to vector<16x128xf32>
    %364 = arith.mulf %3, %363 : vector<16x128xf32>
    %365 = arith.addf %361, %364 : vector<16x128xf32>
    %c82 = arith.constant 82 : index
    %366 = memref.load %arg1[%c82] : memref<700xf32, #tpu.memory_space<smem>>
    %367 = vector.broadcast %366 : f32 to vector<16x128xf32>
    %368 = arith.mulf %5, %367 : vector<16x128xf32>
    %369 = arith.addf %365, %368 : vector<16x128xf32>
    %c83 = arith.constant 83 : index
    %370 = memref.load %arg1[%c83] : memref<700xf32, #tpu.memory_space<smem>>
    %371 = vector.broadcast %370 : f32 to vector<16x128xf32>
    %372 = arith.mulf %7, %371 : vector<16x128xf32>
    %373 = arith.addf %369, %372 : vector<16x128xf32>
    %c84 = arith.constant 84 : index
    %374 = memref.load %arg1[%c84] : memref<700xf32, #tpu.memory_space<smem>>
    %375 = vector.broadcast %374 : f32 to vector<16x128xf32>
    %376 = arith.mulf %9, %375 : vector<16x128xf32>
    %377 = arith.addf %373, %376 : vector<16x128xf32>
    %c85 = arith.constant 85 : index
    %378 = memref.load %arg1[%c85] : memref<700xf32, #tpu.memory_space<smem>>
    %379 = vector.broadcast %378 : f32 to vector<16x128xf32>
    %380 = arith.mulf %11, %379 : vector<16x128xf32>
    %381 = arith.addf %377, %380 : vector<16x128xf32>
    %c86 = arith.constant 86 : index
    %382 = memref.load %arg1[%c86] : memref<700xf32, #tpu.memory_space<smem>>
    %383 = vector.broadcast %382 : f32 to vector<16x128xf32>
    %384 = arith.mulf %13, %383 : vector<16x128xf32>
    %385 = arith.addf %381, %384 : vector<16x128xf32>
    %c87 = arith.constant 87 : index
    %386 = memref.load %arg1[%c87] : memref<700xf32, #tpu.memory_space<smem>>
    %387 = vector.broadcast %386 : f32 to vector<16x128xf32>
    %388 = arith.mulf %15, %387 : vector<16x128xf32>
    %389 = arith.addf %385, %388 : vector<16x128xf32>
    %c88 = arith.constant 88 : index
    %390 = memref.load %arg1[%c88] : memref<700xf32, #tpu.memory_space<smem>>
    %391 = vector.broadcast %390 : f32 to vector<16x128xf32>
    %392 = arith.mulf %17, %391 : vector<16x128xf32>
    %393 = arith.addf %389, %392 : vector<16x128xf32>
    %c89 = arith.constant 89 : index
    %394 = memref.load %arg1[%c89] : memref<700xf32, #tpu.memory_space<smem>>
    %395 = vector.broadcast %394 : f32 to vector<16x128xf32>
    %396 = arith.mulf %19, %395 : vector<16x128xf32>
    %397 = arith.addf %393, %396 : vector<16x128xf32>
    %c90 = arith.constant 90 : index
    %398 = memref.load %arg1[%c90] : memref<700xf32, #tpu.memory_space<smem>>
    %399 = vector.broadcast %398 : f32 to vector<16x128xf32>
    %400 = arith.mulf %1, %399 : vector<16x128xf32>
    %c9_39 = arith.constant 9 : index
    %401 = memref.load %arg2[%c9_39] : memref<70xf32, #tpu.memory_space<smem>>
    %402 = vector.broadcast %401 : f32 to vector<16x128xf32>
    %403 = arith.addf %400, %402 : vector<16x128xf32>
    %c91 = arith.constant 91 : index
    %404 = memref.load %arg1[%c91] : memref<700xf32, #tpu.memory_space<smem>>
    %405 = vector.broadcast %404 : f32 to vector<16x128xf32>
    %406 = arith.mulf %3, %405 : vector<16x128xf32>
    %407 = arith.addf %403, %406 : vector<16x128xf32>
    %c92 = arith.constant 92 : index
    %408 = memref.load %arg1[%c92] : memref<700xf32, #tpu.memory_space<smem>>
    %409 = vector.broadcast %408 : f32 to vector<16x128xf32>
    %410 = arith.mulf %5, %409 : vector<16x128xf32>
    %411 = arith.addf %407, %410 : vector<16x128xf32>
    %c93 = arith.constant 93 : index
    %412 = memref.load %arg1[%c93] : memref<700xf32, #tpu.memory_space<smem>>
    %413 = vector.broadcast %412 : f32 to vector<16x128xf32>
    %414 = arith.mulf %7, %413 : vector<16x128xf32>
    %415 = arith.addf %411, %414 : vector<16x128xf32>
    %c94 = arith.constant 94 : index
    %416 = memref.load %arg1[%c94] : memref<700xf32, #tpu.memory_space<smem>>
    %417 = vector.broadcast %416 : f32 to vector<16x128xf32>
    %418 = arith.mulf %9, %417 : vector<16x128xf32>
    %419 = arith.addf %415, %418 : vector<16x128xf32>
    %c95 = arith.constant 95 : index
    %420 = memref.load %arg1[%c95] : memref<700xf32, #tpu.memory_space<smem>>
    %421 = vector.broadcast %420 : f32 to vector<16x128xf32>
    %422 = arith.mulf %11, %421 : vector<16x128xf32>
    %423 = arith.addf %419, %422 : vector<16x128xf32>
    %c96 = arith.constant 96 : index
    %424 = memref.load %arg1[%c96] : memref<700xf32, #tpu.memory_space<smem>>
    %425 = vector.broadcast %424 : f32 to vector<16x128xf32>
    %426 = arith.mulf %13, %425 : vector<16x128xf32>
    %427 = arith.addf %423, %426 : vector<16x128xf32>
    %c97 = arith.constant 97 : index
    %428 = memref.load %arg1[%c97] : memref<700xf32, #tpu.memory_space<smem>>
    %429 = vector.broadcast %428 : f32 to vector<16x128xf32>
    %430 = arith.mulf %15, %429 : vector<16x128xf32>
    %431 = arith.addf %427, %430 : vector<16x128xf32>
    %c98 = arith.constant 98 : index
    %432 = memref.load %arg1[%c98] : memref<700xf32, #tpu.memory_space<smem>>
    %433 = vector.broadcast %432 : f32 to vector<16x128xf32>
    %434 = arith.mulf %17, %433 : vector<16x128xf32>
    %435 = arith.addf %431, %434 : vector<16x128xf32>
    %c99 = arith.constant 99 : index
    %436 = memref.load %arg1[%c99] : memref<700xf32, #tpu.memory_space<smem>>
    %437 = vector.broadcast %436 : f32 to vector<16x128xf32>
    %438 = arith.mulf %19, %437 : vector<16x128xf32>
    %439 = arith.addf %435, %438 : vector<16x128xf32>
    %cst = arith.constant 5.000000e-01 : f32
    %440 = vector.broadcast %cst : f32 to vector<16x128xf32>
    %441 = arith.mulf %440, %61 : vector<16x128xf32>
    %442 = math.tanh %441 : vector<16x128xf32>
    %cst_40 = arith.constant 5.000000e-01 : f32
    %443 = vector.broadcast %cst_40 : f32 to vector<16x128xf32>
    %444 = arith.mulf %443, %442 : vector<16x128xf32>
    %cst_41 = arith.constant 5.000000e-01 : f32
    %445 = vector.broadcast %cst_41 : f32 to vector<16x128xf32>
    %446 = arith.addf %444, %445 : vector<16x128xf32>
    %cst_42 = arith.constant 5.000000e-01 : f32
    %447 = vector.broadcast %cst_42 : f32 to vector<16x128xf32>
    %448 = arith.mulf %447, %103 : vector<16x128xf32>
    %449 = math.tanh %448 : vector<16x128xf32>
    %cst_43 = arith.constant 5.000000e-01 : f32
    %450 = vector.broadcast %cst_43 : f32 to vector<16x128xf32>
    %451 = arith.mulf %450, %449 : vector<16x128xf32>
    %cst_44 = arith.constant 5.000000e-01 : f32
    %452 = vector.broadcast %cst_44 : f32 to vector<16x128xf32>
    %453 = arith.addf %451, %452 : vector<16x128xf32>
    %cst_45 = arith.constant 5.000000e-01 : f32
    %454 = vector.broadcast %cst_45 : f32 to vector<16x128xf32>
    %455 = arith.mulf %454, %145 : vector<16x128xf32>
    %456 = math.tanh %455 : vector<16x128xf32>
    %cst_46 = arith.constant 5.000000e-01 : f32
    %457 = vector.broadcast %cst_46 : f32 to vector<16x128xf32>
    %458 = arith.mulf %457, %456 : vector<16x128xf32>
    %cst_47 = arith.constant 5.000000e-01 : f32
    %459 = vector.broadcast %cst_47 : f32 to vector<16x128xf32>
    %460 = arith.addf %458, %459 : vector<16x128xf32>
    %cst_48 = arith.constant 5.000000e-01 : f32
    %461 = vector.broadcast %cst_48 : f32 to vector<16x128xf32>
    %462 = arith.mulf %461, %187 : vector<16x128xf32>
    %463 = math.tanh %462 : vector<16x128xf32>
    %cst_49 = arith.constant 5.000000e-01 : f32
    %464 = vector.broadcast %cst_49 : f32 to vector<16x128xf32>
    %465 = arith.mulf %464, %463 : vector<16x128xf32>
    %cst_50 = arith.constant 5.000000e-01 : f32
    %466 = vector.broadcast %cst_50 : f32 to vector<16x128xf32>
    %467 = arith.addf %465, %466 : vector<16x128xf32>
    %cst_51 = arith.constant 5.000000e-01 : f32
    %468 = vector.broadcast %cst_51 : f32 to vector<16x128xf32>
    %469 = arith.mulf %468, %229 : vector<16x128xf32>
    %470 = math.tanh %469 : vector<16x128xf32>
    %cst_52 = arith.constant 5.000000e-01 : f32
    %471 = vector.broadcast %cst_52 : f32 to vector<16x128xf32>
    %472 = arith.mulf %471, %470 : vector<16x128xf32>
    %cst_53 = arith.constant 5.000000e-01 : f32
    %473 = vector.broadcast %cst_53 : f32 to vector<16x128xf32>
    %474 = arith.addf %472, %473 : vector<16x128xf32>
    %cst_54 = arith.constant 5.000000e-01 : f32
    %475 = vector.broadcast %cst_54 : f32 to vector<16x128xf32>
    %476 = arith.mulf %475, %271 : vector<16x128xf32>
    %477 = math.tanh %476 : vector<16x128xf32>
    %cst_55 = arith.constant 5.000000e-01 : f32
    %478 = vector.broadcast %cst_55 : f32 to vector<16x128xf32>
    %479 = arith.mulf %478, %477 : vector<16x128xf32>
    %cst_56 = arith.constant 5.000000e-01 : f32
    %480 = vector.broadcast %cst_56 : f32 to vector<16x128xf32>
    %481 = arith.addf %479, %480 : vector<16x128xf32>
    %cst_57 = arith.constant 5.000000e-01 : f32
    %482 = vector.broadcast %cst_57 : f32 to vector<16x128xf32>
    %483 = arith.mulf %482, %313 : vector<16x128xf32>
    %484 = math.tanh %483 : vector<16x128xf32>
    %cst_58 = arith.constant 5.000000e-01 : f32
    %485 = vector.broadcast %cst_58 : f32 to vector<16x128xf32>
    %486 = arith.mulf %485, %484 : vector<16x128xf32>
    %cst_59 = arith.constant 5.000000e-01 : f32
    %487 = vector.broadcast %cst_59 : f32 to vector<16x128xf32>
    %488 = arith.addf %486, %487 : vector<16x128xf32>
    %cst_60 = arith.constant 5.000000e-01 : f32
    %489 = vector.broadcast %cst_60 : f32 to vector<16x128xf32>
    %490 = arith.mulf %489, %355 : vector<16x128xf32>
    %491 = math.tanh %490 : vector<16x128xf32>
    %cst_61 = arith.constant 5.000000e-01 : f32
    %492 = vector.broadcast %cst_61 : f32 to vector<16x128xf32>
    %493 = arith.mulf %492, %491 : vector<16x128xf32>
    %cst_62 = arith.constant 5.000000e-01 : f32
    %494 = vector.broadcast %cst_62 : f32 to vector<16x128xf32>
    %495 = arith.addf %493, %494 : vector<16x128xf32>
    %cst_63 = arith.constant 5.000000e-01 : f32
    %496 = vector.broadcast %cst_63 : f32 to vector<16x128xf32>
    %497 = arith.mulf %496, %397 : vector<16x128xf32>
    %498 = math.tanh %497 : vector<16x128xf32>
    %cst_64 = arith.constant 5.000000e-01 : f32
    %499 = vector.broadcast %cst_64 : f32 to vector<16x128xf32>
    %500 = arith.mulf %499, %498 : vector<16x128xf32>
    %cst_65 = arith.constant 5.000000e-01 : f32
    %501 = vector.broadcast %cst_65 : f32 to vector<16x128xf32>
    %502 = arith.addf %500, %501 : vector<16x128xf32>
    %cst_66 = arith.constant 5.000000e-01 : f32
    %503 = vector.broadcast %cst_66 : f32 to vector<16x128xf32>
    %504 = arith.mulf %503, %439 : vector<16x128xf32>
    %505 = math.tanh %504 : vector<16x128xf32>
    %cst_67 = arith.constant 5.000000e-01 : f32
    %506 = vector.broadcast %cst_67 : f32 to vector<16x128xf32>
    %507 = arith.mulf %506, %505 : vector<16x128xf32>
    %cst_68 = arith.constant 5.000000e-01 : f32
    %508 = vector.broadcast %cst_68 : f32 to vector<16x128xf32>
    %509 = arith.addf %507, %508 : vector<16x128xf32>
    %c100 = arith.constant 100 : index
    %510 = memref.load %arg1[%c100] : memref<700xf32, #tpu.memory_space<smem>>
    %511 = vector.broadcast %510 : f32 to vector<16x128xf32>
    %512 = arith.mulf %446, %511 : vector<16x128xf32>
    %c10_69 = arith.constant 10 : index
    %513 = memref.load %arg2[%c10_69] : memref<70xf32, #tpu.memory_space<smem>>
    %514 = vector.broadcast %513 : f32 to vector<16x128xf32>
    %515 = arith.addf %512, %514 : vector<16x128xf32>
    %c101 = arith.constant 101 : index
    %516 = memref.load %arg1[%c101] : memref<700xf32, #tpu.memory_space<smem>>
    %517 = vector.broadcast %516 : f32 to vector<16x128xf32>
    %518 = arith.mulf %453, %517 : vector<16x128xf32>
    %519 = arith.addf %515, %518 : vector<16x128xf32>
    %c102 = arith.constant 102 : index
    %520 = memref.load %arg1[%c102] : memref<700xf32, #tpu.memory_space<smem>>
    %521 = vector.broadcast %520 : f32 to vector<16x128xf32>
    %522 = arith.mulf %460, %521 : vector<16x128xf32>
    %523 = arith.addf %519, %522 : vector<16x128xf32>
    %c103 = arith.constant 103 : index
    %524 = memref.load %arg1[%c103] : memref<700xf32, #tpu.memory_space<smem>>
    %525 = vector.broadcast %524 : f32 to vector<16x128xf32>
    %526 = arith.mulf %467, %525 : vector<16x128xf32>
    %527 = arith.addf %523, %526 : vector<16x128xf32>
    %c104 = arith.constant 104 : index
    %528 = memref.load %arg1[%c104] : memref<700xf32, #tpu.memory_space<smem>>
    %529 = vector.broadcast %528 : f32 to vector<16x128xf32>
    %530 = arith.mulf %474, %529 : vector<16x128xf32>
    %531 = arith.addf %527, %530 : vector<16x128xf32>
    %c105 = arith.constant 105 : index
    %532 = memref.load %arg1[%c105] : memref<700xf32, #tpu.memory_space<smem>>
    %533 = vector.broadcast %532 : f32 to vector<16x128xf32>
    %534 = arith.mulf %481, %533 : vector<16x128xf32>
    %535 = arith.addf %531, %534 : vector<16x128xf32>
    %c106 = arith.constant 106 : index
    %536 = memref.load %arg1[%c106] : memref<700xf32, #tpu.memory_space<smem>>
    %537 = vector.broadcast %536 : f32 to vector<16x128xf32>
    %538 = arith.mulf %488, %537 : vector<16x128xf32>
    %539 = arith.addf %535, %538 : vector<16x128xf32>
    %c107 = arith.constant 107 : index
    %540 = memref.load %arg1[%c107] : memref<700xf32, #tpu.memory_space<smem>>
    %541 = vector.broadcast %540 : f32 to vector<16x128xf32>
    %542 = arith.mulf %495, %541 : vector<16x128xf32>
    %543 = arith.addf %539, %542 : vector<16x128xf32>
    %c108 = arith.constant 108 : index
    %544 = memref.load %arg1[%c108] : memref<700xf32, #tpu.memory_space<smem>>
    %545 = vector.broadcast %544 : f32 to vector<16x128xf32>
    %546 = arith.mulf %502, %545 : vector<16x128xf32>
    %547 = arith.addf %543, %546 : vector<16x128xf32>
    %c109 = arith.constant 109 : index
    %548 = memref.load %arg1[%c109] : memref<700xf32, #tpu.memory_space<smem>>
    %549 = vector.broadcast %548 : f32 to vector<16x128xf32>
    %550 = arith.mulf %509, %549 : vector<16x128xf32>
    %551 = arith.addf %547, %550 : vector<16x128xf32>
    %c110 = arith.constant 110 : index
    %552 = memref.load %arg1[%c110] : memref<700xf32, #tpu.memory_space<smem>>
    %553 = vector.broadcast %552 : f32 to vector<16x128xf32>
    %554 = arith.mulf %446, %553 : vector<16x128xf32>
    %c11_70 = arith.constant 11 : index
    %555 = memref.load %arg2[%c11_70] : memref<70xf32, #tpu.memory_space<smem>>
    %556 = vector.broadcast %555 : f32 to vector<16x128xf32>
    %557 = arith.addf %554, %556 : vector<16x128xf32>
    %c111 = arith.constant 111 : index
    %558 = memref.load %arg1[%c111] : memref<700xf32, #tpu.memory_space<smem>>
    %559 = vector.broadcast %558 : f32 to vector<16x128xf32>
    %560 = arith.mulf %453, %559 : vector<16x128xf32>
    %561 = arith.addf %557, %560 : vector<16x128xf32>
    %c112 = arith.constant 112 : index
    %562 = memref.load %arg1[%c112] : memref<700xf32, #tpu.memory_space<smem>>
    %563 = vector.broadcast %562 : f32 to vector<16x128xf32>
    %564 = arith.mulf %460, %563 : vector<16x128xf32>
    %565 = arith.addf %561, %564 : vector<16x128xf32>
    %c113 = arith.constant 113 : index
    %566 = memref.load %arg1[%c113] : memref<700xf32, #tpu.memory_space<smem>>
    %567 = vector.broadcast %566 : f32 to vector<16x128xf32>
    %568 = arith.mulf %467, %567 : vector<16x128xf32>
    %569 = arith.addf %565, %568 : vector<16x128xf32>
    %c114 = arith.constant 114 : index
    %570 = memref.load %arg1[%c114] : memref<700xf32, #tpu.memory_space<smem>>
    %571 = vector.broadcast %570 : f32 to vector<16x128xf32>
    %572 = arith.mulf %474, %571 : vector<16x128xf32>
    %573 = arith.addf %569, %572 : vector<16x128xf32>
    %c115 = arith.constant 115 : index
    %574 = memref.load %arg1[%c115] : memref<700xf32, #tpu.memory_space<smem>>
    %575 = vector.broadcast %574 : f32 to vector<16x128xf32>
    %576 = arith.mulf %481, %575 : vector<16x128xf32>
    %577 = arith.addf %573, %576 : vector<16x128xf32>
    %c116 = arith.constant 116 : index
    %578 = memref.load %arg1[%c116] : memref<700xf32, #tpu.memory_space<smem>>
    %579 = vector.broadcast %578 : f32 to vector<16x128xf32>
    %580 = arith.mulf %488, %579 : vector<16x128xf32>
    %581 = arith.addf %577, %580 : vector<16x128xf32>
    %c117 = arith.constant 117 : index
    %582 = memref.load %arg1[%c117] : memref<700xf32, #tpu.memory_space<smem>>
    %583 = vector.broadcast %582 : f32 to vector<16x128xf32>
    %584 = arith.mulf %495, %583 : vector<16x128xf32>
    %585 = arith.addf %581, %584 : vector<16x128xf32>
    %c118 = arith.constant 118 : index
    %586 = memref.load %arg1[%c118] : memref<700xf32, #tpu.memory_space<smem>>
    %587 = vector.broadcast %586 : f32 to vector<16x128xf32>
    %588 = arith.mulf %502, %587 : vector<16x128xf32>
    %589 = arith.addf %585, %588 : vector<16x128xf32>
    %c119 = arith.constant 119 : index
    %590 = memref.load %arg1[%c119] : memref<700xf32, #tpu.memory_space<smem>>
    %591 = vector.broadcast %590 : f32 to vector<16x128xf32>
    %592 = arith.mulf %509, %591 : vector<16x128xf32>
    %593 = arith.addf %589, %592 : vector<16x128xf32>
    %c120 = arith.constant 120 : index
    %594 = memref.load %arg1[%c120] : memref<700xf32, #tpu.memory_space<smem>>
    %595 = vector.broadcast %594 : f32 to vector<16x128xf32>
    %596 = arith.mulf %446, %595 : vector<16x128xf32>
    %c12_71 = arith.constant 12 : index
    %597 = memref.load %arg2[%c12_71] : memref<70xf32, #tpu.memory_space<smem>>
    %598 = vector.broadcast %597 : f32 to vector<16x128xf32>
    %599 = arith.addf %596, %598 : vector<16x128xf32>
    %c121 = arith.constant 121 : index
    %600 = memref.load %arg1[%c121] : memref<700xf32, #tpu.memory_space<smem>>
    %601 = vector.broadcast %600 : f32 to vector<16x128xf32>
    %602 = arith.mulf %453, %601 : vector<16x128xf32>
    %603 = arith.addf %599, %602 : vector<16x128xf32>
    %c122 = arith.constant 122 : index
    %604 = memref.load %arg1[%c122] : memref<700xf32, #tpu.memory_space<smem>>
    %605 = vector.broadcast %604 : f32 to vector<16x128xf32>
    %606 = arith.mulf %460, %605 : vector<16x128xf32>
    %607 = arith.addf %603, %606 : vector<16x128xf32>
    %c123 = arith.constant 123 : index
    %608 = memref.load %arg1[%c123] : memref<700xf32, #tpu.memory_space<smem>>
    %609 = vector.broadcast %608 : f32 to vector<16x128xf32>
    %610 = arith.mulf %467, %609 : vector<16x128xf32>
    %611 = arith.addf %607, %610 : vector<16x128xf32>
    %c124 = arith.constant 124 : index
    %612 = memref.load %arg1[%c124] : memref<700xf32, #tpu.memory_space<smem>>
    %613 = vector.broadcast %612 : f32 to vector<16x128xf32>
    %614 = arith.mulf %474, %613 : vector<16x128xf32>
    %615 = arith.addf %611, %614 : vector<16x128xf32>
    %c125 = arith.constant 125 : index
    %616 = memref.load %arg1[%c125] : memref<700xf32, #tpu.memory_space<smem>>
    %617 = vector.broadcast %616 : f32 to vector<16x128xf32>
    %618 = arith.mulf %481, %617 : vector<16x128xf32>
    %619 = arith.addf %615, %618 : vector<16x128xf32>
    %c126 = arith.constant 126 : index
    %620 = memref.load %arg1[%c126] : memref<700xf32, #tpu.memory_space<smem>>
    %621 = vector.broadcast %620 : f32 to vector<16x128xf32>
    %622 = arith.mulf %488, %621 : vector<16x128xf32>
    %623 = arith.addf %619, %622 : vector<16x128xf32>
    %c127 = arith.constant 127 : index
    %624 = memref.load %arg1[%c127] : memref<700xf32, #tpu.memory_space<smem>>
    %625 = vector.broadcast %624 : f32 to vector<16x128xf32>
    %626 = arith.mulf %495, %625 : vector<16x128xf32>
    %627 = arith.addf %623, %626 : vector<16x128xf32>
    %c128 = arith.constant 128 : index
    %628 = memref.load %arg1[%c128] : memref<700xf32, #tpu.memory_space<smem>>
    %629 = vector.broadcast %628 : f32 to vector<16x128xf32>
    %630 = arith.mulf %502, %629 : vector<16x128xf32>
    %631 = arith.addf %627, %630 : vector<16x128xf32>
    %c129 = arith.constant 129 : index
    %632 = memref.load %arg1[%c129] : memref<700xf32, #tpu.memory_space<smem>>
    %633 = vector.broadcast %632 : f32 to vector<16x128xf32>
    %634 = arith.mulf %509, %633 : vector<16x128xf32>
    %635 = arith.addf %631, %634 : vector<16x128xf32>
    %c130 = arith.constant 130 : index
    %636 = memref.load %arg1[%c130] : memref<700xf32, #tpu.memory_space<smem>>
    %637 = vector.broadcast %636 : f32 to vector<16x128xf32>
    %638 = arith.mulf %446, %637 : vector<16x128xf32>
    %c13_72 = arith.constant 13 : index
    %639 = memref.load %arg2[%c13_72] : memref<70xf32, #tpu.memory_space<smem>>
    %640 = vector.broadcast %639 : f32 to vector<16x128xf32>
    %641 = arith.addf %638, %640 : vector<16x128xf32>
    %c131 = arith.constant 131 : index
    %642 = memref.load %arg1[%c131] : memref<700xf32, #tpu.memory_space<smem>>
    %643 = vector.broadcast %642 : f32 to vector<16x128xf32>
    %644 = arith.mulf %453, %643 : vector<16x128xf32>
    %645 = arith.addf %641, %644 : vector<16x128xf32>
    %c132 = arith.constant 132 : index
    %646 = memref.load %arg1[%c132] : memref<700xf32, #tpu.memory_space<smem>>
    %647 = vector.broadcast %646 : f32 to vector<16x128xf32>
    %648 = arith.mulf %460, %647 : vector<16x128xf32>
    %649 = arith.addf %645, %648 : vector<16x128xf32>
    %c133 = arith.constant 133 : index
    %650 = memref.load %arg1[%c133] : memref<700xf32, #tpu.memory_space<smem>>
    %651 = vector.broadcast %650 : f32 to vector<16x128xf32>
    %652 = arith.mulf %467, %651 : vector<16x128xf32>
    %653 = arith.addf %649, %652 : vector<16x128xf32>
    %c134 = arith.constant 134 : index
    %654 = memref.load %arg1[%c134] : memref<700xf32, #tpu.memory_space<smem>>
    %655 = vector.broadcast %654 : f32 to vector<16x128xf32>
    %656 = arith.mulf %474, %655 : vector<16x128xf32>
    %657 = arith.addf %653, %656 : vector<16x128xf32>
    %c135 = arith.constant 135 : index
    %658 = memref.load %arg1[%c135] : memref<700xf32, #tpu.memory_space<smem>>
    %659 = vector.broadcast %658 : f32 to vector<16x128xf32>
    %660 = arith.mulf %481, %659 : vector<16x128xf32>
    %661 = arith.addf %657, %660 : vector<16x128xf32>
    %c136 = arith.constant 136 : index
    %662 = memref.load %arg1[%c136] : memref<700xf32, #tpu.memory_space<smem>>
    %663 = vector.broadcast %662 : f32 to vector<16x128xf32>
    %664 = arith.mulf %488, %663 : vector<16x128xf32>
    %665 = arith.addf %661, %664 : vector<16x128xf32>
    %c137 = arith.constant 137 : index
    %666 = memref.load %arg1[%c137] : memref<700xf32, #tpu.memory_space<smem>>
    %667 = vector.broadcast %666 : f32 to vector<16x128xf32>
    %668 = arith.mulf %495, %667 : vector<16x128xf32>
    %669 = arith.addf %665, %668 : vector<16x128xf32>
    %c138 = arith.constant 138 : index
    %670 = memref.load %arg1[%c138] : memref<700xf32, #tpu.memory_space<smem>>
    %671 = vector.broadcast %670 : f32 to vector<16x128xf32>
    %672 = arith.mulf %502, %671 : vector<16x128xf32>
    %673 = arith.addf %669, %672 : vector<16x128xf32>
    %c139 = arith.constant 139 : index
    %674 = memref.load %arg1[%c139] : memref<700xf32, #tpu.memory_space<smem>>
    %675 = vector.broadcast %674 : f32 to vector<16x128xf32>
    %676 = arith.mulf %509, %675 : vector<16x128xf32>
    %677 = arith.addf %673, %676 : vector<16x128xf32>
    %c140 = arith.constant 140 : index
    %678 = memref.load %arg1[%c140] : memref<700xf32, #tpu.memory_space<smem>>
    %679 = vector.broadcast %678 : f32 to vector<16x128xf32>
    %680 = arith.mulf %446, %679 : vector<16x128xf32>
    %c14_73 = arith.constant 14 : index
    %681 = memref.load %arg2[%c14_73] : memref<70xf32, #tpu.memory_space<smem>>
    %682 = vector.broadcast %681 : f32 to vector<16x128xf32>
    %683 = arith.addf %680, %682 : vector<16x128xf32>
    %c141 = arith.constant 141 : index
    %684 = memref.load %arg1[%c141] : memref<700xf32, #tpu.memory_space<smem>>
    %685 = vector.broadcast %684 : f32 to vector<16x128xf32>
    %686 = arith.mulf %453, %685 : vector<16x128xf32>
    %687 = arith.addf %683, %686 : vector<16x128xf32>
    %c142 = arith.constant 142 : index
    %688 = memref.load %arg1[%c142] : memref<700xf32, #tpu.memory_space<smem>>
    %689 = vector.broadcast %688 : f32 to vector<16x128xf32>
    %690 = arith.mulf %460, %689 : vector<16x128xf32>
    %691 = arith.addf %687, %690 : vector<16x128xf32>
    %c143 = arith.constant 143 : index
    %692 = memref.load %arg1[%c143] : memref<700xf32, #tpu.memory_space<smem>>
    %693 = vector.broadcast %692 : f32 to vector<16x128xf32>
    %694 = arith.mulf %467, %693 : vector<16x128xf32>
    %695 = arith.addf %691, %694 : vector<16x128xf32>
    %c144 = arith.constant 144 : index
    %696 = memref.load %arg1[%c144] : memref<700xf32, #tpu.memory_space<smem>>
    %697 = vector.broadcast %696 : f32 to vector<16x128xf32>
    %698 = arith.mulf %474, %697 : vector<16x128xf32>
    %699 = arith.addf %695, %698 : vector<16x128xf32>
    %c145 = arith.constant 145 : index
    %700 = memref.load %arg1[%c145] : memref<700xf32, #tpu.memory_space<smem>>
    %701 = vector.broadcast %700 : f32 to vector<16x128xf32>
    %702 = arith.mulf %481, %701 : vector<16x128xf32>
    %703 = arith.addf %699, %702 : vector<16x128xf32>
    %c146 = arith.constant 146 : index
    %704 = memref.load %arg1[%c146] : memref<700xf32, #tpu.memory_space<smem>>
    %705 = vector.broadcast %704 : f32 to vector<16x128xf32>
    %706 = arith.mulf %488, %705 : vector<16x128xf32>
    %707 = arith.addf %703, %706 : vector<16x128xf32>
    %c147 = arith.constant 147 : index
    %708 = memref.load %arg1[%c147] : memref<700xf32, #tpu.memory_space<smem>>
    %709 = vector.broadcast %708 : f32 to vector<16x128xf32>
    %710 = arith.mulf %495, %709 : vector<16x128xf32>
    %711 = arith.addf %707, %710 : vector<16x128xf32>
    %c148 = arith.constant 148 : index
    %712 = memref.load %arg1[%c148] : memref<700xf32, #tpu.memory_space<smem>>
    %713 = vector.broadcast %712 : f32 to vector<16x128xf32>
    %714 = arith.mulf %502, %713 : vector<16x128xf32>
    %715 = arith.addf %711, %714 : vector<16x128xf32>
    %c149 = arith.constant 149 : index
    %716 = memref.load %arg1[%c149] : memref<700xf32, #tpu.memory_space<smem>>
    %717 = vector.broadcast %716 : f32 to vector<16x128xf32>
    %718 = arith.mulf %509, %717 : vector<16x128xf32>
    %719 = arith.addf %715, %718 : vector<16x128xf32>
    %c150 = arith.constant 150 : index
    %720 = memref.load %arg1[%c150] : memref<700xf32, #tpu.memory_space<smem>>
    %721 = vector.broadcast %720 : f32 to vector<16x128xf32>
    %722 = arith.mulf %446, %721 : vector<16x128xf32>
    %c15_74 = arith.constant 15 : index
    %723 = memref.load %arg2[%c15_74] : memref<70xf32, #tpu.memory_space<smem>>
    %724 = vector.broadcast %723 : f32 to vector<16x128xf32>
    %725 = arith.addf %722, %724 : vector<16x128xf32>
    %c151 = arith.constant 151 : index
    %726 = memref.load %arg1[%c151] : memref<700xf32, #tpu.memory_space<smem>>
    %727 = vector.broadcast %726 : f32 to vector<16x128xf32>
    %728 = arith.mulf %453, %727 : vector<16x128xf32>
    %729 = arith.addf %725, %728 : vector<16x128xf32>
    %c152 = arith.constant 152 : index
    %730 = memref.load %arg1[%c152] : memref<700xf32, #tpu.memory_space<smem>>
    %731 = vector.broadcast %730 : f32 to vector<16x128xf32>
    %732 = arith.mulf %460, %731 : vector<16x128xf32>
    %733 = arith.addf %729, %732 : vector<16x128xf32>
    %c153 = arith.constant 153 : index
    %734 = memref.load %arg1[%c153] : memref<700xf32, #tpu.memory_space<smem>>
    %735 = vector.broadcast %734 : f32 to vector<16x128xf32>
    %736 = arith.mulf %467, %735 : vector<16x128xf32>
    %737 = arith.addf %733, %736 : vector<16x128xf32>
    %c154 = arith.constant 154 : index
    %738 = memref.load %arg1[%c154] : memref<700xf32, #tpu.memory_space<smem>>
    %739 = vector.broadcast %738 : f32 to vector<16x128xf32>
    %740 = arith.mulf %474, %739 : vector<16x128xf32>
    %741 = arith.addf %737, %740 : vector<16x128xf32>
    %c155 = arith.constant 155 : index
    %742 = memref.load %arg1[%c155] : memref<700xf32, #tpu.memory_space<smem>>
    %743 = vector.broadcast %742 : f32 to vector<16x128xf32>
    %744 = arith.mulf %481, %743 : vector<16x128xf32>
    %745 = arith.addf %741, %744 : vector<16x128xf32>
    %c156 = arith.constant 156 : index
    %746 = memref.load %arg1[%c156] : memref<700xf32, #tpu.memory_space<smem>>
    %747 = vector.broadcast %746 : f32 to vector<16x128xf32>
    %748 = arith.mulf %488, %747 : vector<16x128xf32>
    %749 = arith.addf %745, %748 : vector<16x128xf32>
    %c157 = arith.constant 157 : index
    %750 = memref.load %arg1[%c157] : memref<700xf32, #tpu.memory_space<smem>>
    %751 = vector.broadcast %750 : f32 to vector<16x128xf32>
    %752 = arith.mulf %495, %751 : vector<16x128xf32>
    %753 = arith.addf %749, %752 : vector<16x128xf32>
    %c158 = arith.constant 158 : index
    %754 = memref.load %arg1[%c158] : memref<700xf32, #tpu.memory_space<smem>>
    %755 = vector.broadcast %754 : f32 to vector<16x128xf32>
    %756 = arith.mulf %502, %755 : vector<16x128xf32>
    %757 = arith.addf %753, %756 : vector<16x128xf32>
    %c159 = arith.constant 159 : index
    %758 = memref.load %arg1[%c159] : memref<700xf32, #tpu.memory_space<smem>>
    %759 = vector.broadcast %758 : f32 to vector<16x128xf32>
    %760 = arith.mulf %509, %759 : vector<16x128xf32>
    %761 = arith.addf %757, %760 : vector<16x128xf32>
    %c160 = arith.constant 160 : index
    %762 = memref.load %arg1[%c160] : memref<700xf32, #tpu.memory_space<smem>>
    %763 = vector.broadcast %762 : f32 to vector<16x128xf32>
    %764 = arith.mulf %446, %763 : vector<16x128xf32>
    %c16_75 = arith.constant 16 : index
    %765 = memref.load %arg2[%c16_75] : memref<70xf32, #tpu.memory_space<smem>>
    %766 = vector.broadcast %765 : f32 to vector<16x128xf32>
    %767 = arith.addf %764, %766 : vector<16x128xf32>
    %c161 = arith.constant 161 : index
    %768 = memref.load %arg1[%c161] : memref<700xf32, #tpu.memory_space<smem>>
    %769 = vector.broadcast %768 : f32 to vector<16x128xf32>
    %770 = arith.mulf %453, %769 : vector<16x128xf32>
    %771 = arith.addf %767, %770 : vector<16x128xf32>
    %c162 = arith.constant 162 : index
    %772 = memref.load %arg1[%c162] : memref<700xf32, #tpu.memory_space<smem>>
    %773 = vector.broadcast %772 : f32 to vector<16x128xf32>
    %774 = arith.mulf %460, %773 : vector<16x128xf32>
    %775 = arith.addf %771, %774 : vector<16x128xf32>
    %c163 = arith.constant 163 : index
    %776 = memref.load %arg1[%c163] : memref<700xf32, #tpu.memory_space<smem>>
    %777 = vector.broadcast %776 : f32 to vector<16x128xf32>
    %778 = arith.mulf %467, %777 : vector<16x128xf32>
    %779 = arith.addf %775, %778 : vector<16x128xf32>
    %c164 = arith.constant 164 : index
    %780 = memref.load %arg1[%c164] : memref<700xf32, #tpu.memory_space<smem>>
    %781 = vector.broadcast %780 : f32 to vector<16x128xf32>
    %782 = arith.mulf %474, %781 : vector<16x128xf32>
    %783 = arith.addf %779, %782 : vector<16x128xf32>
    %c165 = arith.constant 165 : index
    %784 = memref.load %arg1[%c165] : memref<700xf32, #tpu.memory_space<smem>>
    %785 = vector.broadcast %784 : f32 to vector<16x128xf32>
    %786 = arith.mulf %481, %785 : vector<16x128xf32>
    %787 = arith.addf %783, %786 : vector<16x128xf32>
    %c166 = arith.constant 166 : index
    %788 = memref.load %arg1[%c166] : memref<700xf32, #tpu.memory_space<smem>>
    %789 = vector.broadcast %788 : f32 to vector<16x128xf32>
    %790 = arith.mulf %488, %789 : vector<16x128xf32>
    %791 = arith.addf %787, %790 : vector<16x128xf32>
    %c167 = arith.constant 167 : index
    %792 = memref.load %arg1[%c167] : memref<700xf32, #tpu.memory_space<smem>>
    %793 = vector.broadcast %792 : f32 to vector<16x128xf32>
    %794 = arith.mulf %495, %793 : vector<16x128xf32>
    %795 = arith.addf %791, %794 : vector<16x128xf32>
    %c168 = arith.constant 168 : index
    %796 = memref.load %arg1[%c168] : memref<700xf32, #tpu.memory_space<smem>>
    %797 = vector.broadcast %796 : f32 to vector<16x128xf32>
    %798 = arith.mulf %502, %797 : vector<16x128xf32>
    %799 = arith.addf %795, %798 : vector<16x128xf32>
    %c169 = arith.constant 169 : index
    %800 = memref.load %arg1[%c169] : memref<700xf32, #tpu.memory_space<smem>>
    %801 = vector.broadcast %800 : f32 to vector<16x128xf32>
    %802 = arith.mulf %509, %801 : vector<16x128xf32>
    %803 = arith.addf %799, %802 : vector<16x128xf32>
    %c170 = arith.constant 170 : index
    %804 = memref.load %arg1[%c170] : memref<700xf32, #tpu.memory_space<smem>>
    %805 = vector.broadcast %804 : f32 to vector<16x128xf32>
    %806 = arith.mulf %446, %805 : vector<16x128xf32>
    %c17_76 = arith.constant 17 : index
    %807 = memref.load %arg2[%c17_76] : memref<70xf32, #tpu.memory_space<smem>>
    %808 = vector.broadcast %807 : f32 to vector<16x128xf32>
    %809 = arith.addf %806, %808 : vector<16x128xf32>
    %c171 = arith.constant 171 : index
    %810 = memref.load %arg1[%c171] : memref<700xf32, #tpu.memory_space<smem>>
    %811 = vector.broadcast %810 : f32 to vector<16x128xf32>
    %812 = arith.mulf %453, %811 : vector<16x128xf32>
    %813 = arith.addf %809, %812 : vector<16x128xf32>
    %c172 = arith.constant 172 : index
    %814 = memref.load %arg1[%c172] : memref<700xf32, #tpu.memory_space<smem>>
    %815 = vector.broadcast %814 : f32 to vector<16x128xf32>
    %816 = arith.mulf %460, %815 : vector<16x128xf32>
    %817 = arith.addf %813, %816 : vector<16x128xf32>
    %c173 = arith.constant 173 : index
    %818 = memref.load %arg1[%c173] : memref<700xf32, #tpu.memory_space<smem>>
    %819 = vector.broadcast %818 : f32 to vector<16x128xf32>
    %820 = arith.mulf %467, %819 : vector<16x128xf32>
    %821 = arith.addf %817, %820 : vector<16x128xf32>
    %c174 = arith.constant 174 : index
    %822 = memref.load %arg1[%c174] : memref<700xf32, #tpu.memory_space<smem>>
    %823 = vector.broadcast %822 : f32 to vector<16x128xf32>
    %824 = arith.mulf %474, %823 : vector<16x128xf32>
    %825 = arith.addf %821, %824 : vector<16x128xf32>
    %c175 = arith.constant 175 : index
    %826 = memref.load %arg1[%c175] : memref<700xf32, #tpu.memory_space<smem>>
    %827 = vector.broadcast %826 : f32 to vector<16x128xf32>
    %828 = arith.mulf %481, %827 : vector<16x128xf32>
    %829 = arith.addf %825, %828 : vector<16x128xf32>
    %c176 = arith.constant 176 : index
    %830 = memref.load %arg1[%c176] : memref<700xf32, #tpu.memory_space<smem>>
    %831 = vector.broadcast %830 : f32 to vector<16x128xf32>
    %832 = arith.mulf %488, %831 : vector<16x128xf32>
    %833 = arith.addf %829, %832 : vector<16x128xf32>
    %c177 = arith.constant 177 : index
    %834 = memref.load %arg1[%c177] : memref<700xf32, #tpu.memory_space<smem>>
    %835 = vector.broadcast %834 : f32 to vector<16x128xf32>
    %836 = arith.mulf %495, %835 : vector<16x128xf32>
    %837 = arith.addf %833, %836 : vector<16x128xf32>
    %c178 = arith.constant 178 : index
    %838 = memref.load %arg1[%c178] : memref<700xf32, #tpu.memory_space<smem>>
    %839 = vector.broadcast %838 : f32 to vector<16x128xf32>
    %840 = arith.mulf %502, %839 : vector<16x128xf32>
    %841 = arith.addf %837, %840 : vector<16x128xf32>
    %c179 = arith.constant 179 : index
    %842 = memref.load %arg1[%c179] : memref<700xf32, #tpu.memory_space<smem>>
    %843 = vector.broadcast %842 : f32 to vector<16x128xf32>
    %844 = arith.mulf %509, %843 : vector<16x128xf32>
    %845 = arith.addf %841, %844 : vector<16x128xf32>
    %c180 = arith.constant 180 : index
    %846 = memref.load %arg1[%c180] : memref<700xf32, #tpu.memory_space<smem>>
    %847 = vector.broadcast %846 : f32 to vector<16x128xf32>
    %848 = arith.mulf %446, %847 : vector<16x128xf32>
    %c18_77 = arith.constant 18 : index
    %849 = memref.load %arg2[%c18_77] : memref<70xf32, #tpu.memory_space<smem>>
    %850 = vector.broadcast %849 : f32 to vector<16x128xf32>
    %851 = arith.addf %848, %850 : vector<16x128xf32>
    %c181 = arith.constant 181 : index
    %852 = memref.load %arg1[%c181] : memref<700xf32, #tpu.memory_space<smem>>
    %853 = vector.broadcast %852 : f32 to vector<16x128xf32>
    %854 = arith.mulf %453, %853 : vector<16x128xf32>
    %855 = arith.addf %851, %854 : vector<16x128xf32>
    %c182 = arith.constant 182 : index
    %856 = memref.load %arg1[%c182] : memref<700xf32, #tpu.memory_space<smem>>
    %857 = vector.broadcast %856 : f32 to vector<16x128xf32>
    %858 = arith.mulf %460, %857 : vector<16x128xf32>
    %859 = arith.addf %855, %858 : vector<16x128xf32>
    %c183 = arith.constant 183 : index
    %860 = memref.load %arg1[%c183] : memref<700xf32, #tpu.memory_space<smem>>
    %861 = vector.broadcast %860 : f32 to vector<16x128xf32>
    %862 = arith.mulf %467, %861 : vector<16x128xf32>
    %863 = arith.addf %859, %862 : vector<16x128xf32>
    %c184 = arith.constant 184 : index
    %864 = memref.load %arg1[%c184] : memref<700xf32, #tpu.memory_space<smem>>
    %865 = vector.broadcast %864 : f32 to vector<16x128xf32>
    %866 = arith.mulf %474, %865 : vector<16x128xf32>
    %867 = arith.addf %863, %866 : vector<16x128xf32>
    %c185 = arith.constant 185 : index
    %868 = memref.load %arg1[%c185] : memref<700xf32, #tpu.memory_space<smem>>
    %869 = vector.broadcast %868 : f32 to vector<16x128xf32>
    %870 = arith.mulf %481, %869 : vector<16x128xf32>
    %871 = arith.addf %867, %870 : vector<16x128xf32>
    %c186 = arith.constant 186 : index
    %872 = memref.load %arg1[%c186] : memref<700xf32, #tpu.memory_space<smem>>
    %873 = vector.broadcast %872 : f32 to vector<16x128xf32>
    %874 = arith.mulf %488, %873 : vector<16x128xf32>
    %875 = arith.addf %871, %874 : vector<16x128xf32>
    %c187 = arith.constant 187 : index
    %876 = memref.load %arg1[%c187] : memref<700xf32, #tpu.memory_space<smem>>
    %877 = vector.broadcast %876 : f32 to vector<16x128xf32>
    %878 = arith.mulf %495, %877 : vector<16x128xf32>
    %879 = arith.addf %875, %878 : vector<16x128xf32>
    %c188 = arith.constant 188 : index
    %880 = memref.load %arg1[%c188] : memref<700xf32, #tpu.memory_space<smem>>
    %881 = vector.broadcast %880 : f32 to vector<16x128xf32>
    %882 = arith.mulf %502, %881 : vector<16x128xf32>
    %883 = arith.addf %879, %882 : vector<16x128xf32>
    %c189 = arith.constant 189 : index
    %884 = memref.load %arg1[%c189] : memref<700xf32, #tpu.memory_space<smem>>
    %885 = vector.broadcast %884 : f32 to vector<16x128xf32>
    %886 = arith.mulf %509, %885 : vector<16x128xf32>
    %887 = arith.addf %883, %886 : vector<16x128xf32>
    %c190 = arith.constant 190 : index
    %888 = memref.load %arg1[%c190] : memref<700xf32, #tpu.memory_space<smem>>
    %889 = vector.broadcast %888 : f32 to vector<16x128xf32>
    %890 = arith.mulf %446, %889 : vector<16x128xf32>
    %c19_78 = arith.constant 19 : index
    %891 = memref.load %arg2[%c19_78] : memref<70xf32, #tpu.memory_space<smem>>
    %892 = vector.broadcast %891 : f32 to vector<16x128xf32>
    %893 = arith.addf %890, %892 : vector<16x128xf32>
    %c191 = arith.constant 191 : index
    %894 = memref.load %arg1[%c191] : memref<700xf32, #tpu.memory_space<smem>>
    %895 = vector.broadcast %894 : f32 to vector<16x128xf32>
    %896 = arith.mulf %453, %895 : vector<16x128xf32>
    %897 = arith.addf %893, %896 : vector<16x128xf32>
    %c192 = arith.constant 192 : index
    %898 = memref.load %arg1[%c192] : memref<700xf32, #tpu.memory_space<smem>>
    %899 = vector.broadcast %898 : f32 to vector<16x128xf32>
    %900 = arith.mulf %460, %899 : vector<16x128xf32>
    %901 = arith.addf %897, %900 : vector<16x128xf32>
    %c193 = arith.constant 193 : index
    %902 = memref.load %arg1[%c193] : memref<700xf32, #tpu.memory_space<smem>>
    %903 = vector.broadcast %902 : f32 to vector<16x128xf32>
    %904 = arith.mulf %467, %903 : vector<16x128xf32>
    %905 = arith.addf %901, %904 : vector<16x128xf32>
    %c194 = arith.constant 194 : index
    %906 = memref.load %arg1[%c194] : memref<700xf32, #tpu.memory_space<smem>>
    %907 = vector.broadcast %906 : f32 to vector<16x128xf32>
    %908 = arith.mulf %474, %907 : vector<16x128xf32>
    %909 = arith.addf %905, %908 : vector<16x128xf32>
    %c195 = arith.constant 195 : index
    %910 = memref.load %arg1[%c195] : memref<700xf32, #tpu.memory_space<smem>>
    %911 = vector.broadcast %910 : f32 to vector<16x128xf32>
    %912 = arith.mulf %481, %911 : vector<16x128xf32>
    %913 = arith.addf %909, %912 : vector<16x128xf32>
    %c196 = arith.constant 196 : index
    %914 = memref.load %arg1[%c196] : memref<700xf32, #tpu.memory_space<smem>>
    %915 = vector.broadcast %914 : f32 to vector<16x128xf32>
    %916 = arith.mulf %488, %915 : vector<16x128xf32>
    %917 = arith.addf %913, %916 : vector<16x128xf32>
    %c197 = arith.constant 197 : index
    %918 = memref.load %arg1[%c197] : memref<700xf32, #tpu.memory_space<smem>>
    %919 = vector.broadcast %918 : f32 to vector<16x128xf32>
    %920 = arith.mulf %495, %919 : vector<16x128xf32>
    %921 = arith.addf %917, %920 : vector<16x128xf32>
    %c198 = arith.constant 198 : index
    %922 = memref.load %arg1[%c198] : memref<700xf32, #tpu.memory_space<smem>>
    %923 = vector.broadcast %922 : f32 to vector<16x128xf32>
    %924 = arith.mulf %502, %923 : vector<16x128xf32>
    %925 = arith.addf %921, %924 : vector<16x128xf32>
    %c199 = arith.constant 199 : index
    %926 = memref.load %arg1[%c199] : memref<700xf32, #tpu.memory_space<smem>>
    %927 = vector.broadcast %926 : f32 to vector<16x128xf32>
    %928 = arith.mulf %509, %927 : vector<16x128xf32>
    %929 = arith.addf %925, %928 : vector<16x128xf32>
    %cst_79 = arith.constant 5.000000e-01 : f32
    %930 = vector.broadcast %cst_79 : f32 to vector<16x128xf32>
    %931 = arith.mulf %930, %551 : vector<16x128xf32>
    %932 = math.tanh %931 : vector<16x128xf32>
    %cst_80 = arith.constant 5.000000e-01 : f32
    %933 = vector.broadcast %cst_80 : f32 to vector<16x128xf32>
    %934 = arith.mulf %933, %932 : vector<16x128xf32>
    %cst_81 = arith.constant 5.000000e-01 : f32
    %935 = vector.broadcast %cst_81 : f32 to vector<16x128xf32>
    %936 = arith.addf %934, %935 : vector<16x128xf32>
    %cst_82 = arith.constant 5.000000e-01 : f32
    %937 = vector.broadcast %cst_82 : f32 to vector<16x128xf32>
    %938 = arith.mulf %937, %593 : vector<16x128xf32>
    %939 = math.tanh %938 : vector<16x128xf32>
    %cst_83 = arith.constant 5.000000e-01 : f32
    %940 = vector.broadcast %cst_83 : f32 to vector<16x128xf32>
    %941 = arith.mulf %940, %939 : vector<16x128xf32>
    %cst_84 = arith.constant 5.000000e-01 : f32
    %942 = vector.broadcast %cst_84 : f32 to vector<16x128xf32>
    %943 = arith.addf %941, %942 : vector<16x128xf32>
    %cst_85 = arith.constant 5.000000e-01 : f32
    %944 = vector.broadcast %cst_85 : f32 to vector<16x128xf32>
    %945 = arith.mulf %944, %635 : vector<16x128xf32>
    %946 = math.tanh %945 : vector<16x128xf32>
    %cst_86 = arith.constant 5.000000e-01 : f32
    %947 = vector.broadcast %cst_86 : f32 to vector<16x128xf32>
    %948 = arith.mulf %947, %946 : vector<16x128xf32>
    %cst_87 = arith.constant 5.000000e-01 : f32
    %949 = vector.broadcast %cst_87 : f32 to vector<16x128xf32>
    %950 = arith.addf %948, %949 : vector<16x128xf32>
    %cst_88 = arith.constant 5.000000e-01 : f32
    %951 = vector.broadcast %cst_88 : f32 to vector<16x128xf32>
    %952 = arith.mulf %951, %677 : vector<16x128xf32>
    %953 = math.tanh %952 : vector<16x128xf32>
    %cst_89 = arith.constant 5.000000e-01 : f32
    %954 = vector.broadcast %cst_89 : f32 to vector<16x128xf32>
    %955 = arith.mulf %954, %953 : vector<16x128xf32>
    %cst_90 = arith.constant 5.000000e-01 : f32
    %956 = vector.broadcast %cst_90 : f32 to vector<16x128xf32>
    %957 = arith.addf %955, %956 : vector<16x128xf32>
    %cst_91 = arith.constant 5.000000e-01 : f32
    %958 = vector.broadcast %cst_91 : f32 to vector<16x128xf32>
    %959 = arith.mulf %958, %719 : vector<16x128xf32>
    %960 = math.tanh %959 : vector<16x128xf32>
    %cst_92 = arith.constant 5.000000e-01 : f32
    %961 = vector.broadcast %cst_92 : f32 to vector<16x128xf32>
    %962 = arith.mulf %961, %960 : vector<16x128xf32>
    %cst_93 = arith.constant 5.000000e-01 : f32
    %963 = vector.broadcast %cst_93 : f32 to vector<16x128xf32>
    %964 = arith.addf %962, %963 : vector<16x128xf32>
    %cst_94 = arith.constant 5.000000e-01 : f32
    %965 = vector.broadcast %cst_94 : f32 to vector<16x128xf32>
    %966 = arith.mulf %965, %761 : vector<16x128xf32>
    %967 = math.tanh %966 : vector<16x128xf32>
    %cst_95 = arith.constant 5.000000e-01 : f32
    %968 = vector.broadcast %cst_95 : f32 to vector<16x128xf32>
    %969 = arith.mulf %968, %967 : vector<16x128xf32>
    %cst_96 = arith.constant 5.000000e-01 : f32
    %970 = vector.broadcast %cst_96 : f32 to vector<16x128xf32>
    %971 = arith.addf %969, %970 : vector<16x128xf32>
    %cst_97 = arith.constant 5.000000e-01 : f32
    %972 = vector.broadcast %cst_97 : f32 to vector<16x128xf32>
    %973 = arith.mulf %972, %803 : vector<16x128xf32>
    %974 = math.tanh %973 : vector<16x128xf32>
    %cst_98 = arith.constant 5.000000e-01 : f32
    %975 = vector.broadcast %cst_98 : f32 to vector<16x128xf32>
    %976 = arith.mulf %975, %974 : vector<16x128xf32>
    %cst_99 = arith.constant 5.000000e-01 : f32
    %977 = vector.broadcast %cst_99 : f32 to vector<16x128xf32>
    %978 = arith.addf %976, %977 : vector<16x128xf32>
    %cst_100 = arith.constant 5.000000e-01 : f32
    %979 = vector.broadcast %cst_100 : f32 to vector<16x128xf32>
    %980 = arith.mulf %979, %845 : vector<16x128xf32>
    %981 = math.tanh %980 : vector<16x128xf32>
    %cst_101 = arith.constant 5.000000e-01 : f32
    %982 = vector.broadcast %cst_101 : f32 to vector<16x128xf32>
    %983 = arith.mulf %982, %981 : vector<16x128xf32>
    %cst_102 = arith.constant 5.000000e-01 : f32
    %984 = vector.broadcast %cst_102 : f32 to vector<16x128xf32>
    %985 = arith.addf %983, %984 : vector<16x128xf32>
    %cst_103 = arith.constant 5.000000e-01 : f32
    %986 = vector.broadcast %cst_103 : f32 to vector<16x128xf32>
    %987 = arith.mulf %986, %887 : vector<16x128xf32>
    %988 = math.tanh %987 : vector<16x128xf32>
    %cst_104 = arith.constant 5.000000e-01 : f32
    %989 = vector.broadcast %cst_104 : f32 to vector<16x128xf32>
    %990 = arith.mulf %989, %988 : vector<16x128xf32>
    %cst_105 = arith.constant 5.000000e-01 : f32
    %991 = vector.broadcast %cst_105 : f32 to vector<16x128xf32>
    %992 = arith.addf %990, %991 : vector<16x128xf32>
    %cst_106 = arith.constant 5.000000e-01 : f32
    %993 = vector.broadcast %cst_106 : f32 to vector<16x128xf32>
    %994 = arith.mulf %993, %929 : vector<16x128xf32>
    %995 = math.tanh %994 : vector<16x128xf32>
    %cst_107 = arith.constant 5.000000e-01 : f32
    %996 = vector.broadcast %cst_107 : f32 to vector<16x128xf32>
    %997 = arith.mulf %996, %995 : vector<16x128xf32>
    %cst_108 = arith.constant 5.000000e-01 : f32
    %998 = vector.broadcast %cst_108 : f32 to vector<16x128xf32>
    %999 = arith.addf %997, %998 : vector<16x128xf32>
    %c200 = arith.constant 200 : index
    %1000 = memref.load %arg1[%c200] : memref<700xf32, #tpu.memory_space<smem>>
    %1001 = vector.broadcast %1000 : f32 to vector<16x128xf32>
    %1002 = arith.mulf %936, %1001 : vector<16x128xf32>
    %c20_109 = arith.constant 20 : index
    %1003 = memref.load %arg2[%c20_109] : memref<70xf32, #tpu.memory_space<smem>>
    %1004 = vector.broadcast %1003 : f32 to vector<16x128xf32>
    %1005 = arith.addf %1002, %1004 : vector<16x128xf32>
    %c201 = arith.constant 201 : index
    %1006 = memref.load %arg1[%c201] : memref<700xf32, #tpu.memory_space<smem>>
    %1007 = vector.broadcast %1006 : f32 to vector<16x128xf32>
    %1008 = arith.mulf %943, %1007 : vector<16x128xf32>
    %1009 = arith.addf %1005, %1008 : vector<16x128xf32>
    %c202 = arith.constant 202 : index
    %1010 = memref.load %arg1[%c202] : memref<700xf32, #tpu.memory_space<smem>>
    %1011 = vector.broadcast %1010 : f32 to vector<16x128xf32>
    %1012 = arith.mulf %950, %1011 : vector<16x128xf32>
    %1013 = arith.addf %1009, %1012 : vector<16x128xf32>
    %c203 = arith.constant 203 : index
    %1014 = memref.load %arg1[%c203] : memref<700xf32, #tpu.memory_space<smem>>
    %1015 = vector.broadcast %1014 : f32 to vector<16x128xf32>
    %1016 = arith.mulf %957, %1015 : vector<16x128xf32>
    %1017 = arith.addf %1013, %1016 : vector<16x128xf32>
    %c204 = arith.constant 204 : index
    %1018 = memref.load %arg1[%c204] : memref<700xf32, #tpu.memory_space<smem>>
    %1019 = vector.broadcast %1018 : f32 to vector<16x128xf32>
    %1020 = arith.mulf %964, %1019 : vector<16x128xf32>
    %1021 = arith.addf %1017, %1020 : vector<16x128xf32>
    %c205 = arith.constant 205 : index
    %1022 = memref.load %arg1[%c205] : memref<700xf32, #tpu.memory_space<smem>>
    %1023 = vector.broadcast %1022 : f32 to vector<16x128xf32>
    %1024 = arith.mulf %971, %1023 : vector<16x128xf32>
    %1025 = arith.addf %1021, %1024 : vector<16x128xf32>
    %c206 = arith.constant 206 : index
    %1026 = memref.load %arg1[%c206] : memref<700xf32, #tpu.memory_space<smem>>
    %1027 = vector.broadcast %1026 : f32 to vector<16x128xf32>
    %1028 = arith.mulf %978, %1027 : vector<16x128xf32>
    %1029 = arith.addf %1025, %1028 : vector<16x128xf32>
    %c207 = arith.constant 207 : index
    %1030 = memref.load %arg1[%c207] : memref<700xf32, #tpu.memory_space<smem>>
    %1031 = vector.broadcast %1030 : f32 to vector<16x128xf32>
    %1032 = arith.mulf %985, %1031 : vector<16x128xf32>
    %1033 = arith.addf %1029, %1032 : vector<16x128xf32>
    %c208 = arith.constant 208 : index
    %1034 = memref.load %arg1[%c208] : memref<700xf32, #tpu.memory_space<smem>>
    %1035 = vector.broadcast %1034 : f32 to vector<16x128xf32>
    %1036 = arith.mulf %992, %1035 : vector<16x128xf32>
    %1037 = arith.addf %1033, %1036 : vector<16x128xf32>
    %c209 = arith.constant 209 : index
    %1038 = memref.load %arg1[%c209] : memref<700xf32, #tpu.memory_space<smem>>
    %1039 = vector.broadcast %1038 : f32 to vector<16x128xf32>
    %1040 = arith.mulf %999, %1039 : vector<16x128xf32>
    %1041 = arith.addf %1037, %1040 : vector<16x128xf32>
    %c210 = arith.constant 210 : index
    %1042 = memref.load %arg1[%c210] : memref<700xf32, #tpu.memory_space<smem>>
    %1043 = vector.broadcast %1042 : f32 to vector<16x128xf32>
    %1044 = arith.mulf %936, %1043 : vector<16x128xf32>
    %c21_110 = arith.constant 21 : index
    %1045 = memref.load %arg2[%c21_110] : memref<70xf32, #tpu.memory_space<smem>>
    %1046 = vector.broadcast %1045 : f32 to vector<16x128xf32>
    %1047 = arith.addf %1044, %1046 : vector<16x128xf32>
    %c211 = arith.constant 211 : index
    %1048 = memref.load %arg1[%c211] : memref<700xf32, #tpu.memory_space<smem>>
    %1049 = vector.broadcast %1048 : f32 to vector<16x128xf32>
    %1050 = arith.mulf %943, %1049 : vector<16x128xf32>
    %1051 = arith.addf %1047, %1050 : vector<16x128xf32>
    %c212 = arith.constant 212 : index
    %1052 = memref.load %arg1[%c212] : memref<700xf32, #tpu.memory_space<smem>>
    %1053 = vector.broadcast %1052 : f32 to vector<16x128xf32>
    %1054 = arith.mulf %950, %1053 : vector<16x128xf32>
    %1055 = arith.addf %1051, %1054 : vector<16x128xf32>
    %c213 = arith.constant 213 : index
    %1056 = memref.load %arg1[%c213] : memref<700xf32, #tpu.memory_space<smem>>
    %1057 = vector.broadcast %1056 : f32 to vector<16x128xf32>
    %1058 = arith.mulf %957, %1057 : vector<16x128xf32>
    %1059 = arith.addf %1055, %1058 : vector<16x128xf32>
    %c214 = arith.constant 214 : index
    %1060 = memref.load %arg1[%c214] : memref<700xf32, #tpu.memory_space<smem>>
    %1061 = vector.broadcast %1060 : f32 to vector<16x128xf32>
    %1062 = arith.mulf %964, %1061 : vector<16x128xf32>
    %1063 = arith.addf %1059, %1062 : vector<16x128xf32>
    %c215 = arith.constant 215 : index
    %1064 = memref.load %arg1[%c215] : memref<700xf32, #tpu.memory_space<smem>>
    %1065 = vector.broadcast %1064 : f32 to vector<16x128xf32>
    %1066 = arith.mulf %971, %1065 : vector<16x128xf32>
    %1067 = arith.addf %1063, %1066 : vector<16x128xf32>
    %c216 = arith.constant 216 : index
    %1068 = memref.load %arg1[%c216] : memref<700xf32, #tpu.memory_space<smem>>
    %1069 = vector.broadcast %1068 : f32 to vector<16x128xf32>
    %1070 = arith.mulf %978, %1069 : vector<16x128xf32>
    %1071 = arith.addf %1067, %1070 : vector<16x128xf32>
    %c217 = arith.constant 217 : index
    %1072 = memref.load %arg1[%c217] : memref<700xf32, #tpu.memory_space<smem>>
    %1073 = vector.broadcast %1072 : f32 to vector<16x128xf32>
    %1074 = arith.mulf %985, %1073 : vector<16x128xf32>
    %1075 = arith.addf %1071, %1074 : vector<16x128xf32>
    %c218 = arith.constant 218 : index
    %1076 = memref.load %arg1[%c218] : memref<700xf32, #tpu.memory_space<smem>>
    %1077 = vector.broadcast %1076 : f32 to vector<16x128xf32>
    %1078 = arith.mulf %992, %1077 : vector<16x128xf32>
    %1079 = arith.addf %1075, %1078 : vector<16x128xf32>
    %c219 = arith.constant 219 : index
    %1080 = memref.load %arg1[%c219] : memref<700xf32, #tpu.memory_space<smem>>
    %1081 = vector.broadcast %1080 : f32 to vector<16x128xf32>
    %1082 = arith.mulf %999, %1081 : vector<16x128xf32>
    %1083 = arith.addf %1079, %1082 : vector<16x128xf32>
    %c220 = arith.constant 220 : index
    %1084 = memref.load %arg1[%c220] : memref<700xf32, #tpu.memory_space<smem>>
    %1085 = vector.broadcast %1084 : f32 to vector<16x128xf32>
    %1086 = arith.mulf %936, %1085 : vector<16x128xf32>
    %c22_111 = arith.constant 22 : index
    %1087 = memref.load %arg2[%c22_111] : memref<70xf32, #tpu.memory_space<smem>>
    %1088 = vector.broadcast %1087 : f32 to vector<16x128xf32>
    %1089 = arith.addf %1086, %1088 : vector<16x128xf32>
    %c221 = arith.constant 221 : index
    %1090 = memref.load %arg1[%c221] : memref<700xf32, #tpu.memory_space<smem>>
    %1091 = vector.broadcast %1090 : f32 to vector<16x128xf32>
    %1092 = arith.mulf %943, %1091 : vector<16x128xf32>
    %1093 = arith.addf %1089, %1092 : vector<16x128xf32>
    %c222 = arith.constant 222 : index
    %1094 = memref.load %arg1[%c222] : memref<700xf32, #tpu.memory_space<smem>>
    %1095 = vector.broadcast %1094 : f32 to vector<16x128xf32>
    %1096 = arith.mulf %950, %1095 : vector<16x128xf32>
    %1097 = arith.addf %1093, %1096 : vector<16x128xf32>
    %c223 = arith.constant 223 : index
    %1098 = memref.load %arg1[%c223] : memref<700xf32, #tpu.memory_space<smem>>
    %1099 = vector.broadcast %1098 : f32 to vector<16x128xf32>
    %1100 = arith.mulf %957, %1099 : vector<16x128xf32>
    %1101 = arith.addf %1097, %1100 : vector<16x128xf32>
    %c224 = arith.constant 224 : index
    %1102 = memref.load %arg1[%c224] : memref<700xf32, #tpu.memory_space<smem>>
    %1103 = vector.broadcast %1102 : f32 to vector<16x128xf32>
    %1104 = arith.mulf %964, %1103 : vector<16x128xf32>
    %1105 = arith.addf %1101, %1104 : vector<16x128xf32>
    %c225 = arith.constant 225 : index
    %1106 = memref.load %arg1[%c225] : memref<700xf32, #tpu.memory_space<smem>>
    %1107 = vector.broadcast %1106 : f32 to vector<16x128xf32>
    %1108 = arith.mulf %971, %1107 : vector<16x128xf32>
    %1109 = arith.addf %1105, %1108 : vector<16x128xf32>
    %c226 = arith.constant 226 : index
    %1110 = memref.load %arg1[%c226] : memref<700xf32, #tpu.memory_space<smem>>
    %1111 = vector.broadcast %1110 : f32 to vector<16x128xf32>
    %1112 = arith.mulf %978, %1111 : vector<16x128xf32>
    %1113 = arith.addf %1109, %1112 : vector<16x128xf32>
    %c227 = arith.constant 227 : index
    %1114 = memref.load %arg1[%c227] : memref<700xf32, #tpu.memory_space<smem>>
    %1115 = vector.broadcast %1114 : f32 to vector<16x128xf32>
    %1116 = arith.mulf %985, %1115 : vector<16x128xf32>
    %1117 = arith.addf %1113, %1116 : vector<16x128xf32>
    %c228 = arith.constant 228 : index
    %1118 = memref.load %arg1[%c228] : memref<700xf32, #tpu.memory_space<smem>>
    %1119 = vector.broadcast %1118 : f32 to vector<16x128xf32>
    %1120 = arith.mulf %992, %1119 : vector<16x128xf32>
    %1121 = arith.addf %1117, %1120 : vector<16x128xf32>
    %c229 = arith.constant 229 : index
    %1122 = memref.load %arg1[%c229] : memref<700xf32, #tpu.memory_space<smem>>
    %1123 = vector.broadcast %1122 : f32 to vector<16x128xf32>
    %1124 = arith.mulf %999, %1123 : vector<16x128xf32>
    %1125 = arith.addf %1121, %1124 : vector<16x128xf32>
    %c230 = arith.constant 230 : index
    %1126 = memref.load %arg1[%c230] : memref<700xf32, #tpu.memory_space<smem>>
    %1127 = vector.broadcast %1126 : f32 to vector<16x128xf32>
    %1128 = arith.mulf %936, %1127 : vector<16x128xf32>
    %c23_112 = arith.constant 23 : index
    %1129 = memref.load %arg2[%c23_112] : memref<70xf32, #tpu.memory_space<smem>>
    %1130 = vector.broadcast %1129 : f32 to vector<16x128xf32>
    %1131 = arith.addf %1128, %1130 : vector<16x128xf32>
    %c231 = arith.constant 231 : index
    %1132 = memref.load %arg1[%c231] : memref<700xf32, #tpu.memory_space<smem>>
    %1133 = vector.broadcast %1132 : f32 to vector<16x128xf32>
    %1134 = arith.mulf %943, %1133 : vector<16x128xf32>
    %1135 = arith.addf %1131, %1134 : vector<16x128xf32>
    %c232 = arith.constant 232 : index
    %1136 = memref.load %arg1[%c232] : memref<700xf32, #tpu.memory_space<smem>>
    %1137 = vector.broadcast %1136 : f32 to vector<16x128xf32>
    %1138 = arith.mulf %950, %1137 : vector<16x128xf32>
    %1139 = arith.addf %1135, %1138 : vector<16x128xf32>
    %c233 = arith.constant 233 : index
    %1140 = memref.load %arg1[%c233] : memref<700xf32, #tpu.memory_space<smem>>
    %1141 = vector.broadcast %1140 : f32 to vector<16x128xf32>
    %1142 = arith.mulf %957, %1141 : vector<16x128xf32>
    %1143 = arith.addf %1139, %1142 : vector<16x128xf32>
    %c234 = arith.constant 234 : index
    %1144 = memref.load %arg1[%c234] : memref<700xf32, #tpu.memory_space<smem>>
    %1145 = vector.broadcast %1144 : f32 to vector<16x128xf32>
    %1146 = arith.mulf %964, %1145 : vector<16x128xf32>
    %1147 = arith.addf %1143, %1146 : vector<16x128xf32>
    %c235 = arith.constant 235 : index
    %1148 = memref.load %arg1[%c235] : memref<700xf32, #tpu.memory_space<smem>>
    %1149 = vector.broadcast %1148 : f32 to vector<16x128xf32>
    %1150 = arith.mulf %971, %1149 : vector<16x128xf32>
    %1151 = arith.addf %1147, %1150 : vector<16x128xf32>
    %c236 = arith.constant 236 : index
    %1152 = memref.load %arg1[%c236] : memref<700xf32, #tpu.memory_space<smem>>
    %1153 = vector.broadcast %1152 : f32 to vector<16x128xf32>
    %1154 = arith.mulf %978, %1153 : vector<16x128xf32>
    %1155 = arith.addf %1151, %1154 : vector<16x128xf32>
    %c237 = arith.constant 237 : index
    %1156 = memref.load %arg1[%c237] : memref<700xf32, #tpu.memory_space<smem>>
    %1157 = vector.broadcast %1156 : f32 to vector<16x128xf32>
    %1158 = arith.mulf %985, %1157 : vector<16x128xf32>
    %1159 = arith.addf %1155, %1158 : vector<16x128xf32>
    %c238 = arith.constant 238 : index
    %1160 = memref.load %arg1[%c238] : memref<700xf32, #tpu.memory_space<smem>>
    %1161 = vector.broadcast %1160 : f32 to vector<16x128xf32>
    %1162 = arith.mulf %992, %1161 : vector<16x128xf32>
    %1163 = arith.addf %1159, %1162 : vector<16x128xf32>
    %c239 = arith.constant 239 : index
    %1164 = memref.load %arg1[%c239] : memref<700xf32, #tpu.memory_space<smem>>
    %1165 = vector.broadcast %1164 : f32 to vector<16x128xf32>
    %1166 = arith.mulf %999, %1165 : vector<16x128xf32>
    %1167 = arith.addf %1163, %1166 : vector<16x128xf32>
    %c240 = arith.constant 240 : index
    %1168 = memref.load %arg1[%c240] : memref<700xf32, #tpu.memory_space<smem>>
    %1169 = vector.broadcast %1168 : f32 to vector<16x128xf32>
    %1170 = arith.mulf %936, %1169 : vector<16x128xf32>
    %c24_113 = arith.constant 24 : index
    %1171 = memref.load %arg2[%c24_113] : memref<70xf32, #tpu.memory_space<smem>>
    %1172 = vector.broadcast %1171 : f32 to vector<16x128xf32>
    %1173 = arith.addf %1170, %1172 : vector<16x128xf32>
    %c241 = arith.constant 241 : index
    %1174 = memref.load %arg1[%c241] : memref<700xf32, #tpu.memory_space<smem>>
    %1175 = vector.broadcast %1174 : f32 to vector<16x128xf32>
    %1176 = arith.mulf %943, %1175 : vector<16x128xf32>
    %1177 = arith.addf %1173, %1176 : vector<16x128xf32>
    %c242 = arith.constant 242 : index
    %1178 = memref.load %arg1[%c242] : memref<700xf32, #tpu.memory_space<smem>>
    %1179 = vector.broadcast %1178 : f32 to vector<16x128xf32>
    %1180 = arith.mulf %950, %1179 : vector<16x128xf32>
    %1181 = arith.addf %1177, %1180 : vector<16x128xf32>
    %c243 = arith.constant 243 : index
    %1182 = memref.load %arg1[%c243] : memref<700xf32, #tpu.memory_space<smem>>
    %1183 = vector.broadcast %1182 : f32 to vector<16x128xf32>
    %1184 = arith.mulf %957, %1183 : vector<16x128xf32>
    %1185 = arith.addf %1181, %1184 : vector<16x128xf32>
    %c244 = arith.constant 244 : index
    %1186 = memref.load %arg1[%c244] : memref<700xf32, #tpu.memory_space<smem>>
    %1187 = vector.broadcast %1186 : f32 to vector<16x128xf32>
    %1188 = arith.mulf %964, %1187 : vector<16x128xf32>
    %1189 = arith.addf %1185, %1188 : vector<16x128xf32>
    %c245 = arith.constant 245 : index
    %1190 = memref.load %arg1[%c245] : memref<700xf32, #tpu.memory_space<smem>>
    %1191 = vector.broadcast %1190 : f32 to vector<16x128xf32>
    %1192 = arith.mulf %971, %1191 : vector<16x128xf32>
    %1193 = arith.addf %1189, %1192 : vector<16x128xf32>
    %c246 = arith.constant 246 : index
    %1194 = memref.load %arg1[%c246] : memref<700xf32, #tpu.memory_space<smem>>
    %1195 = vector.broadcast %1194 : f32 to vector<16x128xf32>
    %1196 = arith.mulf %978, %1195 : vector<16x128xf32>
    %1197 = arith.addf %1193, %1196 : vector<16x128xf32>
    %c247 = arith.constant 247 : index
    %1198 = memref.load %arg1[%c247] : memref<700xf32, #tpu.memory_space<smem>>
    %1199 = vector.broadcast %1198 : f32 to vector<16x128xf32>
    %1200 = arith.mulf %985, %1199 : vector<16x128xf32>
    %1201 = arith.addf %1197, %1200 : vector<16x128xf32>
    %c248 = arith.constant 248 : index
    %1202 = memref.load %arg1[%c248] : memref<700xf32, #tpu.memory_space<smem>>
    %1203 = vector.broadcast %1202 : f32 to vector<16x128xf32>
    %1204 = arith.mulf %992, %1203 : vector<16x128xf32>
    %1205 = arith.addf %1201, %1204 : vector<16x128xf32>
    %c249 = arith.constant 249 : index
    %1206 = memref.load %arg1[%c249] : memref<700xf32, #tpu.memory_space<smem>>
    %1207 = vector.broadcast %1206 : f32 to vector<16x128xf32>
    %1208 = arith.mulf %999, %1207 : vector<16x128xf32>
    %1209 = arith.addf %1205, %1208 : vector<16x128xf32>
    %c250 = arith.constant 250 : index
    %1210 = memref.load %arg1[%c250] : memref<700xf32, #tpu.memory_space<smem>>
    %1211 = vector.broadcast %1210 : f32 to vector<16x128xf32>
    %1212 = arith.mulf %936, %1211 : vector<16x128xf32>
    %c25_114 = arith.constant 25 : index
    %1213 = memref.load %arg2[%c25_114] : memref<70xf32, #tpu.memory_space<smem>>
    %1214 = vector.broadcast %1213 : f32 to vector<16x128xf32>
    %1215 = arith.addf %1212, %1214 : vector<16x128xf32>
    %c251 = arith.constant 251 : index
    %1216 = memref.load %arg1[%c251] : memref<700xf32, #tpu.memory_space<smem>>
    %1217 = vector.broadcast %1216 : f32 to vector<16x128xf32>
    %1218 = arith.mulf %943, %1217 : vector<16x128xf32>
    %1219 = arith.addf %1215, %1218 : vector<16x128xf32>
    %c252 = arith.constant 252 : index
    %1220 = memref.load %arg1[%c252] : memref<700xf32, #tpu.memory_space<smem>>
    %1221 = vector.broadcast %1220 : f32 to vector<16x128xf32>
    %1222 = arith.mulf %950, %1221 : vector<16x128xf32>
    %1223 = arith.addf %1219, %1222 : vector<16x128xf32>
    %c253 = arith.constant 253 : index
    %1224 = memref.load %arg1[%c253] : memref<700xf32, #tpu.memory_space<smem>>
    %1225 = vector.broadcast %1224 : f32 to vector<16x128xf32>
    %1226 = arith.mulf %957, %1225 : vector<16x128xf32>
    %1227 = arith.addf %1223, %1226 : vector<16x128xf32>
    %c254 = arith.constant 254 : index
    %1228 = memref.load %arg1[%c254] : memref<700xf32, #tpu.memory_space<smem>>
    %1229 = vector.broadcast %1228 : f32 to vector<16x128xf32>
    %1230 = arith.mulf %964, %1229 : vector<16x128xf32>
    %1231 = arith.addf %1227, %1230 : vector<16x128xf32>
    %c255 = arith.constant 255 : index
    %1232 = memref.load %arg1[%c255] : memref<700xf32, #tpu.memory_space<smem>>
    %1233 = vector.broadcast %1232 : f32 to vector<16x128xf32>
    %1234 = arith.mulf %971, %1233 : vector<16x128xf32>
    %1235 = arith.addf %1231, %1234 : vector<16x128xf32>
    %c256 = arith.constant 256 : index
    %1236 = memref.load %arg1[%c256] : memref<700xf32, #tpu.memory_space<smem>>
    %1237 = vector.broadcast %1236 : f32 to vector<16x128xf32>
    %1238 = arith.mulf %978, %1237 : vector<16x128xf32>
    %1239 = arith.addf %1235, %1238 : vector<16x128xf32>
    %c257 = arith.constant 257 : index
    %1240 = memref.load %arg1[%c257] : memref<700xf32, #tpu.memory_space<smem>>
    %1241 = vector.broadcast %1240 : f32 to vector<16x128xf32>
    %1242 = arith.mulf %985, %1241 : vector<16x128xf32>
    %1243 = arith.addf %1239, %1242 : vector<16x128xf32>
    %c258 = arith.constant 258 : index
    %1244 = memref.load %arg1[%c258] : memref<700xf32, #tpu.memory_space<smem>>
    %1245 = vector.broadcast %1244 : f32 to vector<16x128xf32>
    %1246 = arith.mulf %992, %1245 : vector<16x128xf32>
    %1247 = arith.addf %1243, %1246 : vector<16x128xf32>
    %c259 = arith.constant 259 : index
    %1248 = memref.load %arg1[%c259] : memref<700xf32, #tpu.memory_space<smem>>
    %1249 = vector.broadcast %1248 : f32 to vector<16x128xf32>
    %1250 = arith.mulf %999, %1249 : vector<16x128xf32>
    %1251 = arith.addf %1247, %1250 : vector<16x128xf32>
    %c260 = arith.constant 260 : index
    %1252 = memref.load %arg1[%c260] : memref<700xf32, #tpu.memory_space<smem>>
    %1253 = vector.broadcast %1252 : f32 to vector<16x128xf32>
    %1254 = arith.mulf %936, %1253 : vector<16x128xf32>
    %c26_115 = arith.constant 26 : index
    %1255 = memref.load %arg2[%c26_115] : memref<70xf32, #tpu.memory_space<smem>>
    %1256 = vector.broadcast %1255 : f32 to vector<16x128xf32>
    %1257 = arith.addf %1254, %1256 : vector<16x128xf32>
    %c261 = arith.constant 261 : index
    %1258 = memref.load %arg1[%c261] : memref<700xf32, #tpu.memory_space<smem>>
    %1259 = vector.broadcast %1258 : f32 to vector<16x128xf32>
    %1260 = arith.mulf %943, %1259 : vector<16x128xf32>
    %1261 = arith.addf %1257, %1260 : vector<16x128xf32>
    %c262 = arith.constant 262 : index
    %1262 = memref.load %arg1[%c262] : memref<700xf32, #tpu.memory_space<smem>>
    %1263 = vector.broadcast %1262 : f32 to vector<16x128xf32>
    %1264 = arith.mulf %950, %1263 : vector<16x128xf32>
    %1265 = arith.addf %1261, %1264 : vector<16x128xf32>
    %c263 = arith.constant 263 : index
    %1266 = memref.load %arg1[%c263] : memref<700xf32, #tpu.memory_space<smem>>
    %1267 = vector.broadcast %1266 : f32 to vector<16x128xf32>
    %1268 = arith.mulf %957, %1267 : vector<16x128xf32>
    %1269 = arith.addf %1265, %1268 : vector<16x128xf32>
    %c264 = arith.constant 264 : index
    %1270 = memref.load %arg1[%c264] : memref<700xf32, #tpu.memory_space<smem>>
    %1271 = vector.broadcast %1270 : f32 to vector<16x128xf32>
    %1272 = arith.mulf %964, %1271 : vector<16x128xf32>
    %1273 = arith.addf %1269, %1272 : vector<16x128xf32>
    %c265 = arith.constant 265 : index
    %1274 = memref.load %arg1[%c265] : memref<700xf32, #tpu.memory_space<smem>>
    %1275 = vector.broadcast %1274 : f32 to vector<16x128xf32>
    %1276 = arith.mulf %971, %1275 : vector<16x128xf32>
    %1277 = arith.addf %1273, %1276 : vector<16x128xf32>
    %c266 = arith.constant 266 : index
    %1278 = memref.load %arg1[%c266] : memref<700xf32, #tpu.memory_space<smem>>
    %1279 = vector.broadcast %1278 : f32 to vector<16x128xf32>
    %1280 = arith.mulf %978, %1279 : vector<16x128xf32>
    %1281 = arith.addf %1277, %1280 : vector<16x128xf32>
    %c267 = arith.constant 267 : index
    %1282 = memref.load %arg1[%c267] : memref<700xf32, #tpu.memory_space<smem>>
    %1283 = vector.broadcast %1282 : f32 to vector<16x128xf32>
    %1284 = arith.mulf %985, %1283 : vector<16x128xf32>
    %1285 = arith.addf %1281, %1284 : vector<16x128xf32>
    %c268 = arith.constant 268 : index
    %1286 = memref.load %arg1[%c268] : memref<700xf32, #tpu.memory_space<smem>>
    %1287 = vector.broadcast %1286 : f32 to vector<16x128xf32>
    %1288 = arith.mulf %992, %1287 : vector<16x128xf32>
    %1289 = arith.addf %1285, %1288 : vector<16x128xf32>
    %c269 = arith.constant 269 : index
    %1290 = memref.load %arg1[%c269] : memref<700xf32, #tpu.memory_space<smem>>
    %1291 = vector.broadcast %1290 : f32 to vector<16x128xf32>
    %1292 = arith.mulf %999, %1291 : vector<16x128xf32>
    %1293 = arith.addf %1289, %1292 : vector<16x128xf32>
    %c270 = arith.constant 270 : index
    %1294 = memref.load %arg1[%c270] : memref<700xf32, #tpu.memory_space<smem>>
    %1295 = vector.broadcast %1294 : f32 to vector<16x128xf32>
    %1296 = arith.mulf %936, %1295 : vector<16x128xf32>
    %c27_116 = arith.constant 27 : index
    %1297 = memref.load %arg2[%c27_116] : memref<70xf32, #tpu.memory_space<smem>>
    %1298 = vector.broadcast %1297 : f32 to vector<16x128xf32>
    %1299 = arith.addf %1296, %1298 : vector<16x128xf32>
    %c271 = arith.constant 271 : index
    %1300 = memref.load %arg1[%c271] : memref<700xf32, #tpu.memory_space<smem>>
    %1301 = vector.broadcast %1300 : f32 to vector<16x128xf32>
    %1302 = arith.mulf %943, %1301 : vector<16x128xf32>
    %1303 = arith.addf %1299, %1302 : vector<16x128xf32>
    %c272 = arith.constant 272 : index
    %1304 = memref.load %arg1[%c272] : memref<700xf32, #tpu.memory_space<smem>>
    %1305 = vector.broadcast %1304 : f32 to vector<16x128xf32>
    %1306 = arith.mulf %950, %1305 : vector<16x128xf32>
    %1307 = arith.addf %1303, %1306 : vector<16x128xf32>
    %c273 = arith.constant 273 : index
    %1308 = memref.load %arg1[%c273] : memref<700xf32, #tpu.memory_space<smem>>
    %1309 = vector.broadcast %1308 : f32 to vector<16x128xf32>
    %1310 = arith.mulf %957, %1309 : vector<16x128xf32>
    %1311 = arith.addf %1307, %1310 : vector<16x128xf32>
    %c274 = arith.constant 274 : index
    %1312 = memref.load %arg1[%c274] : memref<700xf32, #tpu.memory_space<smem>>
    %1313 = vector.broadcast %1312 : f32 to vector<16x128xf32>
    %1314 = arith.mulf %964, %1313 : vector<16x128xf32>
    %1315 = arith.addf %1311, %1314 : vector<16x128xf32>
    %c275 = arith.constant 275 : index
    %1316 = memref.load %arg1[%c275] : memref<700xf32, #tpu.memory_space<smem>>
    %1317 = vector.broadcast %1316 : f32 to vector<16x128xf32>
    %1318 = arith.mulf %971, %1317 : vector<16x128xf32>
    %1319 = arith.addf %1315, %1318 : vector<16x128xf32>
    %c276 = arith.constant 276 : index
    %1320 = memref.load %arg1[%c276] : memref<700xf32, #tpu.memory_space<smem>>
    %1321 = vector.broadcast %1320 : f32 to vector<16x128xf32>
    %1322 = arith.mulf %978, %1321 : vector<16x128xf32>
    %1323 = arith.addf %1319, %1322 : vector<16x128xf32>
    %c277 = arith.constant 277 : index
    %1324 = memref.load %arg1[%c277] : memref<700xf32, #tpu.memory_space<smem>>
    %1325 = vector.broadcast %1324 : f32 to vector<16x128xf32>
    %1326 = arith.mulf %985, %1325 : vector<16x128xf32>
    %1327 = arith.addf %1323, %1326 : vector<16x128xf32>
    %c278 = arith.constant 278 : index
    %1328 = memref.load %arg1[%c278] : memref<700xf32, #tpu.memory_space<smem>>
    %1329 = vector.broadcast %1328 : f32 to vector<16x128xf32>
    %1330 = arith.mulf %992, %1329 : vector<16x128xf32>
    %1331 = arith.addf %1327, %1330 : vector<16x128xf32>
    %c279 = arith.constant 279 : index
    %1332 = memref.load %arg1[%c279] : memref<700xf32, #tpu.memory_space<smem>>
    %1333 = vector.broadcast %1332 : f32 to vector<16x128xf32>
    %1334 = arith.mulf %999, %1333 : vector<16x128xf32>
    %1335 = arith.addf %1331, %1334 : vector<16x128xf32>
    %c280 = arith.constant 280 : index
    %1336 = memref.load %arg1[%c280] : memref<700xf32, #tpu.memory_space<smem>>
    %1337 = vector.broadcast %1336 : f32 to vector<16x128xf32>
    %1338 = arith.mulf %936, %1337 : vector<16x128xf32>
    %c28_117 = arith.constant 28 : index
    %1339 = memref.load %arg2[%c28_117] : memref<70xf32, #tpu.memory_space<smem>>
    %1340 = vector.broadcast %1339 : f32 to vector<16x128xf32>
    %1341 = arith.addf %1338, %1340 : vector<16x128xf32>
    %c281 = arith.constant 281 : index
    %1342 = memref.load %arg1[%c281] : memref<700xf32, #tpu.memory_space<smem>>
    %1343 = vector.broadcast %1342 : f32 to vector<16x128xf32>
    %1344 = arith.mulf %943, %1343 : vector<16x128xf32>
    %1345 = arith.addf %1341, %1344 : vector<16x128xf32>
    %c282 = arith.constant 282 : index
    %1346 = memref.load %arg1[%c282] : memref<700xf32, #tpu.memory_space<smem>>
    %1347 = vector.broadcast %1346 : f32 to vector<16x128xf32>
    %1348 = arith.mulf %950, %1347 : vector<16x128xf32>
    %1349 = arith.addf %1345, %1348 : vector<16x128xf32>
    %c283 = arith.constant 283 : index
    %1350 = memref.load %arg1[%c283] : memref<700xf32, #tpu.memory_space<smem>>
    %1351 = vector.broadcast %1350 : f32 to vector<16x128xf32>
    %1352 = arith.mulf %957, %1351 : vector<16x128xf32>
    %1353 = arith.addf %1349, %1352 : vector<16x128xf32>
    %c284 = arith.constant 284 : index
    %1354 = memref.load %arg1[%c284] : memref<700xf32, #tpu.memory_space<smem>>
    %1355 = vector.broadcast %1354 : f32 to vector<16x128xf32>
    %1356 = arith.mulf %964, %1355 : vector<16x128xf32>
    %1357 = arith.addf %1353, %1356 : vector<16x128xf32>
    %c285 = arith.constant 285 : index
    %1358 = memref.load %arg1[%c285] : memref<700xf32, #tpu.memory_space<smem>>
    %1359 = vector.broadcast %1358 : f32 to vector<16x128xf32>
    %1360 = arith.mulf %971, %1359 : vector<16x128xf32>
    %1361 = arith.addf %1357, %1360 : vector<16x128xf32>
    %c286 = arith.constant 286 : index
    %1362 = memref.load %arg1[%c286] : memref<700xf32, #tpu.memory_space<smem>>
    %1363 = vector.broadcast %1362 : f32 to vector<16x128xf32>
    %1364 = arith.mulf %978, %1363 : vector<16x128xf32>
    %1365 = arith.addf %1361, %1364 : vector<16x128xf32>
    %c287 = arith.constant 287 : index
    %1366 = memref.load %arg1[%c287] : memref<700xf32, #tpu.memory_space<smem>>
    %1367 = vector.broadcast %1366 : f32 to vector<16x128xf32>
    %1368 = arith.mulf %985, %1367 : vector<16x128xf32>
    %1369 = arith.addf %1365, %1368 : vector<16x128xf32>
    %c288 = arith.constant 288 : index
    %1370 = memref.load %arg1[%c288] : memref<700xf32, #tpu.memory_space<smem>>
    %1371 = vector.broadcast %1370 : f32 to vector<16x128xf32>
    %1372 = arith.mulf %992, %1371 : vector<16x128xf32>
    %1373 = arith.addf %1369, %1372 : vector<16x128xf32>
    %c289 = arith.constant 289 : index
    %1374 = memref.load %arg1[%c289] : memref<700xf32, #tpu.memory_space<smem>>
    %1375 = vector.broadcast %1374 : f32 to vector<16x128xf32>
    %1376 = arith.mulf %999, %1375 : vector<16x128xf32>
    %1377 = arith.addf %1373, %1376 : vector<16x128xf32>
    %c290 = arith.constant 290 : index
    %1378 = memref.load %arg1[%c290] : memref<700xf32, #tpu.memory_space<smem>>
    %1379 = vector.broadcast %1378 : f32 to vector<16x128xf32>
    %1380 = arith.mulf %936, %1379 : vector<16x128xf32>
    %c29_118 = arith.constant 29 : index
    %1381 = memref.load %arg2[%c29_118] : memref<70xf32, #tpu.memory_space<smem>>
    %1382 = vector.broadcast %1381 : f32 to vector<16x128xf32>
    %1383 = arith.addf %1380, %1382 : vector<16x128xf32>
    %c291 = arith.constant 291 : index
    %1384 = memref.load %arg1[%c291] : memref<700xf32, #tpu.memory_space<smem>>
    %1385 = vector.broadcast %1384 : f32 to vector<16x128xf32>
    %1386 = arith.mulf %943, %1385 : vector<16x128xf32>
    %1387 = arith.addf %1383, %1386 : vector<16x128xf32>
    %c292 = arith.constant 292 : index
    %1388 = memref.load %arg1[%c292] : memref<700xf32, #tpu.memory_space<smem>>
    %1389 = vector.broadcast %1388 : f32 to vector<16x128xf32>
    %1390 = arith.mulf %950, %1389 : vector<16x128xf32>
    %1391 = arith.addf %1387, %1390 : vector<16x128xf32>
    %c293 = arith.constant 293 : index
    %1392 = memref.load %arg1[%c293] : memref<700xf32, #tpu.memory_space<smem>>
    %1393 = vector.broadcast %1392 : f32 to vector<16x128xf32>
    %1394 = arith.mulf %957, %1393 : vector<16x128xf32>
    %1395 = arith.addf %1391, %1394 : vector<16x128xf32>
    %c294 = arith.constant 294 : index
    %1396 = memref.load %arg1[%c294] : memref<700xf32, #tpu.memory_space<smem>>
    %1397 = vector.broadcast %1396 : f32 to vector<16x128xf32>
    %1398 = arith.mulf %964, %1397 : vector<16x128xf32>
    %1399 = arith.addf %1395, %1398 : vector<16x128xf32>
    %c295 = arith.constant 295 : index
    %1400 = memref.load %arg1[%c295] : memref<700xf32, #tpu.memory_space<smem>>
    %1401 = vector.broadcast %1400 : f32 to vector<16x128xf32>
    %1402 = arith.mulf %971, %1401 : vector<16x128xf32>
    %1403 = arith.addf %1399, %1402 : vector<16x128xf32>
    %c296 = arith.constant 296 : index
    %1404 = memref.load %arg1[%c296] : memref<700xf32, #tpu.memory_space<smem>>
    %1405 = vector.broadcast %1404 : f32 to vector<16x128xf32>
    %1406 = arith.mulf %978, %1405 : vector<16x128xf32>
    %1407 = arith.addf %1403, %1406 : vector<16x128xf32>
    %c297 = arith.constant 297 : index
    %1408 = memref.load %arg1[%c297] : memref<700xf32, #tpu.memory_space<smem>>
    %1409 = vector.broadcast %1408 : f32 to vector<16x128xf32>
    %1410 = arith.mulf %985, %1409 : vector<16x128xf32>
    %1411 = arith.addf %1407, %1410 : vector<16x128xf32>
    %c298 = arith.constant 298 : index
    %1412 = memref.load %arg1[%c298] : memref<700xf32, #tpu.memory_space<smem>>
    %1413 = vector.broadcast %1412 : f32 to vector<16x128xf32>
    %1414 = arith.mulf %992, %1413 : vector<16x128xf32>
    %1415 = arith.addf %1411, %1414 : vector<16x128xf32>
    %c299 = arith.constant 299 : index
    %1416 = memref.load %arg1[%c299] : memref<700xf32, #tpu.memory_space<smem>>
    %1417 = vector.broadcast %1416 : f32 to vector<16x128xf32>
    %1418 = arith.mulf %999, %1417 : vector<16x128xf32>
    %1419 = arith.addf %1415, %1418 : vector<16x128xf32>
    %cst_119 = arith.constant 5.000000e-01 : f32
    %1420 = vector.broadcast %cst_119 : f32 to vector<16x128xf32>
    %1421 = arith.mulf %1420, %1041 : vector<16x128xf32>
    %1422 = math.tanh %1421 : vector<16x128xf32>
    %cst_120 = arith.constant 5.000000e-01 : f32
    %1423 = vector.broadcast %cst_120 : f32 to vector<16x128xf32>
    %1424 = arith.mulf %1423, %1422 : vector<16x128xf32>
    %cst_121 = arith.constant 5.000000e-01 : f32
    %1425 = vector.broadcast %cst_121 : f32 to vector<16x128xf32>
    %1426 = arith.addf %1424, %1425 : vector<16x128xf32>
    %cst_122 = arith.constant 5.000000e-01 : f32
    %1427 = vector.broadcast %cst_122 : f32 to vector<16x128xf32>
    %1428 = arith.mulf %1427, %1083 : vector<16x128xf32>
    %1429 = math.tanh %1428 : vector<16x128xf32>
    %cst_123 = arith.constant 5.000000e-01 : f32
    %1430 = vector.broadcast %cst_123 : f32 to vector<16x128xf32>
    %1431 = arith.mulf %1430, %1429 : vector<16x128xf32>
    %cst_124 = arith.constant 5.000000e-01 : f32
    %1432 = vector.broadcast %cst_124 : f32 to vector<16x128xf32>
    %1433 = arith.addf %1431, %1432 : vector<16x128xf32>
    %cst_125 = arith.constant 5.000000e-01 : f32
    %1434 = vector.broadcast %cst_125 : f32 to vector<16x128xf32>
    %1435 = arith.mulf %1434, %1125 : vector<16x128xf32>
    %1436 = math.tanh %1435 : vector<16x128xf32>
    %cst_126 = arith.constant 5.000000e-01 : f32
    %1437 = vector.broadcast %cst_126 : f32 to vector<16x128xf32>
    %1438 = arith.mulf %1437, %1436 : vector<16x128xf32>
    %cst_127 = arith.constant 5.000000e-01 : f32
    %1439 = vector.broadcast %cst_127 : f32 to vector<16x128xf32>
    %1440 = arith.addf %1438, %1439 : vector<16x128xf32>
    %cst_128 = arith.constant 5.000000e-01 : f32
    %1441 = vector.broadcast %cst_128 : f32 to vector<16x128xf32>
    %1442 = arith.mulf %1441, %1167 : vector<16x128xf32>
    %1443 = math.tanh %1442 : vector<16x128xf32>
    %cst_129 = arith.constant 5.000000e-01 : f32
    %1444 = vector.broadcast %cst_129 : f32 to vector<16x128xf32>
    %1445 = arith.mulf %1444, %1443 : vector<16x128xf32>
    %cst_130 = arith.constant 5.000000e-01 : f32
    %1446 = vector.broadcast %cst_130 : f32 to vector<16x128xf32>
    %1447 = arith.addf %1445, %1446 : vector<16x128xf32>
    %cst_131 = arith.constant 5.000000e-01 : f32
    %1448 = vector.broadcast %cst_131 : f32 to vector<16x128xf32>
    %1449 = arith.mulf %1448, %1209 : vector<16x128xf32>
    %1450 = math.tanh %1449 : vector<16x128xf32>
    %cst_132 = arith.constant 5.000000e-01 : f32
    %1451 = vector.broadcast %cst_132 : f32 to vector<16x128xf32>
    %1452 = arith.mulf %1451, %1450 : vector<16x128xf32>
    %cst_133 = arith.constant 5.000000e-01 : f32
    %1453 = vector.broadcast %cst_133 : f32 to vector<16x128xf32>
    %1454 = arith.addf %1452, %1453 : vector<16x128xf32>
    %cst_134 = arith.constant 5.000000e-01 : f32
    %1455 = vector.broadcast %cst_134 : f32 to vector<16x128xf32>
    %1456 = arith.mulf %1455, %1251 : vector<16x128xf32>
    %1457 = math.tanh %1456 : vector<16x128xf32>
    %cst_135 = arith.constant 5.000000e-01 : f32
    %1458 = vector.broadcast %cst_135 : f32 to vector<16x128xf32>
    %1459 = arith.mulf %1458, %1457 : vector<16x128xf32>
    %cst_136 = arith.constant 5.000000e-01 : f32
    %1460 = vector.broadcast %cst_136 : f32 to vector<16x128xf32>
    %1461 = arith.addf %1459, %1460 : vector<16x128xf32>
    %cst_137 = arith.constant 5.000000e-01 : f32
    %1462 = vector.broadcast %cst_137 : f32 to vector<16x128xf32>
    %1463 = arith.mulf %1462, %1293 : vector<16x128xf32>
    %1464 = math.tanh %1463 : vector<16x128xf32>
    %cst_138 = arith.constant 5.000000e-01 : f32
    %1465 = vector.broadcast %cst_138 : f32 to vector<16x128xf32>
    %1466 = arith.mulf %1465, %1464 : vector<16x128xf32>
    %cst_139 = arith.constant 5.000000e-01 : f32
    %1467 = vector.broadcast %cst_139 : f32 to vector<16x128xf32>
    %1468 = arith.addf %1466, %1467 : vector<16x128xf32>
    %cst_140 = arith.constant 5.000000e-01 : f32
    %1469 = vector.broadcast %cst_140 : f32 to vector<16x128xf32>
    %1470 = arith.mulf %1469, %1335 : vector<16x128xf32>
    %1471 = math.tanh %1470 : vector<16x128xf32>
    %cst_141 = arith.constant 5.000000e-01 : f32
    %1472 = vector.broadcast %cst_141 : f32 to vector<16x128xf32>
    %1473 = arith.mulf %1472, %1471 : vector<16x128xf32>
    %cst_142 = arith.constant 5.000000e-01 : f32
    %1474 = vector.broadcast %cst_142 : f32 to vector<16x128xf32>
    %1475 = arith.addf %1473, %1474 : vector<16x128xf32>
    %cst_143 = arith.constant 5.000000e-01 : f32
    %1476 = vector.broadcast %cst_143 : f32 to vector<16x128xf32>
    %1477 = arith.mulf %1476, %1377 : vector<16x128xf32>
    %1478 = math.tanh %1477 : vector<16x128xf32>
    %cst_144 = arith.constant 5.000000e-01 : f32
    %1479 = vector.broadcast %cst_144 : f32 to vector<16x128xf32>
    %1480 = arith.mulf %1479, %1478 : vector<16x128xf32>
    %cst_145 = arith.constant 5.000000e-01 : f32
    %1481 = vector.broadcast %cst_145 : f32 to vector<16x128xf32>
    %1482 = arith.addf %1480, %1481 : vector<16x128xf32>
    %cst_146 = arith.constant 5.000000e-01 : f32
    %1483 = vector.broadcast %cst_146 : f32 to vector<16x128xf32>
    %1484 = arith.mulf %1483, %1419 : vector<16x128xf32>
    %1485 = math.tanh %1484 : vector<16x128xf32>
    %cst_147 = arith.constant 5.000000e-01 : f32
    %1486 = vector.broadcast %cst_147 : f32 to vector<16x128xf32>
    %1487 = arith.mulf %1486, %1485 : vector<16x128xf32>
    %cst_148 = arith.constant 5.000000e-01 : f32
    %1488 = vector.broadcast %cst_148 : f32 to vector<16x128xf32>
    %1489 = arith.addf %1487, %1488 : vector<16x128xf32>
    %c300 = arith.constant 300 : index
    %1490 = memref.load %arg1[%c300] : memref<700xf32, #tpu.memory_space<smem>>
    %1491 = vector.broadcast %1490 : f32 to vector<16x128xf32>
    %1492 = arith.mulf %1426, %1491 : vector<16x128xf32>
    %c30_149 = arith.constant 30 : index
    %1493 = memref.load %arg2[%c30_149] : memref<70xf32, #tpu.memory_space<smem>>
    %1494 = vector.broadcast %1493 : f32 to vector<16x128xf32>
    %1495 = arith.addf %1492, %1494 : vector<16x128xf32>
    %c301 = arith.constant 301 : index
    %1496 = memref.load %arg1[%c301] : memref<700xf32, #tpu.memory_space<smem>>
    %1497 = vector.broadcast %1496 : f32 to vector<16x128xf32>
    %1498 = arith.mulf %1433, %1497 : vector<16x128xf32>
    %1499 = arith.addf %1495, %1498 : vector<16x128xf32>
    %c302 = arith.constant 302 : index
    %1500 = memref.load %arg1[%c302] : memref<700xf32, #tpu.memory_space<smem>>
    %1501 = vector.broadcast %1500 : f32 to vector<16x128xf32>
    %1502 = arith.mulf %1440, %1501 : vector<16x128xf32>
    %1503 = arith.addf %1499, %1502 : vector<16x128xf32>
    %c303 = arith.constant 303 : index
    %1504 = memref.load %arg1[%c303] : memref<700xf32, #tpu.memory_space<smem>>
    %1505 = vector.broadcast %1504 : f32 to vector<16x128xf32>
    %1506 = arith.mulf %1447, %1505 : vector<16x128xf32>
    %1507 = arith.addf %1503, %1506 : vector<16x128xf32>
    %c304 = arith.constant 304 : index
    %1508 = memref.load %arg1[%c304] : memref<700xf32, #tpu.memory_space<smem>>
    %1509 = vector.broadcast %1508 : f32 to vector<16x128xf32>
    %1510 = arith.mulf %1454, %1509 : vector<16x128xf32>
    %1511 = arith.addf %1507, %1510 : vector<16x128xf32>
    %c305 = arith.constant 305 : index
    %1512 = memref.load %arg1[%c305] : memref<700xf32, #tpu.memory_space<smem>>
    %1513 = vector.broadcast %1512 : f32 to vector<16x128xf32>
    %1514 = arith.mulf %1461, %1513 : vector<16x128xf32>
    %1515 = arith.addf %1511, %1514 : vector<16x128xf32>
    %c306 = arith.constant 306 : index
    %1516 = memref.load %arg1[%c306] : memref<700xf32, #tpu.memory_space<smem>>
    %1517 = vector.broadcast %1516 : f32 to vector<16x128xf32>
    %1518 = arith.mulf %1468, %1517 : vector<16x128xf32>
    %1519 = arith.addf %1515, %1518 : vector<16x128xf32>
    %c307 = arith.constant 307 : index
    %1520 = memref.load %arg1[%c307] : memref<700xf32, #tpu.memory_space<smem>>
    %1521 = vector.broadcast %1520 : f32 to vector<16x128xf32>
    %1522 = arith.mulf %1475, %1521 : vector<16x128xf32>
    %1523 = arith.addf %1519, %1522 : vector<16x128xf32>
    %c308 = arith.constant 308 : index
    %1524 = memref.load %arg1[%c308] : memref<700xf32, #tpu.memory_space<smem>>
    %1525 = vector.broadcast %1524 : f32 to vector<16x128xf32>
    %1526 = arith.mulf %1482, %1525 : vector<16x128xf32>
    %1527 = arith.addf %1523, %1526 : vector<16x128xf32>
    %c309 = arith.constant 309 : index
    %1528 = memref.load %arg1[%c309] : memref<700xf32, #tpu.memory_space<smem>>
    %1529 = vector.broadcast %1528 : f32 to vector<16x128xf32>
    %1530 = arith.mulf %1489, %1529 : vector<16x128xf32>
    %1531 = arith.addf %1527, %1530 : vector<16x128xf32>
    %c310 = arith.constant 310 : index
    %1532 = memref.load %arg1[%c310] : memref<700xf32, #tpu.memory_space<smem>>
    %1533 = vector.broadcast %1532 : f32 to vector<16x128xf32>
    %1534 = arith.mulf %1426, %1533 : vector<16x128xf32>
    %c31_150 = arith.constant 31 : index
    %1535 = memref.load %arg2[%c31_150] : memref<70xf32, #tpu.memory_space<smem>>
    %1536 = vector.broadcast %1535 : f32 to vector<16x128xf32>
    %1537 = arith.addf %1534, %1536 : vector<16x128xf32>
    %c311 = arith.constant 311 : index
    %1538 = memref.load %arg1[%c311] : memref<700xf32, #tpu.memory_space<smem>>
    %1539 = vector.broadcast %1538 : f32 to vector<16x128xf32>
    %1540 = arith.mulf %1433, %1539 : vector<16x128xf32>
    %1541 = arith.addf %1537, %1540 : vector<16x128xf32>
    %c312 = arith.constant 312 : index
    %1542 = memref.load %arg1[%c312] : memref<700xf32, #tpu.memory_space<smem>>
    %1543 = vector.broadcast %1542 : f32 to vector<16x128xf32>
    %1544 = arith.mulf %1440, %1543 : vector<16x128xf32>
    %1545 = arith.addf %1541, %1544 : vector<16x128xf32>
    %c313 = arith.constant 313 : index
    %1546 = memref.load %arg1[%c313] : memref<700xf32, #tpu.memory_space<smem>>
    %1547 = vector.broadcast %1546 : f32 to vector<16x128xf32>
    %1548 = arith.mulf %1447, %1547 : vector<16x128xf32>
    %1549 = arith.addf %1545, %1548 : vector<16x128xf32>
    %c314 = arith.constant 314 : index
    %1550 = memref.load %arg1[%c314] : memref<700xf32, #tpu.memory_space<smem>>
    %1551 = vector.broadcast %1550 : f32 to vector<16x128xf32>
    %1552 = arith.mulf %1454, %1551 : vector<16x128xf32>
    %1553 = arith.addf %1549, %1552 : vector<16x128xf32>
    %c315 = arith.constant 315 : index
    %1554 = memref.load %arg1[%c315] : memref<700xf32, #tpu.memory_space<smem>>
    %1555 = vector.broadcast %1554 : f32 to vector<16x128xf32>
    %1556 = arith.mulf %1461, %1555 : vector<16x128xf32>
    %1557 = arith.addf %1553, %1556 : vector<16x128xf32>
    %c316 = arith.constant 316 : index
    %1558 = memref.load %arg1[%c316] : memref<700xf32, #tpu.memory_space<smem>>
    %1559 = vector.broadcast %1558 : f32 to vector<16x128xf32>
    %1560 = arith.mulf %1468, %1559 : vector<16x128xf32>
    %1561 = arith.addf %1557, %1560 : vector<16x128xf32>
    %c317 = arith.constant 317 : index
    %1562 = memref.load %arg1[%c317] : memref<700xf32, #tpu.memory_space<smem>>
    %1563 = vector.broadcast %1562 : f32 to vector<16x128xf32>
    %1564 = arith.mulf %1475, %1563 : vector<16x128xf32>
    %1565 = arith.addf %1561, %1564 : vector<16x128xf32>
    %c318 = arith.constant 318 : index
    %1566 = memref.load %arg1[%c318] : memref<700xf32, #tpu.memory_space<smem>>
    %1567 = vector.broadcast %1566 : f32 to vector<16x128xf32>
    %1568 = arith.mulf %1482, %1567 : vector<16x128xf32>
    %1569 = arith.addf %1565, %1568 : vector<16x128xf32>
    %c319 = arith.constant 319 : index
    %1570 = memref.load %arg1[%c319] : memref<700xf32, #tpu.memory_space<smem>>
    %1571 = vector.broadcast %1570 : f32 to vector<16x128xf32>
    %1572 = arith.mulf %1489, %1571 : vector<16x128xf32>
    %1573 = arith.addf %1569, %1572 : vector<16x128xf32>
    %c320 = arith.constant 320 : index
    %1574 = memref.load %arg1[%c320] : memref<700xf32, #tpu.memory_space<smem>>
    %1575 = vector.broadcast %1574 : f32 to vector<16x128xf32>
    %1576 = arith.mulf %1426, %1575 : vector<16x128xf32>
    %c32_151 = arith.constant 32 : index
    %1577 = memref.load %arg2[%c32_151] : memref<70xf32, #tpu.memory_space<smem>>
    %1578 = vector.broadcast %1577 : f32 to vector<16x128xf32>
    %1579 = arith.addf %1576, %1578 : vector<16x128xf32>
    %c321 = arith.constant 321 : index
    %1580 = memref.load %arg1[%c321] : memref<700xf32, #tpu.memory_space<smem>>
    %1581 = vector.broadcast %1580 : f32 to vector<16x128xf32>
    %1582 = arith.mulf %1433, %1581 : vector<16x128xf32>
    %1583 = arith.addf %1579, %1582 : vector<16x128xf32>
    %c322 = arith.constant 322 : index
    %1584 = memref.load %arg1[%c322] : memref<700xf32, #tpu.memory_space<smem>>
    %1585 = vector.broadcast %1584 : f32 to vector<16x128xf32>
    %1586 = arith.mulf %1440, %1585 : vector<16x128xf32>
    %1587 = arith.addf %1583, %1586 : vector<16x128xf32>
    %c323 = arith.constant 323 : index
    %1588 = memref.load %arg1[%c323] : memref<700xf32, #tpu.memory_space<smem>>
    %1589 = vector.broadcast %1588 : f32 to vector<16x128xf32>
    %1590 = arith.mulf %1447, %1589 : vector<16x128xf32>
    %1591 = arith.addf %1587, %1590 : vector<16x128xf32>
    %c324 = arith.constant 324 : index
    %1592 = memref.load %arg1[%c324] : memref<700xf32, #tpu.memory_space<smem>>
    %1593 = vector.broadcast %1592 : f32 to vector<16x128xf32>
    %1594 = arith.mulf %1454, %1593 : vector<16x128xf32>
    %1595 = arith.addf %1591, %1594 : vector<16x128xf32>
    %c325 = arith.constant 325 : index
    %1596 = memref.load %arg1[%c325] : memref<700xf32, #tpu.memory_space<smem>>
    %1597 = vector.broadcast %1596 : f32 to vector<16x128xf32>
    %1598 = arith.mulf %1461, %1597 : vector<16x128xf32>
    %1599 = arith.addf %1595, %1598 : vector<16x128xf32>
    %c326 = arith.constant 326 : index
    %1600 = memref.load %arg1[%c326] : memref<700xf32, #tpu.memory_space<smem>>
    %1601 = vector.broadcast %1600 : f32 to vector<16x128xf32>
    %1602 = arith.mulf %1468, %1601 : vector<16x128xf32>
    %1603 = arith.addf %1599, %1602 : vector<16x128xf32>
    %c327 = arith.constant 327 : index
    %1604 = memref.load %arg1[%c327] : memref<700xf32, #tpu.memory_space<smem>>
    %1605 = vector.broadcast %1604 : f32 to vector<16x128xf32>
    %1606 = arith.mulf %1475, %1605 : vector<16x128xf32>
    %1607 = arith.addf %1603, %1606 : vector<16x128xf32>
    %c328 = arith.constant 328 : index
    %1608 = memref.load %arg1[%c328] : memref<700xf32, #tpu.memory_space<smem>>
    %1609 = vector.broadcast %1608 : f32 to vector<16x128xf32>
    %1610 = arith.mulf %1482, %1609 : vector<16x128xf32>
    %1611 = arith.addf %1607, %1610 : vector<16x128xf32>
    %c329 = arith.constant 329 : index
    %1612 = memref.load %arg1[%c329] : memref<700xf32, #tpu.memory_space<smem>>
    %1613 = vector.broadcast %1612 : f32 to vector<16x128xf32>
    %1614 = arith.mulf %1489, %1613 : vector<16x128xf32>
    %1615 = arith.addf %1611, %1614 : vector<16x128xf32>
    %c330 = arith.constant 330 : index
    %1616 = memref.load %arg1[%c330] : memref<700xf32, #tpu.memory_space<smem>>
    %1617 = vector.broadcast %1616 : f32 to vector<16x128xf32>
    %1618 = arith.mulf %1426, %1617 : vector<16x128xf32>
    %c33_152 = arith.constant 33 : index
    %1619 = memref.load %arg2[%c33_152] : memref<70xf32, #tpu.memory_space<smem>>
    %1620 = vector.broadcast %1619 : f32 to vector<16x128xf32>
    %1621 = arith.addf %1618, %1620 : vector<16x128xf32>
    %c331 = arith.constant 331 : index
    %1622 = memref.load %arg1[%c331] : memref<700xf32, #tpu.memory_space<smem>>
    %1623 = vector.broadcast %1622 : f32 to vector<16x128xf32>
    %1624 = arith.mulf %1433, %1623 : vector<16x128xf32>
    %1625 = arith.addf %1621, %1624 : vector<16x128xf32>
    %c332 = arith.constant 332 : index
    %1626 = memref.load %arg1[%c332] : memref<700xf32, #tpu.memory_space<smem>>
    %1627 = vector.broadcast %1626 : f32 to vector<16x128xf32>
    %1628 = arith.mulf %1440, %1627 : vector<16x128xf32>
    %1629 = arith.addf %1625, %1628 : vector<16x128xf32>
    %c333 = arith.constant 333 : index
    %1630 = memref.load %arg1[%c333] : memref<700xf32, #tpu.memory_space<smem>>
    %1631 = vector.broadcast %1630 : f32 to vector<16x128xf32>
    %1632 = arith.mulf %1447, %1631 : vector<16x128xf32>
    %1633 = arith.addf %1629, %1632 : vector<16x128xf32>
    %c334 = arith.constant 334 : index
    %1634 = memref.load %arg1[%c334] : memref<700xf32, #tpu.memory_space<smem>>
    %1635 = vector.broadcast %1634 : f32 to vector<16x128xf32>
    %1636 = arith.mulf %1454, %1635 : vector<16x128xf32>
    %1637 = arith.addf %1633, %1636 : vector<16x128xf32>
    %c335 = arith.constant 335 : index
    %1638 = memref.load %arg1[%c335] : memref<700xf32, #tpu.memory_space<smem>>
    %1639 = vector.broadcast %1638 : f32 to vector<16x128xf32>
    %1640 = arith.mulf %1461, %1639 : vector<16x128xf32>
    %1641 = arith.addf %1637, %1640 : vector<16x128xf32>
    %c336 = arith.constant 336 : index
    %1642 = memref.load %arg1[%c336] : memref<700xf32, #tpu.memory_space<smem>>
    %1643 = vector.broadcast %1642 : f32 to vector<16x128xf32>
    %1644 = arith.mulf %1468, %1643 : vector<16x128xf32>
    %1645 = arith.addf %1641, %1644 : vector<16x128xf32>
    %c337 = arith.constant 337 : index
    %1646 = memref.load %arg1[%c337] : memref<700xf32, #tpu.memory_space<smem>>
    %1647 = vector.broadcast %1646 : f32 to vector<16x128xf32>
    %1648 = arith.mulf %1475, %1647 : vector<16x128xf32>
    %1649 = arith.addf %1645, %1648 : vector<16x128xf32>
    %c338 = arith.constant 338 : index
    %1650 = memref.load %arg1[%c338] : memref<700xf32, #tpu.memory_space<smem>>
    %1651 = vector.broadcast %1650 : f32 to vector<16x128xf32>
    %1652 = arith.mulf %1482, %1651 : vector<16x128xf32>
    %1653 = arith.addf %1649, %1652 : vector<16x128xf32>
    %c339 = arith.constant 339 : index
    %1654 = memref.load %arg1[%c339] : memref<700xf32, #tpu.memory_space<smem>>
    %1655 = vector.broadcast %1654 : f32 to vector<16x128xf32>
    %1656 = arith.mulf %1489, %1655 : vector<16x128xf32>
    %1657 = arith.addf %1653, %1656 : vector<16x128xf32>
    %c340 = arith.constant 340 : index
    %1658 = memref.load %arg1[%c340] : memref<700xf32, #tpu.memory_space<smem>>
    %1659 = vector.broadcast %1658 : f32 to vector<16x128xf32>
    %1660 = arith.mulf %1426, %1659 : vector<16x128xf32>
    %c34_153 = arith.constant 34 : index
    %1661 = memref.load %arg2[%c34_153] : memref<70xf32, #tpu.memory_space<smem>>
    %1662 = vector.broadcast %1661 : f32 to vector<16x128xf32>
    %1663 = arith.addf %1660, %1662 : vector<16x128xf32>
    %c341 = arith.constant 341 : index
    %1664 = memref.load %arg1[%c341] : memref<700xf32, #tpu.memory_space<smem>>
    %1665 = vector.broadcast %1664 : f32 to vector<16x128xf32>
    %1666 = arith.mulf %1433, %1665 : vector<16x128xf32>
    %1667 = arith.addf %1663, %1666 : vector<16x128xf32>
    %c342 = arith.constant 342 : index
    %1668 = memref.load %arg1[%c342] : memref<700xf32, #tpu.memory_space<smem>>
    %1669 = vector.broadcast %1668 : f32 to vector<16x128xf32>
    %1670 = arith.mulf %1440, %1669 : vector<16x128xf32>
    %1671 = arith.addf %1667, %1670 : vector<16x128xf32>
    %c343 = arith.constant 343 : index
    %1672 = memref.load %arg1[%c343] : memref<700xf32, #tpu.memory_space<smem>>
    %1673 = vector.broadcast %1672 : f32 to vector<16x128xf32>
    %1674 = arith.mulf %1447, %1673 : vector<16x128xf32>
    %1675 = arith.addf %1671, %1674 : vector<16x128xf32>
    %c344 = arith.constant 344 : index
    %1676 = memref.load %arg1[%c344] : memref<700xf32, #tpu.memory_space<smem>>
    %1677 = vector.broadcast %1676 : f32 to vector<16x128xf32>
    %1678 = arith.mulf %1454, %1677 : vector<16x128xf32>
    %1679 = arith.addf %1675, %1678 : vector<16x128xf32>
    %c345 = arith.constant 345 : index
    %1680 = memref.load %arg1[%c345] : memref<700xf32, #tpu.memory_space<smem>>
    %1681 = vector.broadcast %1680 : f32 to vector<16x128xf32>
    %1682 = arith.mulf %1461, %1681 : vector<16x128xf32>
    %1683 = arith.addf %1679, %1682 : vector<16x128xf32>
    %c346 = arith.constant 346 : index
    %1684 = memref.load %arg1[%c346] : memref<700xf32, #tpu.memory_space<smem>>
    %1685 = vector.broadcast %1684 : f32 to vector<16x128xf32>
    %1686 = arith.mulf %1468, %1685 : vector<16x128xf32>
    %1687 = arith.addf %1683, %1686 : vector<16x128xf32>
    %c347 = arith.constant 347 : index
    %1688 = memref.load %arg1[%c347] : memref<700xf32, #tpu.memory_space<smem>>
    %1689 = vector.broadcast %1688 : f32 to vector<16x128xf32>
    %1690 = arith.mulf %1475, %1689 : vector<16x128xf32>
    %1691 = arith.addf %1687, %1690 : vector<16x128xf32>
    %c348 = arith.constant 348 : index
    %1692 = memref.load %arg1[%c348] : memref<700xf32, #tpu.memory_space<smem>>
    %1693 = vector.broadcast %1692 : f32 to vector<16x128xf32>
    %1694 = arith.mulf %1482, %1693 : vector<16x128xf32>
    %1695 = arith.addf %1691, %1694 : vector<16x128xf32>
    %c349 = arith.constant 349 : index
    %1696 = memref.load %arg1[%c349] : memref<700xf32, #tpu.memory_space<smem>>
    %1697 = vector.broadcast %1696 : f32 to vector<16x128xf32>
    %1698 = arith.mulf %1489, %1697 : vector<16x128xf32>
    %1699 = arith.addf %1695, %1698 : vector<16x128xf32>
    %c350 = arith.constant 350 : index
    %1700 = memref.load %arg1[%c350] : memref<700xf32, #tpu.memory_space<smem>>
    %1701 = vector.broadcast %1700 : f32 to vector<16x128xf32>
    %1702 = arith.mulf %1426, %1701 : vector<16x128xf32>
    %c35_154 = arith.constant 35 : index
    %1703 = memref.load %arg2[%c35_154] : memref<70xf32, #tpu.memory_space<smem>>
    %1704 = vector.broadcast %1703 : f32 to vector<16x128xf32>
    %1705 = arith.addf %1702, %1704 : vector<16x128xf32>
    %c351 = arith.constant 351 : index
    %1706 = memref.load %arg1[%c351] : memref<700xf32, #tpu.memory_space<smem>>
    %1707 = vector.broadcast %1706 : f32 to vector<16x128xf32>
    %1708 = arith.mulf %1433, %1707 : vector<16x128xf32>
    %1709 = arith.addf %1705, %1708 : vector<16x128xf32>
    %c352 = arith.constant 352 : index
    %1710 = memref.load %arg1[%c352] : memref<700xf32, #tpu.memory_space<smem>>
    %1711 = vector.broadcast %1710 : f32 to vector<16x128xf32>
    %1712 = arith.mulf %1440, %1711 : vector<16x128xf32>
    %1713 = arith.addf %1709, %1712 : vector<16x128xf32>
    %c353 = arith.constant 353 : index
    %1714 = memref.load %arg1[%c353] : memref<700xf32, #tpu.memory_space<smem>>
    %1715 = vector.broadcast %1714 : f32 to vector<16x128xf32>
    %1716 = arith.mulf %1447, %1715 : vector<16x128xf32>
    %1717 = arith.addf %1713, %1716 : vector<16x128xf32>
    %c354 = arith.constant 354 : index
    %1718 = memref.load %arg1[%c354] : memref<700xf32, #tpu.memory_space<smem>>
    %1719 = vector.broadcast %1718 : f32 to vector<16x128xf32>
    %1720 = arith.mulf %1454, %1719 : vector<16x128xf32>
    %1721 = arith.addf %1717, %1720 : vector<16x128xf32>
    %c355 = arith.constant 355 : index
    %1722 = memref.load %arg1[%c355] : memref<700xf32, #tpu.memory_space<smem>>
    %1723 = vector.broadcast %1722 : f32 to vector<16x128xf32>
    %1724 = arith.mulf %1461, %1723 : vector<16x128xf32>
    %1725 = arith.addf %1721, %1724 : vector<16x128xf32>
    %c356 = arith.constant 356 : index
    %1726 = memref.load %arg1[%c356] : memref<700xf32, #tpu.memory_space<smem>>
    %1727 = vector.broadcast %1726 : f32 to vector<16x128xf32>
    %1728 = arith.mulf %1468, %1727 : vector<16x128xf32>
    %1729 = arith.addf %1725, %1728 : vector<16x128xf32>
    %c357 = arith.constant 357 : index
    %1730 = memref.load %arg1[%c357] : memref<700xf32, #tpu.memory_space<smem>>
    %1731 = vector.broadcast %1730 : f32 to vector<16x128xf32>
    %1732 = arith.mulf %1475, %1731 : vector<16x128xf32>
    %1733 = arith.addf %1729, %1732 : vector<16x128xf32>
    %c358 = arith.constant 358 : index
    %1734 = memref.load %arg1[%c358] : memref<700xf32, #tpu.memory_space<smem>>
    %1735 = vector.broadcast %1734 : f32 to vector<16x128xf32>
    %1736 = arith.mulf %1482, %1735 : vector<16x128xf32>
    %1737 = arith.addf %1733, %1736 : vector<16x128xf32>
    %c359 = arith.constant 359 : index
    %1738 = memref.load %arg1[%c359] : memref<700xf32, #tpu.memory_space<smem>>
    %1739 = vector.broadcast %1738 : f32 to vector<16x128xf32>
    %1740 = arith.mulf %1489, %1739 : vector<16x128xf32>
    %1741 = arith.addf %1737, %1740 : vector<16x128xf32>
    %c360 = arith.constant 360 : index
    %1742 = memref.load %arg1[%c360] : memref<700xf32, #tpu.memory_space<smem>>
    %1743 = vector.broadcast %1742 : f32 to vector<16x128xf32>
    %1744 = arith.mulf %1426, %1743 : vector<16x128xf32>
    %c36_155 = arith.constant 36 : index
    %1745 = memref.load %arg2[%c36_155] : memref<70xf32, #tpu.memory_space<smem>>
    %1746 = vector.broadcast %1745 : f32 to vector<16x128xf32>
    %1747 = arith.addf %1744, %1746 : vector<16x128xf32>
    %c361 = arith.constant 361 : index
    %1748 = memref.load %arg1[%c361] : memref<700xf32, #tpu.memory_space<smem>>
    %1749 = vector.broadcast %1748 : f32 to vector<16x128xf32>
    %1750 = arith.mulf %1433, %1749 : vector<16x128xf32>
    %1751 = arith.addf %1747, %1750 : vector<16x128xf32>
    %c362 = arith.constant 362 : index
    %1752 = memref.load %arg1[%c362] : memref<700xf32, #tpu.memory_space<smem>>
    %1753 = vector.broadcast %1752 : f32 to vector<16x128xf32>
    %1754 = arith.mulf %1440, %1753 : vector<16x128xf32>
    %1755 = arith.addf %1751, %1754 : vector<16x128xf32>
    %c363 = arith.constant 363 : index
    %1756 = memref.load %arg1[%c363] : memref<700xf32, #tpu.memory_space<smem>>
    %1757 = vector.broadcast %1756 : f32 to vector<16x128xf32>
    %1758 = arith.mulf %1447, %1757 : vector<16x128xf32>
    %1759 = arith.addf %1755, %1758 : vector<16x128xf32>
    %c364 = arith.constant 364 : index
    %1760 = memref.load %arg1[%c364] : memref<700xf32, #tpu.memory_space<smem>>
    %1761 = vector.broadcast %1760 : f32 to vector<16x128xf32>
    %1762 = arith.mulf %1454, %1761 : vector<16x128xf32>
    %1763 = arith.addf %1759, %1762 : vector<16x128xf32>
    %c365 = arith.constant 365 : index
    %1764 = memref.load %arg1[%c365] : memref<700xf32, #tpu.memory_space<smem>>
    %1765 = vector.broadcast %1764 : f32 to vector<16x128xf32>
    %1766 = arith.mulf %1461, %1765 : vector<16x128xf32>
    %1767 = arith.addf %1763, %1766 : vector<16x128xf32>
    %c366 = arith.constant 366 : index
    %1768 = memref.load %arg1[%c366] : memref<700xf32, #tpu.memory_space<smem>>
    %1769 = vector.broadcast %1768 : f32 to vector<16x128xf32>
    %1770 = arith.mulf %1468, %1769 : vector<16x128xf32>
    %1771 = arith.addf %1767, %1770 : vector<16x128xf32>
    %c367 = arith.constant 367 : index
    %1772 = memref.load %arg1[%c367] : memref<700xf32, #tpu.memory_space<smem>>
    %1773 = vector.broadcast %1772 : f32 to vector<16x128xf32>
    %1774 = arith.mulf %1475, %1773 : vector<16x128xf32>
    %1775 = arith.addf %1771, %1774 : vector<16x128xf32>
    %c368 = arith.constant 368 : index
    %1776 = memref.load %arg1[%c368] : memref<700xf32, #tpu.memory_space<smem>>
    %1777 = vector.broadcast %1776 : f32 to vector<16x128xf32>
    %1778 = arith.mulf %1482, %1777 : vector<16x128xf32>
    %1779 = arith.addf %1775, %1778 : vector<16x128xf32>
    %c369 = arith.constant 369 : index
    %1780 = memref.load %arg1[%c369] : memref<700xf32, #tpu.memory_space<smem>>
    %1781 = vector.broadcast %1780 : f32 to vector<16x128xf32>
    %1782 = arith.mulf %1489, %1781 : vector<16x128xf32>
    %1783 = arith.addf %1779, %1782 : vector<16x128xf32>
    %c370 = arith.constant 370 : index
    %1784 = memref.load %arg1[%c370] : memref<700xf32, #tpu.memory_space<smem>>
    %1785 = vector.broadcast %1784 : f32 to vector<16x128xf32>
    %1786 = arith.mulf %1426, %1785 : vector<16x128xf32>
    %c37_156 = arith.constant 37 : index
    %1787 = memref.load %arg2[%c37_156] : memref<70xf32, #tpu.memory_space<smem>>
    %1788 = vector.broadcast %1787 : f32 to vector<16x128xf32>
    %1789 = arith.addf %1786, %1788 : vector<16x128xf32>
    %c371 = arith.constant 371 : index
    %1790 = memref.load %arg1[%c371] : memref<700xf32, #tpu.memory_space<smem>>
    %1791 = vector.broadcast %1790 : f32 to vector<16x128xf32>
    %1792 = arith.mulf %1433, %1791 : vector<16x128xf32>
    %1793 = arith.addf %1789, %1792 : vector<16x128xf32>
    %c372 = arith.constant 372 : index
    %1794 = memref.load %arg1[%c372] : memref<700xf32, #tpu.memory_space<smem>>
    %1795 = vector.broadcast %1794 : f32 to vector<16x128xf32>
    %1796 = arith.mulf %1440, %1795 : vector<16x128xf32>
    %1797 = arith.addf %1793, %1796 : vector<16x128xf32>
    %c373 = arith.constant 373 : index
    %1798 = memref.load %arg1[%c373] : memref<700xf32, #tpu.memory_space<smem>>
    %1799 = vector.broadcast %1798 : f32 to vector<16x128xf32>
    %1800 = arith.mulf %1447, %1799 : vector<16x128xf32>
    %1801 = arith.addf %1797, %1800 : vector<16x128xf32>
    %c374 = arith.constant 374 : index
    %1802 = memref.load %arg1[%c374] : memref<700xf32, #tpu.memory_space<smem>>
    %1803 = vector.broadcast %1802 : f32 to vector<16x128xf32>
    %1804 = arith.mulf %1454, %1803 : vector<16x128xf32>
    %1805 = arith.addf %1801, %1804 : vector<16x128xf32>
    %c375 = arith.constant 375 : index
    %1806 = memref.load %arg1[%c375] : memref<700xf32, #tpu.memory_space<smem>>
    %1807 = vector.broadcast %1806 : f32 to vector<16x128xf32>
    %1808 = arith.mulf %1461, %1807 : vector<16x128xf32>
    %1809 = arith.addf %1805, %1808 : vector<16x128xf32>
    %c376 = arith.constant 376 : index
    %1810 = memref.load %arg1[%c376] : memref<700xf32, #tpu.memory_space<smem>>
    %1811 = vector.broadcast %1810 : f32 to vector<16x128xf32>
    %1812 = arith.mulf %1468, %1811 : vector<16x128xf32>
    %1813 = arith.addf %1809, %1812 : vector<16x128xf32>
    %c377 = arith.constant 377 : index
    %1814 = memref.load %arg1[%c377] : memref<700xf32, #tpu.memory_space<smem>>
    %1815 = vector.broadcast %1814 : f32 to vector<16x128xf32>
    %1816 = arith.mulf %1475, %1815 : vector<16x128xf32>
    %1817 = arith.addf %1813, %1816 : vector<16x128xf32>
    %c378 = arith.constant 378 : index
    %1818 = memref.load %arg1[%c378] : memref<700xf32, #tpu.memory_space<smem>>
    %1819 = vector.broadcast %1818 : f32 to vector<16x128xf32>
    %1820 = arith.mulf %1482, %1819 : vector<16x128xf32>
    %1821 = arith.addf %1817, %1820 : vector<16x128xf32>
    %c379 = arith.constant 379 : index
    %1822 = memref.load %arg1[%c379] : memref<700xf32, #tpu.memory_space<smem>>
    %1823 = vector.broadcast %1822 : f32 to vector<16x128xf32>
    %1824 = arith.mulf %1489, %1823 : vector<16x128xf32>
    %1825 = arith.addf %1821, %1824 : vector<16x128xf32>
    %c380 = arith.constant 380 : index
    %1826 = memref.load %arg1[%c380] : memref<700xf32, #tpu.memory_space<smem>>
    %1827 = vector.broadcast %1826 : f32 to vector<16x128xf32>
    %1828 = arith.mulf %1426, %1827 : vector<16x128xf32>
    %c38_157 = arith.constant 38 : index
    %1829 = memref.load %arg2[%c38_157] : memref<70xf32, #tpu.memory_space<smem>>
    %1830 = vector.broadcast %1829 : f32 to vector<16x128xf32>
    %1831 = arith.addf %1828, %1830 : vector<16x128xf32>
    %c381 = arith.constant 381 : index
    %1832 = memref.load %arg1[%c381] : memref<700xf32, #tpu.memory_space<smem>>
    %1833 = vector.broadcast %1832 : f32 to vector<16x128xf32>
    %1834 = arith.mulf %1433, %1833 : vector<16x128xf32>
    %1835 = arith.addf %1831, %1834 : vector<16x128xf32>
    %c382 = arith.constant 382 : index
    %1836 = memref.load %arg1[%c382] : memref<700xf32, #tpu.memory_space<smem>>
    %1837 = vector.broadcast %1836 : f32 to vector<16x128xf32>
    %1838 = arith.mulf %1440, %1837 : vector<16x128xf32>
    %1839 = arith.addf %1835, %1838 : vector<16x128xf32>
    %c383 = arith.constant 383 : index
    %1840 = memref.load %arg1[%c383] : memref<700xf32, #tpu.memory_space<smem>>
    %1841 = vector.broadcast %1840 : f32 to vector<16x128xf32>
    %1842 = arith.mulf %1447, %1841 : vector<16x128xf32>
    %1843 = arith.addf %1839, %1842 : vector<16x128xf32>
    %c384 = arith.constant 384 : index
    %1844 = memref.load %arg1[%c384] : memref<700xf32, #tpu.memory_space<smem>>
    %1845 = vector.broadcast %1844 : f32 to vector<16x128xf32>
    %1846 = arith.mulf %1454, %1845 : vector<16x128xf32>
    %1847 = arith.addf %1843, %1846 : vector<16x128xf32>
    %c385 = arith.constant 385 : index
    %1848 = memref.load %arg1[%c385] : memref<700xf32, #tpu.memory_space<smem>>
    %1849 = vector.broadcast %1848 : f32 to vector<16x128xf32>
    %1850 = arith.mulf %1461, %1849 : vector<16x128xf32>
    %1851 = arith.addf %1847, %1850 : vector<16x128xf32>
    %c386 = arith.constant 386 : index
    %1852 = memref.load %arg1[%c386] : memref<700xf32, #tpu.memory_space<smem>>
    %1853 = vector.broadcast %1852 : f32 to vector<16x128xf32>
    %1854 = arith.mulf %1468, %1853 : vector<16x128xf32>
    %1855 = arith.addf %1851, %1854 : vector<16x128xf32>
    %c387 = arith.constant 387 : index
    %1856 = memref.load %arg1[%c387] : memref<700xf32, #tpu.memory_space<smem>>
    %1857 = vector.broadcast %1856 : f32 to vector<16x128xf32>
    %1858 = arith.mulf %1475, %1857 : vector<16x128xf32>
    %1859 = arith.addf %1855, %1858 : vector<16x128xf32>
    %c388 = arith.constant 388 : index
    %1860 = memref.load %arg1[%c388] : memref<700xf32, #tpu.memory_space<smem>>
    %1861 = vector.broadcast %1860 : f32 to vector<16x128xf32>
    %1862 = arith.mulf %1482, %1861 : vector<16x128xf32>
    %1863 = arith.addf %1859, %1862 : vector<16x128xf32>
    %c389 = arith.constant 389 : index
    %1864 = memref.load %arg1[%c389] : memref<700xf32, #tpu.memory_space<smem>>
    %1865 = vector.broadcast %1864 : f32 to vector<16x128xf32>
    %1866 = arith.mulf %1489, %1865 : vector<16x128xf32>
    %1867 = arith.addf %1863, %1866 : vector<16x128xf32>
    %c390 = arith.constant 390 : index
    %1868 = memref.load %arg1[%c390] : memref<700xf32, #tpu.memory_space<smem>>
    %1869 = vector.broadcast %1868 : f32 to vector<16x128xf32>
    %1870 = arith.mulf %1426, %1869 : vector<16x128xf32>
    %c39_158 = arith.constant 39 : index
    %1871 = memref.load %arg2[%c39_158] : memref<70xf32, #tpu.memory_space<smem>>
    %1872 = vector.broadcast %1871 : f32 to vector<16x128xf32>
    %1873 = arith.addf %1870, %1872 : vector<16x128xf32>
    %c391 = arith.constant 391 : index
    %1874 = memref.load %arg1[%c391] : memref<700xf32, #tpu.memory_space<smem>>
    %1875 = vector.broadcast %1874 : f32 to vector<16x128xf32>
    %1876 = arith.mulf %1433, %1875 : vector<16x128xf32>
    %1877 = arith.addf %1873, %1876 : vector<16x128xf32>
    %c392 = arith.constant 392 : index
    %1878 = memref.load %arg1[%c392] : memref<700xf32, #tpu.memory_space<smem>>
    %1879 = vector.broadcast %1878 : f32 to vector<16x128xf32>
    %1880 = arith.mulf %1440, %1879 : vector<16x128xf32>
    %1881 = arith.addf %1877, %1880 : vector<16x128xf32>
    %c393 = arith.constant 393 : index
    %1882 = memref.load %arg1[%c393] : memref<700xf32, #tpu.memory_space<smem>>
    %1883 = vector.broadcast %1882 : f32 to vector<16x128xf32>
    %1884 = arith.mulf %1447, %1883 : vector<16x128xf32>
    %1885 = arith.addf %1881, %1884 : vector<16x128xf32>
    %c394 = arith.constant 394 : index
    %1886 = memref.load %arg1[%c394] : memref<700xf32, #tpu.memory_space<smem>>
    %1887 = vector.broadcast %1886 : f32 to vector<16x128xf32>
    %1888 = arith.mulf %1454, %1887 : vector<16x128xf32>
    %1889 = arith.addf %1885, %1888 : vector<16x128xf32>
    %c395 = arith.constant 395 : index
    %1890 = memref.load %arg1[%c395] : memref<700xf32, #tpu.memory_space<smem>>
    %1891 = vector.broadcast %1890 : f32 to vector<16x128xf32>
    %1892 = arith.mulf %1461, %1891 : vector<16x128xf32>
    %1893 = arith.addf %1889, %1892 : vector<16x128xf32>
    %c396 = arith.constant 396 : index
    %1894 = memref.load %arg1[%c396] : memref<700xf32, #tpu.memory_space<smem>>
    %1895 = vector.broadcast %1894 : f32 to vector<16x128xf32>
    %1896 = arith.mulf %1468, %1895 : vector<16x128xf32>
    %1897 = arith.addf %1893, %1896 : vector<16x128xf32>
    %c397 = arith.constant 397 : index
    %1898 = memref.load %arg1[%c397] : memref<700xf32, #tpu.memory_space<smem>>
    %1899 = vector.broadcast %1898 : f32 to vector<16x128xf32>
    %1900 = arith.mulf %1475, %1899 : vector<16x128xf32>
    %1901 = arith.addf %1897, %1900 : vector<16x128xf32>
    %c398 = arith.constant 398 : index
    %1902 = memref.load %arg1[%c398] : memref<700xf32, #tpu.memory_space<smem>>
    %1903 = vector.broadcast %1902 : f32 to vector<16x128xf32>
    %1904 = arith.mulf %1482, %1903 : vector<16x128xf32>
    %1905 = arith.addf %1901, %1904 : vector<16x128xf32>
    %c399 = arith.constant 399 : index
    %1906 = memref.load %arg1[%c399] : memref<700xf32, #tpu.memory_space<smem>>
    %1907 = vector.broadcast %1906 : f32 to vector<16x128xf32>
    %1908 = arith.mulf %1489, %1907 : vector<16x128xf32>
    %1909 = arith.addf %1905, %1908 : vector<16x128xf32>
    %cst_159 = arith.constant 5.000000e-01 : f32
    %1910 = vector.broadcast %cst_159 : f32 to vector<16x128xf32>
    %1911 = arith.mulf %1910, %1531 : vector<16x128xf32>
    %1912 = math.tanh %1911 : vector<16x128xf32>
    %cst_160 = arith.constant 5.000000e-01 : f32
    %1913 = vector.broadcast %cst_160 : f32 to vector<16x128xf32>
    %1914 = arith.mulf %1913, %1912 : vector<16x128xf32>
    %cst_161 = arith.constant 5.000000e-01 : f32
    %1915 = vector.broadcast %cst_161 : f32 to vector<16x128xf32>
    %1916 = arith.addf %1914, %1915 : vector<16x128xf32>
    %cst_162 = arith.constant 5.000000e-01 : f32
    %1917 = vector.broadcast %cst_162 : f32 to vector<16x128xf32>
    %1918 = arith.mulf %1917, %1573 : vector<16x128xf32>
    %1919 = math.tanh %1918 : vector<16x128xf32>
    %cst_163 = arith.constant 5.000000e-01 : f32
    %1920 = vector.broadcast %cst_163 : f32 to vector<16x128xf32>
    %1921 = arith.mulf %1920, %1919 : vector<16x128xf32>
    %cst_164 = arith.constant 5.000000e-01 : f32
    %1922 = vector.broadcast %cst_164 : f32 to vector<16x128xf32>
    %1923 = arith.addf %1921, %1922 : vector<16x128xf32>
    %cst_165 = arith.constant 5.000000e-01 : f32
    %1924 = vector.broadcast %cst_165 : f32 to vector<16x128xf32>
    %1925 = arith.mulf %1924, %1615 : vector<16x128xf32>
    %1926 = math.tanh %1925 : vector<16x128xf32>
    %cst_166 = arith.constant 5.000000e-01 : f32
    %1927 = vector.broadcast %cst_166 : f32 to vector<16x128xf32>
    %1928 = arith.mulf %1927, %1926 : vector<16x128xf32>
    %cst_167 = arith.constant 5.000000e-01 : f32
    %1929 = vector.broadcast %cst_167 : f32 to vector<16x128xf32>
    %1930 = arith.addf %1928, %1929 : vector<16x128xf32>
    %cst_168 = arith.constant 5.000000e-01 : f32
    %1931 = vector.broadcast %cst_168 : f32 to vector<16x128xf32>
    %1932 = arith.mulf %1931, %1657 : vector<16x128xf32>
    %1933 = math.tanh %1932 : vector<16x128xf32>
    %cst_169 = arith.constant 5.000000e-01 : f32
    %1934 = vector.broadcast %cst_169 : f32 to vector<16x128xf32>
    %1935 = arith.mulf %1934, %1933 : vector<16x128xf32>
    %cst_170 = arith.constant 5.000000e-01 : f32
    %1936 = vector.broadcast %cst_170 : f32 to vector<16x128xf32>
    %1937 = arith.addf %1935, %1936 : vector<16x128xf32>
    %cst_171 = arith.constant 5.000000e-01 : f32
    %1938 = vector.broadcast %cst_171 : f32 to vector<16x128xf32>
    %1939 = arith.mulf %1938, %1699 : vector<16x128xf32>
    %1940 = math.tanh %1939 : vector<16x128xf32>
    %cst_172 = arith.constant 5.000000e-01 : f32
    %1941 = vector.broadcast %cst_172 : f32 to vector<16x128xf32>
    %1942 = arith.mulf %1941, %1940 : vector<16x128xf32>
    %cst_173 = arith.constant 5.000000e-01 : f32
    %1943 = vector.broadcast %cst_173 : f32 to vector<16x128xf32>
    %1944 = arith.addf %1942, %1943 : vector<16x128xf32>
    %cst_174 = arith.constant 5.000000e-01 : f32
    %1945 = vector.broadcast %cst_174 : f32 to vector<16x128xf32>
    %1946 = arith.mulf %1945, %1741 : vector<16x128xf32>
    %1947 = math.tanh %1946 : vector<16x128xf32>
    %cst_175 = arith.constant 5.000000e-01 : f32
    %1948 = vector.broadcast %cst_175 : f32 to vector<16x128xf32>
    %1949 = arith.mulf %1948, %1947 : vector<16x128xf32>
    %cst_176 = arith.constant 5.000000e-01 : f32
    %1950 = vector.broadcast %cst_176 : f32 to vector<16x128xf32>
    %1951 = arith.addf %1949, %1950 : vector<16x128xf32>
    %cst_177 = arith.constant 5.000000e-01 : f32
    %1952 = vector.broadcast %cst_177 : f32 to vector<16x128xf32>
    %1953 = arith.mulf %1952, %1783 : vector<16x128xf32>
    %1954 = math.tanh %1953 : vector<16x128xf32>
    %cst_178 = arith.constant 5.000000e-01 : f32
    %1955 = vector.broadcast %cst_178 : f32 to vector<16x128xf32>
    %1956 = arith.mulf %1955, %1954 : vector<16x128xf32>
    %cst_179 = arith.constant 5.000000e-01 : f32
    %1957 = vector.broadcast %cst_179 : f32 to vector<16x128xf32>
    %1958 = arith.addf %1956, %1957 : vector<16x128xf32>
    %cst_180 = arith.constant 5.000000e-01 : f32
    %1959 = vector.broadcast %cst_180 : f32 to vector<16x128xf32>
    %1960 = arith.mulf %1959, %1825 : vector<16x128xf32>
    %1961 = math.tanh %1960 : vector<16x128xf32>
    %cst_181 = arith.constant 5.000000e-01 : f32
    %1962 = vector.broadcast %cst_181 : f32 to vector<16x128xf32>
    %1963 = arith.mulf %1962, %1961 : vector<16x128xf32>
    %cst_182 = arith.constant 5.000000e-01 : f32
    %1964 = vector.broadcast %cst_182 : f32 to vector<16x128xf32>
    %1965 = arith.addf %1963, %1964 : vector<16x128xf32>
    %cst_183 = arith.constant 5.000000e-01 : f32
    %1966 = vector.broadcast %cst_183 : f32 to vector<16x128xf32>
    %1967 = arith.mulf %1966, %1867 : vector<16x128xf32>
    %1968 = math.tanh %1967 : vector<16x128xf32>
    %cst_184 = arith.constant 5.000000e-01 : f32
    %1969 = vector.broadcast %cst_184 : f32 to vector<16x128xf32>
    %1970 = arith.mulf %1969, %1968 : vector<16x128xf32>
    %cst_185 = arith.constant 5.000000e-01 : f32
    %1971 = vector.broadcast %cst_185 : f32 to vector<16x128xf32>
    %1972 = arith.addf %1970, %1971 : vector<16x128xf32>
    %cst_186 = arith.constant 5.000000e-01 : f32
    %1973 = vector.broadcast %cst_186 : f32 to vector<16x128xf32>
    %1974 = arith.mulf %1973, %1909 : vector<16x128xf32>
    %1975 = math.tanh %1974 : vector<16x128xf32>
    %cst_187 = arith.constant 5.000000e-01 : f32
    %1976 = vector.broadcast %cst_187 : f32 to vector<16x128xf32>
    %1977 = arith.mulf %1976, %1975 : vector<16x128xf32>
    %cst_188 = arith.constant 5.000000e-01 : f32
    %1978 = vector.broadcast %cst_188 : f32 to vector<16x128xf32>
    %1979 = arith.addf %1977, %1978 : vector<16x128xf32>
    %c400 = arith.constant 400 : index
    %1980 = memref.load %arg1[%c400] : memref<700xf32, #tpu.memory_space<smem>>
    %1981 = vector.broadcast %1980 : f32 to vector<16x128xf32>
    %1982 = arith.mulf %1916, %1981 : vector<16x128xf32>
    %c40_189 = arith.constant 40 : index
    %1983 = memref.load %arg2[%c40_189] : memref<70xf32, #tpu.memory_space<smem>>
    %1984 = vector.broadcast %1983 : f32 to vector<16x128xf32>
    %1985 = arith.addf %1982, %1984 : vector<16x128xf32>
    %c401 = arith.constant 401 : index
    %1986 = memref.load %arg1[%c401] : memref<700xf32, #tpu.memory_space<smem>>
    %1987 = vector.broadcast %1986 : f32 to vector<16x128xf32>
    %1988 = arith.mulf %1923, %1987 : vector<16x128xf32>
    %1989 = arith.addf %1985, %1988 : vector<16x128xf32>
    %c402 = arith.constant 402 : index
    %1990 = memref.load %arg1[%c402] : memref<700xf32, #tpu.memory_space<smem>>
    %1991 = vector.broadcast %1990 : f32 to vector<16x128xf32>
    %1992 = arith.mulf %1930, %1991 : vector<16x128xf32>
    %1993 = arith.addf %1989, %1992 : vector<16x128xf32>
    %c403 = arith.constant 403 : index
    %1994 = memref.load %arg1[%c403] : memref<700xf32, #tpu.memory_space<smem>>
    %1995 = vector.broadcast %1994 : f32 to vector<16x128xf32>
    %1996 = arith.mulf %1937, %1995 : vector<16x128xf32>
    %1997 = arith.addf %1993, %1996 : vector<16x128xf32>
    %c404 = arith.constant 404 : index
    %1998 = memref.load %arg1[%c404] : memref<700xf32, #tpu.memory_space<smem>>
    %1999 = vector.broadcast %1998 : f32 to vector<16x128xf32>
    %2000 = arith.mulf %1944, %1999 : vector<16x128xf32>
    %2001 = arith.addf %1997, %2000 : vector<16x128xf32>
    %c405 = arith.constant 405 : index
    %2002 = memref.load %arg1[%c405] : memref<700xf32, #tpu.memory_space<smem>>
    %2003 = vector.broadcast %2002 : f32 to vector<16x128xf32>
    %2004 = arith.mulf %1951, %2003 : vector<16x128xf32>
    %2005 = arith.addf %2001, %2004 : vector<16x128xf32>
    %c406 = arith.constant 406 : index
    %2006 = memref.load %arg1[%c406] : memref<700xf32, #tpu.memory_space<smem>>
    %2007 = vector.broadcast %2006 : f32 to vector<16x128xf32>
    %2008 = arith.mulf %1958, %2007 : vector<16x128xf32>
    %2009 = arith.addf %2005, %2008 : vector<16x128xf32>
    %c407 = arith.constant 407 : index
    %2010 = memref.load %arg1[%c407] : memref<700xf32, #tpu.memory_space<smem>>
    %2011 = vector.broadcast %2010 : f32 to vector<16x128xf32>
    %2012 = arith.mulf %1965, %2011 : vector<16x128xf32>
    %2013 = arith.addf %2009, %2012 : vector<16x128xf32>
    %c408 = arith.constant 408 : index
    %2014 = memref.load %arg1[%c408] : memref<700xf32, #tpu.memory_space<smem>>
    %2015 = vector.broadcast %2014 : f32 to vector<16x128xf32>
    %2016 = arith.mulf %1972, %2015 : vector<16x128xf32>
    %2017 = arith.addf %2013, %2016 : vector<16x128xf32>
    %c409 = arith.constant 409 : index
    %2018 = memref.load %arg1[%c409] : memref<700xf32, #tpu.memory_space<smem>>
    %2019 = vector.broadcast %2018 : f32 to vector<16x128xf32>
    %2020 = arith.mulf %1979, %2019 : vector<16x128xf32>
    %2021 = arith.addf %2017, %2020 : vector<16x128xf32>
    %c410 = arith.constant 410 : index
    %2022 = memref.load %arg1[%c410] : memref<700xf32, #tpu.memory_space<smem>>
    %2023 = vector.broadcast %2022 : f32 to vector<16x128xf32>
    %2024 = arith.mulf %1916, %2023 : vector<16x128xf32>
    %c41_190 = arith.constant 41 : index
    %2025 = memref.load %arg2[%c41_190] : memref<70xf32, #tpu.memory_space<smem>>
    %2026 = vector.broadcast %2025 : f32 to vector<16x128xf32>
    %2027 = arith.addf %2024, %2026 : vector<16x128xf32>
    %c411 = arith.constant 411 : index
    %2028 = memref.load %arg1[%c411] : memref<700xf32, #tpu.memory_space<smem>>
    %2029 = vector.broadcast %2028 : f32 to vector<16x128xf32>
    %2030 = arith.mulf %1923, %2029 : vector<16x128xf32>
    %2031 = arith.addf %2027, %2030 : vector<16x128xf32>
    %c412 = arith.constant 412 : index
    %2032 = memref.load %arg1[%c412] : memref<700xf32, #tpu.memory_space<smem>>
    %2033 = vector.broadcast %2032 : f32 to vector<16x128xf32>
    %2034 = arith.mulf %1930, %2033 : vector<16x128xf32>
    %2035 = arith.addf %2031, %2034 : vector<16x128xf32>
    %c413 = arith.constant 413 : index
    %2036 = memref.load %arg1[%c413] : memref<700xf32, #tpu.memory_space<smem>>
    %2037 = vector.broadcast %2036 : f32 to vector<16x128xf32>
    %2038 = arith.mulf %1937, %2037 : vector<16x128xf32>
    %2039 = arith.addf %2035, %2038 : vector<16x128xf32>
    %c414 = arith.constant 414 : index
    %2040 = memref.load %arg1[%c414] : memref<700xf32, #tpu.memory_space<smem>>
    %2041 = vector.broadcast %2040 : f32 to vector<16x128xf32>
    %2042 = arith.mulf %1944, %2041 : vector<16x128xf32>
    %2043 = arith.addf %2039, %2042 : vector<16x128xf32>
    %c415 = arith.constant 415 : index
    %2044 = memref.load %arg1[%c415] : memref<700xf32, #tpu.memory_space<smem>>
    %2045 = vector.broadcast %2044 : f32 to vector<16x128xf32>
    %2046 = arith.mulf %1951, %2045 : vector<16x128xf32>
    %2047 = arith.addf %2043, %2046 : vector<16x128xf32>
    %c416 = arith.constant 416 : index
    %2048 = memref.load %arg1[%c416] : memref<700xf32, #tpu.memory_space<smem>>
    %2049 = vector.broadcast %2048 : f32 to vector<16x128xf32>
    %2050 = arith.mulf %1958, %2049 : vector<16x128xf32>
    %2051 = arith.addf %2047, %2050 : vector<16x128xf32>
    %c417 = arith.constant 417 : index
    %2052 = memref.load %arg1[%c417] : memref<700xf32, #tpu.memory_space<smem>>
    %2053 = vector.broadcast %2052 : f32 to vector<16x128xf32>
    %2054 = arith.mulf %1965, %2053 : vector<16x128xf32>
    %2055 = arith.addf %2051, %2054 : vector<16x128xf32>
    %c418 = arith.constant 418 : index
    %2056 = memref.load %arg1[%c418] : memref<700xf32, #tpu.memory_space<smem>>
    %2057 = vector.broadcast %2056 : f32 to vector<16x128xf32>
    %2058 = arith.mulf %1972, %2057 : vector<16x128xf32>
    %2059 = arith.addf %2055, %2058 : vector<16x128xf32>
    %c419 = arith.constant 419 : index
    %2060 = memref.load %arg1[%c419] : memref<700xf32, #tpu.memory_space<smem>>
    %2061 = vector.broadcast %2060 : f32 to vector<16x128xf32>
    %2062 = arith.mulf %1979, %2061 : vector<16x128xf32>
    %2063 = arith.addf %2059, %2062 : vector<16x128xf32>
    %c420 = arith.constant 420 : index
    %2064 = memref.load %arg1[%c420] : memref<700xf32, #tpu.memory_space<smem>>
    %2065 = vector.broadcast %2064 : f32 to vector<16x128xf32>
    %2066 = arith.mulf %1916, %2065 : vector<16x128xf32>
    %c42_191 = arith.constant 42 : index
    %2067 = memref.load %arg2[%c42_191] : memref<70xf32, #tpu.memory_space<smem>>
    %2068 = vector.broadcast %2067 : f32 to vector<16x128xf32>
    %2069 = arith.addf %2066, %2068 : vector<16x128xf32>
    %c421 = arith.constant 421 : index
    %2070 = memref.load %arg1[%c421] : memref<700xf32, #tpu.memory_space<smem>>
    %2071 = vector.broadcast %2070 : f32 to vector<16x128xf32>
    %2072 = arith.mulf %1923, %2071 : vector<16x128xf32>
    %2073 = arith.addf %2069, %2072 : vector<16x128xf32>
    %c422 = arith.constant 422 : index
    %2074 = memref.load %arg1[%c422] : memref<700xf32, #tpu.memory_space<smem>>
    %2075 = vector.broadcast %2074 : f32 to vector<16x128xf32>
    %2076 = arith.mulf %1930, %2075 : vector<16x128xf32>
    %2077 = arith.addf %2073, %2076 : vector<16x128xf32>
    %c423 = arith.constant 423 : index
    %2078 = memref.load %arg1[%c423] : memref<700xf32, #tpu.memory_space<smem>>
    %2079 = vector.broadcast %2078 : f32 to vector<16x128xf32>
    %2080 = arith.mulf %1937, %2079 : vector<16x128xf32>
    %2081 = arith.addf %2077, %2080 : vector<16x128xf32>
    %c424 = arith.constant 424 : index
    %2082 = memref.load %arg1[%c424] : memref<700xf32, #tpu.memory_space<smem>>
    %2083 = vector.broadcast %2082 : f32 to vector<16x128xf32>
    %2084 = arith.mulf %1944, %2083 : vector<16x128xf32>
    %2085 = arith.addf %2081, %2084 : vector<16x128xf32>
    %c425 = arith.constant 425 : index
    %2086 = memref.load %arg1[%c425] : memref<700xf32, #tpu.memory_space<smem>>
    %2087 = vector.broadcast %2086 : f32 to vector<16x128xf32>
    %2088 = arith.mulf %1951, %2087 : vector<16x128xf32>
    %2089 = arith.addf %2085, %2088 : vector<16x128xf32>
    %c426 = arith.constant 426 : index
    %2090 = memref.load %arg1[%c426] : memref<700xf32, #tpu.memory_space<smem>>
    %2091 = vector.broadcast %2090 : f32 to vector<16x128xf32>
    %2092 = arith.mulf %1958, %2091 : vector<16x128xf32>
    %2093 = arith.addf %2089, %2092 : vector<16x128xf32>
    %c427 = arith.constant 427 : index
    %2094 = memref.load %arg1[%c427] : memref<700xf32, #tpu.memory_space<smem>>
    %2095 = vector.broadcast %2094 : f32 to vector<16x128xf32>
    %2096 = arith.mulf %1965, %2095 : vector<16x128xf32>
    %2097 = arith.addf %2093, %2096 : vector<16x128xf32>
    %c428 = arith.constant 428 : index
    %2098 = memref.load %arg1[%c428] : memref<700xf32, #tpu.memory_space<smem>>
    %2099 = vector.broadcast %2098 : f32 to vector<16x128xf32>
    %2100 = arith.mulf %1972, %2099 : vector<16x128xf32>
    %2101 = arith.addf %2097, %2100 : vector<16x128xf32>
    %c429 = arith.constant 429 : index
    %2102 = memref.load %arg1[%c429] : memref<700xf32, #tpu.memory_space<smem>>
    %2103 = vector.broadcast %2102 : f32 to vector<16x128xf32>
    %2104 = arith.mulf %1979, %2103 : vector<16x128xf32>
    %2105 = arith.addf %2101, %2104 : vector<16x128xf32>
    %c430 = arith.constant 430 : index
    %2106 = memref.load %arg1[%c430] : memref<700xf32, #tpu.memory_space<smem>>
    %2107 = vector.broadcast %2106 : f32 to vector<16x128xf32>
    %2108 = arith.mulf %1916, %2107 : vector<16x128xf32>
    %c43_192 = arith.constant 43 : index
    %2109 = memref.load %arg2[%c43_192] : memref<70xf32, #tpu.memory_space<smem>>
    %2110 = vector.broadcast %2109 : f32 to vector<16x128xf32>
    %2111 = arith.addf %2108, %2110 : vector<16x128xf32>
    %c431 = arith.constant 431 : index
    %2112 = memref.load %arg1[%c431] : memref<700xf32, #tpu.memory_space<smem>>
    %2113 = vector.broadcast %2112 : f32 to vector<16x128xf32>
    %2114 = arith.mulf %1923, %2113 : vector<16x128xf32>
    %2115 = arith.addf %2111, %2114 : vector<16x128xf32>
    %c432 = arith.constant 432 : index
    %2116 = memref.load %arg1[%c432] : memref<700xf32, #tpu.memory_space<smem>>
    %2117 = vector.broadcast %2116 : f32 to vector<16x128xf32>
    %2118 = arith.mulf %1930, %2117 : vector<16x128xf32>
    %2119 = arith.addf %2115, %2118 : vector<16x128xf32>
    %c433 = arith.constant 433 : index
    %2120 = memref.load %arg1[%c433] : memref<700xf32, #tpu.memory_space<smem>>
    %2121 = vector.broadcast %2120 : f32 to vector<16x128xf32>
    %2122 = arith.mulf %1937, %2121 : vector<16x128xf32>
    %2123 = arith.addf %2119, %2122 : vector<16x128xf32>
    %c434 = arith.constant 434 : index
    %2124 = memref.load %arg1[%c434] : memref<700xf32, #tpu.memory_space<smem>>
    %2125 = vector.broadcast %2124 : f32 to vector<16x128xf32>
    %2126 = arith.mulf %1944, %2125 : vector<16x128xf32>
    %2127 = arith.addf %2123, %2126 : vector<16x128xf32>
    %c435 = arith.constant 435 : index
    %2128 = memref.load %arg1[%c435] : memref<700xf32, #tpu.memory_space<smem>>
    %2129 = vector.broadcast %2128 : f32 to vector<16x128xf32>
    %2130 = arith.mulf %1951, %2129 : vector<16x128xf32>
    %2131 = arith.addf %2127, %2130 : vector<16x128xf32>
    %c436 = arith.constant 436 : index
    %2132 = memref.load %arg1[%c436] : memref<700xf32, #tpu.memory_space<smem>>
    %2133 = vector.broadcast %2132 : f32 to vector<16x128xf32>
    %2134 = arith.mulf %1958, %2133 : vector<16x128xf32>
    %2135 = arith.addf %2131, %2134 : vector<16x128xf32>
    %c437 = arith.constant 437 : index
    %2136 = memref.load %arg1[%c437] : memref<700xf32, #tpu.memory_space<smem>>
    %2137 = vector.broadcast %2136 : f32 to vector<16x128xf32>
    %2138 = arith.mulf %1965, %2137 : vector<16x128xf32>
    %2139 = arith.addf %2135, %2138 : vector<16x128xf32>
    %c438 = arith.constant 438 : index
    %2140 = memref.load %arg1[%c438] : memref<700xf32, #tpu.memory_space<smem>>
    %2141 = vector.broadcast %2140 : f32 to vector<16x128xf32>
    %2142 = arith.mulf %1972, %2141 : vector<16x128xf32>
    %2143 = arith.addf %2139, %2142 : vector<16x128xf32>
    %c439 = arith.constant 439 : index
    %2144 = memref.load %arg1[%c439] : memref<700xf32, #tpu.memory_space<smem>>
    %2145 = vector.broadcast %2144 : f32 to vector<16x128xf32>
    %2146 = arith.mulf %1979, %2145 : vector<16x128xf32>
    %2147 = arith.addf %2143, %2146 : vector<16x128xf32>
    %c440 = arith.constant 440 : index
    %2148 = memref.load %arg1[%c440] : memref<700xf32, #tpu.memory_space<smem>>
    %2149 = vector.broadcast %2148 : f32 to vector<16x128xf32>
    %2150 = arith.mulf %1916, %2149 : vector<16x128xf32>
    %c44_193 = arith.constant 44 : index
    %2151 = memref.load %arg2[%c44_193] : memref<70xf32, #tpu.memory_space<smem>>
    %2152 = vector.broadcast %2151 : f32 to vector<16x128xf32>
    %2153 = arith.addf %2150, %2152 : vector<16x128xf32>
    %c441 = arith.constant 441 : index
    %2154 = memref.load %arg1[%c441] : memref<700xf32, #tpu.memory_space<smem>>
    %2155 = vector.broadcast %2154 : f32 to vector<16x128xf32>
    %2156 = arith.mulf %1923, %2155 : vector<16x128xf32>
    %2157 = arith.addf %2153, %2156 : vector<16x128xf32>
    %c442 = arith.constant 442 : index
    %2158 = memref.load %arg1[%c442] : memref<700xf32, #tpu.memory_space<smem>>
    %2159 = vector.broadcast %2158 : f32 to vector<16x128xf32>
    %2160 = arith.mulf %1930, %2159 : vector<16x128xf32>
    %2161 = arith.addf %2157, %2160 : vector<16x128xf32>
    %c443 = arith.constant 443 : index
    %2162 = memref.load %arg1[%c443] : memref<700xf32, #tpu.memory_space<smem>>
    %2163 = vector.broadcast %2162 : f32 to vector<16x128xf32>
    %2164 = arith.mulf %1937, %2163 : vector<16x128xf32>
    %2165 = arith.addf %2161, %2164 : vector<16x128xf32>
    %c444 = arith.constant 444 : index
    %2166 = memref.load %arg1[%c444] : memref<700xf32, #tpu.memory_space<smem>>
    %2167 = vector.broadcast %2166 : f32 to vector<16x128xf32>
    %2168 = arith.mulf %1944, %2167 : vector<16x128xf32>
    %2169 = arith.addf %2165, %2168 : vector<16x128xf32>
    %c445 = arith.constant 445 : index
    %2170 = memref.load %arg1[%c445] : memref<700xf32, #tpu.memory_space<smem>>
    %2171 = vector.broadcast %2170 : f32 to vector<16x128xf32>
    %2172 = arith.mulf %1951, %2171 : vector<16x128xf32>
    %2173 = arith.addf %2169, %2172 : vector<16x128xf32>
    %c446 = arith.constant 446 : index
    %2174 = memref.load %arg1[%c446] : memref<700xf32, #tpu.memory_space<smem>>
    %2175 = vector.broadcast %2174 : f32 to vector<16x128xf32>
    %2176 = arith.mulf %1958, %2175 : vector<16x128xf32>
    %2177 = arith.addf %2173, %2176 : vector<16x128xf32>
    %c447 = arith.constant 447 : index
    %2178 = memref.load %arg1[%c447] : memref<700xf32, #tpu.memory_space<smem>>
    %2179 = vector.broadcast %2178 : f32 to vector<16x128xf32>
    %2180 = arith.mulf %1965, %2179 : vector<16x128xf32>
    %2181 = arith.addf %2177, %2180 : vector<16x128xf32>
    %c448 = arith.constant 448 : index
    %2182 = memref.load %arg1[%c448] : memref<700xf32, #tpu.memory_space<smem>>
    %2183 = vector.broadcast %2182 : f32 to vector<16x128xf32>
    %2184 = arith.mulf %1972, %2183 : vector<16x128xf32>
    %2185 = arith.addf %2181, %2184 : vector<16x128xf32>
    %c449 = arith.constant 449 : index
    %2186 = memref.load %arg1[%c449] : memref<700xf32, #tpu.memory_space<smem>>
    %2187 = vector.broadcast %2186 : f32 to vector<16x128xf32>
    %2188 = arith.mulf %1979, %2187 : vector<16x128xf32>
    %2189 = arith.addf %2185, %2188 : vector<16x128xf32>
    %c450 = arith.constant 450 : index
    %2190 = memref.load %arg1[%c450] : memref<700xf32, #tpu.memory_space<smem>>
    %2191 = vector.broadcast %2190 : f32 to vector<16x128xf32>
    %2192 = arith.mulf %1916, %2191 : vector<16x128xf32>
    %c45_194 = arith.constant 45 : index
    %2193 = memref.load %arg2[%c45_194] : memref<70xf32, #tpu.memory_space<smem>>
    %2194 = vector.broadcast %2193 : f32 to vector<16x128xf32>
    %2195 = arith.addf %2192, %2194 : vector<16x128xf32>
    %c451 = arith.constant 451 : index
    %2196 = memref.load %arg1[%c451] : memref<700xf32, #tpu.memory_space<smem>>
    %2197 = vector.broadcast %2196 : f32 to vector<16x128xf32>
    %2198 = arith.mulf %1923, %2197 : vector<16x128xf32>
    %2199 = arith.addf %2195, %2198 : vector<16x128xf32>
    %c452 = arith.constant 452 : index
    %2200 = memref.load %arg1[%c452] : memref<700xf32, #tpu.memory_space<smem>>
    %2201 = vector.broadcast %2200 : f32 to vector<16x128xf32>
    %2202 = arith.mulf %1930, %2201 : vector<16x128xf32>
    %2203 = arith.addf %2199, %2202 : vector<16x128xf32>
    %c453 = arith.constant 453 : index
    %2204 = memref.load %arg1[%c453] : memref<700xf32, #tpu.memory_space<smem>>
    %2205 = vector.broadcast %2204 : f32 to vector<16x128xf32>
    %2206 = arith.mulf %1937, %2205 : vector<16x128xf32>
    %2207 = arith.addf %2203, %2206 : vector<16x128xf32>
    %c454 = arith.constant 454 : index
    %2208 = memref.load %arg1[%c454] : memref<700xf32, #tpu.memory_space<smem>>
    %2209 = vector.broadcast %2208 : f32 to vector<16x128xf32>
    %2210 = arith.mulf %1944, %2209 : vector<16x128xf32>
    %2211 = arith.addf %2207, %2210 : vector<16x128xf32>
    %c455 = arith.constant 455 : index
    %2212 = memref.load %arg1[%c455] : memref<700xf32, #tpu.memory_space<smem>>
    %2213 = vector.broadcast %2212 : f32 to vector<16x128xf32>
    %2214 = arith.mulf %1951, %2213 : vector<16x128xf32>
    %2215 = arith.addf %2211, %2214 : vector<16x128xf32>
    %c456 = arith.constant 456 : index
    %2216 = memref.load %arg1[%c456] : memref<700xf32, #tpu.memory_space<smem>>
    %2217 = vector.broadcast %2216 : f32 to vector<16x128xf32>
    %2218 = arith.mulf %1958, %2217 : vector<16x128xf32>
    %2219 = arith.addf %2215, %2218 : vector<16x128xf32>
    %c457 = arith.constant 457 : index
    %2220 = memref.load %arg1[%c457] : memref<700xf32, #tpu.memory_space<smem>>
    %2221 = vector.broadcast %2220 : f32 to vector<16x128xf32>
    %2222 = arith.mulf %1965, %2221 : vector<16x128xf32>
    %2223 = arith.addf %2219, %2222 : vector<16x128xf32>
    %c458 = arith.constant 458 : index
    %2224 = memref.load %arg1[%c458] : memref<700xf32, #tpu.memory_space<smem>>
    %2225 = vector.broadcast %2224 : f32 to vector<16x128xf32>
    %2226 = arith.mulf %1972, %2225 : vector<16x128xf32>
    %2227 = arith.addf %2223, %2226 : vector<16x128xf32>
    %c459 = arith.constant 459 : index
    %2228 = memref.load %arg1[%c459] : memref<700xf32, #tpu.memory_space<smem>>
    %2229 = vector.broadcast %2228 : f32 to vector<16x128xf32>
    %2230 = arith.mulf %1979, %2229 : vector<16x128xf32>
    %2231 = arith.addf %2227, %2230 : vector<16x128xf32>
    %c460 = arith.constant 460 : index
    %2232 = memref.load %arg1[%c460] : memref<700xf32, #tpu.memory_space<smem>>
    %2233 = vector.broadcast %2232 : f32 to vector<16x128xf32>
    %2234 = arith.mulf %1916, %2233 : vector<16x128xf32>
    %c46_195 = arith.constant 46 : index
    %2235 = memref.load %arg2[%c46_195] : memref<70xf32, #tpu.memory_space<smem>>
    %2236 = vector.broadcast %2235 : f32 to vector<16x128xf32>
    %2237 = arith.addf %2234, %2236 : vector<16x128xf32>
    %c461 = arith.constant 461 : index
    %2238 = memref.load %arg1[%c461] : memref<700xf32, #tpu.memory_space<smem>>
    %2239 = vector.broadcast %2238 : f32 to vector<16x128xf32>
    %2240 = arith.mulf %1923, %2239 : vector<16x128xf32>
    %2241 = arith.addf %2237, %2240 : vector<16x128xf32>
    %c462 = arith.constant 462 : index
    %2242 = memref.load %arg1[%c462] : memref<700xf32, #tpu.memory_space<smem>>
    %2243 = vector.broadcast %2242 : f32 to vector<16x128xf32>
    %2244 = arith.mulf %1930, %2243 : vector<16x128xf32>
    %2245 = arith.addf %2241, %2244 : vector<16x128xf32>
    %c463 = arith.constant 463 : index
    %2246 = memref.load %arg1[%c463] : memref<700xf32, #tpu.memory_space<smem>>
    %2247 = vector.broadcast %2246 : f32 to vector<16x128xf32>
    %2248 = arith.mulf %1937, %2247 : vector<16x128xf32>
    %2249 = arith.addf %2245, %2248 : vector<16x128xf32>
    %c464 = arith.constant 464 : index
    %2250 = memref.load %arg1[%c464] : memref<700xf32, #tpu.memory_space<smem>>
    %2251 = vector.broadcast %2250 : f32 to vector<16x128xf32>
    %2252 = arith.mulf %1944, %2251 : vector<16x128xf32>
    %2253 = arith.addf %2249, %2252 : vector<16x128xf32>
    %c465 = arith.constant 465 : index
    %2254 = memref.load %arg1[%c465] : memref<700xf32, #tpu.memory_space<smem>>
    %2255 = vector.broadcast %2254 : f32 to vector<16x128xf32>
    %2256 = arith.mulf %1951, %2255 : vector<16x128xf32>
    %2257 = arith.addf %2253, %2256 : vector<16x128xf32>
    %c466 = arith.constant 466 : index
    %2258 = memref.load %arg1[%c466] : memref<700xf32, #tpu.memory_space<smem>>
    %2259 = vector.broadcast %2258 : f32 to vector<16x128xf32>
    %2260 = arith.mulf %1958, %2259 : vector<16x128xf32>
    %2261 = arith.addf %2257, %2260 : vector<16x128xf32>
    %c467 = arith.constant 467 : index
    %2262 = memref.load %arg1[%c467] : memref<700xf32, #tpu.memory_space<smem>>
    %2263 = vector.broadcast %2262 : f32 to vector<16x128xf32>
    %2264 = arith.mulf %1965, %2263 : vector<16x128xf32>
    %2265 = arith.addf %2261, %2264 : vector<16x128xf32>
    %c468 = arith.constant 468 : index
    %2266 = memref.load %arg1[%c468] : memref<700xf32, #tpu.memory_space<smem>>
    %2267 = vector.broadcast %2266 : f32 to vector<16x128xf32>
    %2268 = arith.mulf %1972, %2267 : vector<16x128xf32>
    %2269 = arith.addf %2265, %2268 : vector<16x128xf32>
    %c469 = arith.constant 469 : index
    %2270 = memref.load %arg1[%c469] : memref<700xf32, #tpu.memory_space<smem>>
    %2271 = vector.broadcast %2270 : f32 to vector<16x128xf32>
    %2272 = arith.mulf %1979, %2271 : vector<16x128xf32>
    %2273 = arith.addf %2269, %2272 : vector<16x128xf32>
    %c470 = arith.constant 470 : index
    %2274 = memref.load %arg1[%c470] : memref<700xf32, #tpu.memory_space<smem>>
    %2275 = vector.broadcast %2274 : f32 to vector<16x128xf32>
    %2276 = arith.mulf %1916, %2275 : vector<16x128xf32>
    %c47_196 = arith.constant 47 : index
    %2277 = memref.load %arg2[%c47_196] : memref<70xf32, #tpu.memory_space<smem>>
    %2278 = vector.broadcast %2277 : f32 to vector<16x128xf32>
    %2279 = arith.addf %2276, %2278 : vector<16x128xf32>
    %c471 = arith.constant 471 : index
    %2280 = memref.load %arg1[%c471] : memref<700xf32, #tpu.memory_space<smem>>
    %2281 = vector.broadcast %2280 : f32 to vector<16x128xf32>
    %2282 = arith.mulf %1923, %2281 : vector<16x128xf32>
    %2283 = arith.addf %2279, %2282 : vector<16x128xf32>
    %c472 = arith.constant 472 : index
    %2284 = memref.load %arg1[%c472] : memref<700xf32, #tpu.memory_space<smem>>
    %2285 = vector.broadcast %2284 : f32 to vector<16x128xf32>
    %2286 = arith.mulf %1930, %2285 : vector<16x128xf32>
    %2287 = arith.addf %2283, %2286 : vector<16x128xf32>
    %c473 = arith.constant 473 : index
    %2288 = memref.load %arg1[%c473] : memref<700xf32, #tpu.memory_space<smem>>
    %2289 = vector.broadcast %2288 : f32 to vector<16x128xf32>
    %2290 = arith.mulf %1937, %2289 : vector<16x128xf32>
    %2291 = arith.addf %2287, %2290 : vector<16x128xf32>
    %c474 = arith.constant 474 : index
    %2292 = memref.load %arg1[%c474] : memref<700xf32, #tpu.memory_space<smem>>
    %2293 = vector.broadcast %2292 : f32 to vector<16x128xf32>
    %2294 = arith.mulf %1944, %2293 : vector<16x128xf32>
    %2295 = arith.addf %2291, %2294 : vector<16x128xf32>
    %c475 = arith.constant 475 : index
    %2296 = memref.load %arg1[%c475] : memref<700xf32, #tpu.memory_space<smem>>
    %2297 = vector.broadcast %2296 : f32 to vector<16x128xf32>
    %2298 = arith.mulf %1951, %2297 : vector<16x128xf32>
    %2299 = arith.addf %2295, %2298 : vector<16x128xf32>
    %c476 = arith.constant 476 : index
    %2300 = memref.load %arg1[%c476] : memref<700xf32, #tpu.memory_space<smem>>
    %2301 = vector.broadcast %2300 : f32 to vector<16x128xf32>
    %2302 = arith.mulf %1958, %2301 : vector<16x128xf32>
    %2303 = arith.addf %2299, %2302 : vector<16x128xf32>
    %c477 = arith.constant 477 : index
    %2304 = memref.load %arg1[%c477] : memref<700xf32, #tpu.memory_space<smem>>
    %2305 = vector.broadcast %2304 : f32 to vector<16x128xf32>
    %2306 = arith.mulf %1965, %2305 : vector<16x128xf32>
    %2307 = arith.addf %2303, %2306 : vector<16x128xf32>
    %c478 = arith.constant 478 : index
    %2308 = memref.load %arg1[%c478] : memref<700xf32, #tpu.memory_space<smem>>
    %2309 = vector.broadcast %2308 : f32 to vector<16x128xf32>
    %2310 = arith.mulf %1972, %2309 : vector<16x128xf32>
    %2311 = arith.addf %2307, %2310 : vector<16x128xf32>
    %c479 = arith.constant 479 : index
    %2312 = memref.load %arg1[%c479] : memref<700xf32, #tpu.memory_space<smem>>
    %2313 = vector.broadcast %2312 : f32 to vector<16x128xf32>
    %2314 = arith.mulf %1979, %2313 : vector<16x128xf32>
    %2315 = arith.addf %2311, %2314 : vector<16x128xf32>
    %c480 = arith.constant 480 : index
    %2316 = memref.load %arg1[%c480] : memref<700xf32, #tpu.memory_space<smem>>
    %2317 = vector.broadcast %2316 : f32 to vector<16x128xf32>
    %2318 = arith.mulf %1916, %2317 : vector<16x128xf32>
    %c48_197 = arith.constant 48 : index
    %2319 = memref.load %arg2[%c48_197] : memref<70xf32, #tpu.memory_space<smem>>
    %2320 = vector.broadcast %2319 : f32 to vector<16x128xf32>
    %2321 = arith.addf %2318, %2320 : vector<16x128xf32>
    %c481 = arith.constant 481 : index
    %2322 = memref.load %arg1[%c481] : memref<700xf32, #tpu.memory_space<smem>>
    %2323 = vector.broadcast %2322 : f32 to vector<16x128xf32>
    %2324 = arith.mulf %1923, %2323 : vector<16x128xf32>
    %2325 = arith.addf %2321, %2324 : vector<16x128xf32>
    %c482 = arith.constant 482 : index
    %2326 = memref.load %arg1[%c482] : memref<700xf32, #tpu.memory_space<smem>>
    %2327 = vector.broadcast %2326 : f32 to vector<16x128xf32>
    %2328 = arith.mulf %1930, %2327 : vector<16x128xf32>
    %2329 = arith.addf %2325, %2328 : vector<16x128xf32>
    %c483 = arith.constant 483 : index
    %2330 = memref.load %arg1[%c483] : memref<700xf32, #tpu.memory_space<smem>>
    %2331 = vector.broadcast %2330 : f32 to vector<16x128xf32>
    %2332 = arith.mulf %1937, %2331 : vector<16x128xf32>
    %2333 = arith.addf %2329, %2332 : vector<16x128xf32>
    %c484 = arith.constant 484 : index
    %2334 = memref.load %arg1[%c484] : memref<700xf32, #tpu.memory_space<smem>>
    %2335 = vector.broadcast %2334 : f32 to vector<16x128xf32>
    %2336 = arith.mulf %1944, %2335 : vector<16x128xf32>
    %2337 = arith.addf %2333, %2336 : vector<16x128xf32>
    %c485 = arith.constant 485 : index
    %2338 = memref.load %arg1[%c485] : memref<700xf32, #tpu.memory_space<smem>>
    %2339 = vector.broadcast %2338 : f32 to vector<16x128xf32>
    %2340 = arith.mulf %1951, %2339 : vector<16x128xf32>
    %2341 = arith.addf %2337, %2340 : vector<16x128xf32>
    %c486 = arith.constant 486 : index
    %2342 = memref.load %arg1[%c486] : memref<700xf32, #tpu.memory_space<smem>>
    %2343 = vector.broadcast %2342 : f32 to vector<16x128xf32>
    %2344 = arith.mulf %1958, %2343 : vector<16x128xf32>
    %2345 = arith.addf %2341, %2344 : vector<16x128xf32>
    %c487 = arith.constant 487 : index
    %2346 = memref.load %arg1[%c487] : memref<700xf32, #tpu.memory_space<smem>>
    %2347 = vector.broadcast %2346 : f32 to vector<16x128xf32>
    %2348 = arith.mulf %1965, %2347 : vector<16x128xf32>
    %2349 = arith.addf %2345, %2348 : vector<16x128xf32>
    %c488 = arith.constant 488 : index
    %2350 = memref.load %arg1[%c488] : memref<700xf32, #tpu.memory_space<smem>>
    %2351 = vector.broadcast %2350 : f32 to vector<16x128xf32>
    %2352 = arith.mulf %1972, %2351 : vector<16x128xf32>
    %2353 = arith.addf %2349, %2352 : vector<16x128xf32>
    %c489 = arith.constant 489 : index
    %2354 = memref.load %arg1[%c489] : memref<700xf32, #tpu.memory_space<smem>>
    %2355 = vector.broadcast %2354 : f32 to vector<16x128xf32>
    %2356 = arith.mulf %1979, %2355 : vector<16x128xf32>
    %2357 = arith.addf %2353, %2356 : vector<16x128xf32>
    %c490 = arith.constant 490 : index
    %2358 = memref.load %arg1[%c490] : memref<700xf32, #tpu.memory_space<smem>>
    %2359 = vector.broadcast %2358 : f32 to vector<16x128xf32>
    %2360 = arith.mulf %1916, %2359 : vector<16x128xf32>
    %c49_198 = arith.constant 49 : index
    %2361 = memref.load %arg2[%c49_198] : memref<70xf32, #tpu.memory_space<smem>>
    %2362 = vector.broadcast %2361 : f32 to vector<16x128xf32>
    %2363 = arith.addf %2360, %2362 : vector<16x128xf32>
    %c491 = arith.constant 491 : index
    %2364 = memref.load %arg1[%c491] : memref<700xf32, #tpu.memory_space<smem>>
    %2365 = vector.broadcast %2364 : f32 to vector<16x128xf32>
    %2366 = arith.mulf %1923, %2365 : vector<16x128xf32>
    %2367 = arith.addf %2363, %2366 : vector<16x128xf32>
    %c492 = arith.constant 492 : index
    %2368 = memref.load %arg1[%c492] : memref<700xf32, #tpu.memory_space<smem>>
    %2369 = vector.broadcast %2368 : f32 to vector<16x128xf32>
    %2370 = arith.mulf %1930, %2369 : vector<16x128xf32>
    %2371 = arith.addf %2367, %2370 : vector<16x128xf32>
    %c493 = arith.constant 493 : index
    %2372 = memref.load %arg1[%c493] : memref<700xf32, #tpu.memory_space<smem>>
    %2373 = vector.broadcast %2372 : f32 to vector<16x128xf32>
    %2374 = arith.mulf %1937, %2373 : vector<16x128xf32>
    %2375 = arith.addf %2371, %2374 : vector<16x128xf32>
    %c494 = arith.constant 494 : index
    %2376 = memref.load %arg1[%c494] : memref<700xf32, #tpu.memory_space<smem>>
    %2377 = vector.broadcast %2376 : f32 to vector<16x128xf32>
    %2378 = arith.mulf %1944, %2377 : vector<16x128xf32>
    %2379 = arith.addf %2375, %2378 : vector<16x128xf32>
    %c495 = arith.constant 495 : index
    %2380 = memref.load %arg1[%c495] : memref<700xf32, #tpu.memory_space<smem>>
    %2381 = vector.broadcast %2380 : f32 to vector<16x128xf32>
    %2382 = arith.mulf %1951, %2381 : vector<16x128xf32>
    %2383 = arith.addf %2379, %2382 : vector<16x128xf32>
    %c496 = arith.constant 496 : index
    %2384 = memref.load %arg1[%c496] : memref<700xf32, #tpu.memory_space<smem>>
    %2385 = vector.broadcast %2384 : f32 to vector<16x128xf32>
    %2386 = arith.mulf %1958, %2385 : vector<16x128xf32>
    %2387 = arith.addf %2383, %2386 : vector<16x128xf32>
    %c497 = arith.constant 497 : index
    %2388 = memref.load %arg1[%c497] : memref<700xf32, #tpu.memory_space<smem>>
    %2389 = vector.broadcast %2388 : f32 to vector<16x128xf32>
    %2390 = arith.mulf %1965, %2389 : vector<16x128xf32>
    %2391 = arith.addf %2387, %2390 : vector<16x128xf32>
    %c498 = arith.constant 498 : index
    %2392 = memref.load %arg1[%c498] : memref<700xf32, #tpu.memory_space<smem>>
    %2393 = vector.broadcast %2392 : f32 to vector<16x128xf32>
    %2394 = arith.mulf %1972, %2393 : vector<16x128xf32>
    %2395 = arith.addf %2391, %2394 : vector<16x128xf32>
    %c499 = arith.constant 499 : index
    %2396 = memref.load %arg1[%c499] : memref<700xf32, #tpu.memory_space<smem>>
    %2397 = vector.broadcast %2396 : f32 to vector<16x128xf32>
    %2398 = arith.mulf %1979, %2397 : vector<16x128xf32>
    %2399 = arith.addf %2395, %2398 : vector<16x128xf32>
    %cst_199 = arith.constant 5.000000e-01 : f32
    %2400 = vector.broadcast %cst_199 : f32 to vector<16x128xf32>
    %2401 = arith.mulf %2400, %2021 : vector<16x128xf32>
    %2402 = math.tanh %2401 : vector<16x128xf32>
    %cst_200 = arith.constant 5.000000e-01 : f32
    %2403 = vector.broadcast %cst_200 : f32 to vector<16x128xf32>
    %2404 = arith.mulf %2403, %2402 : vector<16x128xf32>
    %cst_201 = arith.constant 5.000000e-01 : f32
    %2405 = vector.broadcast %cst_201 : f32 to vector<16x128xf32>
    %2406 = arith.addf %2404, %2405 : vector<16x128xf32>
    %cst_202 = arith.constant 5.000000e-01 : f32
    %2407 = vector.broadcast %cst_202 : f32 to vector<16x128xf32>
    %2408 = arith.mulf %2407, %2063 : vector<16x128xf32>
    %2409 = math.tanh %2408 : vector<16x128xf32>
    %cst_203 = arith.constant 5.000000e-01 : f32
    %2410 = vector.broadcast %cst_203 : f32 to vector<16x128xf32>
    %2411 = arith.mulf %2410, %2409 : vector<16x128xf32>
    %cst_204 = arith.constant 5.000000e-01 : f32
    %2412 = vector.broadcast %cst_204 : f32 to vector<16x128xf32>
    %2413 = arith.addf %2411, %2412 : vector<16x128xf32>
    %cst_205 = arith.constant 5.000000e-01 : f32
    %2414 = vector.broadcast %cst_205 : f32 to vector<16x128xf32>
    %2415 = arith.mulf %2414, %2105 : vector<16x128xf32>
    %2416 = math.tanh %2415 : vector<16x128xf32>
    %cst_206 = arith.constant 5.000000e-01 : f32
    %2417 = vector.broadcast %cst_206 : f32 to vector<16x128xf32>
    %2418 = arith.mulf %2417, %2416 : vector<16x128xf32>
    %cst_207 = arith.constant 5.000000e-01 : f32
    %2419 = vector.broadcast %cst_207 : f32 to vector<16x128xf32>
    %2420 = arith.addf %2418, %2419 : vector<16x128xf32>
    %cst_208 = arith.constant 5.000000e-01 : f32
    %2421 = vector.broadcast %cst_208 : f32 to vector<16x128xf32>
    %2422 = arith.mulf %2421, %2147 : vector<16x128xf32>
    %2423 = math.tanh %2422 : vector<16x128xf32>
    %cst_209 = arith.constant 5.000000e-01 : f32
    %2424 = vector.broadcast %cst_209 : f32 to vector<16x128xf32>
    %2425 = arith.mulf %2424, %2423 : vector<16x128xf32>
    %cst_210 = arith.constant 5.000000e-01 : f32
    %2426 = vector.broadcast %cst_210 : f32 to vector<16x128xf32>
    %2427 = arith.addf %2425, %2426 : vector<16x128xf32>
    %cst_211 = arith.constant 5.000000e-01 : f32
    %2428 = vector.broadcast %cst_211 : f32 to vector<16x128xf32>
    %2429 = arith.mulf %2428, %2189 : vector<16x128xf32>
    %2430 = math.tanh %2429 : vector<16x128xf32>
    %cst_212 = arith.constant 5.000000e-01 : f32
    %2431 = vector.broadcast %cst_212 : f32 to vector<16x128xf32>
    %2432 = arith.mulf %2431, %2430 : vector<16x128xf32>
    %cst_213 = arith.constant 5.000000e-01 : f32
    %2433 = vector.broadcast %cst_213 : f32 to vector<16x128xf32>
    %2434 = arith.addf %2432, %2433 : vector<16x128xf32>
    %cst_214 = arith.constant 5.000000e-01 : f32
    %2435 = vector.broadcast %cst_214 : f32 to vector<16x128xf32>
    %2436 = arith.mulf %2435, %2231 : vector<16x128xf32>
    %2437 = math.tanh %2436 : vector<16x128xf32>
    %cst_215 = arith.constant 5.000000e-01 : f32
    %2438 = vector.broadcast %cst_215 : f32 to vector<16x128xf32>
    %2439 = arith.mulf %2438, %2437 : vector<16x128xf32>
    %cst_216 = arith.constant 5.000000e-01 : f32
    %2440 = vector.broadcast %cst_216 : f32 to vector<16x128xf32>
    %2441 = arith.addf %2439, %2440 : vector<16x128xf32>
    %cst_217 = arith.constant 5.000000e-01 : f32
    %2442 = vector.broadcast %cst_217 : f32 to vector<16x128xf32>
    %2443 = arith.mulf %2442, %2273 : vector<16x128xf32>
    %2444 = math.tanh %2443 : vector<16x128xf32>
    %cst_218 = arith.constant 5.000000e-01 : f32
    %2445 = vector.broadcast %cst_218 : f32 to vector<16x128xf32>
    %2446 = arith.mulf %2445, %2444 : vector<16x128xf32>
    %cst_219 = arith.constant 5.000000e-01 : f32
    %2447 = vector.broadcast %cst_219 : f32 to vector<16x128xf32>
    %2448 = arith.addf %2446, %2447 : vector<16x128xf32>
    %cst_220 = arith.constant 5.000000e-01 : f32
    %2449 = vector.broadcast %cst_220 : f32 to vector<16x128xf32>
    %2450 = arith.mulf %2449, %2315 : vector<16x128xf32>
    %2451 = math.tanh %2450 : vector<16x128xf32>
    %cst_221 = arith.constant 5.000000e-01 : f32
    %2452 = vector.broadcast %cst_221 : f32 to vector<16x128xf32>
    %2453 = arith.mulf %2452, %2451 : vector<16x128xf32>
    %cst_222 = arith.constant 5.000000e-01 : f32
    %2454 = vector.broadcast %cst_222 : f32 to vector<16x128xf32>
    %2455 = arith.addf %2453, %2454 : vector<16x128xf32>
    %cst_223 = arith.constant 5.000000e-01 : f32
    %2456 = vector.broadcast %cst_223 : f32 to vector<16x128xf32>
    %2457 = arith.mulf %2456, %2357 : vector<16x128xf32>
    %2458 = math.tanh %2457 : vector<16x128xf32>
    %cst_224 = arith.constant 5.000000e-01 : f32
    %2459 = vector.broadcast %cst_224 : f32 to vector<16x128xf32>
    %2460 = arith.mulf %2459, %2458 : vector<16x128xf32>
    %cst_225 = arith.constant 5.000000e-01 : f32
    %2461 = vector.broadcast %cst_225 : f32 to vector<16x128xf32>
    %2462 = arith.addf %2460, %2461 : vector<16x128xf32>
    %cst_226 = arith.constant 5.000000e-01 : f32
    %2463 = vector.broadcast %cst_226 : f32 to vector<16x128xf32>
    %2464 = arith.mulf %2463, %2399 : vector<16x128xf32>
    %2465 = math.tanh %2464 : vector<16x128xf32>
    %cst_227 = arith.constant 5.000000e-01 : f32
    %2466 = vector.broadcast %cst_227 : f32 to vector<16x128xf32>
    %2467 = arith.mulf %2466, %2465 : vector<16x128xf32>
    %cst_228 = arith.constant 5.000000e-01 : f32
    %2468 = vector.broadcast %cst_228 : f32 to vector<16x128xf32>
    %2469 = arith.addf %2467, %2468 : vector<16x128xf32>
    %c500 = arith.constant 500 : index
    %2470 = memref.load %arg1[%c500] : memref<700xf32, #tpu.memory_space<smem>>
    %2471 = vector.broadcast %2470 : f32 to vector<16x128xf32>
    %2472 = arith.mulf %2406, %2471 : vector<16x128xf32>
    %c50_229 = arith.constant 50 : index
    %2473 = memref.load %arg2[%c50_229] : memref<70xf32, #tpu.memory_space<smem>>
    %2474 = vector.broadcast %2473 : f32 to vector<16x128xf32>
    %2475 = arith.addf %2472, %2474 : vector<16x128xf32>
    %c501 = arith.constant 501 : index
    %2476 = memref.load %arg1[%c501] : memref<700xf32, #tpu.memory_space<smem>>
    %2477 = vector.broadcast %2476 : f32 to vector<16x128xf32>
    %2478 = arith.mulf %2413, %2477 : vector<16x128xf32>
    %2479 = arith.addf %2475, %2478 : vector<16x128xf32>
    %c502 = arith.constant 502 : index
    %2480 = memref.load %arg1[%c502] : memref<700xf32, #tpu.memory_space<smem>>
    %2481 = vector.broadcast %2480 : f32 to vector<16x128xf32>
    %2482 = arith.mulf %2420, %2481 : vector<16x128xf32>
    %2483 = arith.addf %2479, %2482 : vector<16x128xf32>
    %c503 = arith.constant 503 : index
    %2484 = memref.load %arg1[%c503] : memref<700xf32, #tpu.memory_space<smem>>
    %2485 = vector.broadcast %2484 : f32 to vector<16x128xf32>
    %2486 = arith.mulf %2427, %2485 : vector<16x128xf32>
    %2487 = arith.addf %2483, %2486 : vector<16x128xf32>
    %c504 = arith.constant 504 : index
    %2488 = memref.load %arg1[%c504] : memref<700xf32, #tpu.memory_space<smem>>
    %2489 = vector.broadcast %2488 : f32 to vector<16x128xf32>
    %2490 = arith.mulf %2434, %2489 : vector<16x128xf32>
    %2491 = arith.addf %2487, %2490 : vector<16x128xf32>
    %c505 = arith.constant 505 : index
    %2492 = memref.load %arg1[%c505] : memref<700xf32, #tpu.memory_space<smem>>
    %2493 = vector.broadcast %2492 : f32 to vector<16x128xf32>
    %2494 = arith.mulf %2441, %2493 : vector<16x128xf32>
    %2495 = arith.addf %2491, %2494 : vector<16x128xf32>
    %c506 = arith.constant 506 : index
    %2496 = memref.load %arg1[%c506] : memref<700xf32, #tpu.memory_space<smem>>
    %2497 = vector.broadcast %2496 : f32 to vector<16x128xf32>
    %2498 = arith.mulf %2448, %2497 : vector<16x128xf32>
    %2499 = arith.addf %2495, %2498 : vector<16x128xf32>
    %c507 = arith.constant 507 : index
    %2500 = memref.load %arg1[%c507] : memref<700xf32, #tpu.memory_space<smem>>
    %2501 = vector.broadcast %2500 : f32 to vector<16x128xf32>
    %2502 = arith.mulf %2455, %2501 : vector<16x128xf32>
    %2503 = arith.addf %2499, %2502 : vector<16x128xf32>
    %c508 = arith.constant 508 : index
    %2504 = memref.load %arg1[%c508] : memref<700xf32, #tpu.memory_space<smem>>
    %2505 = vector.broadcast %2504 : f32 to vector<16x128xf32>
    %2506 = arith.mulf %2462, %2505 : vector<16x128xf32>
    %2507 = arith.addf %2503, %2506 : vector<16x128xf32>
    %c509 = arith.constant 509 : index
    %2508 = memref.load %arg1[%c509] : memref<700xf32, #tpu.memory_space<smem>>
    %2509 = vector.broadcast %2508 : f32 to vector<16x128xf32>
    %2510 = arith.mulf %2469, %2509 : vector<16x128xf32>
    %2511 = arith.addf %2507, %2510 : vector<16x128xf32>
    %c510 = arith.constant 510 : index
    %2512 = memref.load %arg1[%c510] : memref<700xf32, #tpu.memory_space<smem>>
    %2513 = vector.broadcast %2512 : f32 to vector<16x128xf32>
    %2514 = arith.mulf %2406, %2513 : vector<16x128xf32>
    %c51_230 = arith.constant 51 : index
    %2515 = memref.load %arg2[%c51_230] : memref<70xf32, #tpu.memory_space<smem>>
    %2516 = vector.broadcast %2515 : f32 to vector<16x128xf32>
    %2517 = arith.addf %2514, %2516 : vector<16x128xf32>
    %c511 = arith.constant 511 : index
    %2518 = memref.load %arg1[%c511] : memref<700xf32, #tpu.memory_space<smem>>
    %2519 = vector.broadcast %2518 : f32 to vector<16x128xf32>
    %2520 = arith.mulf %2413, %2519 : vector<16x128xf32>
    %2521 = arith.addf %2517, %2520 : vector<16x128xf32>
    %c512 = arith.constant 512 : index
    %2522 = memref.load %arg1[%c512] : memref<700xf32, #tpu.memory_space<smem>>
    %2523 = vector.broadcast %2522 : f32 to vector<16x128xf32>
    %2524 = arith.mulf %2420, %2523 : vector<16x128xf32>
    %2525 = arith.addf %2521, %2524 : vector<16x128xf32>
    %c513 = arith.constant 513 : index
    %2526 = memref.load %arg1[%c513] : memref<700xf32, #tpu.memory_space<smem>>
    %2527 = vector.broadcast %2526 : f32 to vector<16x128xf32>
    %2528 = arith.mulf %2427, %2527 : vector<16x128xf32>
    %2529 = arith.addf %2525, %2528 : vector<16x128xf32>
    %c514 = arith.constant 514 : index
    %2530 = memref.load %arg1[%c514] : memref<700xf32, #tpu.memory_space<smem>>
    %2531 = vector.broadcast %2530 : f32 to vector<16x128xf32>
    %2532 = arith.mulf %2434, %2531 : vector<16x128xf32>
    %2533 = arith.addf %2529, %2532 : vector<16x128xf32>
    %c515 = arith.constant 515 : index
    %2534 = memref.load %arg1[%c515] : memref<700xf32, #tpu.memory_space<smem>>
    %2535 = vector.broadcast %2534 : f32 to vector<16x128xf32>
    %2536 = arith.mulf %2441, %2535 : vector<16x128xf32>
    %2537 = arith.addf %2533, %2536 : vector<16x128xf32>
    %c516 = arith.constant 516 : index
    %2538 = memref.load %arg1[%c516] : memref<700xf32, #tpu.memory_space<smem>>
    %2539 = vector.broadcast %2538 : f32 to vector<16x128xf32>
    %2540 = arith.mulf %2448, %2539 : vector<16x128xf32>
    %2541 = arith.addf %2537, %2540 : vector<16x128xf32>
    %c517 = arith.constant 517 : index
    %2542 = memref.load %arg1[%c517] : memref<700xf32, #tpu.memory_space<smem>>
    %2543 = vector.broadcast %2542 : f32 to vector<16x128xf32>
    %2544 = arith.mulf %2455, %2543 : vector<16x128xf32>
    %2545 = arith.addf %2541, %2544 : vector<16x128xf32>
    %c518 = arith.constant 518 : index
    %2546 = memref.load %arg1[%c518] : memref<700xf32, #tpu.memory_space<smem>>
    %2547 = vector.broadcast %2546 : f32 to vector<16x128xf32>
    %2548 = arith.mulf %2462, %2547 : vector<16x128xf32>
    %2549 = arith.addf %2545, %2548 : vector<16x128xf32>
    %c519 = arith.constant 519 : index
    %2550 = memref.load %arg1[%c519] : memref<700xf32, #tpu.memory_space<smem>>
    %2551 = vector.broadcast %2550 : f32 to vector<16x128xf32>
    %2552 = arith.mulf %2469, %2551 : vector<16x128xf32>
    %2553 = arith.addf %2549, %2552 : vector<16x128xf32>
    %c520 = arith.constant 520 : index
    %2554 = memref.load %arg1[%c520] : memref<700xf32, #tpu.memory_space<smem>>
    %2555 = vector.broadcast %2554 : f32 to vector<16x128xf32>
    %2556 = arith.mulf %2406, %2555 : vector<16x128xf32>
    %c52_231 = arith.constant 52 : index
    %2557 = memref.load %arg2[%c52_231] : memref<70xf32, #tpu.memory_space<smem>>
    %2558 = vector.broadcast %2557 : f32 to vector<16x128xf32>
    %2559 = arith.addf %2556, %2558 : vector<16x128xf32>
    %c521 = arith.constant 521 : index
    %2560 = memref.load %arg1[%c521] : memref<700xf32, #tpu.memory_space<smem>>
    %2561 = vector.broadcast %2560 : f32 to vector<16x128xf32>
    %2562 = arith.mulf %2413, %2561 : vector<16x128xf32>
    %2563 = arith.addf %2559, %2562 : vector<16x128xf32>
    %c522 = arith.constant 522 : index
    %2564 = memref.load %arg1[%c522] : memref<700xf32, #tpu.memory_space<smem>>
    %2565 = vector.broadcast %2564 : f32 to vector<16x128xf32>
    %2566 = arith.mulf %2420, %2565 : vector<16x128xf32>
    %2567 = arith.addf %2563, %2566 : vector<16x128xf32>
    %c523 = arith.constant 523 : index
    %2568 = memref.load %arg1[%c523] : memref<700xf32, #tpu.memory_space<smem>>
    %2569 = vector.broadcast %2568 : f32 to vector<16x128xf32>
    %2570 = arith.mulf %2427, %2569 : vector<16x128xf32>
    %2571 = arith.addf %2567, %2570 : vector<16x128xf32>
    %c524 = arith.constant 524 : index
    %2572 = memref.load %arg1[%c524] : memref<700xf32, #tpu.memory_space<smem>>
    %2573 = vector.broadcast %2572 : f32 to vector<16x128xf32>
    %2574 = arith.mulf %2434, %2573 : vector<16x128xf32>
    %2575 = arith.addf %2571, %2574 : vector<16x128xf32>
    %c525 = arith.constant 525 : index
    %2576 = memref.load %arg1[%c525] : memref<700xf32, #tpu.memory_space<smem>>
    %2577 = vector.broadcast %2576 : f32 to vector<16x128xf32>
    %2578 = arith.mulf %2441, %2577 : vector<16x128xf32>
    %2579 = arith.addf %2575, %2578 : vector<16x128xf32>
    %c526 = arith.constant 526 : index
    %2580 = memref.load %arg1[%c526] : memref<700xf32, #tpu.memory_space<smem>>
    %2581 = vector.broadcast %2580 : f32 to vector<16x128xf32>
    %2582 = arith.mulf %2448, %2581 : vector<16x128xf32>
    %2583 = arith.addf %2579, %2582 : vector<16x128xf32>
    %c527 = arith.constant 527 : index
    %2584 = memref.load %arg1[%c527] : memref<700xf32, #tpu.memory_space<smem>>
    %2585 = vector.broadcast %2584 : f32 to vector<16x128xf32>
    %2586 = arith.mulf %2455, %2585 : vector<16x128xf32>
    %2587 = arith.addf %2583, %2586 : vector<16x128xf32>
    %c528 = arith.constant 528 : index
    %2588 = memref.load %arg1[%c528] : memref<700xf32, #tpu.memory_space<smem>>
    %2589 = vector.broadcast %2588 : f32 to vector<16x128xf32>
    %2590 = arith.mulf %2462, %2589 : vector<16x128xf32>
    %2591 = arith.addf %2587, %2590 : vector<16x128xf32>
    %c529 = arith.constant 529 : index
    %2592 = memref.load %arg1[%c529] : memref<700xf32, #tpu.memory_space<smem>>
    %2593 = vector.broadcast %2592 : f32 to vector<16x128xf32>
    %2594 = arith.mulf %2469, %2593 : vector<16x128xf32>
    %2595 = arith.addf %2591, %2594 : vector<16x128xf32>
    %c530 = arith.constant 530 : index
    %2596 = memref.load %arg1[%c530] : memref<700xf32, #tpu.memory_space<smem>>
    %2597 = vector.broadcast %2596 : f32 to vector<16x128xf32>
    %2598 = arith.mulf %2406, %2597 : vector<16x128xf32>
    %c53_232 = arith.constant 53 : index
    %2599 = memref.load %arg2[%c53_232] : memref<70xf32, #tpu.memory_space<smem>>
    %2600 = vector.broadcast %2599 : f32 to vector<16x128xf32>
    %2601 = arith.addf %2598, %2600 : vector<16x128xf32>
    %c531 = arith.constant 531 : index
    %2602 = memref.load %arg1[%c531] : memref<700xf32, #tpu.memory_space<smem>>
    %2603 = vector.broadcast %2602 : f32 to vector<16x128xf32>
    %2604 = arith.mulf %2413, %2603 : vector<16x128xf32>
    %2605 = arith.addf %2601, %2604 : vector<16x128xf32>
    %c532 = arith.constant 532 : index
    %2606 = memref.load %arg1[%c532] : memref<700xf32, #tpu.memory_space<smem>>
    %2607 = vector.broadcast %2606 : f32 to vector<16x128xf32>
    %2608 = arith.mulf %2420, %2607 : vector<16x128xf32>
    %2609 = arith.addf %2605, %2608 : vector<16x128xf32>
    %c533 = arith.constant 533 : index
    %2610 = memref.load %arg1[%c533] : memref<700xf32, #tpu.memory_space<smem>>
    %2611 = vector.broadcast %2610 : f32 to vector<16x128xf32>
    %2612 = arith.mulf %2427, %2611 : vector<16x128xf32>
    %2613 = arith.addf %2609, %2612 : vector<16x128xf32>
    %c534 = arith.constant 534 : index
    %2614 = memref.load %arg1[%c534] : memref<700xf32, #tpu.memory_space<smem>>
    %2615 = vector.broadcast %2614 : f32 to vector<16x128xf32>
    %2616 = arith.mulf %2434, %2615 : vector<16x128xf32>
    %2617 = arith.addf %2613, %2616 : vector<16x128xf32>
    %c535 = arith.constant 535 : index
    %2618 = memref.load %arg1[%c535] : memref<700xf32, #tpu.memory_space<smem>>
    %2619 = vector.broadcast %2618 : f32 to vector<16x128xf32>
    %2620 = arith.mulf %2441, %2619 : vector<16x128xf32>
    %2621 = arith.addf %2617, %2620 : vector<16x128xf32>
    %c536 = arith.constant 536 : index
    %2622 = memref.load %arg1[%c536] : memref<700xf32, #tpu.memory_space<smem>>
    %2623 = vector.broadcast %2622 : f32 to vector<16x128xf32>
    %2624 = arith.mulf %2448, %2623 : vector<16x128xf32>
    %2625 = arith.addf %2621, %2624 : vector<16x128xf32>
    %c537 = arith.constant 537 : index
    %2626 = memref.load %arg1[%c537] : memref<700xf32, #tpu.memory_space<smem>>
    %2627 = vector.broadcast %2626 : f32 to vector<16x128xf32>
    %2628 = arith.mulf %2455, %2627 : vector<16x128xf32>
    %2629 = arith.addf %2625, %2628 : vector<16x128xf32>
    %c538 = arith.constant 538 : index
    %2630 = memref.load %arg1[%c538] : memref<700xf32, #tpu.memory_space<smem>>
    %2631 = vector.broadcast %2630 : f32 to vector<16x128xf32>
    %2632 = arith.mulf %2462, %2631 : vector<16x128xf32>
    %2633 = arith.addf %2629, %2632 : vector<16x128xf32>
    %c539 = arith.constant 539 : index
    %2634 = memref.load %arg1[%c539] : memref<700xf32, #tpu.memory_space<smem>>
    %2635 = vector.broadcast %2634 : f32 to vector<16x128xf32>
    %2636 = arith.mulf %2469, %2635 : vector<16x128xf32>
    %2637 = arith.addf %2633, %2636 : vector<16x128xf32>
    %c540 = arith.constant 540 : index
    %2638 = memref.load %arg1[%c540] : memref<700xf32, #tpu.memory_space<smem>>
    %2639 = vector.broadcast %2638 : f32 to vector<16x128xf32>
    %2640 = arith.mulf %2406, %2639 : vector<16x128xf32>
    %c54_233 = arith.constant 54 : index
    %2641 = memref.load %arg2[%c54_233] : memref<70xf32, #tpu.memory_space<smem>>
    %2642 = vector.broadcast %2641 : f32 to vector<16x128xf32>
    %2643 = arith.addf %2640, %2642 : vector<16x128xf32>
    %c541 = arith.constant 541 : index
    %2644 = memref.load %arg1[%c541] : memref<700xf32, #tpu.memory_space<smem>>
    %2645 = vector.broadcast %2644 : f32 to vector<16x128xf32>
    %2646 = arith.mulf %2413, %2645 : vector<16x128xf32>
    %2647 = arith.addf %2643, %2646 : vector<16x128xf32>
    %c542 = arith.constant 542 : index
    %2648 = memref.load %arg1[%c542] : memref<700xf32, #tpu.memory_space<smem>>
    %2649 = vector.broadcast %2648 : f32 to vector<16x128xf32>
    %2650 = arith.mulf %2420, %2649 : vector<16x128xf32>
    %2651 = arith.addf %2647, %2650 : vector<16x128xf32>
    %c543 = arith.constant 543 : index
    %2652 = memref.load %arg1[%c543] : memref<700xf32, #tpu.memory_space<smem>>
    %2653 = vector.broadcast %2652 : f32 to vector<16x128xf32>
    %2654 = arith.mulf %2427, %2653 : vector<16x128xf32>
    %2655 = arith.addf %2651, %2654 : vector<16x128xf32>
    %c544 = arith.constant 544 : index
    %2656 = memref.load %arg1[%c544] : memref<700xf32, #tpu.memory_space<smem>>
    %2657 = vector.broadcast %2656 : f32 to vector<16x128xf32>
    %2658 = arith.mulf %2434, %2657 : vector<16x128xf32>
    %2659 = arith.addf %2655, %2658 : vector<16x128xf32>
    %c545 = arith.constant 545 : index
    %2660 = memref.load %arg1[%c545] : memref<700xf32, #tpu.memory_space<smem>>
    %2661 = vector.broadcast %2660 : f32 to vector<16x128xf32>
    %2662 = arith.mulf %2441, %2661 : vector<16x128xf32>
    %2663 = arith.addf %2659, %2662 : vector<16x128xf32>
    %c546 = arith.constant 546 : index
    %2664 = memref.load %arg1[%c546] : memref<700xf32, #tpu.memory_space<smem>>
    %2665 = vector.broadcast %2664 : f32 to vector<16x128xf32>
    %2666 = arith.mulf %2448, %2665 : vector<16x128xf32>
    %2667 = arith.addf %2663, %2666 : vector<16x128xf32>
    %c547 = arith.constant 547 : index
    %2668 = memref.load %arg1[%c547] : memref<700xf32, #tpu.memory_space<smem>>
    %2669 = vector.broadcast %2668 : f32 to vector<16x128xf32>
    %2670 = arith.mulf %2455, %2669 : vector<16x128xf32>
    %2671 = arith.addf %2667, %2670 : vector<16x128xf32>
    %c548 = arith.constant 548 : index
    %2672 = memref.load %arg1[%c548] : memref<700xf32, #tpu.memory_space<smem>>
    %2673 = vector.broadcast %2672 : f32 to vector<16x128xf32>
    %2674 = arith.mulf %2462, %2673 : vector<16x128xf32>
    %2675 = arith.addf %2671, %2674 : vector<16x128xf32>
    %c549 = arith.constant 549 : index
    %2676 = memref.load %arg1[%c549] : memref<700xf32, #tpu.memory_space<smem>>
    %2677 = vector.broadcast %2676 : f32 to vector<16x128xf32>
    %2678 = arith.mulf %2469, %2677 : vector<16x128xf32>
    %2679 = arith.addf %2675, %2678 : vector<16x128xf32>
    %c550 = arith.constant 550 : index
    %2680 = memref.load %arg1[%c550] : memref<700xf32, #tpu.memory_space<smem>>
    %2681 = vector.broadcast %2680 : f32 to vector<16x128xf32>
    %2682 = arith.mulf %2406, %2681 : vector<16x128xf32>
    %c55_234 = arith.constant 55 : index
    %2683 = memref.load %arg2[%c55_234] : memref<70xf32, #tpu.memory_space<smem>>
    %2684 = vector.broadcast %2683 : f32 to vector<16x128xf32>
    %2685 = arith.addf %2682, %2684 : vector<16x128xf32>
    %c551 = arith.constant 551 : index
    %2686 = memref.load %arg1[%c551] : memref<700xf32, #tpu.memory_space<smem>>
    %2687 = vector.broadcast %2686 : f32 to vector<16x128xf32>
    %2688 = arith.mulf %2413, %2687 : vector<16x128xf32>
    %2689 = arith.addf %2685, %2688 : vector<16x128xf32>
    %c552 = arith.constant 552 : index
    %2690 = memref.load %arg1[%c552] : memref<700xf32, #tpu.memory_space<smem>>
    %2691 = vector.broadcast %2690 : f32 to vector<16x128xf32>
    %2692 = arith.mulf %2420, %2691 : vector<16x128xf32>
    %2693 = arith.addf %2689, %2692 : vector<16x128xf32>
    %c553 = arith.constant 553 : index
    %2694 = memref.load %arg1[%c553] : memref<700xf32, #tpu.memory_space<smem>>
    %2695 = vector.broadcast %2694 : f32 to vector<16x128xf32>
    %2696 = arith.mulf %2427, %2695 : vector<16x128xf32>
    %2697 = arith.addf %2693, %2696 : vector<16x128xf32>
    %c554 = arith.constant 554 : index
    %2698 = memref.load %arg1[%c554] : memref<700xf32, #tpu.memory_space<smem>>
    %2699 = vector.broadcast %2698 : f32 to vector<16x128xf32>
    %2700 = arith.mulf %2434, %2699 : vector<16x128xf32>
    %2701 = arith.addf %2697, %2700 : vector<16x128xf32>
    %c555 = arith.constant 555 : index
    %2702 = memref.load %arg1[%c555] : memref<700xf32, #tpu.memory_space<smem>>
    %2703 = vector.broadcast %2702 : f32 to vector<16x128xf32>
    %2704 = arith.mulf %2441, %2703 : vector<16x128xf32>
    %2705 = arith.addf %2701, %2704 : vector<16x128xf32>
    %c556 = arith.constant 556 : index
    %2706 = memref.load %arg1[%c556] : memref<700xf32, #tpu.memory_space<smem>>
    %2707 = vector.broadcast %2706 : f32 to vector<16x128xf32>
    %2708 = arith.mulf %2448, %2707 : vector<16x128xf32>
    %2709 = arith.addf %2705, %2708 : vector<16x128xf32>
    %c557 = arith.constant 557 : index
    %2710 = memref.load %arg1[%c557] : memref<700xf32, #tpu.memory_space<smem>>
    %2711 = vector.broadcast %2710 : f32 to vector<16x128xf32>
    %2712 = arith.mulf %2455, %2711 : vector<16x128xf32>
    %2713 = arith.addf %2709, %2712 : vector<16x128xf32>
    %c558 = arith.constant 558 : index
    %2714 = memref.load %arg1[%c558] : memref<700xf32, #tpu.memory_space<smem>>
    %2715 = vector.broadcast %2714 : f32 to vector<16x128xf32>
    %2716 = arith.mulf %2462, %2715 : vector<16x128xf32>
    %2717 = arith.addf %2713, %2716 : vector<16x128xf32>
    %c559 = arith.constant 559 : index
    %2718 = memref.load %arg1[%c559] : memref<700xf32, #tpu.memory_space<smem>>
    %2719 = vector.broadcast %2718 : f32 to vector<16x128xf32>
    %2720 = arith.mulf %2469, %2719 : vector<16x128xf32>
    %2721 = arith.addf %2717, %2720 : vector<16x128xf32>
    %c560 = arith.constant 560 : index
    %2722 = memref.load %arg1[%c560] : memref<700xf32, #tpu.memory_space<smem>>
    %2723 = vector.broadcast %2722 : f32 to vector<16x128xf32>
    %2724 = arith.mulf %2406, %2723 : vector<16x128xf32>
    %c56_235 = arith.constant 56 : index
    %2725 = memref.load %arg2[%c56_235] : memref<70xf32, #tpu.memory_space<smem>>
    %2726 = vector.broadcast %2725 : f32 to vector<16x128xf32>
    %2727 = arith.addf %2724, %2726 : vector<16x128xf32>
    %c561 = arith.constant 561 : index
    %2728 = memref.load %arg1[%c561] : memref<700xf32, #tpu.memory_space<smem>>
    %2729 = vector.broadcast %2728 : f32 to vector<16x128xf32>
    %2730 = arith.mulf %2413, %2729 : vector<16x128xf32>
    %2731 = arith.addf %2727, %2730 : vector<16x128xf32>
    %c562 = arith.constant 562 : index
    %2732 = memref.load %arg1[%c562] : memref<700xf32, #tpu.memory_space<smem>>
    %2733 = vector.broadcast %2732 : f32 to vector<16x128xf32>
    %2734 = arith.mulf %2420, %2733 : vector<16x128xf32>
    %2735 = arith.addf %2731, %2734 : vector<16x128xf32>
    %c563 = arith.constant 563 : index
    %2736 = memref.load %arg1[%c563] : memref<700xf32, #tpu.memory_space<smem>>
    %2737 = vector.broadcast %2736 : f32 to vector<16x128xf32>
    %2738 = arith.mulf %2427, %2737 : vector<16x128xf32>
    %2739 = arith.addf %2735, %2738 : vector<16x128xf32>
    %c564 = arith.constant 564 : index
    %2740 = memref.load %arg1[%c564] : memref<700xf32, #tpu.memory_space<smem>>
    %2741 = vector.broadcast %2740 : f32 to vector<16x128xf32>
    %2742 = arith.mulf %2434, %2741 : vector<16x128xf32>
    %2743 = arith.addf %2739, %2742 : vector<16x128xf32>
    %c565 = arith.constant 565 : index
    %2744 = memref.load %arg1[%c565] : memref<700xf32, #tpu.memory_space<smem>>
    %2745 = vector.broadcast %2744 : f32 to vector<16x128xf32>
    %2746 = arith.mulf %2441, %2745 : vector<16x128xf32>
    %2747 = arith.addf %2743, %2746 : vector<16x128xf32>
    %c566 = arith.constant 566 : index
    %2748 = memref.load %arg1[%c566] : memref<700xf32, #tpu.memory_space<smem>>
    %2749 = vector.broadcast %2748 : f32 to vector<16x128xf32>
    %2750 = arith.mulf %2448, %2749 : vector<16x128xf32>
    %2751 = arith.addf %2747, %2750 : vector<16x128xf32>
    %c567 = arith.constant 567 : index
    %2752 = memref.load %arg1[%c567] : memref<700xf32, #tpu.memory_space<smem>>
    %2753 = vector.broadcast %2752 : f32 to vector<16x128xf32>
    %2754 = arith.mulf %2455, %2753 : vector<16x128xf32>
    %2755 = arith.addf %2751, %2754 : vector<16x128xf32>
    %c568 = arith.constant 568 : index
    %2756 = memref.load %arg1[%c568] : memref<700xf32, #tpu.memory_space<smem>>
    %2757 = vector.broadcast %2756 : f32 to vector<16x128xf32>
    %2758 = arith.mulf %2462, %2757 : vector<16x128xf32>
    %2759 = arith.addf %2755, %2758 : vector<16x128xf32>
    %c569 = arith.constant 569 : index
    %2760 = memref.load %arg1[%c569] : memref<700xf32, #tpu.memory_space<smem>>
    %2761 = vector.broadcast %2760 : f32 to vector<16x128xf32>
    %2762 = arith.mulf %2469, %2761 : vector<16x128xf32>
    %2763 = arith.addf %2759, %2762 : vector<16x128xf32>
    %c570 = arith.constant 570 : index
    %2764 = memref.load %arg1[%c570] : memref<700xf32, #tpu.memory_space<smem>>
    %2765 = vector.broadcast %2764 : f32 to vector<16x128xf32>
    %2766 = arith.mulf %2406, %2765 : vector<16x128xf32>
    %c57_236 = arith.constant 57 : index
    %2767 = memref.load %arg2[%c57_236] : memref<70xf32, #tpu.memory_space<smem>>
    %2768 = vector.broadcast %2767 : f32 to vector<16x128xf32>
    %2769 = arith.addf %2766, %2768 : vector<16x128xf32>
    %c571 = arith.constant 571 : index
    %2770 = memref.load %arg1[%c571] : memref<700xf32, #tpu.memory_space<smem>>
    %2771 = vector.broadcast %2770 : f32 to vector<16x128xf32>
    %2772 = arith.mulf %2413, %2771 : vector<16x128xf32>
    %2773 = arith.addf %2769, %2772 : vector<16x128xf32>
    %c572 = arith.constant 572 : index
    %2774 = memref.load %arg1[%c572] : memref<700xf32, #tpu.memory_space<smem>>
    %2775 = vector.broadcast %2774 : f32 to vector<16x128xf32>
    %2776 = arith.mulf %2420, %2775 : vector<16x128xf32>
    %2777 = arith.addf %2773, %2776 : vector<16x128xf32>
    %c573 = arith.constant 573 : index
    %2778 = memref.load %arg1[%c573] : memref<700xf32, #tpu.memory_space<smem>>
    %2779 = vector.broadcast %2778 : f32 to vector<16x128xf32>
    %2780 = arith.mulf %2427, %2779 : vector<16x128xf32>
    %2781 = arith.addf %2777, %2780 : vector<16x128xf32>
    %c574 = arith.constant 574 : index
    %2782 = memref.load %arg1[%c574] : memref<700xf32, #tpu.memory_space<smem>>
    %2783 = vector.broadcast %2782 : f32 to vector<16x128xf32>
    %2784 = arith.mulf %2434, %2783 : vector<16x128xf32>
    %2785 = arith.addf %2781, %2784 : vector<16x128xf32>
    %c575 = arith.constant 575 : index
    %2786 = memref.load %arg1[%c575] : memref<700xf32, #tpu.memory_space<smem>>
    %2787 = vector.broadcast %2786 : f32 to vector<16x128xf32>
    %2788 = arith.mulf %2441, %2787 : vector<16x128xf32>
    %2789 = arith.addf %2785, %2788 : vector<16x128xf32>
    %c576 = arith.constant 576 : index
    %2790 = memref.load %arg1[%c576] : memref<700xf32, #tpu.memory_space<smem>>
    %2791 = vector.broadcast %2790 : f32 to vector<16x128xf32>
    %2792 = arith.mulf %2448, %2791 : vector<16x128xf32>
    %2793 = arith.addf %2789, %2792 : vector<16x128xf32>
    %c577 = arith.constant 577 : index
    %2794 = memref.load %arg1[%c577] : memref<700xf32, #tpu.memory_space<smem>>
    %2795 = vector.broadcast %2794 : f32 to vector<16x128xf32>
    %2796 = arith.mulf %2455, %2795 : vector<16x128xf32>
    %2797 = arith.addf %2793, %2796 : vector<16x128xf32>
    %c578 = arith.constant 578 : index
    %2798 = memref.load %arg1[%c578] : memref<700xf32, #tpu.memory_space<smem>>
    %2799 = vector.broadcast %2798 : f32 to vector<16x128xf32>
    %2800 = arith.mulf %2462, %2799 : vector<16x128xf32>
    %2801 = arith.addf %2797, %2800 : vector<16x128xf32>
    %c579 = arith.constant 579 : index
    %2802 = memref.load %arg1[%c579] : memref<700xf32, #tpu.memory_space<smem>>
    %2803 = vector.broadcast %2802 : f32 to vector<16x128xf32>
    %2804 = arith.mulf %2469, %2803 : vector<16x128xf32>
    %2805 = arith.addf %2801, %2804 : vector<16x128xf32>
    %c580 = arith.constant 580 : index
    %2806 = memref.load %arg1[%c580] : memref<700xf32, #tpu.memory_space<smem>>
    %2807 = vector.broadcast %2806 : f32 to vector<16x128xf32>
    %2808 = arith.mulf %2406, %2807 : vector<16x128xf32>
    %c58_237 = arith.constant 58 : index
    %2809 = memref.load %arg2[%c58_237] : memref<70xf32, #tpu.memory_space<smem>>
    %2810 = vector.broadcast %2809 : f32 to vector<16x128xf32>
    %2811 = arith.addf %2808, %2810 : vector<16x128xf32>
    %c581 = arith.constant 581 : index
    %2812 = memref.load %arg1[%c581] : memref<700xf32, #tpu.memory_space<smem>>
    %2813 = vector.broadcast %2812 : f32 to vector<16x128xf32>
    %2814 = arith.mulf %2413, %2813 : vector<16x128xf32>
    %2815 = arith.addf %2811, %2814 : vector<16x128xf32>
    %c582 = arith.constant 582 : index
    %2816 = memref.load %arg1[%c582] : memref<700xf32, #tpu.memory_space<smem>>
    %2817 = vector.broadcast %2816 : f32 to vector<16x128xf32>
    %2818 = arith.mulf %2420, %2817 : vector<16x128xf32>
    %2819 = arith.addf %2815, %2818 : vector<16x128xf32>
    %c583 = arith.constant 583 : index
    %2820 = memref.load %arg1[%c583] : memref<700xf32, #tpu.memory_space<smem>>
    %2821 = vector.broadcast %2820 : f32 to vector<16x128xf32>
    %2822 = arith.mulf %2427, %2821 : vector<16x128xf32>
    %2823 = arith.addf %2819, %2822 : vector<16x128xf32>
    %c584 = arith.constant 584 : index
    %2824 = memref.load %arg1[%c584] : memref<700xf32, #tpu.memory_space<smem>>
    %2825 = vector.broadcast %2824 : f32 to vector<16x128xf32>
    %2826 = arith.mulf %2434, %2825 : vector<16x128xf32>
    %2827 = arith.addf %2823, %2826 : vector<16x128xf32>
    %c585 = arith.constant 585 : index
    %2828 = memref.load %arg1[%c585] : memref<700xf32, #tpu.memory_space<smem>>
    %2829 = vector.broadcast %2828 : f32 to vector<16x128xf32>
    %2830 = arith.mulf %2441, %2829 : vector<16x128xf32>
    %2831 = arith.addf %2827, %2830 : vector<16x128xf32>
    %c586 = arith.constant 586 : index
    %2832 = memref.load %arg1[%c586] : memref<700xf32, #tpu.memory_space<smem>>
    %2833 = vector.broadcast %2832 : f32 to vector<16x128xf32>
    %2834 = arith.mulf %2448, %2833 : vector<16x128xf32>
    %2835 = arith.addf %2831, %2834 : vector<16x128xf32>
    %c587 = arith.constant 587 : index
    %2836 = memref.load %arg1[%c587] : memref<700xf32, #tpu.memory_space<smem>>
    %2837 = vector.broadcast %2836 : f32 to vector<16x128xf32>
    %2838 = arith.mulf %2455, %2837 : vector<16x128xf32>
    %2839 = arith.addf %2835, %2838 : vector<16x128xf32>
    %c588 = arith.constant 588 : index
    %2840 = memref.load %arg1[%c588] : memref<700xf32, #tpu.memory_space<smem>>
    %2841 = vector.broadcast %2840 : f32 to vector<16x128xf32>
    %2842 = arith.mulf %2462, %2841 : vector<16x128xf32>
    %2843 = arith.addf %2839, %2842 : vector<16x128xf32>
    %c589 = arith.constant 589 : index
    %2844 = memref.load %arg1[%c589] : memref<700xf32, #tpu.memory_space<smem>>
    %2845 = vector.broadcast %2844 : f32 to vector<16x128xf32>
    %2846 = arith.mulf %2469, %2845 : vector<16x128xf32>
    %2847 = arith.addf %2843, %2846 : vector<16x128xf32>
    %c590 = arith.constant 590 : index
    %2848 = memref.load %arg1[%c590] : memref<700xf32, #tpu.memory_space<smem>>
    %2849 = vector.broadcast %2848 : f32 to vector<16x128xf32>
    %2850 = arith.mulf %2406, %2849 : vector<16x128xf32>
    %c59_238 = arith.constant 59 : index
    %2851 = memref.load %arg2[%c59_238] : memref<70xf32, #tpu.memory_space<smem>>
    %2852 = vector.broadcast %2851 : f32 to vector<16x128xf32>
    %2853 = arith.addf %2850, %2852 : vector<16x128xf32>
    %c591 = arith.constant 591 : index
    %2854 = memref.load %arg1[%c591] : memref<700xf32, #tpu.memory_space<smem>>
    %2855 = vector.broadcast %2854 : f32 to vector<16x128xf32>
    %2856 = arith.mulf %2413, %2855 : vector<16x128xf32>
    %2857 = arith.addf %2853, %2856 : vector<16x128xf32>
    %c592 = arith.constant 592 : index
    %2858 = memref.load %arg1[%c592] : memref<700xf32, #tpu.memory_space<smem>>
    %2859 = vector.broadcast %2858 : f32 to vector<16x128xf32>
    %2860 = arith.mulf %2420, %2859 : vector<16x128xf32>
    %2861 = arith.addf %2857, %2860 : vector<16x128xf32>
    %c593 = arith.constant 593 : index
    %2862 = memref.load %arg1[%c593] : memref<700xf32, #tpu.memory_space<smem>>
    %2863 = vector.broadcast %2862 : f32 to vector<16x128xf32>
    %2864 = arith.mulf %2427, %2863 : vector<16x128xf32>
    %2865 = arith.addf %2861, %2864 : vector<16x128xf32>
    %c594 = arith.constant 594 : index
    %2866 = memref.load %arg1[%c594] : memref<700xf32, #tpu.memory_space<smem>>
    %2867 = vector.broadcast %2866 : f32 to vector<16x128xf32>
    %2868 = arith.mulf %2434, %2867 : vector<16x128xf32>
    %2869 = arith.addf %2865, %2868 : vector<16x128xf32>
    %c595 = arith.constant 595 : index
    %2870 = memref.load %arg1[%c595] : memref<700xf32, #tpu.memory_space<smem>>
    %2871 = vector.broadcast %2870 : f32 to vector<16x128xf32>
    %2872 = arith.mulf %2441, %2871 : vector<16x128xf32>
    %2873 = arith.addf %2869, %2872 : vector<16x128xf32>
    %c596 = arith.constant 596 : index
    %2874 = memref.load %arg1[%c596] : memref<700xf32, #tpu.memory_space<smem>>
    %2875 = vector.broadcast %2874 : f32 to vector<16x128xf32>
    %2876 = arith.mulf %2448, %2875 : vector<16x128xf32>
    %2877 = arith.addf %2873, %2876 : vector<16x128xf32>
    %c597 = arith.constant 597 : index
    %2878 = memref.load %arg1[%c597] : memref<700xf32, #tpu.memory_space<smem>>
    %2879 = vector.broadcast %2878 : f32 to vector<16x128xf32>
    %2880 = arith.mulf %2455, %2879 : vector<16x128xf32>
    %2881 = arith.addf %2877, %2880 : vector<16x128xf32>
    %c598 = arith.constant 598 : index
    %2882 = memref.load %arg1[%c598] : memref<700xf32, #tpu.memory_space<smem>>
    %2883 = vector.broadcast %2882 : f32 to vector<16x128xf32>
    %2884 = arith.mulf %2462, %2883 : vector<16x128xf32>
    %2885 = arith.addf %2881, %2884 : vector<16x128xf32>
    %c599 = arith.constant 599 : index
    %2886 = memref.load %arg1[%c599] : memref<700xf32, #tpu.memory_space<smem>>
    %2887 = vector.broadcast %2886 : f32 to vector<16x128xf32>
    %2888 = arith.mulf %2469, %2887 : vector<16x128xf32>
    %2889 = arith.addf %2885, %2888 : vector<16x128xf32>
    %cst_239 = arith.constant 5.000000e-01 : f32
    %2890 = vector.broadcast %cst_239 : f32 to vector<16x128xf32>
    %2891 = arith.mulf %2890, %2511 : vector<16x128xf32>
    %2892 = math.tanh %2891 : vector<16x128xf32>
    %cst_240 = arith.constant 5.000000e-01 : f32
    %2893 = vector.broadcast %cst_240 : f32 to vector<16x128xf32>
    %2894 = arith.mulf %2893, %2892 : vector<16x128xf32>
    %cst_241 = arith.constant 5.000000e-01 : f32
    %2895 = vector.broadcast %cst_241 : f32 to vector<16x128xf32>
    %2896 = arith.addf %2894, %2895 : vector<16x128xf32>
    %cst_242 = arith.constant 5.000000e-01 : f32
    %2897 = vector.broadcast %cst_242 : f32 to vector<16x128xf32>
    %2898 = arith.mulf %2897, %2553 : vector<16x128xf32>
    %2899 = math.tanh %2898 : vector<16x128xf32>
    %cst_243 = arith.constant 5.000000e-01 : f32
    %2900 = vector.broadcast %cst_243 : f32 to vector<16x128xf32>
    %2901 = arith.mulf %2900, %2899 : vector<16x128xf32>
    %cst_244 = arith.constant 5.000000e-01 : f32
    %2902 = vector.broadcast %cst_244 : f32 to vector<16x128xf32>
    %2903 = arith.addf %2901, %2902 : vector<16x128xf32>
    %cst_245 = arith.constant 5.000000e-01 : f32
    %2904 = vector.broadcast %cst_245 : f32 to vector<16x128xf32>
    %2905 = arith.mulf %2904, %2595 : vector<16x128xf32>
    %2906 = math.tanh %2905 : vector<16x128xf32>
    %cst_246 = arith.constant 5.000000e-01 : f32
    %2907 = vector.broadcast %cst_246 : f32 to vector<16x128xf32>
    %2908 = arith.mulf %2907, %2906 : vector<16x128xf32>
    %cst_247 = arith.constant 5.000000e-01 : f32
    %2909 = vector.broadcast %cst_247 : f32 to vector<16x128xf32>
    %2910 = arith.addf %2908, %2909 : vector<16x128xf32>
    %cst_248 = arith.constant 5.000000e-01 : f32
    %2911 = vector.broadcast %cst_248 : f32 to vector<16x128xf32>
    %2912 = arith.mulf %2911, %2637 : vector<16x128xf32>
    %2913 = math.tanh %2912 : vector<16x128xf32>
    %cst_249 = arith.constant 5.000000e-01 : f32
    %2914 = vector.broadcast %cst_249 : f32 to vector<16x128xf32>
    %2915 = arith.mulf %2914, %2913 : vector<16x128xf32>
    %cst_250 = arith.constant 5.000000e-01 : f32
    %2916 = vector.broadcast %cst_250 : f32 to vector<16x128xf32>
    %2917 = arith.addf %2915, %2916 : vector<16x128xf32>
    %cst_251 = arith.constant 5.000000e-01 : f32
    %2918 = vector.broadcast %cst_251 : f32 to vector<16x128xf32>
    %2919 = arith.mulf %2918, %2679 : vector<16x128xf32>
    %2920 = math.tanh %2919 : vector<16x128xf32>
    %cst_252 = arith.constant 5.000000e-01 : f32
    %2921 = vector.broadcast %cst_252 : f32 to vector<16x128xf32>
    %2922 = arith.mulf %2921, %2920 : vector<16x128xf32>
    %cst_253 = arith.constant 5.000000e-01 : f32
    %2923 = vector.broadcast %cst_253 : f32 to vector<16x128xf32>
    %2924 = arith.addf %2922, %2923 : vector<16x128xf32>
    %cst_254 = arith.constant 5.000000e-01 : f32
    %2925 = vector.broadcast %cst_254 : f32 to vector<16x128xf32>
    %2926 = arith.mulf %2925, %2721 : vector<16x128xf32>
    %2927 = math.tanh %2926 : vector<16x128xf32>
    %cst_255 = arith.constant 5.000000e-01 : f32
    %2928 = vector.broadcast %cst_255 : f32 to vector<16x128xf32>
    %2929 = arith.mulf %2928, %2927 : vector<16x128xf32>
    %cst_256 = arith.constant 5.000000e-01 : f32
    %2930 = vector.broadcast %cst_256 : f32 to vector<16x128xf32>
    %2931 = arith.addf %2929, %2930 : vector<16x128xf32>
    %cst_257 = arith.constant 5.000000e-01 : f32
    %2932 = vector.broadcast %cst_257 : f32 to vector<16x128xf32>
    %2933 = arith.mulf %2932, %2763 : vector<16x128xf32>
    %2934 = math.tanh %2933 : vector<16x128xf32>
    %cst_258 = arith.constant 5.000000e-01 : f32
    %2935 = vector.broadcast %cst_258 : f32 to vector<16x128xf32>
    %2936 = arith.mulf %2935, %2934 : vector<16x128xf32>
    %cst_259 = arith.constant 5.000000e-01 : f32
    %2937 = vector.broadcast %cst_259 : f32 to vector<16x128xf32>
    %2938 = arith.addf %2936, %2937 : vector<16x128xf32>
    %cst_260 = arith.constant 5.000000e-01 : f32
    %2939 = vector.broadcast %cst_260 : f32 to vector<16x128xf32>
    %2940 = arith.mulf %2939, %2805 : vector<16x128xf32>
    %2941 = math.tanh %2940 : vector<16x128xf32>
    %cst_261 = arith.constant 5.000000e-01 : f32
    %2942 = vector.broadcast %cst_261 : f32 to vector<16x128xf32>
    %2943 = arith.mulf %2942, %2941 : vector<16x128xf32>
    %cst_262 = arith.constant 5.000000e-01 : f32
    %2944 = vector.broadcast %cst_262 : f32 to vector<16x128xf32>
    %2945 = arith.addf %2943, %2944 : vector<16x128xf32>
    %cst_263 = arith.constant 5.000000e-01 : f32
    %2946 = vector.broadcast %cst_263 : f32 to vector<16x128xf32>
    %2947 = arith.mulf %2946, %2847 : vector<16x128xf32>
    %2948 = math.tanh %2947 : vector<16x128xf32>
    %cst_264 = arith.constant 5.000000e-01 : f32
    %2949 = vector.broadcast %cst_264 : f32 to vector<16x128xf32>
    %2950 = arith.mulf %2949, %2948 : vector<16x128xf32>
    %cst_265 = arith.constant 5.000000e-01 : f32
    %2951 = vector.broadcast %cst_265 : f32 to vector<16x128xf32>
    %2952 = arith.addf %2950, %2951 : vector<16x128xf32>
    %cst_266 = arith.constant 5.000000e-01 : f32
    %2953 = vector.broadcast %cst_266 : f32 to vector<16x128xf32>
    %2954 = arith.mulf %2953, %2889 : vector<16x128xf32>
    %2955 = math.tanh %2954 : vector<16x128xf32>
    %cst_267 = arith.constant 5.000000e-01 : f32
    %2956 = vector.broadcast %cst_267 : f32 to vector<16x128xf32>
    %2957 = arith.mulf %2956, %2955 : vector<16x128xf32>
    %cst_268 = arith.constant 5.000000e-01 : f32
    %2958 = vector.broadcast %cst_268 : f32 to vector<16x128xf32>
    %2959 = arith.addf %2957, %2958 : vector<16x128xf32>
    %c600 = arith.constant 600 : index
    %2960 = memref.load %arg1[%c600] : memref<700xf32, #tpu.memory_space<smem>>
    %2961 = vector.broadcast %2960 : f32 to vector<16x128xf32>
    %2962 = arith.mulf %2896, %2961 : vector<16x128xf32>
    %c60_269 = arith.constant 60 : index
    %2963 = memref.load %arg2[%c60_269] : memref<70xf32, #tpu.memory_space<smem>>
    %2964 = vector.broadcast %2963 : f32 to vector<16x128xf32>
    %2965 = arith.addf %2962, %2964 : vector<16x128xf32>
    %c601 = arith.constant 601 : index
    %2966 = memref.load %arg1[%c601] : memref<700xf32, #tpu.memory_space<smem>>
    %2967 = vector.broadcast %2966 : f32 to vector<16x128xf32>
    %2968 = arith.mulf %2903, %2967 : vector<16x128xf32>
    %2969 = arith.addf %2965, %2968 : vector<16x128xf32>
    %c602 = arith.constant 602 : index
    %2970 = memref.load %arg1[%c602] : memref<700xf32, #tpu.memory_space<smem>>
    %2971 = vector.broadcast %2970 : f32 to vector<16x128xf32>
    %2972 = arith.mulf %2910, %2971 : vector<16x128xf32>
    %2973 = arith.addf %2969, %2972 : vector<16x128xf32>
    %c603 = arith.constant 603 : index
    %2974 = memref.load %arg1[%c603] : memref<700xf32, #tpu.memory_space<smem>>
    %2975 = vector.broadcast %2974 : f32 to vector<16x128xf32>
    %2976 = arith.mulf %2917, %2975 : vector<16x128xf32>
    %2977 = arith.addf %2973, %2976 : vector<16x128xf32>
    %c604 = arith.constant 604 : index
    %2978 = memref.load %arg1[%c604] : memref<700xf32, #tpu.memory_space<smem>>
    %2979 = vector.broadcast %2978 : f32 to vector<16x128xf32>
    %2980 = arith.mulf %2924, %2979 : vector<16x128xf32>
    %2981 = arith.addf %2977, %2980 : vector<16x128xf32>
    %c605 = arith.constant 605 : index
    %2982 = memref.load %arg1[%c605] : memref<700xf32, #tpu.memory_space<smem>>
    %2983 = vector.broadcast %2982 : f32 to vector<16x128xf32>
    %2984 = arith.mulf %2931, %2983 : vector<16x128xf32>
    %2985 = arith.addf %2981, %2984 : vector<16x128xf32>
    %c606 = arith.constant 606 : index
    %2986 = memref.load %arg1[%c606] : memref<700xf32, #tpu.memory_space<smem>>
    %2987 = vector.broadcast %2986 : f32 to vector<16x128xf32>
    %2988 = arith.mulf %2938, %2987 : vector<16x128xf32>
    %2989 = arith.addf %2985, %2988 : vector<16x128xf32>
    %c607 = arith.constant 607 : index
    %2990 = memref.load %arg1[%c607] : memref<700xf32, #tpu.memory_space<smem>>
    %2991 = vector.broadcast %2990 : f32 to vector<16x128xf32>
    %2992 = arith.mulf %2945, %2991 : vector<16x128xf32>
    %2993 = arith.addf %2989, %2992 : vector<16x128xf32>
    %c608 = arith.constant 608 : index
    %2994 = memref.load %arg1[%c608] : memref<700xf32, #tpu.memory_space<smem>>
    %2995 = vector.broadcast %2994 : f32 to vector<16x128xf32>
    %2996 = arith.mulf %2952, %2995 : vector<16x128xf32>
    %2997 = arith.addf %2993, %2996 : vector<16x128xf32>
    %c609 = arith.constant 609 : index
    %2998 = memref.load %arg1[%c609] : memref<700xf32, #tpu.memory_space<smem>>
    %2999 = vector.broadcast %2998 : f32 to vector<16x128xf32>
    %3000 = arith.mulf %2959, %2999 : vector<16x128xf32>
    %3001 = arith.addf %2997, %3000 : vector<16x128xf32>
    %c610 = arith.constant 610 : index
    %3002 = memref.load %arg1[%c610] : memref<700xf32, #tpu.memory_space<smem>>
    %3003 = vector.broadcast %3002 : f32 to vector<16x128xf32>
    %3004 = arith.mulf %2896, %3003 : vector<16x128xf32>
    %c61_270 = arith.constant 61 : index
    %3005 = memref.load %arg2[%c61_270] : memref<70xf32, #tpu.memory_space<smem>>
    %3006 = vector.broadcast %3005 : f32 to vector<16x128xf32>
    %3007 = arith.addf %3004, %3006 : vector<16x128xf32>
    %c611 = arith.constant 611 : index
    %3008 = memref.load %arg1[%c611] : memref<700xf32, #tpu.memory_space<smem>>
    %3009 = vector.broadcast %3008 : f32 to vector<16x128xf32>
    %3010 = arith.mulf %2903, %3009 : vector<16x128xf32>
    %3011 = arith.addf %3007, %3010 : vector<16x128xf32>
    %c612 = arith.constant 612 : index
    %3012 = memref.load %arg1[%c612] : memref<700xf32, #tpu.memory_space<smem>>
    %3013 = vector.broadcast %3012 : f32 to vector<16x128xf32>
    %3014 = arith.mulf %2910, %3013 : vector<16x128xf32>
    %3015 = arith.addf %3011, %3014 : vector<16x128xf32>
    %c613 = arith.constant 613 : index
    %3016 = memref.load %arg1[%c613] : memref<700xf32, #tpu.memory_space<smem>>
    %3017 = vector.broadcast %3016 : f32 to vector<16x128xf32>
    %3018 = arith.mulf %2917, %3017 : vector<16x128xf32>
    %3019 = arith.addf %3015, %3018 : vector<16x128xf32>
    %c614 = arith.constant 614 : index
    %3020 = memref.load %arg1[%c614] : memref<700xf32, #tpu.memory_space<smem>>
    %3021 = vector.broadcast %3020 : f32 to vector<16x128xf32>
    %3022 = arith.mulf %2924, %3021 : vector<16x128xf32>
    %3023 = arith.addf %3019, %3022 : vector<16x128xf32>
    %c615 = arith.constant 615 : index
    %3024 = memref.load %arg1[%c615] : memref<700xf32, #tpu.memory_space<smem>>
    %3025 = vector.broadcast %3024 : f32 to vector<16x128xf32>
    %3026 = arith.mulf %2931, %3025 : vector<16x128xf32>
    %3027 = arith.addf %3023, %3026 : vector<16x128xf32>
    %c616 = arith.constant 616 : index
    %3028 = memref.load %arg1[%c616] : memref<700xf32, #tpu.memory_space<smem>>
    %3029 = vector.broadcast %3028 : f32 to vector<16x128xf32>
    %3030 = arith.mulf %2938, %3029 : vector<16x128xf32>
    %3031 = arith.addf %3027, %3030 : vector<16x128xf32>
    %c617 = arith.constant 617 : index
    %3032 = memref.load %arg1[%c617] : memref<700xf32, #tpu.memory_space<smem>>
    %3033 = vector.broadcast %3032 : f32 to vector<16x128xf32>
    %3034 = arith.mulf %2945, %3033 : vector<16x128xf32>
    %3035 = arith.addf %3031, %3034 : vector<16x128xf32>
    %c618 = arith.constant 618 : index
    %3036 = memref.load %arg1[%c618] : memref<700xf32, #tpu.memory_space<smem>>
    %3037 = vector.broadcast %3036 : f32 to vector<16x128xf32>
    %3038 = arith.mulf %2952, %3037 : vector<16x128xf32>
    %3039 = arith.addf %3035, %3038 : vector<16x128xf32>
    %c619 = arith.constant 619 : index
    %3040 = memref.load %arg1[%c619] : memref<700xf32, #tpu.memory_space<smem>>
    %3041 = vector.broadcast %3040 : f32 to vector<16x128xf32>
    %3042 = arith.mulf %2959, %3041 : vector<16x128xf32>
    %3043 = arith.addf %3039, %3042 : vector<16x128xf32>
    %c620 = arith.constant 620 : index
    %3044 = memref.load %arg1[%c620] : memref<700xf32, #tpu.memory_space<smem>>
    %3045 = vector.broadcast %3044 : f32 to vector<16x128xf32>
    %3046 = arith.mulf %2896, %3045 : vector<16x128xf32>
    %c62_271 = arith.constant 62 : index
    %3047 = memref.load %arg2[%c62_271] : memref<70xf32, #tpu.memory_space<smem>>
    %3048 = vector.broadcast %3047 : f32 to vector<16x128xf32>
    %3049 = arith.addf %3046, %3048 : vector<16x128xf32>
    %c621 = arith.constant 621 : index
    %3050 = memref.load %arg1[%c621] : memref<700xf32, #tpu.memory_space<smem>>
    %3051 = vector.broadcast %3050 : f32 to vector<16x128xf32>
    %3052 = arith.mulf %2903, %3051 : vector<16x128xf32>
    %3053 = arith.addf %3049, %3052 : vector<16x128xf32>
    %c622 = arith.constant 622 : index
    %3054 = memref.load %arg1[%c622] : memref<700xf32, #tpu.memory_space<smem>>
    %3055 = vector.broadcast %3054 : f32 to vector<16x128xf32>
    %3056 = arith.mulf %2910, %3055 : vector<16x128xf32>
    %3057 = arith.addf %3053, %3056 : vector<16x128xf32>
    %c623 = arith.constant 623 : index
    %3058 = memref.load %arg1[%c623] : memref<700xf32, #tpu.memory_space<smem>>
    %3059 = vector.broadcast %3058 : f32 to vector<16x128xf32>
    %3060 = arith.mulf %2917, %3059 : vector<16x128xf32>
    %3061 = arith.addf %3057, %3060 : vector<16x128xf32>
    %c624 = arith.constant 624 : index
    %3062 = memref.load %arg1[%c624] : memref<700xf32, #tpu.memory_space<smem>>
    %3063 = vector.broadcast %3062 : f32 to vector<16x128xf32>
    %3064 = arith.mulf %2924, %3063 : vector<16x128xf32>
    %3065 = arith.addf %3061, %3064 : vector<16x128xf32>
    %c625 = arith.constant 625 : index
    %3066 = memref.load %arg1[%c625] : memref<700xf32, #tpu.memory_space<smem>>
    %3067 = vector.broadcast %3066 : f32 to vector<16x128xf32>
    %3068 = arith.mulf %2931, %3067 : vector<16x128xf32>
    %3069 = arith.addf %3065, %3068 : vector<16x128xf32>
    %c626 = arith.constant 626 : index
    %3070 = memref.load %arg1[%c626] : memref<700xf32, #tpu.memory_space<smem>>
    %3071 = vector.broadcast %3070 : f32 to vector<16x128xf32>
    %3072 = arith.mulf %2938, %3071 : vector<16x128xf32>
    %3073 = arith.addf %3069, %3072 : vector<16x128xf32>
    %c627 = arith.constant 627 : index
    %3074 = memref.load %arg1[%c627] : memref<700xf32, #tpu.memory_space<smem>>
    %3075 = vector.broadcast %3074 : f32 to vector<16x128xf32>
    %3076 = arith.mulf %2945, %3075 : vector<16x128xf32>
    %3077 = arith.addf %3073, %3076 : vector<16x128xf32>
    %c628 = arith.constant 628 : index
    %3078 = memref.load %arg1[%c628] : memref<700xf32, #tpu.memory_space<smem>>
    %3079 = vector.broadcast %3078 : f32 to vector<16x128xf32>
    %3080 = arith.mulf %2952, %3079 : vector<16x128xf32>
    %3081 = arith.addf %3077, %3080 : vector<16x128xf32>
    %c629 = arith.constant 629 : index
    %3082 = memref.load %arg1[%c629] : memref<700xf32, #tpu.memory_space<smem>>
    %3083 = vector.broadcast %3082 : f32 to vector<16x128xf32>
    %3084 = arith.mulf %2959, %3083 : vector<16x128xf32>
    %3085 = arith.addf %3081, %3084 : vector<16x128xf32>
    %c630 = arith.constant 630 : index
    %3086 = memref.load %arg1[%c630] : memref<700xf32, #tpu.memory_space<smem>>
    %3087 = vector.broadcast %3086 : f32 to vector<16x128xf32>
    %3088 = arith.mulf %2896, %3087 : vector<16x128xf32>
    %c63_272 = arith.constant 63 : index
    %3089 = memref.load %arg2[%c63_272] : memref<70xf32, #tpu.memory_space<smem>>
    %3090 = vector.broadcast %3089 : f32 to vector<16x128xf32>
    %3091 = arith.addf %3088, %3090 : vector<16x128xf32>
    %c631 = arith.constant 631 : index
    %3092 = memref.load %arg1[%c631] : memref<700xf32, #tpu.memory_space<smem>>
    %3093 = vector.broadcast %3092 : f32 to vector<16x128xf32>
    %3094 = arith.mulf %2903, %3093 : vector<16x128xf32>
    %3095 = arith.addf %3091, %3094 : vector<16x128xf32>
    %c632 = arith.constant 632 : index
    %3096 = memref.load %arg1[%c632] : memref<700xf32, #tpu.memory_space<smem>>
    %3097 = vector.broadcast %3096 : f32 to vector<16x128xf32>
    %3098 = arith.mulf %2910, %3097 : vector<16x128xf32>
    %3099 = arith.addf %3095, %3098 : vector<16x128xf32>
    %c633 = arith.constant 633 : index
    %3100 = memref.load %arg1[%c633] : memref<700xf32, #tpu.memory_space<smem>>
    %3101 = vector.broadcast %3100 : f32 to vector<16x128xf32>
    %3102 = arith.mulf %2917, %3101 : vector<16x128xf32>
    %3103 = arith.addf %3099, %3102 : vector<16x128xf32>
    %c634 = arith.constant 634 : index
    %3104 = memref.load %arg1[%c634] : memref<700xf32, #tpu.memory_space<smem>>
    %3105 = vector.broadcast %3104 : f32 to vector<16x128xf32>
    %3106 = arith.mulf %2924, %3105 : vector<16x128xf32>
    %3107 = arith.addf %3103, %3106 : vector<16x128xf32>
    %c635 = arith.constant 635 : index
    %3108 = memref.load %arg1[%c635] : memref<700xf32, #tpu.memory_space<smem>>
    %3109 = vector.broadcast %3108 : f32 to vector<16x128xf32>
    %3110 = arith.mulf %2931, %3109 : vector<16x128xf32>
    %3111 = arith.addf %3107, %3110 : vector<16x128xf32>
    %c636 = arith.constant 636 : index
    %3112 = memref.load %arg1[%c636] : memref<700xf32, #tpu.memory_space<smem>>
    %3113 = vector.broadcast %3112 : f32 to vector<16x128xf32>
    %3114 = arith.mulf %2938, %3113 : vector<16x128xf32>
    %3115 = arith.addf %3111, %3114 : vector<16x128xf32>
    %c637 = arith.constant 637 : index
    %3116 = memref.load %arg1[%c637] : memref<700xf32, #tpu.memory_space<smem>>
    %3117 = vector.broadcast %3116 : f32 to vector<16x128xf32>
    %3118 = arith.mulf %2945, %3117 : vector<16x128xf32>
    %3119 = arith.addf %3115, %3118 : vector<16x128xf32>
    %c638 = arith.constant 638 : index
    %3120 = memref.load %arg1[%c638] : memref<700xf32, #tpu.memory_space<smem>>
    %3121 = vector.broadcast %3120 : f32 to vector<16x128xf32>
    %3122 = arith.mulf %2952, %3121 : vector<16x128xf32>
    %3123 = arith.addf %3119, %3122 : vector<16x128xf32>
    %c639 = arith.constant 639 : index
    %3124 = memref.load %arg1[%c639] : memref<700xf32, #tpu.memory_space<smem>>
    %3125 = vector.broadcast %3124 : f32 to vector<16x128xf32>
    %3126 = arith.mulf %2959, %3125 : vector<16x128xf32>
    %3127 = arith.addf %3123, %3126 : vector<16x128xf32>
    %c640 = arith.constant 640 : index
    %3128 = memref.load %arg1[%c640] : memref<700xf32, #tpu.memory_space<smem>>
    %3129 = vector.broadcast %3128 : f32 to vector<16x128xf32>
    %3130 = arith.mulf %2896, %3129 : vector<16x128xf32>
    %c64_273 = arith.constant 64 : index
    %3131 = memref.load %arg2[%c64_273] : memref<70xf32, #tpu.memory_space<smem>>
    %3132 = vector.broadcast %3131 : f32 to vector<16x128xf32>
    %3133 = arith.addf %3130, %3132 : vector<16x128xf32>
    %c641 = arith.constant 641 : index
    %3134 = memref.load %arg1[%c641] : memref<700xf32, #tpu.memory_space<smem>>
    %3135 = vector.broadcast %3134 : f32 to vector<16x128xf32>
    %3136 = arith.mulf %2903, %3135 : vector<16x128xf32>
    %3137 = arith.addf %3133, %3136 : vector<16x128xf32>
    %c642 = arith.constant 642 : index
    %3138 = memref.load %arg1[%c642] : memref<700xf32, #tpu.memory_space<smem>>
    %3139 = vector.broadcast %3138 : f32 to vector<16x128xf32>
    %3140 = arith.mulf %2910, %3139 : vector<16x128xf32>
    %3141 = arith.addf %3137, %3140 : vector<16x128xf32>
    %c643 = arith.constant 643 : index
    %3142 = memref.load %arg1[%c643] : memref<700xf32, #tpu.memory_space<smem>>
    %3143 = vector.broadcast %3142 : f32 to vector<16x128xf32>
    %3144 = arith.mulf %2917, %3143 : vector<16x128xf32>
    %3145 = arith.addf %3141, %3144 : vector<16x128xf32>
    %c644 = arith.constant 644 : index
    %3146 = memref.load %arg1[%c644] : memref<700xf32, #tpu.memory_space<smem>>
    %3147 = vector.broadcast %3146 : f32 to vector<16x128xf32>
    %3148 = arith.mulf %2924, %3147 : vector<16x128xf32>
    %3149 = arith.addf %3145, %3148 : vector<16x128xf32>
    %c645 = arith.constant 645 : index
    %3150 = memref.load %arg1[%c645] : memref<700xf32, #tpu.memory_space<smem>>
    %3151 = vector.broadcast %3150 : f32 to vector<16x128xf32>
    %3152 = arith.mulf %2931, %3151 : vector<16x128xf32>
    %3153 = arith.addf %3149, %3152 : vector<16x128xf32>
    %c646 = arith.constant 646 : index
    %3154 = memref.load %arg1[%c646] : memref<700xf32, #tpu.memory_space<smem>>
    %3155 = vector.broadcast %3154 : f32 to vector<16x128xf32>
    %3156 = arith.mulf %2938, %3155 : vector<16x128xf32>
    %3157 = arith.addf %3153, %3156 : vector<16x128xf32>
    %c647 = arith.constant 647 : index
    %3158 = memref.load %arg1[%c647] : memref<700xf32, #tpu.memory_space<smem>>
    %3159 = vector.broadcast %3158 : f32 to vector<16x128xf32>
    %3160 = arith.mulf %2945, %3159 : vector<16x128xf32>
    %3161 = arith.addf %3157, %3160 : vector<16x128xf32>
    %c648 = arith.constant 648 : index
    %3162 = memref.load %arg1[%c648] : memref<700xf32, #tpu.memory_space<smem>>
    %3163 = vector.broadcast %3162 : f32 to vector<16x128xf32>
    %3164 = arith.mulf %2952, %3163 : vector<16x128xf32>
    %3165 = arith.addf %3161, %3164 : vector<16x128xf32>
    %c649 = arith.constant 649 : index
    %3166 = memref.load %arg1[%c649] : memref<700xf32, #tpu.memory_space<smem>>
    %3167 = vector.broadcast %3166 : f32 to vector<16x128xf32>
    %3168 = arith.mulf %2959, %3167 : vector<16x128xf32>
    %3169 = arith.addf %3165, %3168 : vector<16x128xf32>
    %c650 = arith.constant 650 : index
    %3170 = memref.load %arg1[%c650] : memref<700xf32, #tpu.memory_space<smem>>
    %3171 = vector.broadcast %3170 : f32 to vector<16x128xf32>
    %3172 = arith.mulf %2896, %3171 : vector<16x128xf32>
    %c65_274 = arith.constant 65 : index
    %3173 = memref.load %arg2[%c65_274] : memref<70xf32, #tpu.memory_space<smem>>
    %3174 = vector.broadcast %3173 : f32 to vector<16x128xf32>
    %3175 = arith.addf %3172, %3174 : vector<16x128xf32>
    %c651 = arith.constant 651 : index
    %3176 = memref.load %arg1[%c651] : memref<700xf32, #tpu.memory_space<smem>>
    %3177 = vector.broadcast %3176 : f32 to vector<16x128xf32>
    %3178 = arith.mulf %2903, %3177 : vector<16x128xf32>
    %3179 = arith.addf %3175, %3178 : vector<16x128xf32>
    %c652 = arith.constant 652 : index
    %3180 = memref.load %arg1[%c652] : memref<700xf32, #tpu.memory_space<smem>>
    %3181 = vector.broadcast %3180 : f32 to vector<16x128xf32>
    %3182 = arith.mulf %2910, %3181 : vector<16x128xf32>
    %3183 = arith.addf %3179, %3182 : vector<16x128xf32>
    %c653 = arith.constant 653 : index
    %3184 = memref.load %arg1[%c653] : memref<700xf32, #tpu.memory_space<smem>>
    %3185 = vector.broadcast %3184 : f32 to vector<16x128xf32>
    %3186 = arith.mulf %2917, %3185 : vector<16x128xf32>
    %3187 = arith.addf %3183, %3186 : vector<16x128xf32>
    %c654 = arith.constant 654 : index
    %3188 = memref.load %arg1[%c654] : memref<700xf32, #tpu.memory_space<smem>>
    %3189 = vector.broadcast %3188 : f32 to vector<16x128xf32>
    %3190 = arith.mulf %2924, %3189 : vector<16x128xf32>
    %3191 = arith.addf %3187, %3190 : vector<16x128xf32>
    %c655 = arith.constant 655 : index
    %3192 = memref.load %arg1[%c655] : memref<700xf32, #tpu.memory_space<smem>>
    %3193 = vector.broadcast %3192 : f32 to vector<16x128xf32>
    %3194 = arith.mulf %2931, %3193 : vector<16x128xf32>
    %3195 = arith.addf %3191, %3194 : vector<16x128xf32>
    %c656 = arith.constant 656 : index
    %3196 = memref.load %arg1[%c656] : memref<700xf32, #tpu.memory_space<smem>>
    %3197 = vector.broadcast %3196 : f32 to vector<16x128xf32>
    %3198 = arith.mulf %2938, %3197 : vector<16x128xf32>
    %3199 = arith.addf %3195, %3198 : vector<16x128xf32>
    %c657 = arith.constant 657 : index
    %3200 = memref.load %arg1[%c657] : memref<700xf32, #tpu.memory_space<smem>>
    %3201 = vector.broadcast %3200 : f32 to vector<16x128xf32>
    %3202 = arith.mulf %2945, %3201 : vector<16x128xf32>
    %3203 = arith.addf %3199, %3202 : vector<16x128xf32>
    %c658 = arith.constant 658 : index
    %3204 = memref.load %arg1[%c658] : memref<700xf32, #tpu.memory_space<smem>>
    %3205 = vector.broadcast %3204 : f32 to vector<16x128xf32>
    %3206 = arith.mulf %2952, %3205 : vector<16x128xf32>
    %3207 = arith.addf %3203, %3206 : vector<16x128xf32>
    %c659 = arith.constant 659 : index
    %3208 = memref.load %arg1[%c659] : memref<700xf32, #tpu.memory_space<smem>>
    %3209 = vector.broadcast %3208 : f32 to vector<16x128xf32>
    %3210 = arith.mulf %2959, %3209 : vector<16x128xf32>
    %3211 = arith.addf %3207, %3210 : vector<16x128xf32>
    %c660 = arith.constant 660 : index
    %3212 = memref.load %arg1[%c660] : memref<700xf32, #tpu.memory_space<smem>>
    %3213 = vector.broadcast %3212 : f32 to vector<16x128xf32>
    %3214 = arith.mulf %2896, %3213 : vector<16x128xf32>
    %c66_275 = arith.constant 66 : index
    %3215 = memref.load %arg2[%c66_275] : memref<70xf32, #tpu.memory_space<smem>>
    %3216 = vector.broadcast %3215 : f32 to vector<16x128xf32>
    %3217 = arith.addf %3214, %3216 : vector<16x128xf32>
    %c661 = arith.constant 661 : index
    %3218 = memref.load %arg1[%c661] : memref<700xf32, #tpu.memory_space<smem>>
    %3219 = vector.broadcast %3218 : f32 to vector<16x128xf32>
    %3220 = arith.mulf %2903, %3219 : vector<16x128xf32>
    %3221 = arith.addf %3217, %3220 : vector<16x128xf32>
    %c662 = arith.constant 662 : index
    %3222 = memref.load %arg1[%c662] : memref<700xf32, #tpu.memory_space<smem>>
    %3223 = vector.broadcast %3222 : f32 to vector<16x128xf32>
    %3224 = arith.mulf %2910, %3223 : vector<16x128xf32>
    %3225 = arith.addf %3221, %3224 : vector<16x128xf32>
    %c663 = arith.constant 663 : index
    %3226 = memref.load %arg1[%c663] : memref<700xf32, #tpu.memory_space<smem>>
    %3227 = vector.broadcast %3226 : f32 to vector<16x128xf32>
    %3228 = arith.mulf %2917, %3227 : vector<16x128xf32>
    %3229 = arith.addf %3225, %3228 : vector<16x128xf32>
    %c664 = arith.constant 664 : index
    %3230 = memref.load %arg1[%c664] : memref<700xf32, #tpu.memory_space<smem>>
    %3231 = vector.broadcast %3230 : f32 to vector<16x128xf32>
    %3232 = arith.mulf %2924, %3231 : vector<16x128xf32>
    %3233 = arith.addf %3229, %3232 : vector<16x128xf32>
    %c665 = arith.constant 665 : index
    %3234 = memref.load %arg1[%c665] : memref<700xf32, #tpu.memory_space<smem>>
    %3235 = vector.broadcast %3234 : f32 to vector<16x128xf32>
    %3236 = arith.mulf %2931, %3235 : vector<16x128xf32>
    %3237 = arith.addf %3233, %3236 : vector<16x128xf32>
    %c666 = arith.constant 666 : index
    %3238 = memref.load %arg1[%c666] : memref<700xf32, #tpu.memory_space<smem>>
    %3239 = vector.broadcast %3238 : f32 to vector<16x128xf32>
    %3240 = arith.mulf %2938, %3239 : vector<16x128xf32>
    %3241 = arith.addf %3237, %3240 : vector<16x128xf32>
    %c667 = arith.constant 667 : index
    %3242 = memref.load %arg1[%c667] : memref<700xf32, #tpu.memory_space<smem>>
    %3243 = vector.broadcast %3242 : f32 to vector<16x128xf32>
    %3244 = arith.mulf %2945, %3243 : vector<16x128xf32>
    %3245 = arith.addf %3241, %3244 : vector<16x128xf32>
    %c668 = arith.constant 668 : index
    %3246 = memref.load %arg1[%c668] : memref<700xf32, #tpu.memory_space<smem>>
    %3247 = vector.broadcast %3246 : f32 to vector<16x128xf32>
    %3248 = arith.mulf %2952, %3247 : vector<16x128xf32>
    %3249 = arith.addf %3245, %3248 : vector<16x128xf32>
    %c669 = arith.constant 669 : index
    %3250 = memref.load %arg1[%c669] : memref<700xf32, #tpu.memory_space<smem>>
    %3251 = vector.broadcast %3250 : f32 to vector<16x128xf32>
    %3252 = arith.mulf %2959, %3251 : vector<16x128xf32>
    %3253 = arith.addf %3249, %3252 : vector<16x128xf32>
    %c670 = arith.constant 670 : index
    %3254 = memref.load %arg1[%c670] : memref<700xf32, #tpu.memory_space<smem>>
    %3255 = vector.broadcast %3254 : f32 to vector<16x128xf32>
    %3256 = arith.mulf %2896, %3255 : vector<16x128xf32>
    %c67_276 = arith.constant 67 : index
    %3257 = memref.load %arg2[%c67_276] : memref<70xf32, #tpu.memory_space<smem>>
    %3258 = vector.broadcast %3257 : f32 to vector<16x128xf32>
    %3259 = arith.addf %3256, %3258 : vector<16x128xf32>
    %c671 = arith.constant 671 : index
    %3260 = memref.load %arg1[%c671] : memref<700xf32, #tpu.memory_space<smem>>
    %3261 = vector.broadcast %3260 : f32 to vector<16x128xf32>
    %3262 = arith.mulf %2903, %3261 : vector<16x128xf32>
    %3263 = arith.addf %3259, %3262 : vector<16x128xf32>
    %c672 = arith.constant 672 : index
    %3264 = memref.load %arg1[%c672] : memref<700xf32, #tpu.memory_space<smem>>
    %3265 = vector.broadcast %3264 : f32 to vector<16x128xf32>
    %3266 = arith.mulf %2910, %3265 : vector<16x128xf32>
    %3267 = arith.addf %3263, %3266 : vector<16x128xf32>
    %c673 = arith.constant 673 : index
    %3268 = memref.load %arg1[%c673] : memref<700xf32, #tpu.memory_space<smem>>
    %3269 = vector.broadcast %3268 : f32 to vector<16x128xf32>
    %3270 = arith.mulf %2917, %3269 : vector<16x128xf32>
    %3271 = arith.addf %3267, %3270 : vector<16x128xf32>
    %c674 = arith.constant 674 : index
    %3272 = memref.load %arg1[%c674] : memref<700xf32, #tpu.memory_space<smem>>
    %3273 = vector.broadcast %3272 : f32 to vector<16x128xf32>
    %3274 = arith.mulf %2924, %3273 : vector<16x128xf32>
    %3275 = arith.addf %3271, %3274 : vector<16x128xf32>
    %c675 = arith.constant 675 : index
    %3276 = memref.load %arg1[%c675] : memref<700xf32, #tpu.memory_space<smem>>
    %3277 = vector.broadcast %3276 : f32 to vector<16x128xf32>
    %3278 = arith.mulf %2931, %3277 : vector<16x128xf32>
    %3279 = arith.addf %3275, %3278 : vector<16x128xf32>
    %c676 = arith.constant 676 : index
    %3280 = memref.load %arg1[%c676] : memref<700xf32, #tpu.memory_space<smem>>
    %3281 = vector.broadcast %3280 : f32 to vector<16x128xf32>
    %3282 = arith.mulf %2938, %3281 : vector<16x128xf32>
    %3283 = arith.addf %3279, %3282 : vector<16x128xf32>
    %c677 = arith.constant 677 : index
    %3284 = memref.load %arg1[%c677] : memref<700xf32, #tpu.memory_space<smem>>
    %3285 = vector.broadcast %3284 : f32 to vector<16x128xf32>
    %3286 = arith.mulf %2945, %3285 : vector<16x128xf32>
    %3287 = arith.addf %3283, %3286 : vector<16x128xf32>
    %c678 = arith.constant 678 : index
    %3288 = memref.load %arg1[%c678] : memref<700xf32, #tpu.memory_space<smem>>
    %3289 = vector.broadcast %3288 : f32 to vector<16x128xf32>
    %3290 = arith.mulf %2952, %3289 : vector<16x128xf32>
    %3291 = arith.addf %3287, %3290 : vector<16x128xf32>
    %c679 = arith.constant 679 : index
    %3292 = memref.load %arg1[%c679] : memref<700xf32, #tpu.memory_space<smem>>
    %3293 = vector.broadcast %3292 : f32 to vector<16x128xf32>
    %3294 = arith.mulf %2959, %3293 : vector<16x128xf32>
    %3295 = arith.addf %3291, %3294 : vector<16x128xf32>
    %c680 = arith.constant 680 : index
    %3296 = memref.load %arg1[%c680] : memref<700xf32, #tpu.memory_space<smem>>
    %3297 = vector.broadcast %3296 : f32 to vector<16x128xf32>
    %3298 = arith.mulf %2896, %3297 : vector<16x128xf32>
    %c68_277 = arith.constant 68 : index
    %3299 = memref.load %arg2[%c68_277] : memref<70xf32, #tpu.memory_space<smem>>
    %3300 = vector.broadcast %3299 : f32 to vector<16x128xf32>
    %3301 = arith.addf %3298, %3300 : vector<16x128xf32>
    %c681 = arith.constant 681 : index
    %3302 = memref.load %arg1[%c681] : memref<700xf32, #tpu.memory_space<smem>>
    %3303 = vector.broadcast %3302 : f32 to vector<16x128xf32>
    %3304 = arith.mulf %2903, %3303 : vector<16x128xf32>
    %3305 = arith.addf %3301, %3304 : vector<16x128xf32>
    %c682 = arith.constant 682 : index
    %3306 = memref.load %arg1[%c682] : memref<700xf32, #tpu.memory_space<smem>>
    %3307 = vector.broadcast %3306 : f32 to vector<16x128xf32>
    %3308 = arith.mulf %2910, %3307 : vector<16x128xf32>
    %3309 = arith.addf %3305, %3308 : vector<16x128xf32>
    %c683 = arith.constant 683 : index
    %3310 = memref.load %arg1[%c683] : memref<700xf32, #tpu.memory_space<smem>>
    %3311 = vector.broadcast %3310 : f32 to vector<16x128xf32>
    %3312 = arith.mulf %2917, %3311 : vector<16x128xf32>
    %3313 = arith.addf %3309, %3312 : vector<16x128xf32>
    %c684 = arith.constant 684 : index
    %3314 = memref.load %arg1[%c684] : memref<700xf32, #tpu.memory_space<smem>>
    %3315 = vector.broadcast %3314 : f32 to vector<16x128xf32>
    %3316 = arith.mulf %2924, %3315 : vector<16x128xf32>
    %3317 = arith.addf %3313, %3316 : vector<16x128xf32>
    %c685 = arith.constant 685 : index
    %3318 = memref.load %arg1[%c685] : memref<700xf32, #tpu.memory_space<smem>>
    %3319 = vector.broadcast %3318 : f32 to vector<16x128xf32>
    %3320 = arith.mulf %2931, %3319 : vector<16x128xf32>
    %3321 = arith.addf %3317, %3320 : vector<16x128xf32>
    %c686 = arith.constant 686 : index
    %3322 = memref.load %arg1[%c686] : memref<700xf32, #tpu.memory_space<smem>>
    %3323 = vector.broadcast %3322 : f32 to vector<16x128xf32>
    %3324 = arith.mulf %2938, %3323 : vector<16x128xf32>
    %3325 = arith.addf %3321, %3324 : vector<16x128xf32>
    %c687 = arith.constant 687 : index
    %3326 = memref.load %arg1[%c687] : memref<700xf32, #tpu.memory_space<smem>>
    %3327 = vector.broadcast %3326 : f32 to vector<16x128xf32>
    %3328 = arith.mulf %2945, %3327 : vector<16x128xf32>
    %3329 = arith.addf %3325, %3328 : vector<16x128xf32>
    %c688 = arith.constant 688 : index
    %3330 = memref.load %arg1[%c688] : memref<700xf32, #tpu.memory_space<smem>>
    %3331 = vector.broadcast %3330 : f32 to vector<16x128xf32>
    %3332 = arith.mulf %2952, %3331 : vector<16x128xf32>
    %3333 = arith.addf %3329, %3332 : vector<16x128xf32>
    %c689 = arith.constant 689 : index
    %3334 = memref.load %arg1[%c689] : memref<700xf32, #tpu.memory_space<smem>>
    %3335 = vector.broadcast %3334 : f32 to vector<16x128xf32>
    %3336 = arith.mulf %2959, %3335 : vector<16x128xf32>
    %3337 = arith.addf %3333, %3336 : vector<16x128xf32>
    %c690 = arith.constant 690 : index
    %3338 = memref.load %arg1[%c690] : memref<700xf32, #tpu.memory_space<smem>>
    %3339 = vector.broadcast %3338 : f32 to vector<16x128xf32>
    %3340 = arith.mulf %2896, %3339 : vector<16x128xf32>
    %c69_278 = arith.constant 69 : index
    %3341 = memref.load %arg2[%c69_278] : memref<70xf32, #tpu.memory_space<smem>>
    %3342 = vector.broadcast %3341 : f32 to vector<16x128xf32>
    %3343 = arith.addf %3340, %3342 : vector<16x128xf32>
    %c691 = arith.constant 691 : index
    %3344 = memref.load %arg1[%c691] : memref<700xf32, #tpu.memory_space<smem>>
    %3345 = vector.broadcast %3344 : f32 to vector<16x128xf32>
    %3346 = arith.mulf %2903, %3345 : vector<16x128xf32>
    %3347 = arith.addf %3343, %3346 : vector<16x128xf32>
    %c692 = arith.constant 692 : index
    %3348 = memref.load %arg1[%c692] : memref<700xf32, #tpu.memory_space<smem>>
    %3349 = vector.broadcast %3348 : f32 to vector<16x128xf32>
    %3350 = arith.mulf %2910, %3349 : vector<16x128xf32>
    %3351 = arith.addf %3347, %3350 : vector<16x128xf32>
    %c693 = arith.constant 693 : index
    %3352 = memref.load %arg1[%c693] : memref<700xf32, #tpu.memory_space<smem>>
    %3353 = vector.broadcast %3352 : f32 to vector<16x128xf32>
    %3354 = arith.mulf %2917, %3353 : vector<16x128xf32>
    %3355 = arith.addf %3351, %3354 : vector<16x128xf32>
    %c694 = arith.constant 694 : index
    %3356 = memref.load %arg1[%c694] : memref<700xf32, #tpu.memory_space<smem>>
    %3357 = vector.broadcast %3356 : f32 to vector<16x128xf32>
    %3358 = arith.mulf %2924, %3357 : vector<16x128xf32>
    %3359 = arith.addf %3355, %3358 : vector<16x128xf32>
    %c695 = arith.constant 695 : index
    %3360 = memref.load %arg1[%c695] : memref<700xf32, #tpu.memory_space<smem>>
    %3361 = vector.broadcast %3360 : f32 to vector<16x128xf32>
    %3362 = arith.mulf %2931, %3361 : vector<16x128xf32>
    %3363 = arith.addf %3359, %3362 : vector<16x128xf32>
    %c696 = arith.constant 696 : index
    %3364 = memref.load %arg1[%c696] : memref<700xf32, #tpu.memory_space<smem>>
    %3365 = vector.broadcast %3364 : f32 to vector<16x128xf32>
    %3366 = arith.mulf %2938, %3365 : vector<16x128xf32>
    %3367 = arith.addf %3363, %3366 : vector<16x128xf32>
    %c697 = arith.constant 697 : index
    %3368 = memref.load %arg1[%c697] : memref<700xf32, #tpu.memory_space<smem>>
    %3369 = vector.broadcast %3368 : f32 to vector<16x128xf32>
    %3370 = arith.mulf %2945, %3369 : vector<16x128xf32>
    %3371 = arith.addf %3367, %3370 : vector<16x128xf32>
    %c698 = arith.constant 698 : index
    %3372 = memref.load %arg1[%c698] : memref<700xf32, #tpu.memory_space<smem>>
    %3373 = vector.broadcast %3372 : f32 to vector<16x128xf32>
    %3374 = arith.mulf %2952, %3373 : vector<16x128xf32>
    %3375 = arith.addf %3371, %3374 : vector<16x128xf32>
    %c699 = arith.constant 699 : index
    %3376 = memref.load %arg1[%c699] : memref<700xf32, #tpu.memory_space<smem>>
    %3377 = vector.broadcast %3376 : f32 to vector<16x128xf32>
    %3378 = arith.mulf %2959, %3377 : vector<16x128xf32>
    %3379 = arith.addf %3375, %3378 : vector<16x128xf32>
    %cst_279 = arith.constant 5.000000e-01 : f32
    %3380 = vector.broadcast %cst_279 : f32 to vector<16x128xf32>
    %3381 = arith.mulf %3380, %3001 : vector<16x128xf32>
    %3382 = math.tanh %3381 : vector<16x128xf32>
    %cst_280 = arith.constant 5.000000e-01 : f32
    %3383 = vector.broadcast %cst_280 : f32 to vector<16x128xf32>
    %3384 = arith.mulf %3383, %3382 : vector<16x128xf32>
    %cst_281 = arith.constant 5.000000e-01 : f32
    %3385 = vector.broadcast %cst_281 : f32 to vector<16x128xf32>
    %3386 = arith.addf %3384, %3385 : vector<16x128xf32>
    %cst_282 = arith.constant 5.000000e-01 : f32
    %3387 = vector.broadcast %cst_282 : f32 to vector<16x128xf32>
    %3388 = arith.mulf %3387, %3043 : vector<16x128xf32>
    %3389 = math.tanh %3388 : vector<16x128xf32>
    %cst_283 = arith.constant 5.000000e-01 : f32
    %3390 = vector.broadcast %cst_283 : f32 to vector<16x128xf32>
    %3391 = arith.mulf %3390, %3389 : vector<16x128xf32>
    %cst_284 = arith.constant 5.000000e-01 : f32
    %3392 = vector.broadcast %cst_284 : f32 to vector<16x128xf32>
    %3393 = arith.addf %3391, %3392 : vector<16x128xf32>
    %cst_285 = arith.constant 5.000000e-01 : f32
    %3394 = vector.broadcast %cst_285 : f32 to vector<16x128xf32>
    %3395 = arith.mulf %3394, %3085 : vector<16x128xf32>
    %3396 = math.tanh %3395 : vector<16x128xf32>
    %cst_286 = arith.constant 5.000000e-01 : f32
    %3397 = vector.broadcast %cst_286 : f32 to vector<16x128xf32>
    %3398 = arith.mulf %3397, %3396 : vector<16x128xf32>
    %cst_287 = arith.constant 5.000000e-01 : f32
    %3399 = vector.broadcast %cst_287 : f32 to vector<16x128xf32>
    %3400 = arith.addf %3398, %3399 : vector<16x128xf32>
    %cst_288 = arith.constant 5.000000e-01 : f32
    %3401 = vector.broadcast %cst_288 : f32 to vector<16x128xf32>
    %3402 = arith.mulf %3401, %3127 : vector<16x128xf32>
    %3403 = math.tanh %3402 : vector<16x128xf32>
    %cst_289 = arith.constant 5.000000e-01 : f32
    %3404 = vector.broadcast %cst_289 : f32 to vector<16x128xf32>
    %3405 = arith.mulf %3404, %3403 : vector<16x128xf32>
    %cst_290 = arith.constant 5.000000e-01 : f32
    %3406 = vector.broadcast %cst_290 : f32 to vector<16x128xf32>
    %3407 = arith.addf %3405, %3406 : vector<16x128xf32>
    %cst_291 = arith.constant 5.000000e-01 : f32
    %3408 = vector.broadcast %cst_291 : f32 to vector<16x128xf32>
    %3409 = arith.mulf %3408, %3169 : vector<16x128xf32>
    %3410 = math.tanh %3409 : vector<16x128xf32>
    %cst_292 = arith.constant 5.000000e-01 : f32
    %3411 = vector.broadcast %cst_292 : f32 to vector<16x128xf32>
    %3412 = arith.mulf %3411, %3410 : vector<16x128xf32>
    %cst_293 = arith.constant 5.000000e-01 : f32
    %3413 = vector.broadcast %cst_293 : f32 to vector<16x128xf32>
    %3414 = arith.addf %3412, %3413 : vector<16x128xf32>
    %cst_294 = arith.constant 5.000000e-01 : f32
    %3415 = vector.broadcast %cst_294 : f32 to vector<16x128xf32>
    %3416 = arith.mulf %3415, %3211 : vector<16x128xf32>
    %3417 = math.tanh %3416 : vector<16x128xf32>
    %cst_295 = arith.constant 5.000000e-01 : f32
    %3418 = vector.broadcast %cst_295 : f32 to vector<16x128xf32>
    %3419 = arith.mulf %3418, %3417 : vector<16x128xf32>
    %cst_296 = arith.constant 5.000000e-01 : f32
    %3420 = vector.broadcast %cst_296 : f32 to vector<16x128xf32>
    %3421 = arith.addf %3419, %3420 : vector<16x128xf32>
    %cst_297 = arith.constant 5.000000e-01 : f32
    %3422 = vector.broadcast %cst_297 : f32 to vector<16x128xf32>
    %3423 = arith.mulf %3422, %3253 : vector<16x128xf32>
    %3424 = math.tanh %3423 : vector<16x128xf32>
    %cst_298 = arith.constant 5.000000e-01 : f32
    %3425 = vector.broadcast %cst_298 : f32 to vector<16x128xf32>
    %3426 = arith.mulf %3425, %3424 : vector<16x128xf32>
    %cst_299 = arith.constant 5.000000e-01 : f32
    %3427 = vector.broadcast %cst_299 : f32 to vector<16x128xf32>
    %3428 = arith.addf %3426, %3427 : vector<16x128xf32>
    %cst_300 = arith.constant 5.000000e-01 : f32
    %3429 = vector.broadcast %cst_300 : f32 to vector<16x128xf32>
    %3430 = arith.mulf %3429, %3295 : vector<16x128xf32>
    %3431 = math.tanh %3430 : vector<16x128xf32>
    %cst_301 = arith.constant 5.000000e-01 : f32
    %3432 = vector.broadcast %cst_301 : f32 to vector<16x128xf32>
    %3433 = arith.mulf %3432, %3431 : vector<16x128xf32>
    %cst_302 = arith.constant 5.000000e-01 : f32
    %3434 = vector.broadcast %cst_302 : f32 to vector<16x128xf32>
    %3435 = arith.addf %3433, %3434 : vector<16x128xf32>
    %cst_303 = arith.constant 5.000000e-01 : f32
    %3436 = vector.broadcast %cst_303 : f32 to vector<16x128xf32>
    %3437 = arith.mulf %3436, %3337 : vector<16x128xf32>
    %3438 = math.tanh %3437 : vector<16x128xf32>
    %cst_304 = arith.constant 5.000000e-01 : f32
    %3439 = vector.broadcast %cst_304 : f32 to vector<16x128xf32>
    %3440 = arith.mulf %3439, %3438 : vector<16x128xf32>
    %cst_305 = arith.constant 5.000000e-01 : f32
    %3441 = vector.broadcast %cst_305 : f32 to vector<16x128xf32>
    %3442 = arith.addf %3440, %3441 : vector<16x128xf32>
    %cst_306 = arith.constant 5.000000e-01 : f32
    %3443 = vector.broadcast %cst_306 : f32 to vector<16x128xf32>
    %3444 = arith.mulf %3443, %3379 : vector<16x128xf32>
    %3445 = math.tanh %3444 : vector<16x128xf32>
    %cst_307 = arith.constant 5.000000e-01 : f32
    %3446 = vector.broadcast %cst_307 : f32 to vector<16x128xf32>
    %3447 = arith.mulf %3446, %3445 : vector<16x128xf32>
    %cst_308 = arith.constant 5.000000e-01 : f32
    %3448 = vector.broadcast %cst_308 : f32 to vector<16x128xf32>
    %3449 = arith.addf %3447, %3448 : vector<16x128xf32>
    %c0_309 = arith.constant 0 : index
    %c0_310 = arith.constant 0 : index
    %c0_311 = arith.constant 0 : index
    %3450 = vector.load %arg4[%c0_309, %c0_310, %c0_311] : memref<10x16x128xf32, #tpu.memory_space<vmem>>, vector<1x16x128xf32>
    %3451 = vector.shape_cast %3450 : vector<1x16x128xf32> to vector<16x128xf32>
    %3452 = vector.shape_cast %3386 : vector<16x128xf32> to vector<1x16x128xf32>
    tpu.vector_store %arg4[%c0_309, %c0_310, %c0_311], %3452 {strides = array<i32>} : memref<10x16x128xf32, #tpu.memory_space<vmem>>, vector<1x16x128xf32>,
    %c1_312 = arith.constant 1 : index
    %c0_313 = arith.constant 0 : index
    %c0_314 = arith.constant 0 : index
    %3453 = vector.load %arg4[%c1_312, %c0_313, %c0_314] : memref<10x16x128xf32, #tpu.memory_space<vmem>>, vector<1x16x128xf32>
    %3454 = vector.shape_cast %3453 : vector<1x16x128xf32> to vector<16x128xf32>
    %3455 = vector.shape_cast %3393 : vector<16x128xf32> to vector<1x16x128xf32>
    tpu.vector_store %arg4[%c1_312, %c0_313, %c0_314], %3455 {strides = array<i32>} : memref<10x16x128xf32, #tpu.memory_space<vmem>>, vector<1x16x128xf32>,
    %c2_315 = arith.constant 2 : index
    %c0_316 = arith.constant 0 : index
    %c0_317 = arith.constant 0 : index
    %3456 = vector.load %arg4[%c2_315, %c0_316, %c0_317] : memref<10x16x128xf32, #tpu.memory_space<vmem>>, vector<1x16x128xf32>
    %3457 = vector.shape_cast %3456 : vector<1x16x128xf32> to vector<16x128xf32>
    %3458 = vector.shape_cast %3400 : vector<16x128xf32> to vector<1x16x128xf32>
    tpu.vector_store %arg4[%c2_315, %c0_316, %c0_317], %3458 {strides = array<i32>} : memref<10x16x128xf32, #tpu.memory_space<vmem>>, vector<1x16x128xf32>,
    %c3_318 = arith.constant 3 : index
    %c0_319 = arith.constant 0 : index
    %c0_320 = arith.constant 0 : index
    %3459 = vector.load %arg4[%c3_318, %c0_319, %c0_320] : memref<10x16x128xf32, #tpu.memory_space<vmem>>, vector<1x16x128xf32>
    %3460 = vector.shape_cast %3459 : vector<1x16x128xf32> to vector<16x128xf32>
    %3461 = vector.shape_cast %3407 : vector<16x128xf32> to vector<1x16x128xf32>
    tpu.vector_store %arg4[%c3_318, %c0_319, %c0_320], %3461 {strides = array<i32>} : memref<10x16x128xf32, #tpu.memory_space<vmem>>, vector<1x16x128xf32>,
    %c4_321 = arith.constant 4 : index
    %c0_322 = arith.constant 0 : index
    %c0_323 = arith.constant 0 : index
    %3462 = vector.load %arg4[%c4_321, %c0_322, %c0_323] : memref<10x16x128xf32, #tpu.memory_space<vmem>>, vector<1x16x128xf32>
    %3463 = vector.shape_cast %3462 : vector<1x16x128xf32> to vector<16x128xf32>
    %3464 = vector.shape_cast %3414 : vector<16x128xf32> to vector<1x16x128xf32>
    tpu.vector_store %arg4[%c4_321, %c0_322, %c0_323], %3464 {strides = array<i32>} : memref<10x16x128xf32, #tpu.memory_space<vmem>>, vector<1x16x128xf32>,
    %c5_324 = arith.constant 5 : index
    %c0_325 = arith.constant 0 : index
    %c0_326 = arith.constant 0 : index
    %3465 = vector.load %arg4[%c5_324, %c0_325, %c0_326] : memref<10x16x128xf32, #tpu.memory_space<vmem>>, vector<1x16x128xf32>
    %3466 = vector.shape_cast %3465 : vector<1x16x128xf32> to vector<16x128xf32>
    %3467 = vector.shape_cast %3421 : vector<16x128xf32> to vector<1x16x128xf32>
    tpu.vector_store %arg4[%c5_324, %c0_325, %c0_326], %3467 {strides = array<i32>} : memref<10x16x128xf32, #tpu.memory_space<vmem>>, vector<1x16x128xf32>,
    %c6_327 = arith.constant 6 : index
    %c0_328 = arith.constant 0 : index
    %c0_329 = arith.constant 0 : index
    %3468 = vector.load %arg4[%c6_327, %c0_328, %c0_329] : memref<10x16x128xf32, #tpu.memory_space<vmem>>, vector<1x16x128xf32>
    %3469 = vector.shape_cast %3468 : vector<1x16x128xf32> to vector<16x128xf32>
    %3470 = vector.shape_cast %3428 : vector<16x128xf32> to vector<1x16x128xf32>
    tpu.vector_store %arg4[%c6_327, %c0_328, %c0_329], %3470 {strides = array<i32>} : memref<10x16x128xf32, #tpu.memory_space<vmem>>, vector<1x16x128xf32>,
    %c7_330 = arith.constant 7 : index
    %c0_331 = arith.constant 0 : index
    %c0_332 = arith.constant 0 : index
    %3471 = vector.load %arg4[%c7_330, %c0_331, %c0_332] : memref<10x16x128xf32, #tpu.memory_space<vmem>>, vector<1x16x128xf32>
    %3472 = vector.shape_cast %3471 : vector<1x16x128xf32> to vector<16x128xf32>
    %3473 = vector.shape_cast %3435 : vector<16x128xf32> to vector<1x16x128xf32>
    tpu.vector_store %arg4[%c7_330, %c0_331, %c0_332], %3473 {strides = array<i32>} : memref<10x16x128xf32, #tpu.memory_space<vmem>>, vector<1x16x128xf32>,
    %c8_333 = arith.constant 8 : index
    %c0_334 = arith.constant 0 : index
    %c0_335 = arith.constant 0 : index
    %3474 = vector.load %arg4[%c8_333, %c0_334, %c0_335] : memref<10x16x128xf32, #tpu.memory_space<vmem>>, vector<1x16x128xf32>
    %3475 = vector.shape_cast %3474 : vector<1x16x128xf32> to vector<16x128xf32>
    %3476 = vector.shape_cast %3442 : vector<16x128xf32> to vector<1x16x128xf32>
    tpu.vector_store %arg4[%c8_333, %c0_334, %c0_335], %3476 {strides = array<i32>} : memref<10x16x128xf32, #tpu.memory_space<vmem>>, vector<1x16x128xf32>,
    %c9_336 = arith.constant 9 : index
    %c0_337 = arith.constant 0 : index
    %c0_338 = arith.constant 0 : index
    %3477 = vector.load %arg4[%c9_336, %c0_337, %c0_338] : memref<10x16x128xf32, #tpu.memory_space<vmem>>, vector<1x16x128xf32>
    %3478 = vector.shape_cast %3477 : vector<1x16x128xf32> to vector<16x128xf32>
    %3479 = vector.shape_cast %3449 : vector<16x128xf32> to vector<1x16x128xf32>
    tpu.vector_store %arg4[%c9_336, %c0_337, %c0_338], %3479 {strides = array<i32>} : memref<10x16x128xf32, #tpu.memory_space<vmem>>, vector<1x16x128xf32>,
    return
  }
  func.func @transform_0(%arg0: i32, %arg1: memref<700xf32, #tpu.memory_space<smem>>, %arg2: memref<70xf32, #tpu.memory_space<smem>>) -> (i32, i32, i32) {
    %c0_i32 = arith.constant 0 : i32
    %c0_i32_0 = arith.constant 0 : i32
    %c0_i32_1 = arith.constant 0 : i32
    return %c0_i32, %arg0, %c0_i32_0 : i32, i32, i32
  }
  func.func @transform_1(%arg0: i32, %arg1: memref<700xf32, #tpu.memory_space<smem>>, %arg2: memref<70xf32, #tpu.memory_space<smem>>) -> (i32, i32, i32) {
    %c0_i32 = arith.constant 0 : i32
    %c0_i32_0 = arith.constant 0 : i32
    %c0_i32_1 = arith.constant 0 : i32
    return %c0_i32, %arg0, %c0_i32_0 : i32, i32, i32
  }
}

</mosaic_0001>

<llo_original>
// kernel: simple_nn_forward.1
$region0: #{simple_nn_forward.1}
  #allocation0 [shape = 'u32[]', space=smem, size = 0x4, offset = 0x4, fixed_abs, tag = 'smem constant byte address 0x4 - core index']
  #allocation1 [shape = 'u32[144,128]{1,0:T(1,128)}', space=vmem, size = 0x12000, scoped, tag = 'internal scratch']
  #allocation2 [shape = 's32[1]{0}', space=sflag, size = 0x4, scoped, tag = 'scoped memory for simple_nn_forward.1']
  #allocation3 [shape = 'u8[3072]{0}', space=smem, size = 0xc00, scoped, tag = 'prefetched SMEM operand 0']
  #allocation4 [shape = 'u8[512]{0}', space=smem, size = 0x200, scoped, tag = 'prefetched SMEM operand 1']
  %s0 = inlined_call_operand.vmem [shape: f32[700], index: 0, kind: input, shape index: {}]
  %s1 = inlined_call_operand.vmem [shape: f32[70], index: 1, kind: input, shape index: {}]
  %s2 = inlined_call_operand.vmem [shape: f32[10,16,128], index: 2, kind: input, shape index: {}]
  %s3 = inlined_call_operand.vmem [shape: f32[10,16,128], index: 3, kind: output, shape index: {}]
  %s4 = sld [smem:[#allocation0]]
  $region14: #{simple_nn_forward.1} parent=0
    _
  %s6 = ssub.s32 1, %s4
  %s7 = scalar_select 0, %s6, %s4
  %s8 = sshll.u32 %s0, 4
  %s9 = int_to_ptr.vmem [resolvable:$true] %s8
  %11 = dma.vmem_to_smem %s9, 96, [#allocation3], [#allocation2]
  %s12 = sshll.u32 %s1, 4
  %s13 = int_to_ptr.vmem [resolvable:$true] %s12
  %15 = dma.vmem_to_smem %s13, 16, [#allocation4], [#allocation2]
  %16 = dma.done [#allocation2], 112
  %17 = sfence
  // Predicated region
  $region2: #{simple_nn_forward.1} parent=0 // pred_check
    _
  $region3: #{simple_nn_forward.1} parent=0 // pred_check_branch
    %19 = sbr.rel (0) target = $region5
  $region4: #{simple_nn_forward.1} parent=0 // pred_region
    _
  $region5: #{simple_nn_forward.1} parent=0 // pred_fallthru
    _
  %v20 = vld [vmem:[%s2] sm:$0xff]
  %v21 = vld [vmem:[%s2 + $0x8] sm:$0xff]
  %s22 = scalar_lea.vmem %s2, 16
  %v23 = vld [vmem:[%s22] sm:$0xff]
  %v24 = vld [vmem:[%s22 + $0x8] sm:$0xff]
  %s25 = scalar_lea.vmem %s2, 32
  %v26 = vld [vmem:[%s25] sm:$0xff]
  %v27 = vld [vmem:[%s25 + $0x8] sm:$0xff]
  %s28 = scalar_lea.vmem %s2, 48
  %v29 = vld [vmem:[%s28] sm:$0xff]
  %v30 = vld [vmem:[%s28 + $0x8] sm:$0xff]
  %s31 = scalar_lea.vmem %s2, 64
  %v32 = vld [vmem:[%s31] sm:$0xff]
  %v33 = vld [vmem:[%s31 + $0x8] sm:$0xff]
  %s34 = scalar_lea.vmem %s2, 80
  %v35 = vld [vmem:[%s34] sm:$0xff]
  %v36 = vld [vmem:[%s34 + $0x8] sm:$0xff]
  %s37 = scalar_lea.vmem %s2, 96
  %v38 = vld [vmem:[%s37] sm:$0xff]
  %v39 = vld [vmem:[%s37 + $0x8] sm:$0xff]
  %s40 = scalar_lea.vmem %s2, 112
  %v41 = vld [vmem:[%s40] sm:$0xff]
  %v42 = vld [vmem:[%s40 + $0x8] sm:$0xff]
  %s43 = scalar_lea.vmem %s2, 128
  %v44 = vld [vmem:[%s43] sm:$0xff]
  %v45 = vld [vmem:[%s43 + $0x8] sm:$0xff]
  %s46 = scalar_lea.vmem %s2, 144
  %v47 = vld [vmem:[%s46] sm:$0xff]
  %v48 = vld [vmem:[%s46 + $0x8] sm:$0xff]
  %s49 = sld [smem:[#allocation3]]
  %v50 = vstv %s49
  %v51 = vmul.f32 %v20, %v50
  %v52 = vmul.f32 %v21, %v50
  %s53 = sld [smem:[#allocation4]]
  %v54 = vstv %s53
  %v55 = vadd.f32 %v51, %v54
  %v56 = vadd.f32 %v52, %v54
  %s57 = sld [smem:[#allocation3 + $0x1]]
  %v58 = vstv %s57
  %v59 = vmul.f32 %v23, %v58
  %v60 = vmul.f32 %v24, %v58
  %v61 = vadd.f32 %v55, %v59
  %v62 = vadd.f32 %v56, %v60
  %s63 = sld [smem:[#allocation3 + $0x2]]
  %v64 = vstv %s63
  %v65 = vmul.f32 %v26, %v64
  %v66 = vmul.f32 %v27, %v64
  %v67 = vadd.f32 %v61, %v65
  %v68 = vadd.f32 %v62, %v66
  %s69 = sld [smem:[#allocation3 + $0x3]]
  %v70 = vstv %s69
  %v71 = vmul.f32 %v29, %v70
  %v72 = vmul.f32 %v30, %v70
  %v73 = vadd.f32 %v67, %v71
  %v74 = vadd.f32 %v68, %v72
  %s75 = sld [smem:[#allocation3 + $0x4]]
  %v76 = vstv %s75
  %v77 = vmul.f32 %v32, %v76
  %v78 = vmul.f32 %v33, %v76
  %v79 = vadd.f32 %v73, %v77
  %v80 = vadd.f32 %v74, %v78
  %s81 = sld [smem:[#allocation3 + $0x5]]
  %v82 = vstv %s81
  %v83 = vmul.f32 %v35, %v82
  %v84 = vmul.f32 %v36, %v82
  %v85 = vadd.f32 %v79, %v83
  %v86 = vadd.f32 %v80, %v84
  %s87 = sld [smem:[#allocation3 + $0x6]]
  %v88 = vstv %s87
  %v89 = vmul.f32 %v38, %v88
  %v90 = vmul.f32 %v39, %v88
  %v91 = vadd.f32 %v85, %v89
  %v92 = vadd.f32 %v86, %v90
  %s93 = sld [smem:[#allocation3 + $0x7]]
  %v94 = vstv %s93
  %v95 = vmul.f32 %v41, %v94
  %v96 = vmul.f32 %v42, %v94
  %v97 = vadd.f32 %v91, %v95
  %v98 = vadd.f32 %v92, %v96
  %s99 = sld [smem:[#allocation3 + $0x8]]
  %v100 = vstv %s99
  %v101 = vmul.f32 %v44, %v100
  %v102 = vmul.f32 %v45, %v100
  %v103 = vadd.f32 %v97, %v101
  %v104 = vadd.f32 %v98, %v102
  %s105 = sld [smem:[#allocation3 + $0x9]]
  %v106 = vstv %s105
  %v107 = vmul.f32 %v47, %v106
  %v108 = vmul.f32 %v48, %v106
  %v109 = vadd.f32 %v103, %v107
  %v110 = vadd.f32 %v104, %v108
  %s111 = sld [smem:[#allocation3 + $0xa]]
  %v112 = vstv %s111
  %v113 = vmul.f32 %v20, %v112
  %v114 = vmul.f32 %v21, %v112
  %s115 = sld [smem:[#allocation4 + $0x1]]
  %v116 = vstv %s115
  %v117 = vadd.f32 %v113, %v116
  %v118 = vadd.f32 %v114, %v116
  %s119 = sld [smem:[#allocation3 + $0xb]]
  %v120 = vstv %s119
  %v121 = vmul.f32 %v23, %v120
  %v122 = vmul.f32 %v24, %v120
  %v123 = vadd.f32 %v117, %v121
  %v124 = vadd.f32 %v118, %v122
  %s125 = sld [smem:[#allocation3 + $0xc]]
  %v126 = vstv %s125
  %v127 = vmul.f32 %v26, %v126
  %v128 = vmul.f32 %v27, %v126
  %v129 = vadd.f32 %v123, %v127
  %v130 = vadd.f32 %v124, %v128
  %s131 = sld [smem:[#allocation3 + $0xd]]
  %v132 = vstv %s131
  %v133 = vmul.f32 %v29, %v132
  %v134 = vmul.f32 %v30, %v132
  %v135 = vadd.f32 %v129, %v133
  %v136 = vadd.f32 %v130, %v134
  %s137 = sld [smem:[#allocation3 + $0xe]]
  %v138 = vstv %s137
  %v139 = vmul.f32 %v32, %v138
  %v140 = vmul.f32 %v33, %v138
  %v141 = vadd.f32 %v135, %v139
  %v142 = vadd.f32 %v136, %v140
  %s143 = sld [smem:[#allocation3 + $0xf]]
  %v144 = vstv %s143
  %v145 = vmul.f32 %v35, %v144
  %v146 = vmul.f32 %v36, %v144
  %v147 = vadd.f32 %v141, %v145
  %v148 = vadd.f32 %v142, %v146
  %s149 = sld [smem:[#allocation3 + $0x10]]
  %v150 = vstv %s149
  %v151 = vmul.f32 %v38, %v150
  %v152 = vmul.f32 %v39, %v150
  %v153 = vadd.f32 %v147, %v151
  %v154 = vadd.f32 %v148, %v152
  %s155 = sld [smem:[#allocation3 + $0x11]]
  %v156 = vstv %s155
  %v157 = vmul.f32 %v41, %v156
  %v158 = vmul.f32 %v42, %v156
  %v159 = vadd.f32 %v153, %v157
  %v160 = vadd.f32 %v154, %v158
  %s161 = sld [smem:[#allocation3 + $0x12]]
  %v162 = vstv %s161
  %v163 = vmul.f32 %v44, %v162
  %v164 = vmul.f32 %v45, %v162
  %v165 = vadd.f32 %v159, %v163
  %v166 = vadd.f32 %v160, %v164
  %s167 = sld [smem:[#allocation3 + $0x13]]
  %v168 = vstv %s167
  %v169 = vmul.f32 %v47, %v168
  %v170 = vmul.f32 %v48, %v168
  %v171 = vadd.f32 %v165, %v169
  %v172 = vadd.f32 %v166, %v170
  %s173 = sld [smem:[#allocation3 + $0x14]]
  %v174 = vstv %s173
  %v175 = vmul.f32 %v20, %v174
  %v176 = vmul.f32 %v21, %v174
  %s177 = sld [smem:[#allocation4 + $0x2]]
  %v178 = vstv %s177
  %v179 = vadd.f32 %v175, %v178
  %v180 = vadd.f32 %v176, %v178
  %s181 = sld [smem:[#allocation3 + $0x15]]
  %v182 = vstv %s181
  %v183 = vmul.f32 %v23, %v182
  %v184 = vmul.f32 %v24, %v182
  %v185 = vadd.f32 %v179, %v183
  %v186 = vadd.f32 %v180, %v184
  %s187 = sld [smem:[#allocation3 + $0x16]]
  %v188 = vstv %s187
  %v189 = vmul.f32 %v26, %v188
  %v190 = vmul.f32 %v27, %v188
  %v191 = vadd.f32 %v185, %v189
  %v192 = vadd.f32 %v186, %v190
  %s193 = sld [smem:[#allocation3 + $0x17]]
  %v194 = vstv %s193
  %v195 = vmul.f32 %v29, %v194
  %v196 = vmul.f32 %v30, %v194
  %v197 = vadd.f32 %v191, %v195
  %v198 = vadd.f32 %v192, %v196
  %s199 = sld [smem:[#allocation3 + $0x18]]
  %v200 = vstv %s199
  %v201 = vmul.f32 %v32, %v200
  %v202 = vmul.f32 %v33, %v200
  %v203 = vadd.f32 %v197, %v201
  %v204 = vadd.f32 %v198, %v202
  %s205 = sld [smem:[#allocation3 + $0x19]]
  %v206 = vstv %s205
  %v207 = vmul.f32 %v35, %v206
  %v208 = vmul.f32 %v36, %v206
  %v209 = vadd.f32 %v203, %v207
  %v210 = vadd.f32 %v204, %v208
  %s211 = sld [smem:[#allocation3 + $0x1a]]
  %v212 = vstv %s211
  %v213 = vmul.f32 %v38, %v212
  %v214 = vmul.f32 %v39, %v212
  %v215 = vadd.f32 %v209, %v213
  %v216 = vadd.f32 %v210, %v214
  %s217 = sld [smem:[#allocation3 + $0x1b]]
  %v218 = vstv %s217
  %v219 = vmul.f32 %v41, %v218
  %v220 = vmul.f32 %v42, %v218
  %v221 = vadd.f32 %v215, %v219
  %v222 = vadd.f32 %v216, %v220
  %s223 = sld [smem:[#allocation3 + $0x1c]]
  %v224 = vstv %s223
  %v225 = vmul.f32 %v44, %v224
  %v226 = vmul.f32 %v45, %v224
  %v227 = vadd.f32 %v221, %v225
  %v228 = vadd.f32 %v222, %v226
  %s229 = sld [smem:[#allocation3 + $0x1d]]
  %v230 = vstv %s229
  %v231 = vmul.f32 %v47, %v230
  %v232 = vmul.f32 %v48, %v230
  %v233 = vadd.f32 %v227, %v231
  %v234 = vadd.f32 %v228, %v232
  %s235 = sld [smem:[#allocation3 + $0x1e]]
  %v236 = vstv %s235
  %v237 = vmul.f32 %v20, %v236
  %v238 = vmul.f32 %v21, %v236
  %s239 = sld [smem:[#allocation4 + $0x3]]
  %v240 = vstv %s239
  %v241 = vadd.f32 %v237, %v240
  %v242 = vadd.f32 %v238, %v240
  %s243 = sld [smem:[#allocation3 + $0x1f]]
  %v244 = vstv %s243
  %v245 = vmul.f32 %v23, %v244
  %v246 = vmul.f32 %v24, %v244
  %v247 = vadd.f32 %v241, %v245
  %v248 = vadd.f32 %v242, %v246
  %s249 = sld [smem:[#allocation3 + $0x20]]
  %v250 = vstv %s249
  %v251 = vmul.f32 %v26, %v250
  %v252 = vmul.f32 %v27, %v250
  %v253 = vadd.f32 %v247, %v251
  %v254 = vadd.f32 %v248, %v252
  %s255 = sld [smem:[#allocation3 + $0x21]]
  %v256 = vstv %s255
  %v257 = vmul.f32 %v29, %v256
  %v258 = vmul.f32 %v30, %v256
  %v259 = vadd.f32 %v253, %v257
  %v260 = vadd.f32 %v254, %v258
  %s261 = sld [smem:[#allocation3 + $0x22]]
  %v262 = vstv %s261
  %v263 = vmul.f32 %v32, %v262
  %v264 = vmul.f32 %v33, %v262
  %v265 = vadd.f32 %v259, %v263
  %v266 = vadd.f32 %v260, %v264
  %s267 = sld [smem:[#allocation3 + $0x23]]
  %v268 = vstv %s267
  %v269 = vmul.f32 %v35, %v268
  %v270 = vmul.f32 %v36, %v268
  %v271 = vadd.f32 %v265, %v269
  %v272 = vadd.f32 %v266, %v270
  %s273 = sld [smem:[#allocation3 + $0x24]]
  %v274 = vstv %s273
  %v275 = vmul.f32 %v38, %v274
  %v276 = vmul.f32 %v39, %v274
  %v277 = vadd.f32 %v271, %v275
  %v278 = vadd.f32 %v272, %v276
  %s279 = sld [smem:[#allocation3 + $0x25]]
  %v280 = vstv %s279
  %v281 = vmul.f32 %v41, %v280
  %v282 = vmul.f32 %v42, %v280
  %v283 = vadd.f32 %v277, %v281
  %v284 = vadd.f32 %v278, %v282
  %s285 = sld [smem:[#allocation3 + $0x26]]
  %v286 = vstv %s285
  %v287 = vmul.f32 %v44, %v286
  %v288 = vmul.f32 %v45, %v286
  %v289 = vadd.f32 %v283, %v287
  %v290 = vadd.f32 %v284, %v288
  %s291 = sld [smem:[#allocation3 + $0x27]]
  %v292 = vstv %s291
  %v293 = vmul.f32 %v47, %v292
  %v294 = vmul.f32 %v48, %v292
  %v295 = vadd.f32 %v289, %v293
  %v296 = vadd.f32 %v290, %v294
  %s297 = sld [smem:[#allocation3 + $0x28]]
  %v298 = vstv %s297
  %v299 = vmul.f32 %v20, %v298
  %v300 = vmul.f32 %v21, %v298
  %s301 = sld [smem:[#allocation4 + $0x4]]
  %v302 = vstv %s301
  %v303 = vadd.f32 %v299, %v302
  %v304 = vadd.f32 %v300, %v302
  %s305 = sld [smem:[#allocation3 + $0x29]]
  %v306 = vstv %s305
  %v307 = vmul.f32 %v23, %v306
  %v308 = vmul.f32 %v24, %v306
  %v309 = vadd.f32 %v303, %v307
  %v310 = vadd.f32 %v304, %v308
  %s311 = sld [smem:[#allocation3 + $0x2a]]
  %v312 = vstv %s311
  %v313 = vmul.f32 %v26, %v312
  %v314 = vmul.f32 %v27, %v312
  %v315 = vadd.f32 %v309, %v313
  %v316 = vadd.f32 %v310, %v314
  %s317 = sld [smem:[#allocation3 + $0x2b]]
  %v318 = vstv %s317
  %v319 = vmul.f32 %v29, %v318
  %v320 = vmul.f32 %v30, %v318
  %v321 = vadd.f32 %v315, %v319
  %v322 = vadd.f32 %v316, %v320
  %s323 = sld [smem:[#allocation3 + $0x2c]]
  %v324 = vstv %s323
  %v325 = vmul.f32 %v32, %v324
  %v326 = vmul.f32 %v33, %v324
  %v327 = vadd.f32 %v321, %v325
  %v328 = vadd.f32 %v322, %v326
  %s329 = sld [smem:[#allocation3 + $0x2d]]
  %v330 = vstv %s329
  %v331 = vmul.f32 %v35, %v330
  %v332 = vmul.f32 %v36, %v330
  %v333 = vadd.f32 %v327, %v331
  %v334 = vadd.f32 %v328, %v332
  %s335 = sld [smem:[#allocation3 + $0x2e]]
  %v336 = vstv %s335
  %v337 = vmul.f32 %v38, %v336
  %v338 = vmul.f32 %v39, %v336
  %v339 = vadd.f32 %v333, %v337
  %v340 = vadd.f32 %v334, %v338
  %s341 = sld [smem:[#allocation3 + $0x2f]]
  %v342 = vstv %s341
  %v343 = vmul.f32 %v41, %v342
  %v344 = vmul.f32 %v42, %v342
  %v345 = vadd.f32 %v339, %v343
  %v346 = vadd.f32 %v340, %v344
  %s347 = sld [smem:[#allocation3 + $0x30]]
  %v348 = vstv %s347
  %v349 = vmul.f32 %v44, %v348
  %v350 = vmul.f32 %v45, %v348
  %v351 = vadd.f32 %v345, %v349
  %v352 = vadd.f32 %v346, %v350
  %s353 = sld [smem:[#allocation3 + $0x31]]
  %v354 = vstv %s353
  %v355 = vmul.f32 %v47, %v354
  %v356 = vmul.f32 %v48, %v354
  %v357 = vadd.f32 %v351, %v355
  %v358 = vadd.f32 %v352, %v356
  %s359 = sld [smem:[#allocation3 + $0x32]]
  %v360 = vstv %s359
  %v361 = vmul.f32 %v20, %v360
  %v362 = vmul.f32 %v21, %v360
  %s363 = sld [smem:[#allocation4 + $0x5]]
  %v364 = vstv %s363
  %v365 = vadd.f32 %v361, %v364
  %v366 = vadd.f32 %v362, %v364
  %s367 = sld [smem:[#allocation3 + $0x33]]
  %v368 = vstv %s367
  %v369 = vmul.f32 %v23, %v368
  %v370 = vmul.f32 %v24, %v368
  %v371 = vadd.f32 %v365, %v369
  %v372 = vadd.f32 %v366, %v370
  %s373 = sld [smem:[#allocation3 + $0x34]]
  %v374 = vstv %s373
  %v375 = vmul.f32 %v26, %v374
  %v376 = vmul.f32 %v27, %v374
  %v377 = vadd.f32 %v371, %v375
  %v378 = vadd.f32 %v372, %v376
  %s379 = sld [smem:[#allocation3 + $0x35]]
  %v380 = vstv %s379
  %v381 = vmul.f32 %v29, %v380
  %v382 = vmul.f32 %v30, %v380
  %v383 = vadd.f32 %v377, %v381
  %v384 = vadd.f32 %v378, %v382
  %s385 = sld [smem:[#allocation3 + $0x36]]
  %v386 = vstv %s385
  %v387 = vmul.f32 %v32, %v386
  %v388 = vmul.f32 %v33, %v386
  %v389 = vadd.f32 %v383, %v387
  %v390 = vadd.f32 %v384, %v388
  %s391 = sld [smem:[#allocation3 + $0x37]]
  %v392 = vstv %s391
  %v393 = vmul.f32 %v35, %v392
  %v394 = vmul.f32 %v36, %v392
  %v395 = vadd.f32 %v389, %v393
  %v396 = vadd.f32 %v390, %v394
  %s397 = sld [smem:[#allocation3 + $0x38]]
  %v398 = vstv %s397
  %v399 = vmul.f32 %v38, %v398
  %v400 = vmul.f32 %v39, %v398
  %v401 = vadd.f32 %v395, %v399
  %v402 = vadd.f32 %v396, %v400
  %s403 = sld [smem:[#allocation3 + $0x39]]
  %v404 = vstv %s403
  %v405 = vmul.f32 %v41, %v404
  %v406 = vmul.f32 %v42, %v404
  %v407 = vadd.f32 %v401, %v405
  %v408 = vadd.f32 %v402, %v406
  %s409 = sld [smem:[#allocation3 + $0x3a]]
  %v410 = vstv %s409
  %v411 = vmul.f32 %v44, %v410
  %v412 = vmul.f32 %v45, %v410
  %v413 = vadd.f32 %v407, %v411
  %v414 = vadd.f32 %v408, %v412
  %s415 = sld [smem:[#allocation3 + $0x3b]]
  %v416 = vstv %s415
  %v417 = vmul.f32 %v47, %v416
  %v418 = vmul.f32 %v48, %v416
  %v419 = vadd.f32 %v413, %v417
  %v420 = vadd.f32 %v414, %v418
  %s421 = sld [smem:[#allocation3 + $0x3c]]
  %v422 = vstv %s421
  %v423 = vmul.f32 %v20, %v422
  %v424 = vmul.f32 %v21, %v422
  %s425 = sld [smem:[#allocation4 + $0x6]]
  %v426 = vstv %s425
  %v427 = vadd.f32 %v423, %v426
  %v428 = vadd.f32 %v424, %v426
  %s429 = sld [smem:[#allocation3 + $0x3d]]
  %v430 = vstv %s429
  %v431 = vmul.f32 %v23, %v430
  %v432 = vmul.f32 %v24, %v430
  %v433 = vadd.f32 %v427, %v431
  %v434 = vadd.f32 %v428, %v432
  %s435 = sld [smem:[#allocation3 + $0x3e]]
  %v436 = vstv %s435
  %v437 = vmul.f32 %v26, %v436
  %v438 = vmul.f32 %v27, %v436
  %v439 = vadd.f32 %v433, %v437
  %v440 = vadd.f32 %v434, %v438
  %s441 = sld [smem:[#allocation3 + $0x3f]]
  %v442 = vstv %s441
  %v443 = vmul.f32 %v29, %v442
  %v444 = vmul.f32 %v30, %v442
  %v445 = vadd.f32 %v439, %v443
  %v446 = vadd.f32 %v440, %v444
  %s447 = sld [smem:[#allocation3 + $0x40]]
  %v448 = vstv %s447
  %v449 = vmul.f32 %v32, %v448
  %v450 = vmul.f32 %v33, %v448
  %v451 = vadd.f32 %v445, %v449
  %v452 = vadd.f32 %v446, %v450
  %s453 = sld [smem:[#allocation3 + $0x41]]
  %v454 = vstv %s453
  %v455 = vmul.f32 %v35, %v454
  %v456 = vmul.f32 %v36, %v454
  %v457 = vadd.f32 %v451, %v455
  %v458 = vadd.f32 %v452, %v456
  %s459 = sld [smem:[#allocation3 + $0x42]]
  %v460 = vstv %s459
  %v461 = vmul.f32 %v38, %v460
  %v462 = vmul.f32 %v39, %v460
  %v463 = vadd.f32 %v457, %v461
  %v464 = vadd.f32 %v458, %v462
  %s465 = sld [smem:[#allocation3 + $0x43]]
  %v466 = vstv %s465
  %v467 = vmul.f32 %v41, %v466
  %v468 = vmul.f32 %v42, %v466
  %v469 = vadd.f32 %v463, %v467
  %v470 = vadd.f32 %v464, %v468
  %s471 = sld [smem:[#allocation3 + $0x44]]
  %v472 = vstv %s471
  %v473 = vmul.f32 %v44, %v472
  %v474 = vmul.f32 %v45, %v472
  %v475 = vadd.f32 %v469, %v473
  %v476 = vadd.f32 %v470, %v474
  %s477 = sld [smem:[#allocation3 + $0x45]]
  %v478 = vstv %s477
  %v479 = vmul.f32 %v47, %v478
  %v480 = vmul.f32 %v48, %v478
  %v481 = vadd.f32 %v475, %v479
  %v482 = vadd.f32 %v476, %v480
  %s483 = sld [smem:[#allocation3 + $0x46]]
  %v484 = vstv %s483
  %v485 = vmul.f32 %v20, %v484
  %v486 = vmul.f32 %v21, %v484
  %s487 = sld [smem:[#allocation4 + $0x7]]
  %v488 = vstv %s487
  %v489 = vadd.f32 %v485, %v488
  %v490 = vadd.f32 %v486, %v488
  %s491 = sld [smem:[#allocation3 + $0x47]]
  %v492 = vstv %s491
  %v493 = vmul.f32 %v23, %v492
  %v494 = vmul.f32 %v24, %v492
  %v495 = vadd.f32 %v489, %v493
  %v496 = vadd.f32 %v490, %v494
  %s497 = sld [smem:[#allocation3 + $0x48]]
  %v498 = vstv %s497
  %v499 = vmul.f32 %v26, %v498
  %v500 = vmul.f32 %v27, %v498
  %v501 = vadd.f32 %v495, %v499
  %v502 = vadd.f32 %v496, %v500
  %s503 = sld [smem:[#allocation3 + $0x49]]
  %v504 = vstv %s503
  %v505 = vmul.f32 %v29, %v504
  %v506 = vmul.f32 %v30, %v504
  %v507 = vadd.f32 %v501, %v505
  %v508 = vadd.f32 %v502, %v506
  %s509 = sld [smem:[#allocation3 + $0x4a]]
  %v510 = vstv %s509
  %v511 = vmul.f32 %v32, %v510
  %v512 = vmul.f32 %v33, %v510
  %v513 = vadd.f32 %v507, %v511
  %v514 = vadd.f32 %v508, %v512
  %s515 = sld [smem:[#allocation3 + $0x4b]]
  %v516 = vstv %s515
  %v517 = vmul.f32 %v35, %v516
  %v518 = vmul.f32 %v36, %v516
  %v519 = vadd.f32 %v513, %v517
  %v520 = vadd.f32 %v514, %v518
  %s521 = sld [smem:[#allocation3 + $0x4c]]
  %v522 = vstv %s521
  %v523 = vmul.f32 %v38, %v522
  %v524 = vmul.f32 %v39, %v522
  %v525 = vadd.f32 %v519, %v523
  %v526 = vadd.f32 %v520, %v524
  %s527 = sld [smem:[#allocation3 + $0x4d]]
  %v528 = vstv %s527
  %v529 = vmul.f32 %v41, %v528
  %v530 = vmul.f32 %v42, %v528
  %v531 = vadd.f32 %v525, %v529
  %v532 = vadd.f32 %v526, %v530
  %s533 = sld [smem:[#allocation3 + $0x4e]]
  %v534 = vstv %s533
  %v535 = vmul.f32 %v44, %v534
  %v536 = vmul.f32 %v45, %v534
  %v537 = vadd.f32 %v531, %v535
  %v538 = vadd.f32 %v532, %v536
  %s539 = sld [smem:[#allocation3 + $0x4f]]
  %v540 = vstv %s539
  %v541 = vmul.f32 %v47, %v540
  %v542 = vmul.f32 %v48, %v540
  %v543 = vadd.f32 %v537, %v541
  %v544 = vadd.f32 %v538, %v542
  %s545 = sld [smem:[#allocation3 + $0x50]]
  %v546 = vstv %s545
  %v547 = vmul.f32 %v20, %v546
  %v548 = vmul.f32 %v21, %v546
  %s549 = sld [smem:[#allocation4 + $0x8]]
  %v550 = vstv %s549
  %v551 = vadd.f32 %v547, %v550
  %v552 = vadd.f32 %v548, %v550
  %s553 = sld [smem:[#allocation3 + $0x51]]
  %v554 = vstv %s553
  %v555 = vmul.f32 %v23, %v554
  %v556 = vmul.f32 %v24, %v554
  %v557 = vadd.f32 %v551, %v555
  %v558 = vadd.f32 %v552, %v556
  %s559 = sld [smem:[#allocation3 + $0x52]]
  %v560 = vstv %s559
  %v561 = vmul.f32 %v26, %v560
  %v562 = vmul.f32 %v27, %v560
  %v563 = vadd.f32 %v557, %v561
  %v564 = vadd.f32 %v558, %v562
  %s565 = sld [smem:[#allocation3 + $0x53]]
  %v566 = vstv %s565
  %v567 = vmul.f32 %v29, %v566
  %v568 = vmul.f32 %v30, %v566
  %v569 = vadd.f32 %v563, %v567
  %v570 = vadd.f32 %v564, %v568
  %s571 = sld [smem:[#allocation3 + $0x54]]
  %v572 = vstv %s571
  %v573 = vmul.f32 %v32, %v572
  %v574 = vmul.f32 %v33, %v572
  %v575 = vadd.f32 %v569, %v573
  %v576 = vadd.f32 %v570, %v574
  %s577 = sld [smem:[#allocation3 + $0x55]]
  %v578 = vstv %s577
  %v579 = vmul.f32 %v35, %v578
  %v580 = vmul.f32 %v36, %v578
  %v581 = vadd.f32 %v575, %v579
  %v582 = vadd.f32 %v576, %v580
  %s583 = sld [smem:[#allocation3 + $0x56]]
  %v584 = vstv %s583
  %v585 = vmul.f32 %v38, %v584
  %v586 = vmul.f32 %v39, %v584
  %v587 = vadd.f32 %v581, %v585
  %v588 = vadd.f32 %v582, %v586
  %s589 = sld [smem:[#allocation3 + $0x57]]
  %v590 = vstv %s589
  %v591 = vmul.f32 %v41, %v590
  %v592 = vmul.f32 %v42, %v590
  %v593 = vadd.f32 %v587, %v591
  %v594 = vadd.f32 %v588, %v592
  %s595 = sld [smem:[#allocation3 + $0x58]]
  %v596 = vstv %s595
  %v597 = vmul.f32 %v44, %v596
  %v598 = vmul.f32 %v45, %v596
  %v599 = vadd.f32 %v593, %v597
  %v600 = vadd.f32 %v594, %v598
  %s601 = sld [smem:[#allocation3 + $0x59]]
  %v602 = vstv %s601
  %v603 = vmul.f32 %v47, %v602
  %v604 = vmul.f32 %v48, %v602
  %v605 = vadd.f32 %v599, %v603
  %v606 = vadd.f32 %v600, %v604
  %s607 = sld [smem:[#allocation3 + $0x5a]]
  %v608 = vstv %s607
  %v609 = vmul.f32 %v20, %v608
  %v610 = vmul.f32 %v21, %v608
  %s611 = sld [smem:[#allocation4 + $0x9]]
  %v612 = vstv %s611
  %v613 = vadd.f32 %v609, %v612
  %v614 = vadd.f32 %v610, %v612
  %s615 = sld [smem:[#allocation3 + $0x5b]]
  %v616 = vstv %s615
  %v617 = vmul.f32 %v23, %v616
  %v618 = vmul.f32 %v24, %v616
  %v619 = vadd.f32 %v613, %v617
  %v620 = vadd.f32 %v614, %v618
  %s621 = sld [smem:[#allocation3 + $0x5c]]
  %v622 = vstv %s621
  %v623 = vmul.f32 %v26, %v622
  %v624 = vmul.f32 %v27, %v622
  %v625 = vadd.f32 %v619, %v623
  %v626 = vadd.f32 %v620, %v624
  %s627 = sld [smem:[#allocation3 + $0x5d]]
  %v628 = vstv %s627
  %v629 = vmul.f32 %v29, %v628
  %v630 = vmul.f32 %v30, %v628
  %v631 = vadd.f32 %v625, %v629
  %v632 = vadd.f32 %v626, %v630
  %s633 = sld [smem:[#allocation3 + $0x5e]]
  %v634 = vstv %s633
  %v635 = vmul.f32 %v32, %v634
  %v636 = vmul.f32 %v33, %v634
  %v637 = vadd.f32 %v631, %v635
  %v638 = vadd.f32 %v632, %v636
  %s639 = sld [smem:[#allocation3 + $0x5f]]
  %v640 = vstv %s639
  %v641 = vmul.f32 %v35, %v640
  %v642 = vmul.f32 %v36, %v640
  %v643 = vadd.f32 %v637, %v641
  %v644 = vadd.f32 %v638, %v642
  %s645 = sld [smem:[#allocation3 + $0x60]]
  %v646 = vstv %s645
  %v647 = vmul.f32 %v38, %v646
  %v648 = vmul.f32 %v39, %v646
  %v649 = vadd.f32 %v643, %v647
  %v650 = vadd.f32 %v644, %v648
  %s651 = sld [smem:[#allocation3 + $0x61]]
  %v652 = vstv %s651
  %v653 = vmul.f32 %v41, %v652
  %v654 = vmul.f32 %v42, %v652
  %v655 = vadd.f32 %v649, %v653
  %v656 = vadd.f32 %v650, %v654
  %s657 = sld [smem:[#allocation3 + $0x62]]
  %v658 = vstv %s657
  %v659 = vmul.f32 %v44, %v658
  %v660 = vmul.f32 %v45, %v658
  %v661 = vadd.f32 %v655, %v659
  %v662 = vadd.f32 %v656, %v660
  %s663 = sld [smem:[#allocation3 + $0x63]]
  %v664 = vstv %s663
  %v665 = vmul.f32 %v47, %v664
  %v666 = vmul.f32 %v48, %v664
  %v667 = vadd.f32 %v661, %v665
  %v668 = vadd.f32 %v662, %v666
  %v669 = vmul.f32 %v109, 0.5
  %v670 = vmul.f32 %v110, 0.5
  %v671 = vtanh.pop %v669
  %v672 = vtanh.pop %v670
  %v673 = vmul.f32 %v671, 0.5
  %v674 = vmul.f32 %v672, 0.5
  %v675 = vadd.f32 %v673, 0.5
  %v676 = vadd.f32 %v674, 0.5
  %v677 = vmul.f32 %v171, 0.5
  %v678 = vmul.f32 %v172, 0.5
  %v679 = vtanh.pop %v677
  %v680 = vtanh.pop %v678
  %v681 = vmul.f32 %v679, 0.5
  %v682 = vmul.f32 %v680, 0.5
  %v683 = vadd.f32 %v681, 0.5
  %v684 = vadd.f32 %v682, 0.5
  %v685 = vmul.f32 %v233, 0.5
  %v686 = vmul.f32 %v234, 0.5
  %v687 = vtanh.pop %v685
  %v688 = vtanh.pop %v686
  %v689 = vmul.f32 %v687, 0.5
  %v690 = vmul.f32 %v688, 0.5
  %v691 = vadd.f32 %v689, 0.5
  %v692 = vadd.f32 %v690, 0.5
  %v693 = vmul.f32 %v295, 0.5
  %v694 = vmul.f32 %v296, 0.5
  %v695 = vtanh.pop %v693
  %v696 = vtanh.pop %v694
  %v697 = vmul.f32 %v695, 0.5
  %v698 = vmul.f32 %v696, 0.5
  %v699 = vadd.f32 %v697, 0.5
  %v700 = vadd.f32 %v698, 0.5
  %v701 = vmul.f32 %v357, 0.5
  %v702 = vmul.f32 %v358, 0.5
  %v703 = vtanh.pop %v701
  %v704 = vtanh.pop %v702
  %v705 = vmul.f32 %v703, 0.5
  %v706 = vmul.f32 %v704, 0.5
  %v707 = vadd.f32 %v705, 0.5
  %v708 = vadd.f32 %v706, 0.5
  %v709 = vmul.f32 %v419, 0.5
  %v710 = vmul.f32 %v420, 0.5
  %v711 = vtanh.pop %v709
  %v712 = vtanh.pop %v710
  %v713 = vmul.f32 %v711, 0.5
  %v714 = vmul.f32 %v712, 0.5
  %v715 = vadd.f32 %v713, 0.5
  %v716 = vadd.f32 %v714, 0.5
  %v717 = vmul.f32 %v481, 0.5
  %v718 = vmul.f32 %v482, 0.5
  %v719 = vtanh.pop %v717
  %v720 = vtanh.pop %v718
  %v721 = vmul.f32 %v719, 0.5
  %v722 = vmul.f32 %v720, 0.5
  %v723 = vadd.f32 %v721, 0.5
  %v724 = vadd.f32 %v722, 0.5
  %v725 = vmul.f32 %v543, 0.5
  %v726 = vmul.f32 %v544, 0.5
  %v727 = vtanh.pop %v725
  %v728 = vtanh.pop %v726
  %v729 = vmul.f32 %v727, 0.5
  %v730 = vmul.f32 %v728, 0.5
  %v731 = vadd.f32 %v729, 0.5
  %v732 = vadd.f32 %v730, 0.5
  %v733 = vmul.f32 %v605, 0.5
  %v734 = vmul.f32 %v606, 0.5
  %v735 = vtanh.pop %v733
  %v736 = vtanh.pop %v734
  %v737 = vmul.f32 %v735, 0.5
  %v738 = vmul.f32 %v736, 0.5
  %v739 = vadd.f32 %v737, 0.5
  %v740 = vadd.f32 %v738, 0.5
  %v741 = vmul.f32 %v667, 0.5
  %v742 = vmul.f32 %v668, 0.5
  %v743 = vtanh.pop %v741
  %v744 = vtanh.pop %v742
  %v745 = vmul.f32 %v743, 0.5
  %v746 = vmul.f32 %v744, 0.5
  %v747 = vadd.f32 %v745, 0.5
  %v748 = vadd.f32 %v746, 0.5
  %s749 = sld [smem:[#allocation3 + $0x64]]
  %v750 = vstv %s749
  %v751 = vmul.f32 %v675, %v750
  %v752 = vmul.f32 %v676, %v750
  %s753 = sld [smem:[#allocation4 + $0xa]]
  %v754 = vstv %s753
  %v755 = vadd.f32 %v751, %v754
  %v756 = vadd.f32 %v752, %v754
  %s757 = sld [smem:[#allocation3 + $0x65]]
  %v758 = vstv %s757
  %v759 = vmul.f32 %v683, %v758
  %v760 = vmul.f32 %v684, %v758
  %v761 = vadd.f32 %v755, %v759
  %v762 = vadd.f32 %v756, %v760
  %s763 = sld [smem:[#allocation3 + $0x66]]
  %v764 = vstv %s763
  %v765 = vmul.f32 %v691, %v764
  %v766 = vmul.f32 %v692, %v764
  %v767 = vadd.f32 %v761, %v765
  %v768 = vadd.f32 %v762, %v766
  %s769 = sld [smem:[#allocation3 + $0x67]]
  %v770 = vstv %s769
  %v771 = vmul.f32 %v699, %v770
  %v772 = vmul.f32 %v700, %v770
  %v773 = vadd.f32 %v767, %v771
  %v774 = vadd.f32 %v768, %v772
  %s775 = sld [smem:[#allocation3 + $0x68]]
  %v776 = vstv %s775
  %v777 = vmul.f32 %v707, %v776
  %v778 = vmul.f32 %v708, %v776
  %v779 = vadd.f32 %v773, %v777
  %v780 = vadd.f32 %v774, %v778
  %s781 = sld [smem:[#allocation3 + $0x69]]
  %v782 = vstv %s781
  %v783 = vmul.f32 %v715, %v782
  %v784 = vmul.f32 %v716, %v782
  %v785 = vadd.f32 %v779, %v783
  %v786 = vadd.f32 %v780, %v784
  %s787 = sld [smem:[#allocation3 + $0x6a]]
  %v788 = vstv %s787
  %v789 = vmul.f32 %v723, %v788
  %v790 = vmul.f32 %v724, %v788
  %v791 = vadd.f32 %v785, %v789
  %v792 = vadd.f32 %v786, %v790
  %s793 = sld [smem:[#allocation3 + $0x6b]]
  %v794 = vstv %s793
  %v795 = vmul.f32 %v731, %v794
  %v796 = vmul.f32 %v732, %v794
  %v797 = vadd.f32 %v791, %v795
  %v798 = vadd.f32 %v792, %v796
  %s799 = sld [smem:[#allocation3 + $0x6c]]
  %v800 = vstv %s799
  %v801 = vmul.f32 %v739, %v800
  %v802 = vmul.f32 %v740, %v800
  %v803 = vadd.f32 %v797, %v801
  %v804 = vadd.f32 %v798, %v802
  %s805 = sld [smem:[#allocation3 + $0x6d]]
  %v806 = vstv %s805
  %v807 = vmul.f32 %v747, %v806
  %v808 = vmul.f32 %v748, %v806
  %v809 = vadd.f32 %v803, %v807
  %v810 = vadd.f32 %v804, %v808
  %s811 = sld [smem:[#allocation3 + $0x6e]]
  %v812 = vstv %s811
  %v813 = vmul.f32 %v675, %v812
  %v814 = vmul.f32 %v676, %v812
  %s815 = sld [smem:[#allocation4 + $0xb]]
  %v816 = vstv %s815
  %v817 = vadd.f32 %v813, %v816
  %v818 = vadd.f32 %v814, %v816
  %s819 = sld [smem:[#allocation3 + $0x6f]]
  %v820 = vstv %s819
  %v821 = vmul.f32 %v683, %v820
  %v822 = vmul.f32 %v684, %v820
  %v823 = vadd.f32 %v817, %v821
  %v824 = vadd.f32 %v818, %v822
  %s825 = sld [smem:[#allocation3 + $0x70]]
  %v826 = vstv %s825
  %v827 = vmul.f32 %v691, %v826
  %v828 = vmul.f32 %v692, %v826
  %v829 = vadd.f32 %v823, %v827
  %v830 = vadd.f32 %v824, %v828
  %s831 = sld [smem:[#allocation3 + $0x71]]
  %v832 = vstv %s831
  %v833 = vmul.f32 %v699, %v832
  %v834 = vmul.f32 %v700, %v832
  %v835 = vadd.f32 %v829, %v833
  %v836 = vadd.f32 %v830, %v834
  %s837 = sld [smem:[#allocation3 + $0x72]]
  %v838 = vstv %s837
  %v839 = vmul.f32 %v707, %v838
  %v840 = vmul.f32 %v708, %v838
  %v841 = vadd.f32 %v835, %v839
  %v842 = vadd.f32 %v836, %v840
  %s843 = sld [smem:[#allocation3 + $0x73]]
  %v844 = vstv %s843
  %v845 = vmul.f32 %v715, %v844
  %v846 = vmul.f32 %v716, %v844
  %v847 = vadd.f32 %v841, %v845
  %v848 = vadd.f32 %v842, %v846
  %s849 = sld [smem:[#allocation3 + $0x74]]
  %v850 = vstv %s849
  %v851 = vmul.f32 %v723, %v850
  %v852 = vmul.f32 %v724, %v850
  %v853 = vadd.f32 %v847, %v851
  %v854 = vadd.f32 %v848, %v852
  %s855 = sld [smem:[#allocation3 + $0x75]]
  %v856 = vstv %s855
  %v857 = vmul.f32 %v731, %v856
  %v858 = vmul.f32 %v732, %v856
  %v859 = vadd.f32 %v853, %v857
  %v860 = vadd.f32 %v854, %v858
  %s861 = sld [smem:[#allocation3 + $0x76]]
  %v862 = vstv %s861
  %v863 = vmul.f32 %v739, %v862
  %v864 = vmul.f32 %v740, %v862
  %v865 = vadd.f32 %v859, %v863
  %v866 = vadd.f32 %v860, %v864
  %s867 = sld [smem:[#allocation3 + $0x77]]
  %v868 = vstv %s867
  %v869 = vmul.f32 %v747, %v868
  %v870 = vmul.f32 %v748, %v868
  %v871 = vadd.f32 %v865, %v869
  %v872 = vadd.f32 %v866, %v870
  %s873 = sld [smem:[#allocation3 + $0x78]]
  %v874 = vstv %s873
  %v875 = vmul.f32 %v675, %v874
  %v876 = vmul.f32 %v676, %v874
  %s877 = sld [smem:[#allocation4 + $0xc]]
  %v878 = vstv %s877
  %v879 = vadd.f32 %v875, %v878
  %v880 = vadd.f32 %v876, %v878
  %s881 = sld [smem:[#allocation3 + $0x79]]
  %v882 = vstv %s881
  %v883 = vmul.f32 %v683, %v882
  %v884 = vmul.f32 %v684, %v882
  %v885 = vadd.f32 %v879, %v883
  %v886 = vadd.f32 %v880, %v884
  %s887 = sld [smem:[#allocation3 + $0x7a]]
  %v888 = vstv %s887
  %v889 = vmul.f32 %v691, %v888
  %v890 = vmul.f32 %v692, %v888
  %v891 = vadd.f32 %v885, %v889
  %v892 = vadd.f32 %v886, %v890
  %s893 = sld [smem:[#allocation3 + $0x7b]]
  %v894 = vstv %s893
  %v895 = vmul.f32 %v699, %v894
  %v896 = vmul.f32 %v700, %v894
  %v897 = vadd.f32 %v891, %v895
  %v898 = vadd.f32 %v892, %v896
  %s899 = sld [smem:[#allocation3 + $0x7c]]
  %v900 = vstv %s899
  %v901 = vmul.f32 %v707, %v900
  %v902 = vmul.f32 %v708, %v900
  %v903 = vadd.f32 %v897, %v901
  %v904 = vadd.f32 %v898, %v902
  %s905 = sld [smem:[#allocation3 + $0x7d]]
  %v906 = vstv %s905
  %v907 = vmul.f32 %v715, %v906
  %v908 = vmul.f32 %v716, %v906
  %v909 = vadd.f32 %v903, %v907
  %v910 = vadd.f32 %v904, %v908
  %s911 = sld [smem:[#allocation3 + $0x7e]]
  %v912 = vstv %s911
  %v913 = vmul.f32 %v723, %v912
  %v914 = vmul.f32 %v724, %v912
  %v915 = vadd.f32 %v909, %v913
  %v916 = vadd.f32 %v910, %v914
  %s917 = sld [smem:[#allocation3 + $0x7f]]
  %v918 = vstv %s917
  %v919 = vmul.f32 %v731, %v918
  %v920 = vmul.f32 %v732, %v918
  %v921 = vadd.f32 %v915, %v919
  %v922 = vadd.f32 %v916, %v920
  %s923 = sld [smem:[#allocation3 + $0x80]]
  %v924 = vstv %s923
  %v925 = vmul.f32 %v739, %v924
  %v926 = vmul.f32 %v740, %v924
  %v927 = vadd.f32 %v921, %v925
  %v928 = vadd.f32 %v922, %v926
  %s929 = sld [smem:[#allocation3 + $0x81]]
  %v930 = vstv %s929
  %v931 = vmul.f32 %v747, %v930
  %v932 = vmul.f32 %v748, %v930
  %v933 = vadd.f32 %v927, %v931
  %v934 = vadd.f32 %v928, %v932
  %s935 = sld [smem:[#allocation3 + $0x82]]
  %v936 = vstv %s935
  %v937 = vmul.f32 %v675, %v936
  %v938 = vmul.f32 %v676, %v936
  %s939 = sld [smem:[#allocation4 + $0xd]]
  %v940 = vstv %s939
  %v941 = vadd.f32 %v937, %v940
  %v942 = vadd.f32 %v938, %v940
  %s943 = sld [smem:[#allocation3 + $0x83]]
  %v944 = vstv %s943
  %v945 = vmul.f32 %v683, %v944
  %v946 = vmul.f32 %v684, %v944
  %v947 = vadd.f32 %v941, %v945
  %v948 = vadd.f32 %v942, %v946
  %s949 = sld [smem:[#allocation3 + $0x84]]
  %v950 = vstv %s949
  %v951 = vmul.f32 %v691, %v950
  %v952 = vmul.f32 %v692, %v950
  %v953 = vadd.f32 %v947, %v951
  %v954 = vadd.f32 %v948, %v952
  %s955 = sld [smem:[#allocation3 + $0x85]]
  %v956 = vstv %s955
  %v957 = vmul.f32 %v699, %v956
  %v958 = vmul.f32 %v700, %v956
  %v959 = vadd.f32 %v953, %v957
  %v960 = vadd.f32 %v954, %v958
  %s961 = sld [smem:[#allocation3 + $0x86]]
  %v962 = vstv %s961
  %v963 = vmul.f32 %v707, %v962
  %v964 = vmul.f32 %v708, %v962
  %v965 = vadd.f32 %v959, %v963
  %v966 = vadd.f32 %v960, %v964
  %s967 = sld [smem:[#allocation3 + $0x87]]
  %v968 = vstv %s967
  %v969 = vmul.f32 %v715, %v968
  %v970 = vmul.f32 %v716, %v968
  %v971 = vadd.f32 %v965, %v969
  %v972 = vadd.f32 %v966, %v970
  %s973 = sld [smem:[#allocation3 + $0x88]]
  %v974 = vstv %s973
  %v975 = vmul.f32 %v723, %v974
  %v976 = vmul.f32 %v724, %v974
  %v977 = vadd.f32 %v971, %v975
  %v978 = vadd.f32 %v972, %v976
  %s979 = sld [smem:[#allocation3 + $0x89]]
  %v980 = vstv %s979
  %v981 = vmul.f32 %v731, %v980
  %v982 = vmul.f32 %v732, %v980
  %v983 = vadd.f32 %v977, %v981
  %v984 = vadd.f32 %v978, %v982
  %s985 = sld [smem:[#allocation3 + $0x8a]]
  %v986 = vstv %s985
  %v987 = vmul.f32 %v739, %v986
  %v988 = vmul.f32 %v740, %v986
  %v989 = vadd.f32 %v983, %v987
  %v990 = vadd.f32 %v984, %v988
  %s991 = sld [smem:[#allocation3 + $0x8b]]
  %v992 = vstv %s991
  %v993 = vmul.f32 %v747, %v992
  %v994 = vmul.f32 %v748, %v992
  %v995 = vadd.f32 %v989, %v993
  %v996 = vadd.f32 %v990, %v994
  %s997 = sld [smem:[#allocation3 + $0x8c]]
  %v998 = vstv %s997
  %v999 = vmul.f32 %v675, %v998
  %v1000 = vmul.f32 %v676, %v998
  %s1001 = sld [smem:[#allocation4 + $0xe]]
  %v1002 = vstv %s1001
  %v1003 = vadd.f32 %v999, %v1002
  %v1004 = vadd.f32 %v1000, %v1002
  %s1005 = sld [smem:[#allocation3 + $0x8d]]
  %v1006 = vstv %s1005
  %v1007 = vmul.f32 %v683, %v1006
  %v1008 = vmul.f32 %v684, %v1006
  %v1009 = vadd.f32 %v1003, %v1007
  %v1010 = vadd.f32 %v1004, %v1008
  %s1011 = sld [smem:[#allocation3 + $0x8e]]
  %v1012 = vstv %s1011
  %v1013 = vmul.f32 %v691, %v1012
  %v1014 = vmul.f32 %v692, %v1012
  %v1015 = vadd.f32 %v1009, %v1013
  %v1016 = vadd.f32 %v1010, %v1014
  %s1017 = sld [smem:[#allocation3 + $0x8f]]
  %v1018 = vstv %s1017
  %v1019 = vmul.f32 %v699, %v1018
  %v1020 = vmul.f32 %v700, %v1018
  %v1021 = vadd.f32 %v1015, %v1019
  %v1022 = vadd.f32 %v1016, %v1020
  %s1023 = sld [smem:[#allocation3 + $0x90]]
  %v1024 = vstv %s1023
  %v1025 = vmul.f32 %v707, %v1024
  %v1026 = vmul.f32 %v708, %v1024
  %v1027 = vadd.f32 %v1021, %v1025
  %v1028 = vadd.f32 %v1022, %v1026
  %s1029 = sld [smem:[#allocation3 + $0x91]]
  %v1030 = vstv %s1029
  %v1031 = vmul.f32 %v715, %v1030
  %v1032 = vmul.f32 %v716, %v1030
  %v1033 = vadd.f32 %v1027, %v1031
  %v1034 = vadd.f32 %v1028, %v1032
  %s1035 = sld [smem:[#allocation3 + $0x92]]
  %v1036 = vstv %s1035
  %v1037 = vmul.f32 %v723, %v1036
  %v1038 = vmul.f32 %v724, %v1036
  %v1039 = vadd.f32 %v1033, %v1037
  %v1040 = vadd.f32 %v1034, %v1038
  %s1041 = sld [smem:[#allocation3 + $0x93]]
  %v1042 = vstv %s1041
  %v1043 = vmul.f32 %v731, %v1042
  %v1044 = vmul.f32 %v732, %v1042
  %v1045 = vadd.f32 %v1039, %v1043
  %v1046 = vadd.f32 %v1040, %v1044
  %s1047 = sld [smem:[#allocation3 + $0x94]]
  %v1048 = vstv %s1047
  %v1049 = vmul.f32 %v739, %v1048
  %v1050 = vmul.f32 %v740, %v1048
  %v1051 = vadd.f32 %v1045, %v1049
  %v1052 = vadd.f32 %v1046, %v1050
  %s1053 = sld [smem:[#allocation3 + $0x95]]
  %v1054 = vstv %s1053
  %v1055 = vmul.f32 %v747, %v1054
  %v1056 = vmul.f32 %v748, %v1054
  %v1057 = vadd.f32 %v1051, %v1055
  %v1058 = vadd.f32 %v1052, %v1056
  %s1059 = sld [smem:[#allocation3 + $0x96]]
  %v1060 = vstv %s1059
  %v1061 = vmul.f32 %v675, %v1060
  %v1062 = vmul.f32 %v676, %v1060
  %s1063 = sld [smem:[#allocation4 + $0xf]]
  %v1064 = vstv %s1063
  %v1065 = vadd.f32 %v1061, %v1064
  %v1066 = vadd.f32 %v1062, %v1064
  %s1067 = sld [smem:[#allocation3 + $0x97]]
  %v1068 = vstv %s1067
  %v1069 = vmul.f32 %v683, %v1068
  %v1070 = vmul.f32 %v684, %v1068
  %v1071 = vadd.f32 %v1065, %v1069
  %v1072 = vadd.f32 %v1066, %v1070
  %s1073 = sld [smem:[#allocation3 + $0x98]]
  %v1074 = vstv %s1073
  %v1075 = vmul.f32 %v691, %v1074
  %v1076 = vmul.f32 %v692, %v1074
  %v1077 = vadd.f32 %v1071, %v1075
  %v1078 = vadd.f32 %v1072, %v1076
  %s1079 = sld [smem:[#allocation3 + $0x99]]
  %v1080 = vstv %s1079
  %v1081 = vmul.f32 %v699, %v1080
  %v1082 = vmul.f32 %v700, %v1080
  %v1083 = vadd.f32 %v1077, %v1081
  %v1084 = vadd.f32 %v1078, %v1082
  %s1085 = sld [smem:[#allocation3 + $0x9a]]
  %v1086 = vstv %s1085
  %v1087 = vmul.f32 %v707, %v1086
  %v1088 = vmul.f32 %v708, %v1086
  %v1089 = vadd.f32 %v1083, %v1087
  %v1090 = vadd.f32 %v1084, %v1088
  %s1091 = sld [smem:[#allocation3 + $0x9b]]
  %v1092 = vstv %s1091
  %v1093 = vmul.f32 %v715, %v1092
  %v1094 = vmul.f32 %v716, %v1092
  %v1095 = vadd.f32 %v1089, %v1093
  %v1096 = vadd.f32 %v1090, %v1094
  %s1097 = sld [smem:[#allocation3 + $0x9c]]
  %v1098 = vstv %s1097
  %v1099 = vmul.f32 %v723, %v1098
  %v1100 = vmul.f32 %v724, %v1098
  %v1101 = vadd.f32 %v1095, %v1099
  %v1102 = vadd.f32 %v1096, %v1100
  %s1103 = sld [smem:[#allocation3 + $0x9d]]
  %v1104 = vstv %s1103
  %v1105 = vmul.f32 %v731, %v1104
  %v1106 = vmul.f32 %v732, %v1104
  %v1107 = vadd.f32 %v1101, %v1105
  %v1108 = vadd.f32 %v1102, %v1106
  %s1109 = sld [smem:[#allocation3 + $0x9e]]
  %v1110 = vstv %s1109
  %v1111 = vmul.f32 %v739, %v1110
  %v1112 = vmul.f32 %v740, %v1110
  %v1113 = vadd.f32 %v1107, %v1111
  %v1114 = vadd.f32 %v1108, %v1112
  %s1115 = sld [smem:[#allocation3 + $0x9f]]
  %v1116 = vstv %s1115
  %v1117 = vmul.f32 %v747, %v1116
  %v1118 = vmul.f32 %v748, %v1116
  %v1119 = vadd.f32 %v1113, %v1117
  %v1120 = vadd.f32 %v1114, %v1118
  %s1121 = sld [smem:[#allocation3 + $0xa0]]
  %v1122 = vstv %s1121
  %v1123 = vmul.f32 %v675, %v1122
  %v1124 = vmul.f32 %v676, %v1122
  %s1125 = sld [smem:[#allocation4 + $0x10]]
  %v1126 = vstv %s1125
  %v1127 = vadd.f32 %v1123, %v1126
  %v1128 = vadd.f32 %v1124, %v1126
  %s1129 = sld [smem:[#allocation3 + $0xa1]]
  %v1130 = vstv %s1129
  %v1131 = vmul.f32 %v683, %v1130
  %v1132 = vmul.f32 %v684, %v1130
  %v1133 = vadd.f32 %v1127, %v1131
  %v1134 = vadd.f32 %v1128, %v1132
  %s1135 = sld [smem:[#allocation3 + $0xa2]]
  %v1136 = vstv %s1135
  %v1137 = vmul.f32 %v691, %v1136
  %v1138 = vmul.f32 %v692, %v1136
  %v1139 = vadd.f32 %v1133, %v1137
  %v1140 = vadd.f32 %v1134, %v1138
  %s1141 = sld [smem:[#allocation3 + $0xa3]]
  %v1142 = vstv %s1141
  %v1143 = vmul.f32 %v699, %v1142
  %v1144 = vmul.f32 %v700, %v1142
  %v1145 = vadd.f32 %v1139, %v1143
  %v1146 = vadd.f32 %v1140, %v1144
  %s1147 = sld [smem:[#allocation3 + $0xa4]]
  %v1148 = vstv %s1147
  %v1149 = vmul.f32 %v707, %v1148
  %v1150 = vmul.f32 %v708, %v1148
  %v1151 = vadd.f32 %v1145, %v1149
  %v1152 = vadd.f32 %v1146, %v1150
  %s1153 = sld [smem:[#allocation3 + $0xa5]]
  %v1154 = vstv %s1153
  %v1155 = vmul.f32 %v715, %v1154
  %v1156 = vmul.f32 %v716, %v1154
  %v1157 = vadd.f32 %v1151, %v1155
  %v1158 = vadd.f32 %v1152, %v1156
  %s1159 = sld [smem:[#allocation3 + $0xa6]]
  %v1160 = vstv %s1159
  %v1161 = vmul.f32 %v723, %v1160
  %v1162 = vmul.f32 %v724, %v1160
  %v1163 = vadd.f32 %v1157, %v1161
  %v1164 = vadd.f32 %v1158, %v1162
  %s1165 = sld [smem:[#allocation3 + $0xa7]]
  %v1166 = vstv %s1165
  %v1167 = vmul.f32 %v731, %v1166
  %v1168 = vmul.f32 %v732, %v1166
  %v1169 = vadd.f32 %v1163, %v1167
  %v1170 = vadd.f32 %v1164, %v1168
  %s1171 = sld [smem:[#allocation3 + $0xa8]]
  %v1172 = vstv %s1171
  %v1173 = vmul.f32 %v739, %v1172
  %v1174 = vmul.f32 %v740, %v1172
  %v1175 = vadd.f32 %v1169, %v1173
  %v1176 = vadd.f32 %v1170, %v1174
  %s1177 = sld [smem:[#allocation3 + $0xa9]]
  %v1178 = vstv %s1177
  %v1179 = vmul.f32 %v747, %v1178
  %v1180 = vmul.f32 %v748, %v1178
  %v1181 = vadd.f32 %v1175, %v1179
  %v1182 = vadd.f32 %v1176, %v1180
  %s1183 = sld [smem:[#allocation3 + $0xaa]]
  %v1184 = vstv %s1183
  %v1185 = vmul.f32 %v675, %v1184
  %v1186 = vmul.f32 %v676, %v1184
  %s1187 = sld [smem:[#allocation4 + $0x11]]
  %v1188 = vstv %s1187
  %v1189 = vadd.f32 %v1185, %v1188
  %v1190 = vadd.f32 %v1186, %v1188
  %s1191 = sld [smem:[#allocation3 + $0xab]]
  %v1192 = vstv %s1191
  %v1193 = vmul.f32 %v683, %v1192
  %v1194 = vmul.f32 %v684, %v1192
  %v1195 = vadd.f32 %v1189, %v1193
  %v1196 = vadd.f32 %v1190, %v1194
  %s1197 = sld [smem:[#allocation3 + $0xac]]
  %v1198 = vstv %s1197
  %v1199 = vmul.f32 %v691, %v1198
  %v1200 = vmul.f32 %v692, %v1198
  %v1201 = vadd.f32 %v1195, %v1199
  %v1202 = vadd.f32 %v1196, %v1200
  %s1203 = sld [smem:[#allocation3 + $0xad]]
  %v1204 = vstv %s1203
  %v1205 = vmul.f32 %v699, %v1204
  %v1206 = vmul.f32 %v700, %v1204
  %v1207 = vadd.f32 %v1201, %v1205
  %v1208 = vadd.f32 %v1202, %v1206
  %s1209 = sld [smem:[#allocation3 + $0xae]]
  %v1210 = vstv %s1209
  %v1211 = vmul.f32 %v707, %v1210
  %v1212 = vmul.f32 %v708, %v1210
  %v1213 = vadd.f32 %v1207, %v1211
  %v1214 = vadd.f32 %v1208, %v1212
  %s1215 = sld [smem:[#allocation3 + $0xaf]]
  %v1216 = vstv %s1215
  %v1217 = vmul.f32 %v715, %v1216
  %v1218 = vmul.f32 %v716, %v1216
  %v1219 = vadd.f32 %v1213, %v1217
  %v1220 = vadd.f32 %v1214, %v1218
  %s1221 = sld [smem:[#allocation3 + $0xb0]]
  %v1222 = vstv %s1221
  %v1223 = vmul.f32 %v723, %v1222
  %v1224 = vmul.f32 %v724, %v1222
  %v1225 = vadd.f32 %v1219, %v1223
  %v1226 = vadd.f32 %v1220, %v1224
  %s1227 = sld [smem:[#allocation3 + $0xb1]]
  %v1228 = vstv %s1227
  %v1229 = vmul.f32 %v731, %v1228
  %v1230 = vmul.f32 %v732, %v1228
  %v1231 = vadd.f32 %v1225, %v1229
  %v1232 = vadd.f32 %v1226, %v1230
  %s1233 = sld [smem:[#allocation3 + $0xb2]]
  %v1234 = vstv %s1233
  %v1235 = vmul.f32 %v739, %v1234
  %v1236 = vmul.f32 %v740, %v1234
  %v1237 = vadd.f32 %v1231, %v1235
  %v1238 = vadd.f32 %v1232, %v1236
  %s1239 = sld [smem:[#allocation3 + $0xb3]]
  %v1240 = vstv %s1239
  %v1241 = vmul.f32 %v747, %v1240
  %v1242 = vmul.f32 %v748, %v1240
  %v1243 = vadd.f32 %v1237, %v1241
  %v1244 = vadd.f32 %v1238, %v1242
  %s1245 = sld [smem:[#allocation3 + $0xb4]]
  %v1246 = vstv %s1245
  %v1247 = vmul.f32 %v675, %v1246
  %v1248 = vmul.f32 %v676, %v1246
  %s1249 = sld [smem:[#allocation4 + $0x12]]
  %v1250 = vstv %s1249
  %v1251 = vadd.f32 %v1247, %v1250
  %v1252 = vadd.f32 %v1248, %v1250
  %s1253 = sld [smem:[#allocation3 + $0xb5]]
  %v1254 = vstv %s1253
  %v1255 = vmul.f32 %v683, %v1254
  %v1256 = vmul.f32 %v684, %v1254
  %v1257 = vadd.f32 %v1251, %v1255
  %v1258 = vadd.f32 %v1252, %v1256
  %s1259 = sld [smem:[#allocation3 + $0xb6]]
  %v1260 = vstv %s1259
  %v1261 = vmul.f32 %v691, %v1260
  %v1262 = vmul.f32 %v692, %v1260
  %v1263 = vadd.f32 %v1257, %v1261
  %v1264 = vadd.f32 %v1258, %v1262
  %s1265 = sld [smem:[#allocation3 + $0xb7]]
  %v1266 = vstv %s1265
  %v1267 = vmul.f32 %v699, %v1266
  %v1268 = vmul.f32 %v700, %v1266
  %v1269 = vadd.f32 %v1263, %v1267
  %v1270 = vadd.f32 %v1264, %v1268
  %s1271 = sld [smem:[#allocation3 + $0xb8]]
  %v1272 = vstv %s1271
  %v1273 = vmul.f32 %v707, %v1272
  %v1274 = vmul.f32 %v708, %v1272
  %v1275 = vadd.f32 %v1269, %v1273
  %v1276 = vadd.f32 %v1270, %v1274
  %s1277 = sld [smem:[#allocation3 + $0xb9]]
  %v1278 = vstv %s1277
  %v1279 = vmul.f32 %v715, %v1278
  %v1280 = vmul.f32 %v716, %v1278
  %v1281 = vadd.f32 %v1275, %v1279
  %v1282 = vadd.f32 %v1276, %v1280
  %s1283 = sld [smem:[#allocation3 + $0xba]]
  %v1284 = vstv %s1283
  %v1285 = vmul.f32 %v723, %v1284
  %v1286 = vmul.f32 %v724, %v1284
  %v1287 = vadd.f32 %v1281, %v1285
  %v1288 = vadd.f32 %v1282, %v1286
  %s1289 = sld [smem:[#allocation3 + $0xbb]]
  %v1290 = vstv %s1289
  %v1291 = vmul.f32 %v731, %v1290
  %v1292 = vmul.f32 %v732, %v1290
  %v1293 = vadd.f32 %v1287, %v1291
  %v1294 = vadd.f32 %v1288, %v1292
  %s1295 = sld [smem:[#allocation3 + $0xbc]]
  %v1296 = vstv %s1295
  %v1297 = vmul.f32 %v739, %v1296
  %v1298 = vmul.f32 %v740, %v1296
  %v1299 = vadd.f32 %v1293, %v1297
  %v1300 = vadd.f32 %v1294, %v1298
  %s1301 = sld [smem:[#allocation3 + $0xbd]]
  %v1302 = vstv %s1301
  %v1303 = vmul.f32 %v747, %v1302
  %v1304 = vmul.f32 %v748, %v1302
  %v1305 = vadd.f32 %v1299, %v1303
  %v1306 = vadd.f32 %v1300, %v1304
  %s1307 = sld [smem:[#allocation3 + $0xbe]]
  %v1308 = vstv %s1307
  %v1309 = vmul.f32 %v675, %v1308
  %v1310 = vmul.f32 %v676, %v1308
  %s1311 = sld [smem:[#allocation4 + $0x13]]
  %v1312 = vstv %s1311
  %v1313 = vadd.f32 %v1309, %v1312
  %v1314 = vadd.f32 %v1310, %v1312
  %s1315 = sld [smem:[#allocation3 + $0xbf]]
  %v1316 = vstv %s1315
  %v1317 = vmul.f32 %v683, %v1316
  %v1318 = vmul.f32 %v684, %v1316
  %v1319 = vadd.f32 %v1313, %v1317
  %v1320 = vadd.f32 %v1314, %v1318
  %s1321 = sld [smem:[#allocation3 + $0xc0]]
  %v1322 = vstv %s1321
  %v1323 = vmul.f32 %v691, %v1322
  %v1324 = vmul.f32 %v692, %v1322
  %v1325 = vadd.f32 %v1319, %v1323
  %v1326 = vadd.f32 %v1320, %v1324
  %s1327 = sld [smem:[#allocation3 + $0xc1]]
  %v1328 = vstv %s1327
  %v1329 = vmul.f32 %v699, %v1328
  %v1330 = vmul.f32 %v700, %v1328
  %v1331 = vadd.f32 %v1325, %v1329
  %v1332 = vadd.f32 %v1326, %v1330
  %s1333 = sld [smem:[#allocation3 + $0xc2]]
  %v1334 = vstv %s1333
  %v1335 = vmul.f32 %v707, %v1334
  %v1336 = vmul.f32 %v708, %v1334
  %v1337 = vadd.f32 %v1331, %v1335
  %v1338 = vadd.f32 %v1332, %v1336
  %s1339 = sld [smem:[#allocation3 + $0xc3]]
  %v1340 = vstv %s1339
  %v1341 = vmul.f32 %v715, %v1340
  %v1342 = vmul.f32 %v716, %v1340
  %v1343 = vadd.f32 %v1337, %v1341
  %v1344 = vadd.f32 %v1338, %v1342
  %s1345 = sld [smem:[#allocation3 + $0xc4]]
  %v1346 = vstv %s1345
  %v1347 = vmul.f32 %v723, %v1346
  %v1348 = vmul.f32 %v724, %v1346
  %v1349 = vadd.f32 %v1343, %v1347
  %v1350 = vadd.f32 %v1344, %v1348
  %s1351 = sld [smem:[#allocation3 + $0xc5]]
  %v1352 = vstv %s1351
  %v1353 = vmul.f32 %v731, %v1352
  %v1354 = vmul.f32 %v732, %v1352
  %v1355 = vadd.f32 %v1349, %v1353
  %v1356 = vadd.f32 %v1350, %v1354
  %s1357 = sld [smem:[#allocation3 + $0xc6]]
  %v1358 = vstv %s1357
  %v1359 = vmul.f32 %v739, %v1358
  %v1360 = vmul.f32 %v740, %v1358
  %v1361 = vadd.f32 %v1355, %v1359
  %v1362 = vadd.f32 %v1356, %v1360
  %s1363 = sld [smem:[#allocation3 + $0xc7]]
  %v1364 = vstv %s1363
  %v1365 = vmul.f32 %v747, %v1364
  %v1366 = vmul.f32 %v748, %v1364
  %v1367 = vadd.f32 %v1361, %v1365
  %v1368 = vadd.f32 %v1362, %v1366
  %v1369 = vmul.f32 %v809, 0.5
  %v1370 = vmul.f32 %v810, 0.5
  %v1371 = vtanh.pop %v1369
  %v1372 = vtanh.pop %v1370
  %v1373 = vmul.f32 %v1371, 0.5
  %v1374 = vmul.f32 %v1372, 0.5
  %v1375 = vadd.f32 %v1373, 0.5
  %v1376 = vadd.f32 %v1374, 0.5
  %v1377 = vmul.f32 %v871, 0.5
  %v1378 = vmul.f32 %v872, 0.5
  %v1379 = vtanh.pop %v1377
  %v1380 = vtanh.pop %v1378
  %v1381 = vmul.f32 %v1379, 0.5
  %v1382 = vmul.f32 %v1380, 0.5
  %v1383 = vadd.f32 %v1381, 0.5
  %v1384 = vadd.f32 %v1382, 0.5
  %v1385 = vmul.f32 %v933, 0.5
  %v1386 = vmul.f32 %v934, 0.5
  %v1387 = vtanh.pop %v1385
  %v1388 = vtanh.pop %v1386
  %v1389 = vmul.f32 %v1387, 0.5
  %v1390 = vmul.f32 %v1388, 0.5
  %v1391 = vadd.f32 %v1389, 0.5
  %v1392 = vadd.f32 %v1390, 0.5
  %v1393 = vmul.f32 %v995, 0.5
  %v1394 = vmul.f32 %v996, 0.5
  %v1395 = vtanh.pop %v1393
  %v1396 = vtanh.pop %v1394
  %v1397 = vmul.f32 %v1395, 0.5
  %v1398 = vmul.f32 %v1396, 0.5
  %v1399 = vadd.f32 %v1397, 0.5
  %v1400 = vadd.f32 %v1398, 0.5
  %v1401 = vmul.f32 %v1057, 0.5
  %v1402 = vmul.f32 %v1058, 0.5
  %v1403 = vtanh.pop %v1401
  %v1404 = vtanh.pop %v1402
  %v1405 = vmul.f32 %v1403, 0.5
  %v1406 = vmul.f32 %v1404, 0.5
  %v1407 = vadd.f32 %v1405, 0.5
  %v1408 = vadd.f32 %v1406, 0.5
  %v1409 = vmul.f32 %v1119, 0.5
  %v1410 = vmul.f32 %v1120, 0.5
  %v1411 = vtanh.pop %v1409
  %v1412 = vtanh.pop %v1410
  %v1413 = vmul.f32 %v1411, 0.5
  %v1414 = vmul.f32 %v1412, 0.5
  %v1415 = vadd.f32 %v1413, 0.5
  %v1416 = vadd.f32 %v1414, 0.5
  %v1417 = vmul.f32 %v1181, 0.5
  %v1418 = vmul.f32 %v1182, 0.5
  %v1419 = vtanh.pop %v1417
  %v1420 = vtanh.pop %v1418
  %v1421 = vmul.f32 %v1419, 0.5
  %v1422 = vmul.f32 %v1420, 0.5
  %v1423 = vadd.f32 %v1421, 0.5
  %v1424 = vadd.f32 %v1422, 0.5
  %v1425 = vmul.f32 %v1243, 0.5
  %v1426 = vmul.f32 %v1244, 0.5
  %v1427 = vtanh.pop %v1425
  %v1428 = vtanh.pop %v1426
  %v1429 = vmul.f32 %v1427, 0.5
  %v1430 = vmul.f32 %v1428, 0.5
  %v1431 = vadd.f32 %v1429, 0.5
  %v1432 = vadd.f32 %v1430, 0.5
  %v1433 = vmul.f32 %v1305, 0.5
  %v1434 = vmul.f32 %v1306, 0.5
  %v1435 = vtanh.pop %v1433
  %v1436 = vtanh.pop %v1434
  %v1437 = vmul.f32 %v1435, 0.5
  %v1438 = vmul.f32 %v1436, 0.5
  %v1439 = vadd.f32 %v1437, 0.5
  %v1440 = vadd.f32 %v1438, 0.5
  %v1441 = vmul.f32 %v1367, 0.5
  %v1442 = vmul.f32 %v1368, 0.5
  %v1443 = vtanh.pop %v1441
  %v1444 = vtanh.pop %v1442
  %v1445 = vmul.f32 %v1443, 0.5
  %v1446 = vmul.f32 %v1444, 0.5
  %v1447 = vadd.f32 %v1445, 0.5
  %v1448 = vadd.f32 %v1446, 0.5
  %s1449 = sld [smem:[#allocation3 + $0xc8]]
  %v1450 = vstv %s1449
  %v1451 = vmul.f32 %v1375, %v1450
  %v1452 = vmul.f32 %v1376, %v1450
  %s1453 = sld [smem:[#allocation4 + $0x14]]
  %v1454 = vstv %s1453
  %v1455 = vadd.f32 %v1451, %v1454
  %v1456 = vadd.f32 %v1452, %v1454
  %s1457 = sld [smem:[#allocation3 + $0xc9]]
  %v1458 = vstv %s1457
  %v1459 = vmul.f32 %v1383, %v1458
  %v1460 = vmul.f32 %v1384, %v1458
  %v1461 = vadd.f32 %v1455, %v1459
  %v1462 = vadd.f32 %v1456, %v1460
  %s1463 = sld [smem:[#allocation3 + $0xca]]
  %v1464 = vstv %s1463
  %v1465 = vmul.f32 %v1391, %v1464
  %v1466 = vmul.f32 %v1392, %v1464
  %v1467 = vadd.f32 %v1461, %v1465
  %v1468 = vadd.f32 %v1462, %v1466
  %s1469 = sld [smem:[#allocation3 + $0xcb]]
  %v1470 = vstv %s1469
  %v1471 = vmul.f32 %v1399, %v1470
  %v1472 = vmul.f32 %v1400, %v1470
  %v1473 = vadd.f32 %v1467, %v1471
  %v1474 = vadd.f32 %v1468, %v1472
  %s1475 = sld [smem:[#allocation3 + $0xcc]]
  %v1476 = vstv %s1475
  %v1477 = vmul.f32 %v1407, %v1476
  %v1478 = vmul.f32 %v1408, %v1476
  %v1479 = vadd.f32 %v1473, %v1477
  %v1480 = vadd.f32 %v1474, %v1478
  %s1481 = sld [smem:[#allocation3 + $0xcd]]
  %v1482 = vstv %s1481
  %v1483 = vmul.f32 %v1415, %v1482
  %v1484 = vmul.f32 %v1416, %v1482
  %v1485 = vadd.f32 %v1479, %v1483
  %v1486 = vadd.f32 %v1480, %v1484
  %s1487 = sld [smem:[#allocation3 + $0xce]]
  %v1488 = vstv %s1487
  %v1489 = vmul.f32 %v1423, %v1488
  %v1490 = vmul.f32 %v1424, %v1488
  %v1491 = vadd.f32 %v1485, %v1489
  %v1492 = vadd.f32 %v1486, %v1490
  %s1493 = sld [smem:[#allocation3 + $0xcf]]
  %v1494 = vstv %s1493
  %v1495 = vmul.f32 %v1431, %v1494
  %v1496 = vmul.f32 %v1432, %v1494
  %v1497 = vadd.f32 %v1491, %v1495
  %v1498 = vadd.f32 %v1492, %v1496
  %s1499 = sld [smem:[#allocation3 + $0xd0]]
  %v1500 = vstv %s1499
  %v1501 = vmul.f32 %v1439, %v1500
  %v1502 = vmul.f32 %v1440, %v1500
  %v1503 = vadd.f32 %v1497, %v1501
  %v1504 = vadd.f32 %v1498, %v1502
  %s1505 = sld [smem:[#allocation3 + $0xd1]]
  %v1506 = vstv %s1505
  %v1507 = vmul.f32 %v1447, %v1506
  %v1508 = vmul.f32 %v1448, %v1506
  %v1509 = vadd.f32 %v1503, %v1507
  %v1510 = vadd.f32 %v1504, %v1508
  %s1511 = sld [smem:[#allocation3 + $0xd2]]
  %v1512 = vstv %s1511
  %v1513 = vmul.f32 %v1375, %v1512
  %v1514 = vmul.f32 %v1376, %v1512
  %s1515 = sld [smem:[#allocation4 + $0x15]]
  %v1516 = vstv %s1515
  %v1517 = vadd.f32 %v1513, %v1516
  %v1518 = vadd.f32 %v1514, %v1516
  %s1519 = sld [smem:[#allocation3 + $0xd3]]
  %v1520 = vstv %s1519
  %v1521 = vmul.f32 %v1383, %v1520
  %v1522 = vmul.f32 %v1384, %v1520
  %v1523 = vadd.f32 %v1517, %v1521
  %v1524 = vadd.f32 %v1518, %v1522
  %s1525 = sld [smem:[#allocation3 + $0xd4]]
  %v1526 = vstv %s1525
  %v1527 = vmul.f32 %v1391, %v1526
  %v1528 = vmul.f32 %v1392, %v1526
  %v1529 = vadd.f32 %v1523, %v1527
  %v1530 = vadd.f32 %v1524, %v1528
  %s1531 = sld [smem:[#allocation3 + $0xd5]]
  %v1532 = vstv %s1531
  %v1533 = vmul.f32 %v1399, %v1532
  %v1534 = vmul.f32 %v1400, %v1532
  %v1535 = vadd.f32 %v1529, %v1533
  %v1536 = vadd.f32 %v1530, %v1534
  %s1537 = sld [smem:[#allocation3 + $0xd6]]
  %v1538 = vstv %s1537
  %v1539 = vmul.f32 %v1407, %v1538
  %v1540 = vmul.f32 %v1408, %v1538
  %v1541 = vadd.f32 %v1535, %v1539
  %v1542 = vadd.f32 %v1536, %v1540
  %s1543 = sld [smem:[#allocation3 + $0xd7]]
  %v1544 = vstv %s1543
  %v1545 = vmul.f32 %v1415, %v1544
  %v1546 = vmul.f32 %v1416, %v1544
  %v1547 = vadd.f32 %v1541, %v1545
  %v1548 = vadd.f32 %v1542, %v1546
  %s1549 = sld [smem:[#allocation3 + $0xd8]]
  %v1550 = vstv %s1549
  %v1551 = vmul.f32 %v1423, %v1550
  %v1552 = vmul.f32 %v1424, %v1550
  %v1553 = vadd.f32 %v1547, %v1551
  %v1554 = vadd.f32 %v1548, %v1552
  %s1555 = sld [smem:[#allocation3 + $0xd9]]
  %v1556 = vstv %s1555
  %v1557 = vmul.f32 %v1431, %v1556
  %v1558 = vmul.f32 %v1432, %v1556
  %v1559 = vadd.f32 %v1553, %v1557
  %v1560 = vadd.f32 %v1554, %v1558
  %s1561 = sld [smem:[#allocation3 + $0xda]]
  %v1562 = vstv %s1561
  %v1563 = vmul.f32 %v1439, %v1562
  %v1564 = vmul.f32 %v1440, %v1562
  %v1565 = vadd.f32 %v1559, %v1563
  %v1566 = vadd.f32 %v1560, %v1564
  %s1567 = sld [smem:[#allocation3 + $0xdb]]
  %v1568 = vstv %s1567
  %v1569 = vmul.f32 %v1447, %v1568
  %v1570 = vmul.f32 %v1448, %v1568
  %v1571 = vadd.f32 %v1565, %v1569
  %v1572 = vadd.f32 %v1566, %v1570
  %s1573 = sld [smem:[#allocation3 + $0xdc]]
  %v1574 = vstv %s1573
  %v1575 = vmul.f32 %v1375, %v1574
  %v1576 = vmul.f32 %v1376, %v1574
  %s1577 = sld [smem:[#allocation4 + $0x16]]
  %v1578 = vstv %s1577
  %v1579 = vadd.f32 %v1575, %v1578
  %v1580 = vadd.f32 %v1576, %v1578
  %s1581 = sld [smem:[#allocation3 + $0xdd]]
  %v1582 = vstv %s1581
  %v1583 = vmul.f32 %v1383, %v1582
  %v1584 = vmul.f32 %v1384, %v1582
  %v1585 = vadd.f32 %v1579, %v1583
  %v1586 = vadd.f32 %v1580, %v1584
  %s1587 = sld [smem:[#allocation3 + $0xde]]
  %v1588 = vstv %s1587
  %v1589 = vmul.f32 %v1391, %v1588
  %v1590 = vmul.f32 %v1392, %v1588
  %v1591 = vadd.f32 %v1585, %v1589
  %v1592 = vadd.f32 %v1586, %v1590
  %s1593 = sld [smem:[#allocation3 + $0xdf]]
  %v1594 = vstv %s1593
  %v1595 = vmul.f32 %v1399, %v1594
  %v1596 = vmul.f32 %v1400, %v1594
  %v1597 = vadd.f32 %v1591, %v1595
  %v1598 = vadd.f32 %v1592, %v1596
  %s1599 = sld [smem:[#allocation3 + $0xe0]]
  %v1600 = vstv %s1599
  %v1601 = vmul.f32 %v1407, %v1600
  %v1602 = vmul.f32 %v1408, %v1600
  %v1603 = vadd.f32 %v1597, %v1601
  %v1604 = vadd.f32 %v1598, %v1602
  %s1605 = sld [smem:[#allocation3 + $0xe1]]
  %v1606 = vstv %s1605
  %v1607 = vmul.f32 %v1415, %v1606
  %v1608 = vmul.f32 %v1416, %v1606
  %v1609 = vadd.f32 %v1603, %v1607
  %v1610 = vadd.f32 %v1604, %v1608
  %s1611 = sld [smem:[#allocation3 + $0xe2]]
  %v1612 = vstv %s1611
  %v1613 = vmul.f32 %v1423, %v1612
  %v1614 = vmul.f32 %v1424, %v1612
  %v1615 = vadd.f32 %v1609, %v1613
  %v1616 = vadd.f32 %v1610, %v1614
  %s1617 = sld [smem:[#allocation3 + $0xe3]]
  %v1618 = vstv %s1617
  %v1619 = vmul.f32 %v1431, %v1618
  %v1620 = vmul.f32 %v1432, %v1618
  %v1621 = vadd.f32 %v1615, %v1619
  %v1622 = vadd.f32 %v1616, %v1620
  %s1623 = sld [smem:[#allocation3 + $0xe4]]
  %v1624 = vstv %s1623
  %v1625 = vmul.f32 %v1439, %v1624
  %v1626 = vmul.f32 %v1440, %v1624
  %v1627 = vadd.f32 %v1621, %v1625
  %v1628 = vadd.f32 %v1622, %v1626
  %s1629 = sld [smem:[#allocation3 + $0xe5]]
  %v1630 = vstv %s1629
  %v1631 = vmul.f32 %v1447, %v1630
  %v1632 = vmul.f32 %v1448, %v1630
  %v1633 = vadd.f32 %v1627, %v1631
  %v1634 = vadd.f32 %v1628, %v1632
  %s1635 = sld [smem:[#allocation3 + $0xe6]]
  %v1636 = vstv %s1635
  %v1637 = vmul.f32 %v1375, %v1636
  %v1638 = vmul.f32 %v1376, %v1636
  %s1639 = sld [smem:[#allocation4 + $0x17]]
  %v1640 = vstv %s1639
  %v1641 = vadd.f32 %v1637, %v1640
  %v1642 = vadd.f32 %v1638, %v1640
  %s1643 = sld [smem:[#allocation3 + $0xe7]]
  %v1644 = vstv %s1643
  %v1645 = vmul.f32 %v1383, %v1644
  %v1646 = vmul.f32 %v1384, %v1644
  %v1647 = vadd.f32 %v1641, %v1645
  %v1648 = vadd.f32 %v1642, %v1646
  %s1649 = sld [smem:[#allocation3 + $0xe8]]
  %v1650 = vstv %s1649
  %v1651 = vmul.f32 %v1391, %v1650
  %v1652 = vmul.f32 %v1392, %v1650
  %v1653 = vadd.f32 %v1647, %v1651
  %v1654 = vadd.f32 %v1648, %v1652
  %s1655 = sld [smem:[#allocation3 + $0xe9]]
  %v1656 = vstv %s1655
  %v1657 = vmul.f32 %v1399, %v1656
  %v1658 = vmul.f32 %v1400, %v1656
  %v1659 = vadd.f32 %v1653, %v1657
  %v1660 = vadd.f32 %v1654, %v1658
  %s1661 = sld [smem:[#allocation3 + $0xea]]
  %v1662 = vstv %s1661
  %v1663 = vmul.f32 %v1407, %v1662
  %v1664 = vmul.f32 %v1408, %v1662
  %v1665 = vadd.f32 %v1659, %v1663
  %v1666 = vadd.f32 %v1660, %v1664
  %s1667 = sld [smem:[#allocation3 + $0xeb]]
  %v1668 = vstv %s1667
  %v1669 = vmul.f32 %v1415, %v1668
  %v1670 = vmul.f32 %v1416, %v1668
  %v1671 = vadd.f32 %v1665, %v1669
  %v1672 = vadd.f32 %v1666, %v1670
  %s1673 = sld [smem:[#allocation3 + $0xec]]
  %v1674 = vstv %s1673
  %v1675 = vmul.f32 %v1423, %v1674
  %v1676 = vmul.f32 %v1424, %v1674
  %v1677 = vadd.f32 %v1671, %v1675
  %v1678 = vadd.f32 %v1672, %v1676
  %s1679 = sld [smem:[#allocation3 + $0xed]]
  %v1680 = vstv %s1679
  %v1681 = vmul.f32 %v1431, %v1680
  %v1682 = vmul.f32 %v1432, %v1680
  %v1683 = vadd.f32 %v1677, %v1681
  %v1684 = vadd.f32 %v1678, %v1682
  %s1685 = sld [smem:[#allocation3 + $0xee]]
  %v1686 = vstv %s1685
  %v1687 = vmul.f32 %v1439, %v1686
  %v1688 = vmul.f32 %v1440, %v1686
  %v1689 = vadd.f32 %v1683, %v1687
  %v1690 = vadd.f32 %v1684, %v1688
  %s1691 = sld [smem:[#allocation3 + $0xef]]
  %v1692 = vstv %s1691
  %v1693 = vmul.f32 %v1447, %v1692
  %v1694 = vmul.f32 %v1448, %v1692
  %v1695 = vadd.f32 %v1689, %v1693
  %v1696 = vadd.f32 %v1690, %v1694
  %s1697 = sld [smem:[#allocation3 + $0xf0]]
  %v1698 = vstv %s1697
  %v1699 = vmul.f32 %v1375, %v1698
  %v1700 = vmul.f32 %v1376, %v1698
  %s1701 = sld [smem:[#allocation4 + $0x18]]
  %v1702 = vstv %s1701
  %v1703 = vadd.f32 %v1699, %v1702
  %v1704 = vadd.f32 %v1700, %v1702
  %s1705 = sld [smem:[#allocation3 + $0xf1]]
  %v1706 = vstv %s1705
  %v1707 = vmul.f32 %v1383, %v1706
  %v1708 = vmul.f32 %v1384, %v1706
  %v1709 = vadd.f32 %v1703, %v1707
  %v1710 = vadd.f32 %v1704, %v1708
  %s1711 = sld [smem:[#allocation3 + $0xf2]]
  %v1712 = vstv %s1711
  %v1713 = vmul.f32 %v1391, %v1712
  %v1714 = vmul.f32 %v1392, %v1712
  %v1715 = vadd.f32 %v1709, %v1713
  %v1716 = vadd.f32 %v1710, %v1714
  %s1717 = sld [smem:[#allocation3 + $0xf3]]
  %v1718 = vstv %s1717
  %v1719 = vmul.f32 %v1399, %v1718
  %v1720 = vmul.f32 %v1400, %v1718
  %v1721 = vadd.f32 %v1715, %v1719
  %v1722 = vadd.f32 %v1716, %v1720
  %s1723 = sld [smem:[#allocation3 + $0xf4]]
  %v1724 = vstv %s1723
  %v1725 = vmul.f32 %v1407, %v1724
  %v1726 = vmul.f32 %v1408, %v1724
  %v1727 = vadd.f32 %v1721, %v1725
  %v1728 = vadd.f32 %v1722, %v1726
  %s1729 = sld [smem:[#allocation3 + $0xf5]]
  %v1730 = vstv %s1729
  %v1731 = vmul.f32 %v1415, %v1730
  %v1732 = vmul.f32 %v1416, %v1730
  %v1733 = vadd.f32 %v1727, %v1731
  %v1734 = vadd.f32 %v1728, %v1732
  %s1735 = sld [smem:[#allocation3 + $0xf6]]
  %v1736 = vstv %s1735
  %v1737 = vmul.f32 %v1423, %v1736
  %v1738 = vmul.f32 %v1424, %v1736
  %v1739 = vadd.f32 %v1733, %v1737
  %v1740 = vadd.f32 %v1734, %v1738
  %s1741 = sld [smem:[#allocation3 + $0xf7]]
  %v1742 = vstv %s1741
  %v1743 = vmul.f32 %v1431, %v1742
  %v1744 = vmul.f32 %v1432, %v1742
  %v1745 = vadd.f32 %v1739, %v1743
  %v1746 = vadd.f32 %v1740, %v1744
  %s1747 = sld [smem:[#allocation3 + $0xf8]]
  %v1748 = vstv %s1747
  %v1749 = vmul.f32 %v1439, %v1748
  %v1750 = vmul.f32 %v1440, %v1748
  %v1751 = vadd.f32 %v1745, %v1749
  %v1752 = vadd.f32 %v1746, %v1750
  %s1753 = sld [smem:[#allocation3 + $0xf9]]
  %v1754 = vstv %s1753
  %v1755 = vmul.f32 %v1447, %v1754
  %v1756 = vmul.f32 %v1448, %v1754
  %v1757 = vadd.f32 %v1751, %v1755
  %v1758 = vadd.f32 %v1752, %v1756
  %s1759 = sld [smem:[#allocation3 + $0xfa]]
  %v1760 = vstv %s1759
  %v1761 = vmul.f32 %v1375, %v1760
  %v1762 = vmul.f32 %v1376, %v1760
  %s1763 = sld [smem:[#allocation4 + $0x19]]
  %v1764 = vstv %s1763
  %v1765 = vadd.f32 %v1761, %v1764
  %v1766 = vadd.f32 %v1762, %v1764
  %s1767 = sld [smem:[#allocation3 + $0xfb]]
  %v1768 = vstv %s1767
  %v1769 = vmul.f32 %v1383, %v1768
  %v1770 = vmul.f32 %v1384, %v1768
  %v1771 = vadd.f32 %v1765, %v1769
  %v1772 = vadd.f32 %v1766, %v1770
  %s1773 = sld [smem:[#allocation3 + $0xfc]]
  %v1774 = vstv %s1773
  %v1775 = vmul.f32 %v1391, %v1774
  %v1776 = vmul.f32 %v1392, %v1774
  %v1777 = vadd.f32 %v1771, %v1775
  %v1778 = vadd.f32 %v1772, %v1776
  %s1779 = sld [smem:[#allocation3 + $0xfd]]
  %v1780 = vstv %s1779
  %v1781 = vmul.f32 %v1399, %v1780
  %v1782 = vmul.f32 %v1400, %v1780
  %v1783 = vadd.f32 %v1777, %v1781
  %v1784 = vadd.f32 %v1778, %v1782
  %s1785 = sld [smem:[#allocation3 + $0xfe]]
  %v1786 = vstv %s1785
  %v1787 = vmul.f32 %v1407, %v1786
  %v1788 = vmul.f32 %v1408, %v1786
  %v1789 = vadd.f32 %v1783, %v1787
  %v1790 = vadd.f32 %v1784, %v1788
  %s1791 = sld [smem:[#allocation3 + $0xff]]
  %v1792 = vstv %s1791
  %v1793 = vmul.f32 %v1415, %v1792
  %v1794 = vmul.f32 %v1416, %v1792
  %v1795 = vadd.f32 %v1789, %v1793
  %v1796 = vadd.f32 %v1790, %v1794
  %s1797 = sld [smem:[#allocation3 + $0x100]]
  %v1798 = vstv %s1797
  %v1799 = vmul.f32 %v1423, %v1798
  %v1800 = vmul.f32 %v1424, %v1798
  %v1801 = vadd.f32 %v1795, %v1799
  %v1802 = vadd.f32 %v1796, %v1800
  %s1803 = sld [smem:[#allocation3 + $0x101]]
  %v1804 = vstv %s1803
  %v1805 = vmul.f32 %v1431, %v1804
  %v1806 = vmul.f32 %v1432, %v1804
  %v1807 = vadd.f32 %v1801, %v1805
  %v1808 = vadd.f32 %v1802, %v1806
  %s1809 = sld [smem:[#allocation3 + $0x102]]
  %v1810 = vstv %s1809
  %v1811 = vmul.f32 %v1439, %v1810
  %v1812 = vmul.f32 %v1440, %v1810
  %v1813 = vadd.f32 %v1807, %v1811
  %v1814 = vadd.f32 %v1808, %v1812
  %s1815 = sld [smem:[#allocation3 + $0x103]]
  %v1816 = vstv %s1815
  %v1817 = vmul.f32 %v1447, %v1816
  %v1818 = vmul.f32 %v1448, %v1816
  %v1819 = vadd.f32 %v1813, %v1817
  %v1820 = vadd.f32 %v1814, %v1818
  %s1821 = sld [smem:[#allocation3 + $0x104]]
  %v1822 = vstv %s1821
  %v1823 = vmul.f32 %v1375, %v1822
  %v1824 = vmul.f32 %v1376, %v1822
  %s1825 = sld [smem:[#allocation4 + $0x1a]]
  %v1826 = vstv %s1825
  %v1827 = vadd.f32 %v1823, %v1826
  %v1828 = vadd.f32 %v1824, %v1826
  %s1829 = sld [smem:[#allocation3 + $0x105]]
  %v1830 = vstv %s1829
  %v1831 = vmul.f32 %v1383, %v1830
  %v1832 = vmul.f32 %v1384, %v1830
  %v1833 = vadd.f32 %v1827, %v1831
  %v1834 = vadd.f32 %v1828, %v1832
  %s1835 = sld [smem:[#allocation3 + $0x106]]
  %v1836 = vstv %s1835
  %v1837 = vmul.f32 %v1391, %v1836
  %v1838 = vmul.f32 %v1392, %v1836
  %v1839 = vadd.f32 %v1833, %v1837
  %v1840 = vadd.f32 %v1834, %v1838
  %s1841 = sld [smem:[#allocation3 + $0x107]]
  %v1842 = vstv %s1841
  %v1843 = vmul.f32 %v1399, %v1842
  %v1844 = vmul.f32 %v1400, %v1842
  %v1845 = vadd.f32 %v1839, %v1843
  %v1846 = vadd.f32 %v1840, %v1844
  %s1847 = sld [smem:[#allocation3 + $0x108]]
  %v1848 = vstv %s1847
  %v1849 = vmul.f32 %v1407, %v1848
  %v1850 = vmul.f32 %v1408, %v1848
  %v1851 = vadd.f32 %v1845, %v1849
  %v1852 = vadd.f32 %v1846, %v1850
  %s1853 = sld [smem:[#allocation3 + $0x109]]
  %v1854 = vstv %s1853
  %v1855 = vmul.f32 %v1415, %v1854
  %v1856 = vmul.f32 %v1416, %v1854
  %v1857 = vadd.f32 %v1851, %v1855
  %v1858 = vadd.f32 %v1852, %v1856
  %s1859 = sld [smem:[#allocation3 + $0x10a]]
  %v1860 = vstv %s1859
  %v1861 = vmul.f32 %v1423, %v1860
  %v1862 = vmul.f32 %v1424, %v1860
  %v1863 = vadd.f32 %v1857, %v1861
  %v1864 = vadd.f32 %v1858, %v1862
  %s1865 = sld [smem:[#allocation3 + $0x10b]]
  %v1866 = vstv %s1865
  %v1867 = vmul.f32 %v1431, %v1866
  %v1868 = vmul.f32 %v1432, %v1866
  %v1869 = vadd.f32 %v1863, %v1867
  %v1870 = vadd.f32 %v1864, %v1868
  %s1871 = sld [smem:[#allocation3 + $0x10c]]
  %v1872 = vstv %s1871
  %v1873 = vmul.f32 %v1439, %v1872
  %v1874 = vmul.f32 %v1440, %v1872
  %v1875 = vadd.f32 %v1869, %v1873
  %v1876 = vadd.f32 %v1870, %v1874
  %s1877 = sld [smem:[#allocation3 + $0x10d]]
  %v1878 = vstv %s1877
  %v1879 = vmul.f32 %v1447, %v1878
  %v1880 = vmul.f32 %v1448, %v1878
  %v1881 = vadd.f32 %v1875, %v1879
  %v1882 = vadd.f32 %v1876, %v1880
  %s1883 = sld [smem:[#allocation3 + $0x10e]]
  %v1884 = vstv %s1883
  %v1885 = vmul.f32 %v1375, %v1884
  %v1886 = vmul.f32 %v1376, %v1884
  %s1887 = sld [smem:[#allocation4 + $0x1b]]
  %v1888 = vstv %s1887
  %v1889 = vadd.f32 %v1885, %v1888
  %v1890 = vadd.f32 %v1886, %v1888
  %s1891 = sld [smem:[#allocation3 + $0x10f]]
  %v1892 = vstv %s1891
  %v1893 = vmul.f32 %v1383, %v1892
  %v1894 = vmul.f32 %v1384, %v1892
  %v1895 = vadd.f32 %v1889, %v1893
  %v1896 = vadd.f32 %v1890, %v1894
  %s1897 = sld [smem:[#allocation3 + $0x110]]
  %v1898 = vstv %s1897
  %v1899 = vmul.f32 %v1391, %v1898
  %v1900 = vmul.f32 %v1392, %v1898
  %v1901 = vadd.f32 %v1895, %v1899
  %v1902 = vadd.f32 %v1896, %v1900
  %s1903 = sld [smem:[#allocation3 + $0x111]]
  %v1904 = vstv %s1903
  %v1905 = vmul.f32 %v1399, %v1904
  %v1906 = vmul.f32 %v1400, %v1904
  %v1907 = vadd.f32 %v1901, %v1905
  %v1908 = vadd.f32 %v1902, %v1906
  %s1909 = sld [smem:[#allocation3 + $0x112]]
  %v1910 = vstv %s1909
  %v1911 = vmul.f32 %v1407, %v1910
  %v1912 = vmul.f32 %v1408, %v1910
  %v1913 = vadd.f32 %v1907, %v1911
  %v1914 = vadd.f32 %v1908, %v1912
  %s1915 = sld [smem:[#allocation3 + $0x113]]
  %v1916 = vstv %s1915
  %v1917 = vmul.f32 %v1415, %v1916
  %v1918 = vmul.f32 %v1416, %v1916
  %v1919 = vadd.f32 %v1913, %v1917
  %v1920 = vadd.f32 %v1914, %v1918
  %s1921 = sld [smem:[#allocation3 + $0x114]]
  %v1922 = vstv %s1921
  %v1923 = vmul.f32 %v1423, %v1922
  %v1924 = vmul.f32 %v1424, %v1922
  %v1925 = vadd.f32 %v1919, %v1923
  %v1926 = vadd.f32 %v1920, %v1924
  %s1927 = sld [smem:[#allocation3 + $0x115]]
  %v1928 = vstv %s1927
  %v1929 = vmul.f32 %v1431, %v1928
  %v1930 = vmul.f32 %v1432, %v1928
  %v1931 = vadd.f32 %v1925, %v1929
  %v1932 = vadd.f32 %v1926, %v1930
  %s1933 = sld [smem:[#allocation3 + $0x116]]
  %v1934 = vstv %s1933
  %v1935 = vmul.f32 %v1439, %v1934
  %v1936 = vmul.f32 %v1440, %v1934
  %v1937 = vadd.f32 %v1931, %v1935
  %v1938 = vadd.f32 %v1932, %v1936
  %s1939 = sld [smem:[#allocation3 + $0x117]]
  %v1940 = vstv %s1939
  %v1941 = vmul.f32 %v1447, %v1940
  %v1942 = vmul.f32 %v1448, %v1940
  %v1943 = vadd.f32 %v1937, %v1941
  %v1944 = vadd.f32 %v1938, %v1942
  %s1945 = sld [smem:[#allocation3 + $0x118]]
  %v1946 = vstv %s1945
  %v1947 = vmul.f32 %v1375, %v1946
  %v1948 = vmul.f32 %v1376, %v1946
  %s1949 = sld [smem:[#allocation4 + $0x1c]]
  %v1950 = vstv %s1949
  %v1951 = vadd.f32 %v1947, %v1950
  %v1952 = vadd.f32 %v1948, %v1950
  %s1953 = sld [smem:[#allocation3 + $0x119]]
  %v1954 = vstv %s1953
  %v1955 = vmul.f32 %v1383, %v1954
  %v1956 = vmul.f32 %v1384, %v1954
  %v1957 = vadd.f32 %v1951, %v1955
  %v1958 = vadd.f32 %v1952, %v1956
  %s1959 = sld [smem:[#allocation3 + $0x11a]]
  %v1960 = vstv %s1959
  %v1961 = vmul.f32 %v1391, %v1960
  %v1962 = vmul.f32 %v1392, %v1960
  %v1963 = vadd.f32 %v1957, %v1961
  %v1964 = vadd.f32 %v1958, %v1962
  %s1965 = sld [smem:[#allocation3 + $0x11b]]
  %v1966 = vstv %s1965
  %v1967 = vmul.f32 %v1399, %v1966
  %v1968 = vmul.f32 %v1400, %v1966
  %v1969 = vadd.f32 %v1963, %v1967
  %v1970 = vadd.f32 %v1964, %v1968
  %s1971 = sld [smem:[#allocation3 + $0x11c]]
  %v1972 = vstv %s1971
  %v1973 = vmul.f32 %v1407, %v1972
  %v1974 = vmul.f32 %v1408, %v1972
  %v1975 = vadd.f32 %v1969, %v1973
  %v1976 = vadd.f32 %v1970, %v1974
  %s1977 = sld [smem:[#allocation3 + $0x11d]]
  %v1978 = vstv %s1977
  %v1979 = vmul.f32 %v1415, %v1978
  %v1980 = vmul.f32 %v1416, %v1978
  %v1981 = vadd.f32 %v1975, %v1979
  %v1982 = vadd.f32 %v1976, %v1980
  %s1983 = sld [smem:[#allocation3 + $0x11e]]
  %v1984 = vstv %s1983
  %v1985 = vmul.f32 %v1423, %v1984
  %v1986 = vmul.f32 %v1424, %v1984
  %v1987 = vadd.f32 %v1981, %v1985
  %v1988 = vadd.f32 %v1982, %v1986
  %s1989 = sld [smem:[#allocation3 + $0x11f]]
  %v1990 = vstv %s1989
  %v1991 = vmul.f32 %v1431, %v1990
  %v1992 = vmul.f32 %v1432, %v1990
  %v1993 = vadd.f32 %v1987, %v1991
  %v1994 = vadd.f32 %v1988, %v1992
  %s1995 = sld [smem:[#allocation3 + $0x120]]
  %v1996 = vstv %s1995
  %v1997 = vmul.f32 %v1439, %v1996
  %v1998 = vmul.f32 %v1440, %v1996
  %v1999 = vadd.f32 %v1993, %v1997
  %v2000 = vadd.f32 %v1994, %v1998
  %s2001 = sld [smem:[#allocation3 + $0x121]]
  %v2002 = vstv %s2001
  %v2003 = vmul.f32 %v1447, %v2002
  %v2004 = vmul.f32 %v1448, %v2002
  %v2005 = vadd.f32 %v1999, %v2003
  %v2006 = vadd.f32 %v2000, %v2004
  %s2007 = sld [smem:[#allocation3 + $0x122]]
  %v2008 = vstv %s2007
  %v2009 = vmul.f32 %v1375, %v2008
  %v2010 = vmul.f32 %v1376, %v2008
  %s2011 = sld [smem:[#allocation4 + $0x1d]]
  %v2012 = vstv %s2011
  %v2013 = vadd.f32 %v2009, %v2012
  %v2014 = vadd.f32 %v2010, %v2012
  %s2015 = sld [smem:[#allocation3 + $0x123]]
  %v2016 = vstv %s2015
  %v2017 = vmul.f32 %v1383, %v2016
  %v2018 = vmul.f32 %v1384, %v2016
  %v2019 = vadd.f32 %v2013, %v2017
  %v2020 = vadd.f32 %v2014, %v2018
  %s2021 = sld [smem:[#allocation3 + $0x124]]
  %v2022 = vstv %s2021
  %v2023 = vmul.f32 %v1391, %v2022
  %v2024 = vmul.f32 %v1392, %v2022
  %v2025 = vadd.f32 %v2019, %v2023
  %v2026 = vadd.f32 %v2020, %v2024
  %s2027 = sld [smem:[#allocation3 + $0x125]]
  %v2028 = vstv %s2027
  %v2029 = vmul.f32 %v1399, %v2028
  %v2030 = vmul.f32 %v1400, %v2028
  %v2031 = vadd.f32 %v2025, %v2029
  %v2032 = vadd.f32 %v2026, %v2030
  %s2033 = sld [smem:[#allocation3 + $0x126]]
  %v2034 = vstv %s2033
  %v2035 = vmul.f32 %v1407, %v2034
  %v2036 = vmul.f32 %v1408, %v2034
  %v2037 = vadd.f32 %v2031, %v2035
  %v2038 = vadd.f32 %v2032, %v2036
  %s2039 = sld [smem:[#allocation3 + $0x127]]
  %v2040 = vstv %s2039
  %v2041 = vmul.f32 %v1415, %v2040
  %v2042 = vmul.f32 %v1416, %v2040
  %v2043 = vadd.f32 %v2037, %v2041
  %v2044 = vadd.f32 %v2038, %v2042
  %s2045 = sld [smem:[#allocation3 + $0x128]]
  %v2046 = vstv %s2045
  %v2047 = vmul.f32 %v1423, %v2046
  %v2048 = vmul.f32 %v1424, %v2046
  %v2049 = vadd.f32 %v2043, %v2047
  %v2050 = vadd.f32 %v2044, %v2048
  %s2051 = sld [smem:[#allocation3 + $0x129]]
  %v2052 = vstv %s2051
  %v2053 = vmul.f32 %v1431, %v2052
  %v2054 = vmul.f32 %v1432, %v2052
  %v2055 = vadd.f32 %v2049, %v2053
  %v2056 = vadd.f32 %v2050, %v2054
  %s2057 = sld [smem:[#allocation3 + $0x12a]]
  %v2058 = vstv %s2057
  %v2059 = vmul.f32 %v1439, %v2058
  %v2060 = vmul.f32 %v1440, %v2058
  %v2061 = vadd.f32 %v2055, %v2059
  %v2062 = vadd.f32 %v2056, %v2060
  %s2063 = sld [smem:[#allocation3 + $0x12b]]
  %v2064 = vstv %s2063
  %v2065 = vmul.f32 %v1447, %v2064
  %v2066 = vmul.f32 %v1448, %v2064
  %v2067 = vadd.f32 %v2061, %v2065
  %v2068 = vadd.f32 %v2062, %v2066
  %v2069 = vmul.f32 %v1509, 0.5
  %v2070 = vmul.f32 %v1510, 0.5
  %v2071 = vtanh.pop %v2069
  %v2072 = vtanh.pop %v2070
  %v2073 = vmul.f32 %v2071, 0.5
  %v2074 = vmul.f32 %v2072, 0.5
  %v2075 = vadd.f32 %v2073, 0.5
  %v2076 = vadd.f32 %v2074, 0.5
  %v2077 = vmul.f32 %v1571, 0.5
  %v2078 = vmul.f32 %v1572, 0.5
  %v2079 = vtanh.pop %v2077
  %v2080 = vtanh.pop %v2078
  %v2081 = vmul.f32 %v2079, 0.5
  %v2082 = vmul.f32 %v2080, 0.5
  %v2083 = vadd.f32 %v2081, 0.5
  %v2084 = vadd.f32 %v2082, 0.5
  %v2085 = vmul.f32 %v1633, 0.5
  %v2086 = vmul.f32 %v1634, 0.5
  %v2087 = vtanh.pop %v2085
  %v2088 = vtanh.pop %v2086
  %v2089 = vmul.f32 %v2087, 0.5
  %v2090 = vmul.f32 %v2088, 0.5
  %v2091 = vadd.f32 %v2089, 0.5
  %v2092 = vadd.f32 %v2090, 0.5
  %v2093 = vmul.f32 %v1695, 0.5
  %v2094 = vmul.f32 %v1696, 0.5
  %v2095 = vtanh.pop %v2093
  %v2096 = vtanh.pop %v2094
  %v2097 = vmul.f32 %v2095, 0.5
  %v2098 = vmul.f32 %v2096, 0.5
  %v2099 = vadd.f32 %v2097, 0.5
  %v2100 = vadd.f32 %v2098, 0.5
  %v2101 = vmul.f32 %v1757, 0.5
  %v2102 = vmul.f32 %v1758, 0.5
  %v2103 = vtanh.pop %v2101
  %v2104 = vtanh.pop %v2102
  %v2105 = vmul.f32 %v2103, 0.5
  %v2106 = vmul.f32 %v2104, 0.5
  %v2107 = vadd.f32 %v2105, 0.5
  %v2108 = vadd.f32 %v2106, 0.5
  %v2109 = vmul.f32 %v1819, 0.5
  %v2110 = vmul.f32 %v1820, 0.5
  %v2111 = vtanh.pop %v2109
  %v2112 = vtanh.pop %v2110
  %v2113 = vmul.f32 %v2111, 0.5
  %v2114 = vmul.f32 %v2112, 0.5
  %v2115 = vadd.f32 %v2113, 0.5
  %v2116 = vadd.f32 %v2114, 0.5
  %v2117 = vmul.f32 %v1881, 0.5
  %v2118 = vmul.f32 %v1882, 0.5
  %v2119 = vtanh.pop %v2117
  %v2120 = vtanh.pop %v2118
  %v2121 = vmul.f32 %v2119, 0.5
  %v2122 = vmul.f32 %v2120, 0.5
  %v2123 = vadd.f32 %v2121, 0.5
  %v2124 = vadd.f32 %v2122, 0.5
  %v2125 = vmul.f32 %v1943, 0.5
  %v2126 = vmul.f32 %v1944, 0.5
  %v2127 = vtanh.pop %v2125
  %v2128 = vtanh.pop %v2126
  %v2129 = vmul.f32 %v2127, 0.5
  %v2130 = vmul.f32 %v2128, 0.5
  %v2131 = vadd.f32 %v2129, 0.5
  %v2132 = vadd.f32 %v2130, 0.5
  %v2133 = vmul.f32 %v2005, 0.5
  %v2134 = vmul.f32 %v2006, 0.5
  %v2135 = vtanh.pop %v2133
  %v2136 = vtanh.pop %v2134
  %v2137 = vmul.f32 %v2135, 0.5
  %v2138 = vmul.f32 %v2136, 0.5
  %v2139 = vadd.f32 %v2137, 0.5
  %v2140 = vadd.f32 %v2138, 0.5
  %v2141 = vmul.f32 %v2067, 0.5
  %v2142 = vmul.f32 %v2068, 0.5
  %v2143 = vtanh.pop %v2141
  %v2144 = vtanh.pop %v2142
  %v2145 = vmul.f32 %v2143, 0.5
  %v2146 = vmul.f32 %v2144, 0.5
  %v2147 = vadd.f32 %v2145, 0.5
  %v2148 = vadd.f32 %v2146, 0.5
  %s2149 = sld [smem:[#allocation3 + $0x12c]]
  %v2150 = vstv %s2149
  %v2151 = vmul.f32 %v2075, %v2150
  %v2152 = vmul.f32 %v2076, %v2150
  %s2153 = sld [smem:[#allocation4 + $0x1e]]
  %v2154 = vstv %s2153
  %v2155 = vadd.f32 %v2151, %v2154
  %v2156 = vadd.f32 %v2152, %v2154
  %s2157 = sld [smem:[#allocation3 + $0x12d]]
  %v2158 = vstv %s2157
  %v2159 = vmul.f32 %v2083, %v2158
  %v2160 = vmul.f32 %v2084, %v2158
  %v2161 = vadd.f32 %v2155, %v2159
  %v2162 = vadd.f32 %v2156, %v2160
  %s2163 = sld [smem:[#allocation3 + $0x12e]]
  %v2164 = vstv %s2163
  %v2165 = vmul.f32 %v2091, %v2164
  %v2166 = vmul.f32 %v2092, %v2164
  %v2167 = vadd.f32 %v2161, %v2165
  %v2168 = vadd.f32 %v2162, %v2166
  %s2169 = sld [smem:[#allocation3 + $0x12f]]
  %v2170 = vstv %s2169
  %v2171 = vmul.f32 %v2099, %v2170
  %v2172 = vmul.f32 %v2100, %v2170
  %v2173 = vadd.f32 %v2167, %v2171
  %v2174 = vadd.f32 %v2168, %v2172
  %s2175 = sld [smem:[#allocation3 + $0x130]]
  %v2176 = vstv %s2175
  %v2177 = vmul.f32 %v2107, %v2176
  %v2178 = vmul.f32 %v2108, %v2176
  %v2179 = vadd.f32 %v2173, %v2177
  %v2180 = vadd.f32 %v2174, %v2178
  %s2181 = sld [smem:[#allocation3 + $0x131]]
  %v2182 = vstv %s2181
  %v2183 = vmul.f32 %v2115, %v2182
  %v2184 = vmul.f32 %v2116, %v2182
  %v2185 = vadd.f32 %v2179, %v2183
  %v2186 = vadd.f32 %v2180, %v2184
  %s2187 = sld [smem:[#allocation3 + $0x132]]
  %v2188 = vstv %s2187
  %v2189 = vmul.f32 %v2123, %v2188
  %v2190 = vmul.f32 %v2124, %v2188
  %v2191 = vadd.f32 %v2185, %v2189
  %v2192 = vadd.f32 %v2186, %v2190
  %s2193 = sld [smem:[#allocation3 + $0x133]]
  %v2194 = vstv %s2193
  %v2195 = vmul.f32 %v2131, %v2194
  %v2196 = vmul.f32 %v2132, %v2194
  %v2197 = vadd.f32 %v2191, %v2195
  %v2198 = vadd.f32 %v2192, %v2196
  %s2199 = sld [smem:[#allocation3 + $0x134]]
  %v2200 = vstv %s2199
  %v2201 = vmul.f32 %v2139, %v2200
  %v2202 = vmul.f32 %v2140, %v2200
  %v2203 = vadd.f32 %v2197, %v2201
  %v2204 = vadd.f32 %v2198, %v2202
  %s2205 = sld [smem:[#allocation3 + $0x135]]
  %v2206 = vstv %s2205
  %v2207 = vmul.f32 %v2147, %v2206
  %v2208 = vmul.f32 %v2148, %v2206
  %v2209 = vadd.f32 %v2203, %v2207
  %v2210 = vadd.f32 %v2204, %v2208
  %s2211 = sld [smem:[#allocation3 + $0x136]]
  %v2212 = vstv %s2211
  %v2213 = vmul.f32 %v2075, %v2212
  %v2214 = vmul.f32 %v2076, %v2212
  %s2215 = sld [smem:[#allocation4 + $0x1f]]
  %v2216 = vstv %s2215
  %v2217 = vadd.f32 %v2213, %v2216
  %v2218 = vadd.f32 %v2214, %v2216
  %s2219 = sld [smem:[#allocation3 + $0x137]]
  %v2220 = vstv %s2219
  %v2221 = vmul.f32 %v2083, %v2220
  %v2222 = vmul.f32 %v2084, %v2220
  %v2223 = vadd.f32 %v2217, %v2221
  %v2224 = vadd.f32 %v2218, %v2222
  %s2225 = sld [smem:[#allocation3 + $0x138]]
  %v2226 = vstv %s2225
  %v2227 = vmul.f32 %v2091, %v2226
  %v2228 = vmul.f32 %v2092, %v2226
  %v2229 = vadd.f32 %v2223, %v2227
  %v2230 = vadd.f32 %v2224, %v2228
  %s2231 = sld [smem:[#allocation3 + $0x139]]
  %v2232 = vstv %s2231
  %v2233 = vmul.f32 %v2099, %v2232
  %v2234 = vmul.f32 %v2100, %v2232
  %v2235 = vadd.f32 %v2229, %v2233
  %v2236 = vadd.f32 %v2230, %v2234
  %s2237 = sld [smem:[#allocation3 + $0x13a]]
  %v2238 = vstv %s2237
  %v2239 = vmul.f32 %v2107, %v2238
  %v2240 = vmul.f32 %v2108, %v2238
  %v2241 = vadd.f32 %v2235, %v2239
  %v2242 = vadd.f32 %v2236, %v2240
  %s2243 = sld [smem:[#allocation3 + $0x13b]]
  %v2244 = vstv %s2243
  %v2245 = vmul.f32 %v2115, %v2244
  %v2246 = vmul.f32 %v2116, %v2244
  %v2247 = vadd.f32 %v2241, %v2245
  %v2248 = vadd.f32 %v2242, %v2246
  %s2249 = sld [smem:[#allocation3 + $0x13c]]
  %v2250 = vstv %s2249
  %v2251 = vmul.f32 %v2123, %v2250
  %v2252 = vmul.f32 %v2124, %v2250
  %v2253 = vadd.f32 %v2247, %v2251
  %v2254 = vadd.f32 %v2248, %v2252
  %s2255 = sld [smem:[#allocation3 + $0x13d]]
  %v2256 = vstv %s2255
  %v2257 = vmul.f32 %v2131, %v2256
  %v2258 = vmul.f32 %v2132, %v2256
  %v2259 = vadd.f32 %v2253, %v2257
  %v2260 = vadd.f32 %v2254, %v2258
  %s2261 = sld [smem:[#allocation3 + $0x13e]]
  %v2262 = vstv %s2261
  %v2263 = vmul.f32 %v2139, %v2262
  %v2264 = vmul.f32 %v2140, %v2262
  %v2265 = vadd.f32 %v2259, %v2263
  %v2266 = vadd.f32 %v2260, %v2264
  %s2267 = sld [smem:[#allocation3 + $0x13f]]
  %v2268 = vstv %s2267
  %v2269 = vmul.f32 %v2147, %v2268
  %v2270 = vmul.f32 %v2148, %v2268
  %v2271 = vadd.f32 %v2265, %v2269
  %v2272 = vadd.f32 %v2266, %v2270
  %s2273 = sld [smem:[#allocation3 + $0x140]]
  %v2274 = vstv %s2273
  %v2275 = vmul.f32 %v2075, %v2274
  %v2276 = vmul.f32 %v2076, %v2274
  %s2277 = sld [smem:[#allocation4 + $0x20]]
  %v2278 = vstv %s2277
  %v2279 = vadd.f32 %v2275, %v2278
  %v2280 = vadd.f32 %v2276, %v2278
  %s2281 = sld [smem:[#allocation3 + $0x141]]
  %v2282 = vstv %s2281
  %v2283 = vmul.f32 %v2083, %v2282
  %v2284 = vmul.f32 %v2084, %v2282
  %v2285 = vadd.f32 %v2279, %v2283
  %v2286 = vadd.f32 %v2280, %v2284
  %s2287 = sld [smem:[#allocation3 + $0x142]]
  %v2288 = vstv %s2287
  %v2289 = vmul.f32 %v2091, %v2288
  %v2290 = vmul.f32 %v2092, %v2288
  %v2291 = vadd.f32 %v2285, %v2289
  %v2292 = vadd.f32 %v2286, %v2290
  %s2293 = sld [smem:[#allocation3 + $0x143]]
  %v2294 = vstv %s2293
  %v2295 = vmul.f32 %v2099, %v2294
  %v2296 = vmul.f32 %v2100, %v2294
  %v2297 = vadd.f32 %v2291, %v2295
  %v2298 = vadd.f32 %v2292, %v2296
  %s2299 = sld [smem:[#allocation3 + $0x144]]
  %v2300 = vstv %s2299
  %v2301 = vmul.f32 %v2107, %v2300
  %v2302 = vmul.f32 %v2108, %v2300
  %v2303 = vadd.f32 %v2297, %v2301
  %v2304 = vadd.f32 %v2298, %v2302
  %s2305 = sld [smem:[#allocation3 + $0x145]]
  %v2306 = vstv %s2305
  %v2307 = vmul.f32 %v2115, %v2306
  %v2308 = vmul.f32 %v2116, %v2306
  %v2309 = vadd.f32 %v2303, %v2307
  %v2310 = vadd.f32 %v2304, %v2308
  %s2311 = sld [smem:[#allocation3 + $0x146]]
  %v2312 = vstv %s2311
  %v2313 = vmul.f32 %v2123, %v2312
  %v2314 = vmul.f32 %v2124, %v2312
  %v2315 = vadd.f32 %v2309, %v2313
  %v2316 = vadd.f32 %v2310, %v2314
  %s2317 = sld [smem:[#allocation3 + $0x147]]
  %v2318 = vstv %s2317
  %v2319 = vmul.f32 %v2131, %v2318
  %v2320 = vmul.f32 %v2132, %v2318
  %v2321 = vadd.f32 %v2315, %v2319
  %v2322 = vadd.f32 %v2316, %v2320
  %s2323 = sld [smem:[#allocation3 + $0x148]]
  %v2324 = vstv %s2323
  %v2325 = vmul.f32 %v2139, %v2324
  %v2326 = vmul.f32 %v2140, %v2324
  %v2327 = vadd.f32 %v2321, %v2325
  %v2328 = vadd.f32 %v2322, %v2326
  %s2329 = sld [smem:[#allocation3 + $0x149]]
  %v2330 = vstv %s2329
  %v2331 = vmul.f32 %v2147, %v2330
  %v2332 = vmul.f32 %v2148, %v2330
  %v2333 = vadd.f32 %v2327, %v2331
  %v2334 = vadd.f32 %v2328, %v2332
  %s2335 = sld [smem:[#allocation3 + $0x14a]]
  %v2336 = vstv %s2335
  %v2337 = vmul.f32 %v2075, %v2336
  %v2338 = vmul.f32 %v2076, %v2336
  %s2339 = sld [smem:[#allocation4 + $0x21]]
  %v2340 = vstv %s2339
  %v2341 = vadd.f32 %v2337, %v2340
  %v2342 = vadd.f32 %v2338, %v2340
  %s2343 = sld [smem:[#allocation3 + $0x14b]]
  %v2344 = vstv %s2343
  %v2345 = vmul.f32 %v2083, %v2344
  %v2346 = vmul.f32 %v2084, %v2344
  %v2347 = vadd.f32 %v2341, %v2345
  %v2348 = vadd.f32 %v2342, %v2346
  %s2349 = sld [smem:[#allocation3 + $0x14c]]
  %v2350 = vstv %s2349
  %v2351 = vmul.f32 %v2091, %v2350
  %v2352 = vmul.f32 %v2092, %v2350
  %v2353 = vadd.f32 %v2347, %v2351
  %v2354 = vadd.f32 %v2348, %v2352
  %s2355 = sld [smem:[#allocation3 + $0x14d]]
  %v2356 = vstv %s2355
  %v2357 = vmul.f32 %v2099, %v2356
  %v2358 = vmul.f32 %v2100, %v2356
  %v2359 = vadd.f32 %v2353, %v2357
  %v2360 = vadd.f32 %v2354, %v2358
  %s2361 = sld [smem:[#allocation3 + $0x14e]]
  %v2362 = vstv %s2361
  %v2363 = vmul.f32 %v2107, %v2362
  %v2364 = vmul.f32 %v2108, %v2362
  %v2365 = vadd.f32 %v2359, %v2363
  %v2366 = vadd.f32 %v2360, %v2364
  %s2367 = sld [smem:[#allocation3 + $0x14f]]
  %v2368 = vstv %s2367
  %v2369 = vmul.f32 %v2115, %v2368
  %v2370 = vmul.f32 %v2116, %v2368
  %v2371 = vadd.f32 %v2365, %v2369
  %v2372 = vadd.f32 %v2366, %v2370
  %s2373 = sld [smem:[#allocation3 + $0x150]]
  %v2374 = vstv %s2373
  %v2375 = vmul.f32 %v2123, %v2374
  %v2376 = vmul.f32 %v2124, %v2374
  %v2377 = vadd.f32 %v2371, %v2375
  %v2378 = vadd.f32 %v2372, %v2376
  %s2379 = sld [smem:[#allocation3 + $0x151]]
  %v2380 = vstv %s2379
  %v2381 = vmul.f32 %v2131, %v2380
  %v2382 = vmul.f32 %v2132, %v2380
  %v2383 = vadd.f32 %v2377, %v2381
  %v2384 = vadd.f32 %v2378, %v2382
  %s2385 = sld [smem:[#allocation3 + $0x152]]
  %v2386 = vstv %s2385
  %v2387 = vmul.f32 %v2139, %v2386
  %v2388 = vmul.f32 %v2140, %v2386
  %v2389 = vadd.f32 %v2383, %v2387
  %v2390 = vadd.f32 %v2384, %v2388
  %s2391 = sld [smem:[#allocation3 + $0x153]]
  %v2392 = vstv %s2391
  %v2393 = vmul.f32 %v2147, %v2392
  %v2394 = vmul.f32 %v2148, %v2392
  %v2395 = vadd.f32 %v2389, %v2393
  %v2396 = vadd.f32 %v2390, %v2394
  %s2397 = sld [smem:[#allocation3 + $0x154]]
  %v2398 = vstv %s2397
  %v2399 = vmul.f32 %v2075, %v2398
  %v2400 = vmul.f32 %v2076, %v2398
  %s2401 = sld [smem:[#allocation4 + $0x22]]
  %v2402 = vstv %s2401
  %v2403 = vadd.f32 %v2399, %v2402
  %v2404 = vadd.f32 %v2400, %v2402
  %s2405 = sld [smem:[#allocation3 + $0x155]]
  %v2406 = vstv %s2405
  %v2407 = vmul.f32 %v2083, %v2406
  %v2408 = vmul.f32 %v2084, %v2406
  %v2409 = vadd.f32 %v2403, %v2407
  %v2410 = vadd.f32 %v2404, %v2408
  %s2411 = sld [smem:[#allocation3 + $0x156]]
  %v2412 = vstv %s2411
  %v2413 = vmul.f32 %v2091, %v2412
  %v2414 = vmul.f32 %v2092, %v2412
  %v2415 = vadd.f32 %v2409, %v2413
  %v2416 = vadd.f32 %v2410, %v2414
  %s2417 = sld [smem:[#allocation3 + $0x157]]
  %v2418 = vstv %s2417
  %v2419 = vmul.f32 %v2099, %v2418
  %v2420 = vmul.f32 %v2100, %v2418
  %v2421 = vadd.f32 %v2415, %v2419
  %v2422 = vadd.f32 %v2416, %v2420
  %s2423 = sld [smem:[#allocation3 + $0x158]]
  %v2424 = vstv %s2423
  %v2425 = vmul.f32 %v2107, %v2424
  %v2426 = vmul.f32 %v2108, %v2424
  %v2427 = vadd.f32 %v2421, %v2425
  %v2428 = vadd.f32 %v2422, %v2426
  %s2429 = sld [smem:[#allocation3 + $0x159]]
  %v2430 = vstv %s2429
  %v2431 = vmul.f32 %v2115, %v2430
  %v2432 = vmul.f32 %v2116, %v2430
  %v2433 = vadd.f32 %v2427, %v2431
  %v2434 = vadd.f32 %v2428, %v2432
  %s2435 = sld [smem:[#allocation3 + $0x15a]]
  %v2436 = vstv %s2435
  %v2437 = vmul.f32 %v2123, %v2436
  %v2438 = vmul.f32 %v2124, %v2436
  %v2439 = vadd.f32 %v2433, %v2437
  %v2440 = vadd.f32 %v2434, %v2438
  %s2441 = sld [smem:[#allocation3 + $0x15b]]
  %v2442 = vstv %s2441
  %v2443 = vmul.f32 %v2131, %v2442
  %v2444 = vmul.f32 %v2132, %v2442
  %v2445 = vadd.f32 %v2439, %v2443
  %v2446 = vadd.f32 %v2440, %v2444
  %s2447 = sld [smem:[#allocation3 + $0x15c]]
  %v2448 = vstv %s2447
  %v2449 = vmul.f32 %v2139, %v2448
  %v2450 = vmul.f32 %v2140, %v2448
  %v2451 = vadd.f32 %v2445, %v2449
  %v2452 = vadd.f32 %v2446, %v2450
  %s2453 = sld [smem:[#allocation3 + $0x15d]]
  %v2454 = vstv %s2453
  %v2455 = vmul.f32 %v2147, %v2454
  %v2456 = vmul.f32 %v2148, %v2454
  %v2457 = vadd.f32 %v2451, %v2455
  %v2458 = vadd.f32 %v2452, %v2456
  %s2459 = sld [smem:[#allocation3 + $0x15e]]
  %v2460 = vstv %s2459
  %v2461 = vmul.f32 %v2075, %v2460
  %v2462 = vmul.f32 %v2076, %v2460
  %s2463 = sld [smem:[#allocation4 + $0x23]]
  %v2464 = vstv %s2463
  %v2465 = vadd.f32 %v2461, %v2464
  %v2466 = vadd.f32 %v2462, %v2464
  %s2467 = sld [smem:[#allocation3 + $0x15f]]
  %v2468 = vstv %s2467
  %v2469 = vmul.f32 %v2083, %v2468
  %v2470 = vmul.f32 %v2084, %v2468
  %v2471 = vadd.f32 %v2465, %v2469
  %v2472 = vadd.f32 %v2466, %v2470
  %s2473 = sld [smem:[#allocation3 + $0x160]]
  %v2474 = vstv %s2473
  %v2475 = vmul.f32 %v2091, %v2474
  %v2476 = vmul.f32 %v2092, %v2474
  %v2477 = vadd.f32 %v2471, %v2475
  %v2478 = vadd.f32 %v2472, %v2476
  %s2479 = sld [smem:[#allocation3 + $0x161]]
  %v2480 = vstv %s2479
  %v2481 = vmul.f32 %v2099, %v2480
  %v2482 = vmul.f32 %v2100, %v2480
  %v2483 = vadd.f32 %v2477, %v2481
  %v2484 = vadd.f32 %v2478, %v2482
  %s2485 = sld [smem:[#allocation3 + $0x162]]
  %v2486 = vstv %s2485
  %v2487 = vmul.f32 %v2107, %v2486
  %v2488 = vmul.f32 %v2108, %v2486
  %v2489 = vadd.f32 %v2483, %v2487
  %v2490 = vadd.f32 %v2484, %v2488
  %s2491 = sld [smem:[#allocation3 + $0x163]]
  %v2492 = vstv %s2491
  %v2493 = vmul.f32 %v2115, %v2492
  %v2494 = vmul.f32 %v2116, %v2492
  %v2495 = vadd.f32 %v2489, %v2493
  %v2496 = vadd.f32 %v2490, %v2494
  %s2497 = sld [smem:[#allocation3 + $0x164]]
  %v2498 = vstv %s2497
  %v2499 = vmul.f32 %v2123, %v2498
  %v2500 = vmul.f32 %v2124, %v2498
  %v2501 = vadd.f32 %v2495, %v2499
  %v2502 = vadd.f32 %v2496, %v2500
  %s2503 = sld [smem:[#allocation3 + $0x165]]
  %v2504 = vstv %s2503
  %v2505 = vmul.f32 %v2131, %v2504
  %v2506 = vmul.f32 %v2132, %v2504
  %v2507 = vadd.f32 %v2501, %v2505
  %v2508 = vadd.f32 %v2502, %v2506
  %s2509 = sld [smem:[#allocation3 + $0x166]]
  %v2510 = vstv %s2509
  %v2511 = vmul.f32 %v2139, %v2510
  %v2512 = vmul.f32 %v2140, %v2510
  %v2513 = vadd.f32 %v2507, %v2511
  %v2514 = vadd.f32 %v2508, %v2512
  %s2515 = sld [smem:[#allocation3 + $0x167]]
  %v2516 = vstv %s2515
  %v2517 = vmul.f32 %v2147, %v2516
  %v2518 = vmul.f32 %v2148, %v2516
  %v2519 = vadd.f32 %v2513, %v2517
  %v2520 = vadd.f32 %v2514, %v2518
  %s2521 = sld [smem:[#allocation3 + $0x168]]
  %v2522 = vstv %s2521
  %v2523 = vmul.f32 %v2075, %v2522
  %v2524 = vmul.f32 %v2076, %v2522
  %s2525 = sld [smem:[#allocation4 + $0x24]]
  %v2526 = vstv %s2525
  %v2527 = vadd.f32 %v2523, %v2526
  %v2528 = vadd.f32 %v2524, %v2526
  %s2529 = sld [smem:[#allocation3 + $0x169]]
  %v2530 = vstv %s2529
  %v2531 = vmul.f32 %v2083, %v2530
  %v2532 = vmul.f32 %v2084, %v2530
  %v2533 = vadd.f32 %v2527, %v2531
  %v2534 = vadd.f32 %v2528, %v2532
  %s2535 = sld [smem:[#allocation3 + $0x16a]]
  %v2536 = vstv %s2535
  %v2537 = vmul.f32 %v2091, %v2536
  %v2538 = vmul.f32 %v2092, %v2536
  %v2539 = vadd.f32 %v2533, %v2537
  %v2540 = vadd.f32 %v2534, %v2538
  %s2541 = sld [smem:[#allocation3 + $0x16b]]
  %v2542 = vstv %s2541
  %v2543 = vmul.f32 %v2099, %v2542
  %v2544 = vmul.f32 %v2100, %v2542
  %v2545 = vadd.f32 %v2539, %v2543
  %v2546 = vadd.f32 %v2540, %v2544
  %s2547 = sld [smem:[#allocation3 + $0x16c]]
  %v2548 = vstv %s2547
  %v2549 = vmul.f32 %v2107, %v2548
  %v2550 = vmul.f32 %v2108, %v2548
  %v2551 = vadd.f32 %v2545, %v2549
  %v2552 = vadd.f32 %v2546, %v2550
  %s2553 = sld [smem:[#allocation3 + $0x16d]]
  %v2554 = vstv %s2553
  %v2555 = vmul.f32 %v2115, %v2554
  %v2556 = vmul.f32 %v2116, %v2554
  %v2557 = vadd.f32 %v2551, %v2555
  %v2558 = vadd.f32 %v2552, %v2556
  %s2559 = sld [smem:[#allocation3 + $0x16e]]
  %v2560 = vstv %s2559
  %v2561 = vmul.f32 %v2123, %v2560
  %v2562 = vmul.f32 %v2124, %v2560
  %v2563 = vadd.f32 %v2557, %v2561
  %v2564 = vadd.f32 %v2558, %v2562
  %s2565 = sld [smem:[#allocation3 + $0x16f]]
  %v2566 = vstv %s2565
  %v2567 = vmul.f32 %v2131, %v2566
  %v2568 = vmul.f32 %v2132, %v2566
  %v2569 = vadd.f32 %v2563, %v2567
  %v2570 = vadd.f32 %v2564, %v2568
  %s2571 = sld [smem:[#allocation3 + $0x170]]
  %v2572 = vstv %s2571
  %v2573 = vmul.f32 %v2139, %v2572
  %v2574 = vmul.f32 %v2140, %v2572
  %v2575 = vadd.f32 %v2569, %v2573
  %v2576 = vadd.f32 %v2570, %v2574
  %s2577 = sld [smem:[#allocation3 + $0x171]]
  %v2578 = vstv %s2577
  %v2579 = vmul.f32 %v2147, %v2578
  %v2580 = vmul.f32 %v2148, %v2578
  %v2581 = vadd.f32 %v2575, %v2579
  %v2582 = vadd.f32 %v2576, %v2580
  %s2583 = sld [smem:[#allocation3 + $0x172]]
  %v2584 = vstv %s2583
  %v2585 = vmul.f32 %v2075, %v2584
  %v2586 = vmul.f32 %v2076, %v2584
  %s2587 = sld [smem:[#allocation4 + $0x25]]
  %v2588 = vstv %s2587
  %v2589 = vadd.f32 %v2585, %v2588
  %v2590 = vadd.f32 %v2586, %v2588
  %s2591 = sld [smem:[#allocation3 + $0x173]]
  %v2592 = vstv %s2591
  %v2593 = vmul.f32 %v2083, %v2592
  %v2594 = vmul.f32 %v2084, %v2592
  %v2595 = vadd.f32 %v2589, %v2593
  %v2596 = vadd.f32 %v2590, %v2594
  %s2597 = sld [smem:[#allocation3 + $0x174]]
  %v2598 = vstv %s2597
  %v2599 = vmul.f32 %v2091, %v2598
  %v2600 = vmul.f32 %v2092, %v2598
  %v2601 = vadd.f32 %v2595, %v2599
  %v2602 = vadd.f32 %v2596, %v2600
  %s2603 = sld [smem:[#allocation3 + $0x175]]
  %v2604 = vstv %s2603
  %v2605 = vmul.f32 %v2099, %v2604
  %v2606 = vmul.f32 %v2100, %v2604
  %v2607 = vadd.f32 %v2601, %v2605
  %v2608 = vadd.f32 %v2602, %v2606
  %s2609 = sld [smem:[#allocation3 + $0x176]]
  %v2610 = vstv %s2609
  %v2611 = vmul.f32 %v2107, %v2610
  %v2612 = vmul.f32 %v2108, %v2610
  %v2613 = vadd.f32 %v2607, %v2611
  %v2614 = vadd.f32 %v2608, %v2612
  %s2615 = sld [smem:[#allocation3 + $0x177]]
  %v2616 = vstv %s2615
  %v2617 = vmul.f32 %v2115, %v2616
  %v2618 = vmul.f32 %v2116, %v2616
  %v2619 = vadd.f32 %v2613, %v2617
  %v2620 = vadd.f32 %v2614, %v2618
  %s2621 = sld [smem:[#allocation3 + $0x178]]
  %v2622 = vstv %s2621
  %v2623 = vmul.f32 %v2123, %v2622
  %v2624 = vmul.f32 %v2124, %v2622
  %v2625 = vadd.f32 %v2619, %v2623
  %v2626 = vadd.f32 %v2620, %v2624
  %s2627 = sld [smem:[#allocation3 + $0x179]]
  %v2628 = vstv %s2627
  %v2629 = vmul.f32 %v2131, %v2628
  %v2630 = vmul.f32 %v2132, %v2628
  %v2631 = vadd.f32 %v2625, %v2629
  %v2632 = vadd.f32 %v2626, %v2630
  %s2633 = sld [smem:[#allocation3 + $0x17a]]
  %v2634 = vstv %s2633
  %v2635 = vmul.f32 %v2139, %v2634
  %v2636 = vmul.f32 %v2140, %v2634
  %v2637 = vadd.f32 %v2631, %v2635
  %v2638 = vadd.f32 %v2632, %v2636
  %s2639 = sld [smem:[#allocation3 + $0x17b]]
  %v2640 = vstv %s2639
  %v2641 = vmul.f32 %v2147, %v2640
  %v2642 = vmul.f32 %v2148, %v2640
  %v2643 = vadd.f32 %v2637, %v2641
  %v2644 = vadd.f32 %v2638, %v2642
  %s2645 = sld [smem:[#allocation3 + $0x17c]]
  %v2646 = vstv %s2645
  %v2647 = vmul.f32 %v2075, %v2646
  %v2648 = vmul.f32 %v2076, %v2646
  %s2649 = sld [smem:[#allocation4 + $0x26]]
  %v2650 = vstv %s2649
  %v2651 = vadd.f32 %v2647, %v2650
  %v2652 = vadd.f32 %v2648, %v2650
  %s2653 = sld [smem:[#allocation3 + $0x17d]]
  %v2654 = vstv %s2653
  %v2655 = vmul.f32 %v2083, %v2654
  %v2656 = vmul.f32 %v2084, %v2654
  %v2657 = vadd.f32 %v2651, %v2655
  %v2658 = vadd.f32 %v2652, %v2656
  %s2659 = sld [smem:[#allocation3 + $0x17e]]
  %v2660 = vstv %s2659
  %v2661 = vmul.f32 %v2091, %v2660
  %v2662 = vmul.f32 %v2092, %v2660
  %v2663 = vadd.f32 %v2657, %v2661
  %v2664 = vadd.f32 %v2658, %v2662
  %s2665 = sld [smem:[#allocation3 + $0x17f]]
  %v2666 = vstv %s2665
  %v2667 = vmul.f32 %v2099, %v2666
  %v2668 = vmul.f32 %v2100, %v2666
  %v2669 = vadd.f32 %v2663, %v2667
  %v2670 = vadd.f32 %v2664, %v2668
  %s2671 = sld [smem:[#allocation3 + $0x180]]
  %v2672 = vstv %s2671
  %v2673 = vmul.f32 %v2107, %v2672
  %v2674 = vmul.f32 %v2108, %v2672
  %v2675 = vadd.f32 %v2669, %v2673
  %v2676 = vadd.f32 %v2670, %v2674
  %s2677 = sld [smem:[#allocation3 + $0x181]]
  %v2678 = vstv %s2677
  %v2679 = vmul.f32 %v2115, %v2678
  %v2680 = vmul.f32 %v2116, %v2678
  %v2681 = vadd.f32 %v2675, %v2679
  %v2682 = vadd.f32 %v2676, %v2680
  %s2683 = sld [smem:[#allocation3 + $0x182]]
  %v2684 = vstv %s2683
  %v2685 = vmul.f32 %v2123, %v2684
  %v2686 = vmul.f32 %v2124, %v2684
  %v2687 = vadd.f32 %v2681, %v2685
  %v2688 = vadd.f32 %v2682, %v2686
  %s2689 = sld [smem:[#allocation3 + $0x183]]
  %v2690 = vstv %s2689
  %v2691 = vmul.f32 %v2131, %v2690
  %v2692 = vmul.f32 %v2132, %v2690
  %v2693 = vadd.f32 %v2687, %v2691
  %v2694 = vadd.f32 %v2688, %v2692
  %s2695 = sld [smem:[#allocation3 + $0x184]]
  %v2696 = vstv %s2695
  %v2697 = vmul.f32 %v2139, %v2696
  %v2698 = vmul.f32 %v2140, %v2696
  %v2699 = vadd.f32 %v2693, %v2697
  %v2700 = vadd.f32 %v2694, %v2698
  %s2701 = sld [smem:[#allocation3 + $0x185]]
  %v2702 = vstv %s2701
  %v2703 = vmul.f32 %v2147, %v2702
  %v2704 = vmul.f32 %v2148, %v2702
  %v2705 = vadd.f32 %v2699, %v2703
  %v2706 = vadd.f32 %v2700, %v2704
  %s2707 = sld [smem:[#allocation3 + $0x186]]
  %v2708 = vstv %s2707
  %v2709 = vmul.f32 %v2075, %v2708
  %v2710 = vmul.f32 %v2076, %v2708
  %s2711 = sld [smem:[#allocation4 + $0x27]]
  %v2712 = vstv %s2711
  %v2713 = vadd.f32 %v2709, %v2712
  %v2714 = vadd.f32 %v2710, %v2712
  %s2715 = sld [smem:[#allocation3 + $0x187]]
  %v2716 = vstv %s2715
  %v2717 = vmul.f32 %v2083, %v2716
  %v2718 = vmul.f32 %v2084, %v2716
  %v2719 = vadd.f32 %v2713, %v2717
  %v2720 = vadd.f32 %v2714, %v2718
  %s2721 = sld [smem:[#allocation3 + $0x188]]
  %v2722 = vstv %s2721
  %v2723 = vmul.f32 %v2091, %v2722
  %v2724 = vmul.f32 %v2092, %v2722
  %v2725 = vadd.f32 %v2719, %v2723
  %v2726 = vadd.f32 %v2720, %v2724
  %s2727 = sld [smem:[#allocation3 + $0x189]]
  %v2728 = vstv %s2727
  %v2729 = vmul.f32 %v2099, %v2728
  %v2730 = vmul.f32 %v2100, %v2728
  %v2731 = vadd.f32 %v2725, %v2729
  %v2732 = vadd.f32 %v2726, %v2730
  %s2733 = sld [smem:[#allocation3 + $0x18a]]
  %v2734 = vstv %s2733
  %v2735 = vmul.f32 %v2107, %v2734
  %v2736 = vmul.f32 %v2108, %v2734
  %v2737 = vadd.f32 %v2731, %v2735
  %v2738 = vadd.f32 %v2732, %v2736
  %s2739 = sld [smem:[#allocation3 + $0x18b]]
  %v2740 = vstv %s2739
  %v2741 = vmul.f32 %v2115, %v2740
  %v2742 = vmul.f32 %v2116, %v2740
  %v2743 = vadd.f32 %v2737, %v2741
  %v2744 = vadd.f32 %v2738, %v2742
  %s2745 = sld [smem:[#allocation3 + $0x18c]]
  %v2746 = vstv %s2745
  %v2747 = vmul.f32 %v2123, %v2746
  %v2748 = vmul.f32 %v2124, %v2746
  %v2749 = vadd.f32 %v2743, %v2747
  %v2750 = vadd.f32 %v2744, %v2748
  %s2751 = sld [smem:[#allocation3 + $0x18d]]
  %v2752 = vstv %s2751
  %v2753 = vmul.f32 %v2131, %v2752
  %v2754 = vmul.f32 %v2132, %v2752
  %v2755 = vadd.f32 %v2749, %v2753
  %v2756 = vadd.f32 %v2750, %v2754
  %s2757 = sld [smem:[#allocation3 + $0x18e]]
  %v2758 = vstv %s2757
  %v2759 = vmul.f32 %v2139, %v2758
  %v2760 = vmul.f32 %v2140, %v2758
  %v2761 = vadd.f32 %v2755, %v2759
  %v2762 = vadd.f32 %v2756, %v2760
  %s2763 = sld [smem:[#allocation3 + $0x18f]]
  %v2764 = vstv %s2763
  %v2765 = vmul.f32 %v2147, %v2764
  %v2766 = vmul.f32 %v2148, %v2764
  %v2767 = vadd.f32 %v2761, %v2765
  %v2768 = vadd.f32 %v2762, %v2766
  %v2769 = vmul.f32 %v2209, 0.5
  %v2770 = vmul.f32 %v2210, 0.5
  %v2771 = vtanh.pop %v2769
  %v2772 = vtanh.pop %v2770
  %v2773 = vmul.f32 %v2771, 0.5
  %v2774 = vmul.f32 %v2772, 0.5
  %v2775 = vadd.f32 %v2773, 0.5
  %v2776 = vadd.f32 %v2774, 0.5
  %v2777 = vmul.f32 %v2271, 0.5
  %v2778 = vmul.f32 %v2272, 0.5
  %v2779 = vtanh.pop %v2777
  %v2780 = vtanh.pop %v2778
  %v2781 = vmul.f32 %v2779, 0.5
  %v2782 = vmul.f32 %v2780, 0.5
  %v2783 = vadd.f32 %v2781, 0.5
  %v2784 = vadd.f32 %v2782, 0.5
  %v2785 = vmul.f32 %v2333, 0.5
  %v2786 = vmul.f32 %v2334, 0.5
  %v2787 = vtanh.pop %v2785
  %v2788 = vtanh.pop %v2786
  %v2789 = vmul.f32 %v2787, 0.5
  %v2790 = vmul.f32 %v2788, 0.5
  %v2791 = vadd.f32 %v2789, 0.5
  %v2792 = vadd.f32 %v2790, 0.5
  %v2793 = vmul.f32 %v2395, 0.5
  %v2794 = vmul.f32 %v2396, 0.5
  %v2795 = vtanh.pop %v2793
  %v2796 = vtanh.pop %v2794
  %v2797 = vmul.f32 %v2795, 0.5
  %v2798 = vmul.f32 %v2796, 0.5
  %v2799 = vadd.f32 %v2797, 0.5
  %v2800 = vadd.f32 %v2798, 0.5
  %v2801 = vmul.f32 %v2457, 0.5
  %v2802 = vmul.f32 %v2458, 0.5
  %v2803 = vtanh.pop %v2801
  %v2804 = vtanh.pop %v2802
  %v2805 = vmul.f32 %v2803, 0.5
  %v2806 = vmul.f32 %v2804, 0.5
  %v2807 = vadd.f32 %v2805, 0.5
  %v2808 = vadd.f32 %v2806, 0.5
  %v2809 = vmul.f32 %v2519, 0.5
  %v2810 = vmul.f32 %v2520, 0.5
  %v2811 = vtanh.pop %v2809
  %v2812 = vtanh.pop %v2810
  %v2813 = vmul.f32 %v2811, 0.5
  %v2814 = vmul.f32 %v2812, 0.5
  %v2815 = vadd.f32 %v2813, 0.5
  %v2816 = vadd.f32 %v2814, 0.5
  %v2817 = vmul.f32 %v2581, 0.5
  %v2818 = vmul.f32 %v2582, 0.5
  %v2819 = vtanh.pop %v2817
  %v2820 = vtanh.pop %v2818
  %v2821 = vmul.f32 %v2819, 0.5
  %v2822 = vmul.f32 %v2820, 0.5
  %v2823 = vadd.f32 %v2821, 0.5
  %v2824 = vadd.f32 %v2822, 0.5
  %v2825 = vmul.f32 %v2643, 0.5
  %v2826 = vmul.f32 %v2644, 0.5
  %v2827 = vtanh.pop %v2825
  %v2828 = vtanh.pop %v2826
  %v2829 = vmul.f32 %v2827, 0.5
  %v2830 = vmul.f32 %v2828, 0.5
  %v2831 = vadd.f32 %v2829, 0.5
  %v2832 = vadd.f32 %v2830, 0.5
  %v2833 = vmul.f32 %v2705, 0.5
  %v2834 = vmul.f32 %v2706, 0.5
  %v2835 = vtanh.pop %v2833
  %v2836 = vtanh.pop %v2834
  %v2837 = vmul.f32 %v2835, 0.5
  %v2838 = vmul.f32 %v2836, 0.5
  %v2839 = vadd.f32 %v2837, 0.5
  %v2840 = vadd.f32 %v2838, 0.5
  %v2841 = vmul.f32 %v2767, 0.5
  %v2842 = vmul.f32 %v2768, 0.5
  %v2843 = vtanh.pop %v2841
  %v2844 = vtanh.pop %v2842
  %v2845 = vmul.f32 %v2843, 0.5
  %v2846 = vmul.f32 %v2844, 0.5
  %v2847 = vadd.f32 %v2845, 0.5
  %v2848 = vadd.f32 %v2846, 0.5
  %s2849 = sld [smem:[#allocation3 + $0x190]]
  %v2850 = vstv %s2849
  %v2851 = vmul.f32 %v2775, %v2850
  %v2852 = vmul.f32 %v2776, %v2850
  %s2853 = sld [smem:[#allocation4 + $0x28]]
  %v2854 = vstv %s2853
  %v2855 = vadd.f32 %v2851, %v2854
  %v2856 = vadd.f32 %v2852, %v2854
  %s2857 = sld [smem:[#allocation3 + $0x191]]
  %v2858 = vstv %s2857
  %v2859 = vmul.f32 %v2783, %v2858
  %v2860 = vmul.f32 %v2784, %v2858
  %v2861 = vadd.f32 %v2855, %v2859
  %v2862 = vadd.f32 %v2856, %v2860
  %s2863 = sld [smem:[#allocation3 + $0x192]]
  %v2864 = vstv %s2863
  %v2865 = vmul.f32 %v2791, %v2864
  %v2866 = vmul.f32 %v2792, %v2864
  %v2867 = vadd.f32 %v2861, %v2865
  %v2868 = vadd.f32 %v2862, %v2866
  %s2869 = sld [smem:[#allocation3 + $0x193]]
  %v2870 = vstv %s2869
  %v2871 = vmul.f32 %v2799, %v2870
  %v2872 = vmul.f32 %v2800, %v2870
  %v2873 = vadd.f32 %v2867, %v2871
  %v2874 = vadd.f32 %v2868, %v2872
  %s2875 = sld [smem:[#allocation3 + $0x194]]
  %v2876 = vstv %s2875
  %v2877 = vmul.f32 %v2807, %v2876
  %v2878 = vmul.f32 %v2808, %v2876
  %v2879 = vadd.f32 %v2873, %v2877
  %v2880 = vadd.f32 %v2874, %v2878
  %s2881 = sld [smem:[#allocation3 + $0x195]]
  %v2882 = vstv %s2881
  %v2883 = vmul.f32 %v2815, %v2882
  %v2884 = vmul.f32 %v2816, %v2882
  %v2885 = vadd.f32 %v2879, %v2883
  %v2886 = vadd.f32 %v2880, %v2884
  %s2887 = sld [smem:[#allocation3 + $0x196]]
  %v2888 = vstv %s2887
  %v2889 = vmul.f32 %v2823, %v2888
  %v2890 = vmul.f32 %v2824, %v2888
  %v2891 = vadd.f32 %v2885, %v2889
  %v2892 = vadd.f32 %v2886, %v2890
  %s2893 = sld [smem:[#allocation3 + $0x197]]
  %v2894 = vstv %s2893
  %v2895 = vmul.f32 %v2831, %v2894
  %v2896 = vmul.f32 %v2832, %v2894
  %v2897 = vadd.f32 %v2891, %v2895
  %v2898 = vadd.f32 %v2892, %v2896
  %s2899 = sld [smem:[#allocation3 + $0x198]]
  %v2900 = vstv %s2899
  %v2901 = vmul.f32 %v2839, %v2900
  %v2902 = vmul.f32 %v2840, %v2900
  %v2903 = vadd.f32 %v2897, %v2901
  %v2904 = vadd.f32 %v2898, %v2902
  %s2905 = sld [smem:[#allocation3 + $0x199]]
  %v2906 = vstv %s2905
  %v2907 = vmul.f32 %v2847, %v2906
  %v2908 = vmul.f32 %v2848, %v2906
  %v2909 = vadd.f32 %v2903, %v2907
  %v2910 = vadd.f32 %v2904, %v2908
  %s2911 = sld [smem:[#allocation3 + $0x19a]]
  %v2912 = vstv %s2911
  %v2913 = vmul.f32 %v2775, %v2912
  %v2914 = vmul.f32 %v2776, %v2912
  %s2915 = sld [smem:[#allocation4 + $0x29]]
  %v2916 = vstv %s2915
  %v2917 = vadd.f32 %v2913, %v2916
  %v2918 = vadd.f32 %v2914, %v2916
  %s2919 = sld [smem:[#allocation3 + $0x19b]]
  %v2920 = vstv %s2919
  %v2921 = vmul.f32 %v2783, %v2920
  %v2922 = vmul.f32 %v2784, %v2920
  %v2923 = vadd.f32 %v2917, %v2921
  %v2924 = vadd.f32 %v2918, %v2922
  %s2925 = sld [smem:[#allocation3 + $0x19c]]
  %v2926 = vstv %s2925
  %v2927 = vmul.f32 %v2791, %v2926
  %v2928 = vmul.f32 %v2792, %v2926
  %v2929 = vadd.f32 %v2923, %v2927
  %v2930 = vadd.f32 %v2924, %v2928
  %s2931 = sld [smem:[#allocation3 + $0x19d]]
  %v2932 = vstv %s2931
  %v2933 = vmul.f32 %v2799, %v2932
  %v2934 = vmul.f32 %v2800, %v2932
  %v2935 = vadd.f32 %v2929, %v2933
  %v2936 = vadd.f32 %v2930, %v2934
  %s2937 = sld [smem:[#allocation3 + $0x19e]]
  %v2938 = vstv %s2937
  %v2939 = vmul.f32 %v2807, %v2938
  %v2940 = vmul.f32 %v2808, %v2938
  %v2941 = vadd.f32 %v2935, %v2939
  %v2942 = vadd.f32 %v2936, %v2940
  %s2943 = sld [smem:[#allocation3 + $0x19f]]
  %v2944 = vstv %s2943
  %v2945 = vmul.f32 %v2815, %v2944
  %v2946 = vmul.f32 %v2816, %v2944
  %v2947 = vadd.f32 %v2941, %v2945
  %v2948 = vadd.f32 %v2942, %v2946
  %s2949 = sld [smem:[#allocation3 + $0x1a0]]
  %v2950 = vstv %s2949
  %v2951 = vmul.f32 %v2823, %v2950
  %v2952 = vmul.f32 %v2824, %v2950
  %v2953 = vadd.f32 %v2947, %v2951
  %v2954 = vadd.f32 %v2948, %v2952
  %s2955 = sld [smem:[#allocation3 + $0x1a1]]
  %v2956 = vstv %s2955
  %v2957 = vmul.f32 %v2831, %v2956
  %v2958 = vmul.f32 %v2832, %v2956
  %v2959 = vadd.f32 %v2953, %v2957
  %v2960 = vadd.f32 %v2954, %v2958
  %s2961 = sld [smem:[#allocation3 + $0x1a2]]
  %v2962 = vstv %s2961
  %v2963 = vmul.f32 %v2839, %v2962
  %v2964 = vmul.f32 %v2840, %v2962
  %v2965 = vadd.f32 %v2959, %v2963
  %v2966 = vadd.f32 %v2960, %v2964
  %s2967 = sld [smem:[#allocation3 + $0x1a3]]
  %v2968 = vstv %s2967
  %v2969 = vmul.f32 %v2847, %v2968
  %v2970 = vmul.f32 %v2848, %v2968
  %v2971 = vadd.f32 %v2965, %v2969
  %v2972 = vadd.f32 %v2966, %v2970
  %s2973 = sld [smem:[#allocation3 + $0x1a4]]
  %v2974 = vstv %s2973
  %v2975 = vmul.f32 %v2775, %v2974
  %v2976 = vmul.f32 %v2776, %v2974
  %s2977 = sld [smem:[#allocation4 + $0x2a]]
  %v2978 = vstv %s2977
  %v2979 = vadd.f32 %v2975, %v2978
  %v2980 = vadd.f32 %v2976, %v2978
  %s2981 = sld [smem:[#allocation3 + $0x1a5]]
  %v2982 = vstv %s2981
  %v2983 = vmul.f32 %v2783, %v2982
  %v2984 = vmul.f32 %v2784, %v2982
  %v2985 = vadd.f32 %v2979, %v2983
  %v2986 = vadd.f32 %v2980, %v2984
  %s2987 = sld [smem:[#allocation3 + $0x1a6]]
  %v2988 = vstv %s2987
  %v2989 = vmul.f32 %v2791, %v2988
  %v2990 = vmul.f32 %v2792, %v2988
  %v2991 = vadd.f32 %v2985, %v2989
  %v2992 = vadd.f32 %v2986, %v2990
  %s2993 = sld [smem:[#allocation3 + $0x1a7]]
  %v2994 = vstv %s2993
  %v2995 = vmul.f32 %v2799, %v2994
  %v2996 = vmul.f32 %v2800, %v2994
  %v2997 = vadd.f32 %v2991, %v2995
  %v2998 = vadd.f32 %v2992, %v2996
  %s2999 = sld [smem:[#allocation3 + $0x1a8]]
  %v3000 = vstv %s2999
  %v3001 = vmul.f32 %v2807, %v3000
  %v3002 = vmul.f32 %v2808, %v3000
  %v3003 = vadd.f32 %v2997, %v3001
  %v3004 = vadd.f32 %v2998, %v3002
  %s3005 = sld [smem:[#allocation3 + $0x1a9]]
  %v3006 = vstv %s3005
  %v3007 = vmul.f32 %v2815, %v3006
  %v3008 = vmul.f32 %v2816, %v3006
  %v3009 = vadd.f32 %v3003, %v3007
  %v3010 = vadd.f32 %v3004, %v3008
  %s3011 = sld [smem:[#allocation3 + $0x1aa]]
  %v3012 = vstv %s3011
  %v3013 = vmul.f32 %v2823, %v3012
  %v3014 = vmul.f32 %v2824, %v3012
  %v3015 = vadd.f32 %v3009, %v3013
  %v3016 = vadd.f32 %v3010, %v3014
  %s3017 = sld [smem:[#allocation3 + $0x1ab]]
  %v3018 = vstv %s3017
  %v3019 = vmul.f32 %v2831, %v3018
  %v3020 = vmul.f32 %v2832, %v3018
  %v3021 = vadd.f32 %v3015, %v3019
  %v3022 = vadd.f32 %v3016, %v3020
  %s3023 = sld [smem:[#allocation3 + $0x1ac]]
  %v3024 = vstv %s3023
  %v3025 = vmul.f32 %v2839, %v3024
  %v3026 = vmul.f32 %v2840, %v3024
  %v3027 = vadd.f32 %v3021, %v3025
  %v3028 = vadd.f32 %v3022, %v3026
  %s3029 = sld [smem:[#allocation3 + $0x1ad]]
  %v3030 = vstv %s3029
  %v3031 = vmul.f32 %v2847, %v3030
  %v3032 = vmul.f32 %v2848, %v3030
  %v3033 = vadd.f32 %v3027, %v3031
  %v3034 = vadd.f32 %v3028, %v3032
  %s3035 = sld [smem:[#allocation3 + $0x1ae]]
  %v3036 = vstv %s3035
  %v3037 = vmul.f32 %v2775, %v3036
  %v3038 = vmul.f32 %v2776, %v3036
  %s3039 = sld [smem:[#allocation4 + $0x2b]]
  %v3040 = vstv %s3039
  %v3041 = vadd.f32 %v3037, %v3040
  %v3042 = vadd.f32 %v3038, %v3040
  %s3043 = sld [smem:[#allocation3 + $0x1af]]
  %v3044 = vstv %s3043
  %v3045 = vmul.f32 %v2783, %v3044
  %v3046 = vmul.f32 %v2784, %v3044
  %v3047 = vadd.f32 %v3041, %v3045
  %v3048 = vadd.f32 %v3042, %v3046
  %s3049 = sld [smem:[#allocation3 + $0x1b0]]
  %v3050 = vstv %s3049
  %v3051 = vmul.f32 %v2791, %v3050
  %v3052 = vmul.f32 %v2792, %v3050
  %v3053 = vadd.f32 %v3047, %v3051
  %v3054 = vadd.f32 %v3048, %v3052
  %s3055 = sld [smem:[#allocation3 + $0x1b1]]
  %v3056 = vstv %s3055
  %v3057 = vmul.f32 %v2799, %v3056
  %v3058 = vmul.f32 %v2800, %v3056
  %v3059 = vadd.f32 %v3053, %v3057
  %v3060 = vadd.f32 %v3054, %v3058
  %s3061 = sld [smem:[#allocation3 + $0x1b2]]
  %v3062 = vstv %s3061
  %v3063 = vmul.f32 %v2807, %v3062
  %v3064 = vmul.f32 %v2808, %v3062
  %v3065 = vadd.f32 %v3059, %v3063
  %v3066 = vadd.f32 %v3060, %v3064
  %s3067 = sld [smem:[#allocation3 + $0x1b3]]
  %v3068 = vstv %s3067
  %v3069 = vmul.f32 %v2815, %v3068
  %v3070 = vmul.f32 %v2816, %v3068
  %v3071 = vadd.f32 %v3065, %v3069
  %v3072 = vadd.f32 %v3066, %v3070
  %s3073 = sld [smem:[#allocation3 + $0x1b4]]
  %v3074 = vstv %s3073
  %v3075 = vmul.f32 %v2823, %v3074
  %v3076 = vmul.f32 %v2824, %v3074
  %v3077 = vadd.f32 %v3071, %v3075
  %v3078 = vadd.f32 %v3072, %v3076
  %s3079 = sld [smem:[#allocation3 + $0x1b5]]
  %v3080 = vstv %s3079
  %v3081 = vmul.f32 %v2831, %v3080
  %v3082 = vmul.f32 %v2832, %v3080
  %v3083 = vadd.f32 %v3077, %v3081
  %v3084 = vadd.f32 %v3078, %v3082
  %s3085 = sld [smem:[#allocation3 + $0x1b6]]
  %v3086 = vstv %s3085
  %v3087 = vmul.f32 %v2839, %v3086
  %v3088 = vmul.f32 %v2840, %v3086
  %v3089 = vadd.f32 %v3083, %v3087
  %v3090 = vadd.f32 %v3084, %v3088
  %s3091 = sld [smem:[#allocation3 + $0x1b7]]
  %v3092 = vstv %s3091
  %v3093 = vmul.f32 %v2847, %v3092
  %v3094 = vmul.f32 %v2848, %v3092
  %v3095 = vadd.f32 %v3089, %v3093
  %v3096 = vadd.f32 %v3090, %v3094
  %s3097 = sld [smem:[#allocation3 + $0x1b8]]
  %v3098 = vstv %s3097
  %v3099 = vmul.f32 %v2775, %v3098
  %v3100 = vmul.f32 %v2776, %v3098
  %s3101 = sld [smem:[#allocation4 + $0x2c]]
  %v3102 = vstv %s3101
  %v3103 = vadd.f32 %v3099, %v3102
  %v3104 = vadd.f32 %v3100, %v3102
  %s3105 = sld [smem:[#allocation3 + $0x1b9]]
  %v3106 = vstv %s3105
  %v3107 = vmul.f32 %v2783, %v3106
  %v3108 = vmul.f32 %v2784, %v3106
  %v3109 = vadd.f32 %v3103, %v3107
  %v3110 = vadd.f32 %v3104, %v3108
  %s3111 = sld [smem:[#allocation3 + $0x1ba]]
  %v3112 = vstv %s3111
  %v3113 = vmul.f32 %v2791, %v3112
  %v3114 = vmul.f32 %v2792, %v3112
  %v3115 = vadd.f32 %v3109, %v3113
  %v3116 = vadd.f32 %v3110, %v3114
  %s3117 = sld [smem:[#allocation3 + $0x1bb]]
  %v3118 = vstv %s3117
  %v3119 = vmul.f32 %v2799, %v3118
  %v3120 = vmul.f32 %v2800, %v3118
  %v3121 = vadd.f32 %v3115, %v3119
  %v3122 = vadd.f32 %v3116, %v3120
  %s3123 = sld [smem:[#allocation3 + $0x1bc]]
  %v3124 = vstv %s3123
  %v3125 = vmul.f32 %v2807, %v3124
  %v3126 = vmul.f32 %v2808, %v3124
  %v3127 = vadd.f32 %v3121, %v3125
  %v3128 = vadd.f32 %v3122, %v3126
  %s3129 = sld [smem:[#allocation3 + $0x1bd]]
  %v3130 = vstv %s3129
  %v3131 = vmul.f32 %v2815, %v3130
  %v3132 = vmul.f32 %v2816, %v3130
  %v3133 = vadd.f32 %v3127, %v3131
  %v3134 = vadd.f32 %v3128, %v3132
  %s3135 = sld [smem:[#allocation3 + $0x1be]]
  %v3136 = vstv %s3135
  %v3137 = vmul.f32 %v2823, %v3136
  %v3138 = vmul.f32 %v2824, %v3136
  %v3139 = vadd.f32 %v3133, %v3137
  %v3140 = vadd.f32 %v3134, %v3138
  %s3141 = sld [smem:[#allocation3 + $0x1bf]]
  %v3142 = vstv %s3141
  %v3143 = vmul.f32 %v2831, %v3142
  %v3144 = vmul.f32 %v2832, %v3142
  %v3145 = vadd.f32 %v3139, %v3143
  %v3146 = vadd.f32 %v3140, %v3144
  %s3147 = sld [smem:[#allocation3 + $0x1c0]]
  %v3148 = vstv %s3147
  %v3149 = vmul.f32 %v2839, %v3148
  %v3150 = vmul.f32 %v2840, %v3148
  %v3151 = vadd.f32 %v3145, %v3149
  %v3152 = vadd.f32 %v3146, %v3150
  %s3153 = sld [smem:[#allocation3 + $0x1c1]]
  %v3154 = vstv %s3153
  %v3155 = vmul.f32 %v2847, %v3154
  %v3156 = vmul.f32 %v2848, %v3154
  %v3157 = vadd.f32 %v3151, %v3155
  %v3158 = vadd.f32 %v3152, %v3156
  %s3159 = sld [smem:[#allocation3 + $0x1c2]]
  %v3160 = vstv %s3159
  %v3161 = vmul.f32 %v2775, %v3160
  %v3162 = vmul.f32 %v2776, %v3160
  %s3163 = sld [smem:[#allocation4 + $0x2d]]
  %v3164 = vstv %s3163
  %v3165 = vadd.f32 %v3161, %v3164
  %v3166 = vadd.f32 %v3162, %v3164
  %s3167 = sld [smem:[#allocation3 + $0x1c3]]
  %v3168 = vstv %s3167
  %v3169 = vmul.f32 %v2783, %v3168
  %v3170 = vmul.f32 %v2784, %v3168
  %v3171 = vadd.f32 %v3165, %v3169
  %v3172 = vadd.f32 %v3166, %v3170
  %s3173 = sld [smem:[#allocation3 + $0x1c4]]
  %v3174 = vstv %s3173
  %v3175 = vmul.f32 %v2791, %v3174
  %v3176 = vmul.f32 %v2792, %v3174
  %v3177 = vadd.f32 %v3171, %v3175
  %v3178 = vadd.f32 %v3172, %v3176
  %s3179 = sld [smem:[#allocation3 + $0x1c5]]
  %v3180 = vstv %s3179
  %v3181 = vmul.f32 %v2799, %v3180
  %v3182 = vmul.f32 %v2800, %v3180
  %v3183 = vadd.f32 %v3177, %v3181
  %v3184 = vadd.f32 %v3178, %v3182
  %s3185 = sld [smem:[#allocation3 + $0x1c6]]
  %v3186 = vstv %s3185
  %v3187 = vmul.f32 %v2807, %v3186
  %v3188 = vmul.f32 %v2808, %v3186
  %v3189 = vadd.f32 %v3183, %v3187
  %v3190 = vadd.f32 %v3184, %v3188
  %s3191 = sld [smem:[#allocation3 + $0x1c7]]
  %v3192 = vstv %s3191
  %v3193 = vmul.f32 %v2815, %v3192
  %v3194 = vmul.f32 %v2816, %v3192
  %v3195 = vadd.f32 %v3189, %v3193
  %v3196 = vadd.f32 %v3190, %v3194
  %s3197 = sld [smem:[#allocation3 + $0x1c8]]
  %v3198 = vstv %s3197
  %v3199 = vmul.f32 %v2823, %v3198
  %v3200 = vmul.f32 %v2824, %v3198
  %v3201 = vadd.f32 %v3195, %v3199
  %v3202 = vadd.f32 %v3196, %v3200
  %s3203 = sld [smem:[#allocation3 + $0x1c9]]
  %v3204 = vstv %s3203
  %v3205 = vmul.f32 %v2831, %v3204
  %v3206 = vmul.f32 %v2832, %v3204
  %v3207 = vadd.f32 %v3201, %v3205
  %v3208 = vadd.f32 %v3202, %v3206
  %s3209 = sld [smem:[#allocation3 + $0x1ca]]
  %v3210 = vstv %s3209
  %v3211 = vmul.f32 %v2839, %v3210
  %v3212 = vmul.f32 %v2840, %v3210
  %v3213 = vadd.f32 %v3207, %v3211
  %v3214 = vadd.f32 %v3208, %v3212
  %s3215 = sld [smem:[#allocation3 + $0x1cb]]
  %v3216 = vstv %s3215
  %v3217 = vmul.f32 %v2847, %v3216
  %v3218 = vmul.f32 %v2848, %v3216
  %v3219 = vadd.f32 %v3213, %v3217
  %v3220 = vadd.f32 %v3214, %v3218
  %s3221 = sld [smem:[#allocation3 + $0x1cc]]
  %v3222 = vstv %s3221
  %v3223 = vmul.f32 %v2775, %v3222
  %v3224 = vmul.f32 %v2776, %v3222
  %s3225 = sld [smem:[#allocation4 + $0x2e]]
  %v3226 = vstv %s3225
  %v3227 = vadd.f32 %v3223, %v3226
  %v3228 = vadd.f32 %v3224, %v3226
  %s3229 = sld [smem:[#allocation3 + $0x1cd]]
  %v3230 = vstv %s3229
  %v3231 = vmul.f32 %v2783, %v3230
  %v3232 = vmul.f32 %v2784, %v3230
  %v3233 = vadd.f32 %v3227, %v3231
  %v3234 = vadd.f32 %v3228, %v3232
  %s3235 = sld [smem:[#allocation3 + $0x1ce]]
  %v3236 = vstv %s3235
  %v3237 = vmul.f32 %v2791, %v3236
  %v3238 = vmul.f32 %v2792, %v3236
  %v3239 = vadd.f32 %v3233, %v3237
  %v3240 = vadd.f32 %v3234, %v3238
  %s3241 = sld [smem:[#allocation3 + $0x1cf]]
  %v3242 = vstv %s3241
  %v3243 = vmul.f32 %v2799, %v3242
  %v3244 = vmul.f32 %v2800, %v3242
  %v3245 = vadd.f32 %v3239, %v3243
  %v3246 = vadd.f32 %v3240, %v3244
  %s3247 = sld [smem:[#allocation3 + $0x1d0]]
  %v3248 = vstv %s3247
  %v3249 = vmul.f32 %v2807, %v3248
  %v3250 = vmul.f32 %v2808, %v3248
  %v3251 = vadd.f32 %v3245, %v3249
  %v3252 = vadd.f32 %v3246, %v3250
  %s3253 = sld [smem:[#allocation3 + $0x1d1]]
  %v3254 = vstv %s3253
  %v3255 = vmul.f32 %v2815, %v3254
  %v3256 = vmul.f32 %v2816, %v3254
  %v3257 = vadd.f32 %v3251, %v3255
  %v3258 = vadd.f32 %v3252, %v3256
  %s3259 = sld [smem:[#allocation3 + $0x1d2]]
  %v3260 = vstv %s3259
  %v3261 = vmul.f32 %v2823, %v3260
  %v3262 = vmul.f32 %v2824, %v3260
  %v3263 = vadd.f32 %v3257, %v3261
  %v3264 = vadd.f32 %v3258, %v3262
  %s3265 = sld [smem:[#allocation3 + $0x1d3]]
  %v3266 = vstv %s3265
  %v3267 = vmul.f32 %v2831, %v3266
  %v3268 = vmul.f32 %v2832, %v3266
  %v3269 = vadd.f32 %v3263, %v3267
  %v3270 = vadd.f32 %v3264, %v3268
  %s3271 = sld [smem:[#allocation3 + $0x1d4]]
  %v3272 = vstv %s3271
  %v3273 = vmul.f32 %v2839, %v3272
  %v3274 = vmul.f32 %v2840, %v3272
  %v3275 = vadd.f32 %v3269, %v3273
  %v3276 = vadd.f32 %v3270, %v3274
  %s3277 = sld [smem:[#allocation3 + $0x1d5]]
  %v3278 = vstv %s3277
  %v3279 = vmul.f32 %v2847, %v3278
  %v3280 = vmul.f32 %v2848, %v3278
  %v3281 = vadd.f32 %v3275, %v3279
  %v3282 = vadd.f32 %v3276, %v3280
  %s3283 = sld [smem:[#allocation3 + $0x1d6]]
  %v3284 = vstv %s3283
  %v3285 = vmul.f32 %v2775, %v3284
  %v3286 = vmul.f32 %v2776, %v3284
  %s3287 = sld [smem:[#allocation4 + $0x2f]]
  %v3288 = vstv %s3287
  %v3289 = vadd.f32 %v3285, %v3288
  %v3290 = vadd.f32 %v3286, %v3288
  %s3291 = sld [smem:[#allocation3 + $0x1d7]]
  %v3292 = vstv %s3291
  %v3293 = vmul.f32 %v2783, %v3292
  %v3294 = vmul.f32 %v2784, %v3292
  %v3295 = vadd.f32 %v3289, %v3293
  %v3296 = vadd.f32 %v3290, %v3294
  %s3297 = sld [smem:[#allocation3 + $0x1d8]]
  %v3298 = vstv %s3297
  %v3299 = vmul.f32 %v2791, %v3298
  %v3300 = vmul.f32 %v2792, %v3298
  %v3301 = vadd.f32 %v3295, %v3299
  %v3302 = vadd.f32 %v3296, %v3300
  %s3303 = sld [smem:[#allocation3 + $0x1d9]]
  %v3304 = vstv %s3303
  %v3305 = vmul.f32 %v2799, %v3304
  %v3306 = vmul.f32 %v2800, %v3304
  %v3307 = vadd.f32 %v3301, %v3305
  %v3308 = vadd.f32 %v3302, %v3306
  %s3309 = sld [smem:[#allocation3 + $0x1da]]
  %v3310 = vstv %s3309
  %v3311 = vmul.f32 %v2807, %v3310
  %v3312 = vmul.f32 %v2808, %v3310
  %v3313 = vadd.f32 %v3307, %v3311
  %v3314 = vadd.f32 %v3308, %v3312
  %s3315 = sld [smem:[#allocation3 + $0x1db]]
  %v3316 = vstv %s3315
  %v3317 = vmul.f32 %v2815, %v3316
  %v3318 = vmul.f32 %v2816, %v3316
  %v3319 = vadd.f32 %v3313, %v3317
  %v3320 = vadd.f32 %v3314, %v3318
  %s3321 = sld [smem:[#allocation3 + $0x1dc]]
  %v3322 = vstv %s3321
  %v3323 = vmul.f32 %v2823, %v3322
  %v3324 = vmul.f32 %v2824, %v3322
  %v3325 = vadd.f32 %v3319, %v3323
  %v3326 = vadd.f32 %v3320, %v3324
  %s3327 = sld [smem:[#allocation3 + $0x1dd]]
  %v3328 = vstv %s3327
  %v3329 = vmul.f32 %v2831, %v3328
  %v3330 = vmul.f32 %v2832, %v3328
  %v3331 = vadd.f32 %v3325, %v3329
  %v3332 = vadd.f32 %v3326, %v3330
  %s3333 = sld [smem:[#allocation3 + $0x1de]]
  %v3334 = vstv %s3333
  %v3335 = vmul.f32 %v2839, %v3334
  %v3336 = vmul.f32 %v2840, %v3334
  %v3337 = vadd.f32 %v3331, %v3335
  %v3338 = vadd.f32 %v3332, %v3336
  %s3339 = sld [smem:[#allocation3 + $0x1df]]
  %v3340 = vstv %s3339
  %v3341 = vmul.f32 %v2847, %v3340
  %v3342 = vmul.f32 %v2848, %v3340
  %v3343 = vadd.f32 %v3337, %v3341
  %v3344 = vadd.f32 %v3338, %v3342
  %s3345 = sld [smem:[#allocation3 + $0x1e0]]
  %v3346 = vstv %s3345
  %v3347 = vmul.f32 %v2775, %v3346
  %v3348 = vmul.f32 %v2776, %v3346
  %s3349 = sld [smem:[#allocation4 + $0x30]]
  %v3350 = vstv %s3349
  %v3351 = vadd.f32 %v3347, %v3350
  %v3352 = vadd.f32 %v3348, %v3350
  %s3353 = sld [smem:[#allocation3 + $0x1e1]]
  %v3354 = vstv %s3353
  %v3355 = vmul.f32 %v2783, %v3354
  %v3356 = vmul.f32 %v2784, %v3354
  %v3357 = vadd.f32 %v3351, %v3355
  %v3358 = vadd.f32 %v3352, %v3356
  %s3359 = sld [smem:[#allocation3 + $0x1e2]]
  %v3360 = vstv %s3359
  %v3361 = vmul.f32 %v2791, %v3360
  %v3362 = vmul.f32 %v2792, %v3360
  %v3363 = vadd.f32 %v3357, %v3361
  %v3364 = vadd.f32 %v3358, %v3362
  %s3365 = sld [smem:[#allocation3 + $0x1e3]]
  %v3366 = vstv %s3365
  %v3367 = vmul.f32 %v2799, %v3366
  %v3368 = vmul.f32 %v2800, %v3366
  %v3369 = vadd.f32 %v3363, %v3367
  %v3370 = vadd.f32 %v3364, %v3368
  %s3371 = sld [smem:[#allocation3 + $0x1e4]]
  %v3372 = vstv %s3371
  %v3373 = vmul.f32 %v2807, %v3372
  %v3374 = vmul.f32 %v2808, %v3372
  %v3375 = vadd.f32 %v3369, %v3373
  %v3376 = vadd.f32 %v3370, %v3374
  %s3377 = sld [smem:[#allocation3 + $0x1e5]]
  %v3378 = vstv %s3377
  %v3379 = vmul.f32 %v2815, %v3378
  %v3380 = vmul.f32 %v2816, %v3378
  %v3381 = vadd.f32 %v3375, %v3379
  %v3382 = vadd.f32 %v3376, %v3380
  %s3383 = sld [smem:[#allocation3 + $0x1e6]]
  %v3384 = vstv %s3383
  %v3385 = vmul.f32 %v2823, %v3384
  %v3386 = vmul.f32 %v2824, %v3384
  %v3387 = vadd.f32 %v3381, %v3385
  %v3388 = vadd.f32 %v3382, %v3386
  %s3389 = sld [smem:[#allocation3 + $0x1e7]]
  %v3390 = vstv %s3389
  %v3391 = vmul.f32 %v2831, %v3390
  %v3392 = vmul.f32 %v2832, %v3390
  %v3393 = vadd.f32 %v3387, %v3391
  %v3394 = vadd.f32 %v3388, %v3392
  %s3395 = sld [smem:[#allocation3 + $0x1e8]]
  %v3396 = vstv %s3395
  %v3397 = vmul.f32 %v2839, %v3396
  %v3398 = vmul.f32 %v2840, %v3396
  %v3399 = vadd.f32 %v3393, %v3397
  %v3400 = vadd.f32 %v3394, %v3398
  %s3401 = sld [smem:[#allocation3 + $0x1e9]]
  %v3402 = vstv %s3401
  %v3403 = vmul.f32 %v2847, %v3402
  %v3404 = vmul.f32 %v2848, %v3402
  %v3405 = vadd.f32 %v3399, %v3403
  %v3406 = vadd.f32 %v3400, %v3404
  %s3407 = sld [smem:[#allocation3 + $0x1ea]]
  %v3408 = vstv %s3407
  %v3409 = vmul.f32 %v2775, %v3408
  %v3410 = vmul.f32 %v2776, %v3408
  %s3411 = sld [smem:[#allocation4 + $0x31]]
  %v3412 = vstv %s3411
  %v3413 = vadd.f32 %v3409, %v3412
  %v3414 = vadd.f32 %v3410, %v3412
  %s3415 = sld [smem:[#allocation3 + $0x1eb]]
  %v3416 = vstv %s3415
  %v3417 = vmul.f32 %v2783, %v3416
  %v3418 = vmul.f32 %v2784, %v3416
  %v3419 = vadd.f32 %v3413, %v3417
  %v3420 = vadd.f32 %v3414, %v3418
  %s3421 = sld [smem:[#allocation3 + $0x1ec]]
  %v3422 = vstv %s3421
  %v3423 = vmul.f32 %v2791, %v3422
  %v3424 = vmul.f32 %v2792, %v3422
  %v3425 = vadd.f32 %v3419, %v3423
  %v3426 = vadd.f32 %v3420, %v3424
  %s3427 = sld [smem:[#allocation3 + $0x1ed]]
  %v3428 = vstv %s3427
  %v3429 = vmul.f32 %v2799, %v3428
  %v3430 = vmul.f32 %v2800, %v3428
  %v3431 = vadd.f32 %v3425, %v3429
  %v3432 = vadd.f32 %v3426, %v3430
  %s3433 = sld [smem:[#allocation3 + $0x1ee]]
  %v3434 = vstv %s3433
  %v3435 = vmul.f32 %v2807, %v3434
  %v3436 = vmul.f32 %v2808, %v3434
  %v3437 = vadd.f32 %v3431, %v3435
  %v3438 = vadd.f32 %v3432, %v3436
  %s3439 = sld [smem:[#allocation3 + $0x1ef]]
  %v3440 = vstv %s3439
  %v3441 = vmul.f32 %v2815, %v3440
  %v3442 = vmul.f32 %v2816, %v3440
  %v3443 = vadd.f32 %v3437, %v3441
  %v3444 = vadd.f32 %v3438, %v3442
  %s3445 = sld [smem:[#allocation3 + $0x1f0]]
  %v3446 = vstv %s3445
  %v3447 = vmul.f32 %v2823, %v3446
  %v3448 = vmul.f32 %v2824, %v3446
  %v3449 = vadd.f32 %v3443, %v3447
  %v3450 = vadd.f32 %v3444, %v3448
  %s3451 = sld [smem:[#allocation3 + $0x1f1]]
  %v3452 = vstv %s3451
  %v3453 = vmul.f32 %v2831, %v3452
  %v3454 = vmul.f32 %v2832, %v3452
  %v3455 = vadd.f32 %v3449, %v3453
  %v3456 = vadd.f32 %v3450, %v3454
  %s3457 = sld [smem:[#allocation3 + $0x1f2]]
  %v3458 = vstv %s3457
  %v3459 = vmul.f32 %v2839, %v3458
  %v3460 = vmul.f32 %v2840, %v3458
  %v3461 = vadd.f32 %v3455, %v3459
  %v3462 = vadd.f32 %v3456, %v3460
  %s3463 = sld [smem:[#allocation3 + $0x1f3]]
  %v3464 = vstv %s3463
  %v3465 = vmul.f32 %v2847, %v3464
  %v3466 = vmul.f32 %v2848, %v3464
  %v3467 = vadd.f32 %v3461, %v3465
  %v3468 = vadd.f32 %v3462, %v3466
  %v3469 = vmul.f32 %v2909, 0.5
  %v3470 = vmul.f32 %v2910, 0.5
  %v3471 = vtanh.pop %v3469
  %v3472 = vtanh.pop %v3470
  %v3473 = vmul.f32 %v3471, 0.5
  %v3474 = vmul.f32 %v3472, 0.5
  %v3475 = vadd.f32 %v3473, 0.5
  %v3476 = vadd.f32 %v3474, 0.5
  %v3477 = vmul.f32 %v2971, 0.5
  %v3478 = vmul.f32 %v2972, 0.5
  %v3479 = vtanh.pop %v3477
  %v3480 = vtanh.pop %v3478
  %v3481 = vmul.f32 %v3479, 0.5
  %v3482 = vmul.f32 %v3480, 0.5
  %v3483 = vadd.f32 %v3481, 0.5
  %v3484 = vadd.f32 %v3482, 0.5
  %v3485 = vmul.f32 %v3033, 0.5
  %v3486 = vmul.f32 %v3034, 0.5
  %v3487 = vtanh.pop %v3485
  %v3488 = vtanh.pop %v3486
  %v3489 = vmul.f32 %v3487, 0.5
  %v3490 = vmul.f32 %v3488, 0.5
  %v3491 = vadd.f32 %v3489, 0.5
  %v3492 = vadd.f32 %v3490, 0.5
  %v3493 = vmul.f32 %v3095, 0.5
  %v3494 = vmul.f32 %v3096, 0.5
  %v3495 = vtanh.pop %v3493
  %v3496 = vtanh.pop %v3494
  %v3497 = vmul.f32 %v3495, 0.5
  %v3498 = vmul.f32 %v3496, 0.5
  %v3499 = vadd.f32 %v3497, 0.5
  %v3500 = vadd.f32 %v3498, 0.5
  %v3501 = vmul.f32 %v3157, 0.5
  %v3502 = vmul.f32 %v3158, 0.5
  %v3503 = vtanh.pop %v3501
  %v3504 = vtanh.pop %v3502
  %v3505 = vmul.f32 %v3503, 0.5
  %v3506 = vmul.f32 %v3504, 0.5
  %v3507 = vadd.f32 %v3505, 0.5
  %v3508 = vadd.f32 %v3506, 0.5
  %v3509 = vmul.f32 %v3219, 0.5
  %v3510 = vmul.f32 %v3220, 0.5
  %v3511 = vtanh.pop %v3509
  %v3512 = vtanh.pop %v3510
  %v3513 = vmul.f32 %v3511, 0.5
  %v3514 = vmul.f32 %v3512, 0.5
  %v3515 = vadd.f32 %v3513, 0.5
  %v3516 = vadd.f32 %v3514, 0.5
  %v3517 = vmul.f32 %v3281, 0.5
  %v3518 = vmul.f32 %v3282, 0.5
  %v3519 = vtanh.pop %v3517
  %v3520 = vtanh.pop %v3518
  %v3521 = vmul.f32 %v3519, 0.5
  %v3522 = vmul.f32 %v3520, 0.5
  %v3523 = vadd.f32 %v3521, 0.5
  %v3524 = vadd.f32 %v3522, 0.5
  %v3525 = vmul.f32 %v3343, 0.5
  %v3526 = vmul.f32 %v3344, 0.5
  %v3527 = vtanh.pop %v3525
  %v3528 = vtanh.pop %v3526
  %v3529 = vmul.f32 %v3527, 0.5
  %v3530 = vmul.f32 %v3528, 0.5
  %v3531 = vadd.f32 %v3529, 0.5
  %v3532 = vadd.f32 %v3530, 0.5
  %v3533 = vmul.f32 %v3405, 0.5
  %v3534 = vmul.f32 %v3406, 0.5
  %v3535 = vtanh.pop %v3533
  %v3536 = vtanh.pop %v3534
  %v3537 = vmul.f32 %v3535, 0.5
  %v3538 = vmul.f32 %v3536, 0.5
  %v3539 = vadd.f32 %v3537, 0.5
  %v3540 = vadd.f32 %v3538, 0.5
  %v3541 = vmul.f32 %v3467, 0.5
  %v3542 = vmul.f32 %v3468, 0.5
  %v3543 = vtanh.pop %v3541
  %v3544 = vtanh.pop %v3542
  %v3545 = vmul.f32 %v3543, 0.5
  %v3546 = vmul.f32 %v3544, 0.5
  %v3547 = vadd.f32 %v3545, 0.5
  %v3548 = vadd.f32 %v3546, 0.5
  %s3549 = sld [smem:[#allocation3 + $0x1f4]]
  %v3550 = vstv %s3549
  %v3551 = vmul.f32 %v3475, %v3550
  %v3552 = vmul.f32 %v3476, %v3550
  %s3553 = sld [smem:[#allocation4 + $0x32]]
  %v3554 = vstv %s3553
  %v3555 = vadd.f32 %v3551, %v3554
  %v3556 = vadd.f32 %v3552, %v3554
  %s3557 = sld [smem:[#allocation3 + $0x1f5]]
  %v3558 = vstv %s3557
  %v3559 = vmul.f32 %v3483, %v3558
  %v3560 = vmul.f32 %v3484, %v3558
  %v3561 = vadd.f32 %v3555, %v3559
  %v3562 = vadd.f32 %v3556, %v3560
  %s3563 = sld [smem:[#allocation3 + $0x1f6]]
  %v3564 = vstv %s3563
  %v3565 = vmul.f32 %v3491, %v3564
  %v3566 = vmul.f32 %v3492, %v3564
  %v3567 = vadd.f32 %v3561, %v3565
  %v3568 = vadd.f32 %v3562, %v3566
  %s3569 = sld [smem:[#allocation3 + $0x1f7]]
  %v3570 = vstv %s3569
  %v3571 = vmul.f32 %v3499, %v3570
  %v3572 = vmul.f32 %v3500, %v3570
  %v3573 = vadd.f32 %v3567, %v3571
  %v3574 = vadd.f32 %v3568, %v3572
  %s3575 = sld [smem:[#allocation3 + $0x1f8]]
  %v3576 = vstv %s3575
  %v3577 = vmul.f32 %v3507, %v3576
  %v3578 = vmul.f32 %v3508, %v3576
  %v3579 = vadd.f32 %v3573, %v3577
  %v3580 = vadd.f32 %v3574, %v3578
  %s3581 = sld [smem:[#allocation3 + $0x1f9]]
  %v3582 = vstv %s3581
  %v3583 = vmul.f32 %v3515, %v3582
  %v3584 = vmul.f32 %v3516, %v3582
  %v3585 = vadd.f32 %v3579, %v3583
  %v3586 = vadd.f32 %v3580, %v3584
  %s3587 = sld [smem:[#allocation3 + $0x1fa]]
  %v3588 = vstv %s3587
  %v3589 = vmul.f32 %v3523, %v3588
  %v3590 = vmul.f32 %v3524, %v3588
  %v3591 = vadd.f32 %v3585, %v3589
  %v3592 = vadd.f32 %v3586, %v3590
  %s3593 = sld [smem:[#allocation3 + $0x1fb]]
  %v3594 = vstv %s3593
  %v3595 = vmul.f32 %v3531, %v3594
  %v3596 = vmul.f32 %v3532, %v3594
  %v3597 = vadd.f32 %v3591, %v3595
  %v3598 = vadd.f32 %v3592, %v3596
  %s3599 = sld [smem:[#allocation3 + $0x1fc]]
  %v3600 = vstv %s3599
  %v3601 = vmul.f32 %v3539, %v3600
  %v3602 = vmul.f32 %v3540, %v3600
  %v3603 = vadd.f32 %v3597, %v3601
  %v3604 = vadd.f32 %v3598, %v3602
  %s3605 = sld [smem:[#allocation3 + $0x1fd]]
  %v3606 = vstv %s3605
  %v3607 = vmul.f32 %v3547, %v3606
  %v3608 = vmul.f32 %v3548, %v3606
  %v3609 = vadd.f32 %v3603, %v3607
  %v3610 = vadd.f32 %v3604, %v3608
  %s3611 = sld [smem:[#allocation3 + $0x1fe]]
  %v3612 = vstv %s3611
  %v3613 = vmul.f32 %v3475, %v3612
  %v3614 = vmul.f32 %v3476, %v3612
  %s3615 = sld [smem:[#allocation4 + $0x33]]
  %v3616 = vstv %s3615
  %v3617 = vadd.f32 %v3613, %v3616
  %v3618 = vadd.f32 %v3614, %v3616
  %s3619 = sld [smem:[#allocation3 + $0x1ff]]
  %v3620 = vstv %s3619
  %v3621 = vmul.f32 %v3483, %v3620
  %v3622 = vmul.f32 %v3484, %v3620
  %v3623 = vadd.f32 %v3617, %v3621
  %v3624 = vadd.f32 %v3618, %v3622
  %s3625 = sld [smem:[#allocation3 + $0x200]]
  %v3626 = vstv %s3625
  %v3627 = vmul.f32 %v3491, %v3626
  %v3628 = vmul.f32 %v3492, %v3626
  %v3629 = vadd.f32 %v3623, %v3627
  %v3630 = vadd.f32 %v3624, %v3628
  %s3631 = sld [smem:[#allocation3 + $0x201]]
  %v3632 = vstv %s3631
  %v3633 = vmul.f32 %v3499, %v3632
  %v3634 = vmul.f32 %v3500, %v3632
  %v3635 = vadd.f32 %v3629, %v3633
  %v3636 = vadd.f32 %v3630, %v3634
  %s3637 = sld [smem:[#allocation3 + $0x202]]
  %v3638 = vstv %s3637
  %v3639 = vmul.f32 %v3507, %v3638
  %v3640 = vmul.f32 %v3508, %v3638
  %v3641 = vadd.f32 %v3635, %v3639
  %v3642 = vadd.f32 %v3636, %v3640
  %s3643 = sld [smem:[#allocation3 + $0x203]]
  %v3644 = vstv %s3643
  %v3645 = vmul.f32 %v3515, %v3644
  %v3646 = vmul.f32 %v3516, %v3644
  %v3647 = vadd.f32 %v3641, %v3645
  %v3648 = vadd.f32 %v3642, %v3646
  %s3649 = sld [smem:[#allocation3 + $0x204]]
  %v3650 = vstv %s3649
  %v3651 = vmul.f32 %v3523, %v3650
  %v3652 = vmul.f32 %v3524, %v3650
  %v3653 = vadd.f32 %v3647, %v3651
  %v3654 = vadd.f32 %v3648, %v3652
  %s3655 = sld [smem:[#allocation3 + $0x205]]
  %v3656 = vstv %s3655
  %v3657 = vmul.f32 %v3531, %v3656
  %v3658 = vmul.f32 %v3532, %v3656
  %v3659 = vadd.f32 %v3653, %v3657
  %v3660 = vadd.f32 %v3654, %v3658
  %s3661 = sld [smem:[#allocation3 + $0x206]]
  %v3662 = vstv %s3661
  %v3663 = vmul.f32 %v3539, %v3662
  %v3664 = vmul.f32 %v3540, %v3662
  %v3665 = vadd.f32 %v3659, %v3663
  %v3666 = vadd.f32 %v3660, %v3664
  %s3667 = sld [smem:[#allocation3 + $0x207]]
  %v3668 = vstv %s3667
  %v3669 = vmul.f32 %v3547, %v3668
  %v3670 = vmul.f32 %v3548, %v3668
  %v3671 = vadd.f32 %v3665, %v3669
  %v3672 = vadd.f32 %v3666, %v3670
  %s3673 = sld [smem:[#allocation3 + $0x208]]
  %v3674 = vstv %s3673
  %v3675 = vmul.f32 %v3475, %v3674
  %v3676 = vmul.f32 %v3476, %v3674
  %s3677 = sld [smem:[#allocation4 + $0x34]]
  %v3678 = vstv %s3677
  %v3679 = vadd.f32 %v3675, %v3678
  %v3680 = vadd.f32 %v3676, %v3678
  %s3681 = sld [smem:[#allocation3 + $0x209]]
  %v3682 = vstv %s3681
  %v3683 = vmul.f32 %v3483, %v3682
  %v3684 = vmul.f32 %v3484, %v3682
  %v3685 = vadd.f32 %v3679, %v3683
  %v3686 = vadd.f32 %v3680, %v3684
  %s3687 = sld [smem:[#allocation3 + $0x20a]]
  %v3688 = vstv %s3687
  %v3689 = vmul.f32 %v3491, %v3688
  %v3690 = vmul.f32 %v3492, %v3688
  %v3691 = vadd.f32 %v3685, %v3689
  %v3692 = vadd.f32 %v3686, %v3690
  %s3693 = sld [smem:[#allocation3 + $0x20b]]
  %v3694 = vstv %s3693
  %v3695 = vmul.f32 %v3499, %v3694
  %v3696 = vmul.f32 %v3500, %v3694
  %v3697 = vadd.f32 %v3691, %v3695
  %v3698 = vadd.f32 %v3692, %v3696
  %s3699 = sld [smem:[#allocation3 + $0x20c]]
  %v3700 = vstv %s3699
  %v3701 = vmul.f32 %v3507, %v3700
  %v3702 = vmul.f32 %v3508, %v3700
  %v3703 = vadd.f32 %v3697, %v3701
  %v3704 = vadd.f32 %v3698, %v3702
  %s3705 = sld [smem:[#allocation3 + $0x20d]]
  %v3706 = vstv %s3705
  %v3707 = vmul.f32 %v3515, %v3706
  %v3708 = vmul.f32 %v3516, %v3706
  %v3709 = vadd.f32 %v3703, %v3707
  %v3710 = vadd.f32 %v3704, %v3708
  %s3711 = sld [smem:[#allocation3 + $0x20e]]
  %v3712 = vstv %s3711
  %v3713 = vmul.f32 %v3523, %v3712
  %v3714 = vmul.f32 %v3524, %v3712
  %v3715 = vadd.f32 %v3709, %v3713
  %v3716 = vadd.f32 %v3710, %v3714
  %s3717 = sld [smem:[#allocation3 + $0x20f]]
  %v3718 = vstv %s3717
  %v3719 = vmul.f32 %v3531, %v3718
  %v3720 = vmul.f32 %v3532, %v3718
  %v3721 = vadd.f32 %v3715, %v3719
  %v3722 = vadd.f32 %v3716, %v3720
  %s3723 = sld [smem:[#allocation3 + $0x210]]
  %v3724 = vstv %s3723
  %v3725 = vmul.f32 %v3539, %v3724
  %v3726 = vmul.f32 %v3540, %v3724
  %v3727 = vadd.f32 %v3721, %v3725
  %v3728 = vadd.f32 %v3722, %v3726
  %s3729 = sld [smem:[#allocation3 + $0x211]]
  %v3730 = vstv %s3729
  %v3731 = vmul.f32 %v3547, %v3730
  %v3732 = vmul.f32 %v3548, %v3730
  %v3733 = vadd.f32 %v3727, %v3731
  %v3734 = vadd.f32 %v3728, %v3732
  %s3735 = sld [smem:[#allocation3 + $0x212]]
  %v3736 = vstv %s3735
  %v3737 = vmul.f32 %v3475, %v3736
  %v3738 = vmul.f32 %v3476, %v3736
  %s3739 = sld [smem:[#allocation4 + $0x35]]
  %v3740 = vstv %s3739
  %v3741 = vadd.f32 %v3737, %v3740
  %v3742 = vadd.f32 %v3738, %v3740
  %s3743 = sld [smem:[#allocation3 + $0x213]]
  %v3744 = vstv %s3743
  %v3745 = vmul.f32 %v3483, %v3744
  %v3746 = vmul.f32 %v3484, %v3744
  %v3747 = vadd.f32 %v3741, %v3745
  %v3748 = vadd.f32 %v3742, %v3746
  %s3749 = sld [smem:[#allocation3 + $0x214]]
  %v3750 = vstv %s3749
  %v3751 = vmul.f32 %v3491, %v3750
  %v3752 = vmul.f32 %v3492, %v3750
  %v3753 = vadd.f32 %v3747, %v3751
  %v3754 = vadd.f32 %v3748, %v3752
  %s3755 = sld [smem:[#allocation3 + $0x215]]
  %v3756 = vstv %s3755
  %v3757 = vmul.f32 %v3499, %v3756
  %v3758 = vmul.f32 %v3500, %v3756
  %v3759 = vadd.f32 %v3753, %v3757
  %v3760 = vadd.f32 %v3754, %v3758
  %s3761 = sld [smem:[#allocation3 + $0x216]]
  %v3762 = vstv %s3761
  %v3763 = vmul.f32 %v3507, %v3762
  %v3764 = vmul.f32 %v3508, %v3762
  %v3765 = vadd.f32 %v3759, %v3763
  %v3766 = vadd.f32 %v3760, %v3764
  %s3767 = sld [smem:[#allocation3 + $0x217]]
  %v3768 = vstv %s3767
  %v3769 = vmul.f32 %v3515, %v3768
  %v3770 = vmul.f32 %v3516, %v3768
  %v3771 = vadd.f32 %v3765, %v3769
  %v3772 = vadd.f32 %v3766, %v3770
  %s3773 = sld [smem:[#allocation3 + $0x218]]
  %v3774 = vstv %s3773
  %v3775 = vmul.f32 %v3523, %v3774
  %v3776 = vmul.f32 %v3524, %v3774
  %v3777 = vadd.f32 %v3771, %v3775
  %v3778 = vadd.f32 %v3772, %v3776
  %s3779 = sld [smem:[#allocation3 + $0x219]]
  %v3780 = vstv %s3779
  %v3781 = vmul.f32 %v3531, %v3780
  %v3782 = vmul.f32 %v3532, %v3780
  %v3783 = vadd.f32 %v3777, %v3781
  %v3784 = vadd.f32 %v3778, %v3782
  %s3785 = sld [smem:[#allocation3 + $0x21a]]
  %v3786 = vstv %s3785
  %v3787 = vmul.f32 %v3539, %v3786
  %v3788 = vmul.f32 %v3540, %v3786
  %v3789 = vadd.f32 %v3783, %v3787
  %v3790 = vadd.f32 %v3784, %v3788
  %s3791 = sld [smem:[#allocation3 + $0x21b]]
  %v3792 = vstv %s3791
  %v3793 = vmul.f32 %v3547, %v3792
  %v3794 = vmul.f32 %v3548, %v3792
  %v3795 = vadd.f32 %v3789, %v3793
  %v3796 = vadd.f32 %v3790, %v3794
  %s3797 = sld [smem:[#allocation3 + $0x21c]]
  %v3798 = vstv %s3797
  %v3799 = vmul.f32 %v3475, %v3798
  %v3800 = vmul.f32 %v3476, %v3798
  %s3801 = sld [smem:[#allocation4 + $0x36]]
  %v3802 = vstv %s3801
  %v3803 = vadd.f32 %v3799, %v3802
  %v3804 = vadd.f32 %v3800, %v3802
  %s3805 = sld [smem:[#allocation3 + $0x21d]]
  %v3806 = vstv %s3805
  %v3807 = vmul.f32 %v3483, %v3806
  %v3808 = vmul.f32 %v3484, %v3806
  %v3809 = vadd.f32 %v3803, %v3807
  %v3810 = vadd.f32 %v3804, %v3808
  %s3811 = sld [smem:[#allocation3 + $0x21e]]
  %v3812 = vstv %s3811
  %v3813 = vmul.f32 %v3491, %v3812
  %v3814 = vmul.f32 %v3492, %v3812
  %v3815 = vadd.f32 %v3809, %v3813
  %v3816 = vadd.f32 %v3810, %v3814
  %s3817 = sld [smem:[#allocation3 + $0x21f]]
  %v3818 = vstv %s3817
  %v3819 = vmul.f32 %v3499, %v3818
  %v3820 = vmul.f32 %v3500, %v3818
  %v3821 = vadd.f32 %v3815, %v3819
  %v3822 = vadd.f32 %v3816, %v3820
  %s3823 = sld [smem:[#allocation3 + $0x220]]
  %v3824 = vstv %s3823
  %v3825 = vmul.f32 %v3507, %v3824
  %v3826 = vmul.f32 %v3508, %v3824
  %v3827 = vadd.f32 %v3821, %v3825
  %v3828 = vadd.f32 %v3822, %v3826
  %s3829 = sld [smem:[#allocation3 + $0x221]]
  %v3830 = vstv %s3829
  %v3831 = vmul.f32 %v3515, %v3830
  %v3832 = vmul.f32 %v3516, %v3830
  %v3833 = vadd.f32 %v3827, %v3831
  %v3834 = vadd.f32 %v3828, %v3832
  %s3835 = sld [smem:[#allocation3 + $0x222]]
  %v3836 = vstv %s3835
  %v3837 = vmul.f32 %v3523, %v3836
  %v3838 = vmul.f32 %v3524, %v3836
  %v3839 = vadd.f32 %v3833, %v3837
  %v3840 = vadd.f32 %v3834, %v3838
  %s3841 = sld [smem:[#allocation3 + $0x223]]
  %v3842 = vstv %s3841
  %v3843 = vmul.f32 %v3531, %v3842
  %v3844 = vmul.f32 %v3532, %v3842
  %v3845 = vadd.f32 %v3839, %v3843
  %v3846 = vadd.f32 %v3840, %v3844
  %s3847 = sld [smem:[#allocation3 + $0x224]]
  %v3848 = vstv %s3847
  %v3849 = vmul.f32 %v3539, %v3848
  %v3850 = vmul.f32 %v3540, %v3848
  %v3851 = vadd.f32 %v3845, %v3849
  %v3852 = vadd.f32 %v3846, %v3850
  %s3853 = sld [smem:[#allocation3 + $0x225]]
  %v3854 = vstv %s3853
  %v3855 = vmul.f32 %v3547, %v3854
  %v3856 = vmul.f32 %v3548, %v3854
  %v3857 = vadd.f32 %v3851, %v3855
  %v3858 = vadd.f32 %v3852, %v3856
  %s3859 = sld [smem:[#allocation3 + $0x226]]
  %v3860 = vstv %s3859
  %v3861 = vmul.f32 %v3475, %v3860
  %v3862 = vmul.f32 %v3476, %v3860
  %s3863 = sld [smem:[#allocation4 + $0x37]]
  %v3864 = vstv %s3863
  %v3865 = vadd.f32 %v3861, %v3864
  %v3866 = vadd.f32 %v3862, %v3864
  %s3867 = sld [smem:[#allocation3 + $0x227]]
  %v3868 = vstv %s3867
  %v3869 = vmul.f32 %v3483, %v3868
  %v3870 = vmul.f32 %v3484, %v3868
  %v3871 = vadd.f32 %v3865, %v3869
  %v3872 = vadd.f32 %v3866, %v3870
  %s3873 = sld [smem:[#allocation3 + $0x228]]
  %v3874 = vstv %s3873
  %v3875 = vmul.f32 %v3491, %v3874
  %v3876 = vmul.f32 %v3492, %v3874
  %v3877 = vadd.f32 %v3871, %v3875
  %v3878 = vadd.f32 %v3872, %v3876
  %s3879 = sld [smem:[#allocation3 + $0x229]]
  %v3880 = vstv %s3879
  %v3881 = vmul.f32 %v3499, %v3880
  %v3882 = vmul.f32 %v3500, %v3880
  %v3883 = vadd.f32 %v3877, %v3881
  %v3884 = vadd.f32 %v3878, %v3882
  %s3885 = sld [smem:[#allocation3 + $0x22a]]
  %v3886 = vstv %s3885
  %v3887 = vmul.f32 %v3507, %v3886
  %v3888 = vmul.f32 %v3508, %v3886
  %v3889 = vadd.f32 %v3883, %v3887
  %v3890 = vadd.f32 %v3884, %v3888
  %s3891 = sld [smem:[#allocation3 + $0x22b]]
  %v3892 = vstv %s3891
  %v3893 = vmul.f32 %v3515, %v3892
  %v3894 = vmul.f32 %v3516, %v3892
  %v3895 = vadd.f32 %v3889, %v3893
  %v3896 = vadd.f32 %v3890, %v3894
  %s3897 = sld [smem:[#allocation3 + $0x22c]]
  %v3898 = vstv %s3897
  %v3899 = vmul.f32 %v3523, %v3898
  %v3900 = vmul.f32 %v3524, %v3898
  %v3901 = vadd.f32 %v3895, %v3899
  %v3902 = vadd.f32 %v3896, %v3900
  %s3903 = sld [smem:[#allocation3 + $0x22d]]
  %v3904 = vstv %s3903
  %v3905 = vmul.f32 %v3531, %v3904
  %v3906 = vmul.f32 %v3532, %v3904
  %v3907 = vadd.f32 %v3901, %v3905
  %v3908 = vadd.f32 %v3902, %v3906
  %s3909 = sld [smem:[#allocation3 + $0x22e]]
  %v3910 = vstv %s3909
  %v3911 = vmul.f32 %v3539, %v3910
  %v3912 = vmul.f32 %v3540, %v3910
  %v3913 = vadd.f32 %v3907, %v3911
  %v3914 = vadd.f32 %v3908, %v3912
  %s3915 = sld [smem:[#allocation3 + $0x22f]]
  %v3916 = vstv %s3915
  %v3917 = vmul.f32 %v3547, %v3916
  %v3918 = vmul.f32 %v3548, %v3916
  %v3919 = vadd.f32 %v3913, %v3917
  %v3920 = vadd.f32 %v3914, %v3918
  %s3921 = sld [smem:[#allocation3 + $0x230]]
  %v3922 = vstv %s3921
  %v3923 = vmul.f32 %v3475, %v3922
  %v3924 = vmul.f32 %v3476, %v3922
  %s3925 = sld [smem:[#allocation4 + $0x38]]
  %v3926 = vstv %s3925
  %v3927 = vadd.f32 %v3923, %v3926
  %v3928 = vadd.f32 %v3924, %v3926
  %s3929 = sld [smem:[#allocation3 + $0x231]]
  %v3930 = vstv %s3929
  %v3931 = vmul.f32 %v3483, %v3930
  %v3932 = vmul.f32 %v3484, %v3930
  %v3933 = vadd.f32 %v3927, %v3931
  %v3934 = vadd.f32 %v3928, %v3932
  %s3935 = sld [smem:[#allocation3 + $0x232]]
  %v3936 = vstv %s3935
  %v3937 = vmul.f32 %v3491, %v3936
  %v3938 = vmul.f32 %v3492, %v3936
  %v3939 = vadd.f32 %v3933, %v3937
  %v3940 = vadd.f32 %v3934, %v3938
  %s3941 = sld [smem:[#allocation3 + $0x233]]
  %v3942 = vstv %s3941
  %v3943 = vmul.f32 %v3499, %v3942
  %v3944 = vmul.f32 %v3500, %v3942
  %v3945 = vadd.f32 %v3939, %v3943
  %v3946 = vadd.f32 %v3940, %v3944
  %s3947 = sld [smem:[#allocation3 + $0x234]]
  %v3948 = vstv %s3947
  %v3949 = vmul.f32 %v3507, %v3948
  %v3950 = vmul.f32 %v3508, %v3948
  %v3951 = vadd.f32 %v3945, %v3949
  %v3952 = vadd.f32 %v3946, %v3950
  %s3953 = sld [smem:[#allocation3 + $0x235]]
  %v3954 = vstv %s3953
  %v3955 = vmul.f32 %v3515, %v3954
  %v3956 = vmul.f32 %v3516, %v3954
  %v3957 = vadd.f32 %v3951, %v3955
  %v3958 = vadd.f32 %v3952, %v3956
  %s3959 = sld [smem:[#allocation3 + $0x236]]
  %v3960 = vstv %s3959
  %v3961 = vmul.f32 %v3523, %v3960
  %v3962 = vmul.f32 %v3524, %v3960
  %v3963 = vadd.f32 %v3957, %v3961
  %v3964 = vadd.f32 %v3958, %v3962
  %s3965 = sld [smem:[#allocation3 + $0x237]]
  %v3966 = vstv %s3965
  %v3967 = vmul.f32 %v3531, %v3966
  %v3968 = vmul.f32 %v3532, %v3966
  %v3969 = vadd.f32 %v3963, %v3967
  %v3970 = vadd.f32 %v3964, %v3968
  %s3971 = sld [smem:[#allocation3 + $0x238]]
  %v3972 = vstv %s3971
  %v3973 = vmul.f32 %v3539, %v3972
  %v3974 = vmul.f32 %v3540, %v3972
  %v3975 = vadd.f32 %v3969, %v3973
  %v3976 = vadd.f32 %v3970, %v3974
  %s3977 = sld [smem:[#allocation3 + $0x239]]
  %v3978 = vstv %s3977
  %v3979 = vmul.f32 %v3547, %v3978
  %v3980 = vmul.f32 %v3548, %v3978
  %v3981 = vadd.f32 %v3975, %v3979
  %v3982 = vadd.f32 %v3976, %v3980
  %s3983 = sld [smem:[#allocation3 + $0x23a]]
  %v3984 = vstv %s3983
  %v3985 = vmul.f32 %v3475, %v3984
  %v3986 = vmul.f32 %v3476, %v3984
  %s3987 = sld [smem:[#allocation4 + $0x39]]
  %v3988 = vstv %s3987
  %v3989 = vadd.f32 %v3985, %v3988
  %v3990 = vadd.f32 %v3986, %v3988
  %s3991 = sld [smem:[#allocation3 + $0x23b]]
  %v3992 = vstv %s3991
  %v3993 = vmul.f32 %v3483, %v3992
  %v3994 = vmul.f32 %v3484, %v3992
  %v3995 = vadd.f32 %v3989, %v3993
  %v3996 = vadd.f32 %v3990, %v3994
  %s3997 = sld [smem:[#allocation3 + $0x23c]]
  %v3998 = vstv %s3997
  %v3999 = vmul.f32 %v3491, %v3998
  %v4000 = vmul.f32 %v3492, %v3998
  %v4001 = vadd.f32 %v3995, %v3999
  %v4002 = vadd.f32 %v3996, %v4000
  %s4003 = sld [smem:[#allocation3 + $0x23d]]
  %v4004 = vstv %s4003
  %v4005 = vmul.f32 %v3499, %v4004
  %v4006 = vmul.f32 %v3500, %v4004
  %v4007 = vadd.f32 %v4001, %v4005
  %v4008 = vadd.f32 %v4002, %v4006
  %s4009 = sld [smem:[#allocation3 + $0x23e]]
  %v4010 = vstv %s4009
  %v4011 = vmul.f32 %v3507, %v4010
  %v4012 = vmul.f32 %v3508, %v4010
  %v4013 = vadd.f32 %v4007, %v4011
  %v4014 = vadd.f32 %v4008, %v4012
  %s4015 = sld [smem:[#allocation3 + $0x23f]]
  %v4016 = vstv %s4015
  %v4017 = vmul.f32 %v3515, %v4016
  %v4018 = vmul.f32 %v3516, %v4016
  %v4019 = vadd.f32 %v4013, %v4017
  %v4020 = vadd.f32 %v4014, %v4018
  %s4021 = sld [smem:[#allocation3 + $0x240]]
  %v4022 = vstv %s4021
  %v4023 = vmul.f32 %v3523, %v4022
  %v4024 = vmul.f32 %v3524, %v4022
  %v4025 = vadd.f32 %v4019, %v4023
  %v4026 = vadd.f32 %v4020, %v4024
  %s4027 = sld [smem:[#allocation3 + $0x241]]
  %v4028 = vstv %s4027
  %v4029 = vmul.f32 %v3531, %v4028
  %v4030 = vmul.f32 %v3532, %v4028
  %v4031 = vadd.f32 %v4025, %v4029
  %v4032 = vadd.f32 %v4026, %v4030
  %s4033 = sld [smem:[#allocation3 + $0x242]]
  %v4034 = vstv %s4033
  %v4035 = vmul.f32 %v3539, %v4034
  %v4036 = vmul.f32 %v3540, %v4034
  %v4037 = vadd.f32 %v4031, %v4035
  %v4038 = vadd.f32 %v4032, %v4036
  %s4039 = sld [smem:[#allocation3 + $0x243]]
  %v4040 = vstv %s4039
  %v4041 = vmul.f32 %v3547, %v4040
  %v4042 = vmul.f32 %v3548, %v4040
  %v4043 = vadd.f32 %v4037, %v4041
  %v4044 = vadd.f32 %v4038, %v4042
  %s4045 = sld [smem:[#allocation3 + $0x244]]
  %v4046 = vstv %s4045
  %v4047 = vmul.f32 %v3475, %v4046
  %v4048 = vmul.f32 %v3476, %v4046
  %s4049 = sld [smem:[#allocation4 + $0x3a]]
  %v4050 = vstv %s4049
  %v4051 = vadd.f32 %v4047, %v4050
  %v4052 = vadd.f32 %v4048, %v4050
  %s4053 = sld [smem:[#allocation3 + $0x245]]
  %v4054 = vstv %s4053
  %v4055 = vmul.f32 %v3483, %v4054
  %v4056 = vmul.f32 %v3484, %v4054
  %v4057 = vadd.f32 %v4051, %v4055
  %v4058 = vadd.f32 %v4052, %v4056
  %s4059 = sld [smem:[#allocation3 + $0x246]]
  %v4060 = vstv %s4059
  %v4061 = vmul.f32 %v3491, %v4060
  %v4062 = vmul.f32 %v3492, %v4060
  %v4063 = vadd.f32 %v4057, %v4061
  %v4064 = vadd.f32 %v4058, %v4062
  %s4065 = sld [smem:[#allocation3 + $0x247]]
  %v4066 = vstv %s4065
  %v4067 = vmul.f32 %v3499, %v4066
  %v4068 = vmul.f32 %v3500, %v4066
  %v4069 = vadd.f32 %v4063, %v4067
  %v4070 = vadd.f32 %v4064, %v4068
  %s4071 = sld [smem:[#allocation3 + $0x248]]
  %v4072 = vstv %s4071
  %v4073 = vmul.f32 %v3507, %v4072
  %v4074 = vmul.f32 %v3508, %v4072
  %v4075 = vadd.f32 %v4069, %v4073
  %v4076 = vadd.f32 %v4070, %v4074
  %s4077 = sld [smem:[#allocation3 + $0x249]]
  %v4078 = vstv %s4077
  %v4079 = vmul.f32 %v3515, %v4078
  %v4080 = vmul.f32 %v3516, %v4078
  %v4081 = vadd.f32 %v4075, %v4079
  %v4082 = vadd.f32 %v4076, %v4080
  %s4083 = sld [smem:[#allocation3 + $0x24a]]
  %v4084 = vstv %s4083
  %v4085 = vmul.f32 %v3523, %v4084
  %v4086 = vmul.f32 %v3524, %v4084
  %v4087 = vadd.f32 %v4081, %v4085
  %v4088 = vadd.f32 %v4082, %v4086
  %s4089 = sld [smem:[#allocation3 + $0x24b]]
  %v4090 = vstv %s4089
  %v4091 = vmul.f32 %v3531, %v4090
  %v4092 = vmul.f32 %v3532, %v4090
  %v4093 = vadd.f32 %v4087, %v4091
  %v4094 = vadd.f32 %v4088, %v4092
  %s4095 = sld [smem:[#allocation3 + $0x24c]]
  %v4096 = vstv %s4095
  %v4097 = vmul.f32 %v3539, %v4096
  %v4098 = vmul.f32 %v3540, %v4096
  %v4099 = vadd.f32 %v4093, %v4097
  %v4100 = vadd.f32 %v4094, %v4098
  %s4101 = sld [smem:[#allocation3 + $0x24d]]
  %v4102 = vstv %s4101
  %v4103 = vmul.f32 %v3547, %v4102
  %v4104 = vmul.f32 %v3548, %v4102
  %v4105 = vadd.f32 %v4099, %v4103
  %v4106 = vadd.f32 %v4100, %v4104
  %s4107 = sld [smem:[#allocation3 + $0x24e]]
  %v4108 = vstv %s4107
  %v4109 = vmul.f32 %v3475, %v4108
  %v4110 = vmul.f32 %v3476, %v4108
  %s4111 = sld [smem:[#allocation4 + $0x3b]]
  %v4112 = vstv %s4111
  %v4113 = vadd.f32 %v4109, %v4112
  %v4114 = vadd.f32 %v4110, %v4112
  %s4115 = sld [smem:[#allocation3 + $0x24f]]
  %v4116 = vstv %s4115
  %v4117 = vmul.f32 %v3483, %v4116
  %v4118 = vmul.f32 %v3484, %v4116
  %v4119 = vadd.f32 %v4113, %v4117
  %v4120 = vadd.f32 %v4114, %v4118
  %s4121 = sld [smem:[#allocation3 + $0x250]]
  %v4122 = vstv %s4121
  %v4123 = vmul.f32 %v3491, %v4122
  %v4124 = vmul.f32 %v3492, %v4122
  %v4125 = vadd.f32 %v4119, %v4123
  %v4126 = vadd.f32 %v4120, %v4124
  %s4127 = sld [smem:[#allocation3 + $0x251]]
  %v4128 = vstv %s4127
  %v4129 = vmul.f32 %v3499, %v4128
  %v4130 = vmul.f32 %v3500, %v4128
  %v4131 = vadd.f32 %v4125, %v4129
  %v4132 = vadd.f32 %v4126, %v4130
  %s4133 = sld [smem:[#allocation3 + $0x252]]
  %v4134 = vstv %s4133
  %v4135 = vmul.f32 %v3507, %v4134
  %v4136 = vmul.f32 %v3508, %v4134
  %v4137 = vadd.f32 %v4131, %v4135
  %v4138 = vadd.f32 %v4132, %v4136
  %s4139 = sld [smem:[#allocation3 + $0x253]]
  %v4140 = vstv %s4139
  %v4141 = vmul.f32 %v3515, %v4140
  %v4142 = vmul.f32 %v3516, %v4140
  %v4143 = vadd.f32 %v4137, %v4141
  %v4144 = vadd.f32 %v4138, %v4142
  %s4145 = sld [smem:[#allocation3 + $0x254]]
  %v4146 = vstv %s4145
  %v4147 = vmul.f32 %v3523, %v4146
  %v4148 = vmul.f32 %v3524, %v4146
  %v4149 = vadd.f32 %v4143, %v4147
  %v4150 = vadd.f32 %v4144, %v4148
  %s4151 = sld [smem:[#allocation3 + $0x255]]
  %v4152 = vstv %s4151
  %v4153 = vmul.f32 %v3531, %v4152
  %v4154 = vmul.f32 %v3532, %v4152
  %v4155 = vadd.f32 %v4149, %v4153
  %v4156 = vadd.f32 %v4150, %v4154
  %s4157 = sld [smem:[#allocation3 + $0x256]]
  %v4158 = vstv %s4157
  %v4159 = vmul.f32 %v3539, %v4158
  %v4160 = vmul.f32 %v3540, %v4158
  %v4161 = vadd.f32 %v4155, %v4159
  %v4162 = vadd.f32 %v4156, %v4160
  %s4163 = sld [smem:[#allocation3 + $0x257]]
  %v4164 = vstv %s4163
  %v4165 = vmul.f32 %v3547, %v4164
  %v4166 = vmul.f32 %v3548, %v4164
  %v4167 = vadd.f32 %v4161, %v4165
  %v4168 = vadd.f32 %v4162, %v4166
  %v4169 = vmul.f32 %v3609, 0.5
  %v4170 = vmul.f32 %v3610, 0.5
  %v4171 = vtanh.pop %v4169
  %v4172 = vtanh.pop %v4170
  %v4173 = vmul.f32 %v4171, 0.5
  %v4174 = vmul.f32 %v4172, 0.5
  %v4175 = vadd.f32 %v4173, 0.5
  %v4176 = vadd.f32 %v4174, 0.5
  %v4177 = vmul.f32 %v3671, 0.5
  %v4178 = vmul.f32 %v3672, 0.5
  %v4179 = vtanh.pop %v4177
  %v4180 = vtanh.pop %v4178
  %v4181 = vmul.f32 %v4179, 0.5
  %v4182 = vmul.f32 %v4180, 0.5
  %v4183 = vadd.f32 %v4181, 0.5
  %v4184 = vadd.f32 %v4182, 0.5
  %v4185 = vmul.f32 %v3733, 0.5
  %v4186 = vmul.f32 %v3734, 0.5
  %v4187 = vtanh.pop %v4185
  %v4188 = vtanh.pop %v4186
  %v4189 = vmul.f32 %v4187, 0.5
  %v4190 = vmul.f32 %v4188, 0.5
  %v4191 = vadd.f32 %v4189, 0.5
  %v4192 = vadd.f32 %v4190, 0.5
  %v4193 = vmul.f32 %v3795, 0.5
  %v4194 = vmul.f32 %v3796, 0.5
  %v4195 = vtanh.pop %v4193
  %v4196 = vtanh.pop %v4194
  %v4197 = vmul.f32 %v4195, 0.5
  %v4198 = vmul.f32 %v4196, 0.5
  %v4199 = vadd.f32 %v4197, 0.5
  %v4200 = vadd.f32 %v4198, 0.5
  %v4201 = vmul.f32 %v3857, 0.5
  %v4202 = vmul.f32 %v3858, 0.5
  %v4203 = vtanh.pop %v4201
  %v4204 = vtanh.pop %v4202
  %v4205 = vmul.f32 %v4203, 0.5
  %v4206 = vmul.f32 %v4204, 0.5
  %v4207 = vadd.f32 %v4205, 0.5
  %v4208 = vadd.f32 %v4206, 0.5
  %v4209 = vmul.f32 %v3919, 0.5
  %v4210 = vmul.f32 %v3920, 0.5
  %v4211 = vtanh.pop %v4209
  %v4212 = vtanh.pop %v4210
  %v4213 = vmul.f32 %v4211, 0.5
  %v4214 = vmul.f32 %v4212, 0.5
  %v4215 = vadd.f32 %v4213, 0.5
  %v4216 = vadd.f32 %v4214, 0.5
  %v4217 = vmul.f32 %v3981, 0.5
  %v4218 = vmul.f32 %v3982, 0.5
  %v4219 = vtanh.pop %v4217
  %v4220 = vtanh.pop %v4218
  %v4221 = vmul.f32 %v4219, 0.5
  %v4222 = vmul.f32 %v4220, 0.5
  %v4223 = vadd.f32 %v4221, 0.5
  %v4224 = vadd.f32 %v4222, 0.5
  %v4225 = vmul.f32 %v4043, 0.5
  %v4226 = vmul.f32 %v4044, 0.5
  %v4227 = vtanh.pop %v4225
  %v4228 = vtanh.pop %v4226
  %v4229 = vmul.f32 %v4227, 0.5
  %v4230 = vmul.f32 %v4228, 0.5
  %v4231 = vadd.f32 %v4229, 0.5
  %v4232 = vadd.f32 %v4230, 0.5
  %v4233 = vmul.f32 %v4105, 0.5
  %v4234 = vmul.f32 %v4106, 0.5
  %v4235 = vtanh.pop %v4233
  %v4236 = vtanh.pop %v4234
  %v4237 = vmul.f32 %v4235, 0.5
  %v4238 = vmul.f32 %v4236, 0.5
  %v4239 = vadd.f32 %v4237, 0.5
  %v4240 = vadd.f32 %v4238, 0.5
  %v4241 = vmul.f32 %v4167, 0.5
  %v4242 = vmul.f32 %v4168, 0.5
  %v4243 = vtanh.pop %v4241
  %v4244 = vtanh.pop %v4242
  %v4245 = vmul.f32 %v4243, 0.5
  %v4246 = vmul.f32 %v4244, 0.5
  %v4247 = vadd.f32 %v4245, 0.5
  %v4248 = vadd.f32 %v4246, 0.5
  %s4249 = sld [smem:[#allocation3 + $0x258]]
  %v4250 = vstv %s4249
  %v4251 = vmul.f32 %v4175, %v4250
  %v4252 = vmul.f32 %v4176, %v4250
  %s4253 = sld [smem:[#allocation4 + $0x3c]]
  %v4254 = vstv %s4253
  %v4255 = vadd.f32 %v4251, %v4254
  %v4256 = vadd.f32 %v4252, %v4254
  %s4257 = sld [smem:[#allocation3 + $0x259]]
  %v4258 = vstv %s4257
  %v4259 = vmul.f32 %v4183, %v4258
  %v4260 = vmul.f32 %v4184, %v4258
  %v4261 = vadd.f32 %v4255, %v4259
  %v4262 = vadd.f32 %v4256, %v4260
  %s4263 = sld [smem:[#allocation3 + $0x25a]]
  %v4264 = vstv %s4263
  %v4265 = vmul.f32 %v4191, %v4264
  %v4266 = vmul.f32 %v4192, %v4264
  %v4267 = vadd.f32 %v4261, %v4265
  %v4268 = vadd.f32 %v4262, %v4266
  %s4269 = sld [smem:[#allocation3 + $0x25b]]
  %v4270 = vstv %s4269
  %v4271 = vmul.f32 %v4199, %v4270
  %v4272 = vmul.f32 %v4200, %v4270
  %v4273 = vadd.f32 %v4267, %v4271
  %v4274 = vadd.f32 %v4268, %v4272
  %s4275 = sld [smem:[#allocation3 + $0x25c]]
  %v4276 = vstv %s4275
  %v4277 = vmul.f32 %v4207, %v4276
  %v4278 = vmul.f32 %v4208, %v4276
  %v4279 = vadd.f32 %v4273, %v4277
  %v4280 = vadd.f32 %v4274, %v4278
  %s4281 = sld [smem:[#allocation3 + $0x25d]]
  %v4282 = vstv %s4281
  %v4283 = vmul.f32 %v4215, %v4282
  %v4284 = vmul.f32 %v4216, %v4282
  %v4285 = vadd.f32 %v4279, %v4283
  %v4286 = vadd.f32 %v4280, %v4284
  %s4287 = sld [smem:[#allocation3 + $0x25e]]
  %v4288 = vstv %s4287
  %v4289 = vmul.f32 %v4223, %v4288
  %v4290 = vmul.f32 %v4224, %v4288
  %v4291 = vadd.f32 %v4285, %v4289
  %v4292 = vadd.f32 %v4286, %v4290
  %s4293 = sld [smem:[#allocation3 + $0x25f]]
  %v4294 = vstv %s4293
  %v4295 = vmul.f32 %v4231, %v4294
  %v4296 = vmul.f32 %v4232, %v4294
  %v4297 = vadd.f32 %v4291, %v4295
  %v4298 = vadd.f32 %v4292, %v4296
  %s4299 = sld [smem:[#allocation3 + $0x260]]
  %v4300 = vstv %s4299
  %v4301 = vmul.f32 %v4239, %v4300
  %v4302 = vmul.f32 %v4240, %v4300
  %v4303 = vadd.f32 %v4297, %v4301
  %v4304 = vadd.f32 %v4298, %v4302
  %s4305 = sld [smem:[#allocation3 + $0x261]]
  %v4306 = vstv %s4305
  %v4307 = vmul.f32 %v4247, %v4306
  %v4308 = vmul.f32 %v4248, %v4306
  %v4309 = vadd.f32 %v4303, %v4307
  %v4310 = vadd.f32 %v4304, %v4308
  %s4311 = sld [smem:[#allocation3 + $0x262]]
  %v4312 = vstv %s4311
  %v4313 = vmul.f32 %v4175, %v4312
  %v4314 = vmul.f32 %v4176, %v4312
  %s4315 = sld [smem:[#allocation4 + $0x3d]]
  %v4316 = vstv %s4315
  %v4317 = vadd.f32 %v4313, %v4316
  %v4318 = vadd.f32 %v4314, %v4316
  %s4319 = sld [smem:[#allocation3 + $0x263]]
  %v4320 = vstv %s4319
  %v4321 = vmul.f32 %v4183, %v4320
  %v4322 = vmul.f32 %v4184, %v4320
  %v4323 = vadd.f32 %v4317, %v4321
  %v4324 = vadd.f32 %v4318, %v4322
  %s4325 = sld [smem:[#allocation3 + $0x264]]
  %v4326 = vstv %s4325
  %v4327 = vmul.f32 %v4191, %v4326
  %v4328 = vmul.f32 %v4192, %v4326
  %v4329 = vadd.f32 %v4323, %v4327
  %v4330 = vadd.f32 %v4324, %v4328
  %s4331 = sld [smem:[#allocation3 + $0x265]]
  %v4332 = vstv %s4331
  %v4333 = vmul.f32 %v4199, %v4332
  %v4334 = vmul.f32 %v4200, %v4332
  %v4335 = vadd.f32 %v4329, %v4333
  %v4336 = vadd.f32 %v4330, %v4334
  %s4337 = sld [smem:[#allocation3 + $0x266]]
  %v4338 = vstv %s4337
  %v4339 = vmul.f32 %v4207, %v4338
  %v4340 = vmul.f32 %v4208, %v4338
  %v4341 = vadd.f32 %v4335, %v4339
  %v4342 = vadd.f32 %v4336, %v4340
  %s4343 = sld [smem:[#allocation3 + $0x267]]
  %v4344 = vstv %s4343
  %v4345 = vmul.f32 %v4215, %v4344
  %v4346 = vmul.f32 %v4216, %v4344
  %v4347 = vadd.f32 %v4341, %v4345
  %v4348 = vadd.f32 %v4342, %v4346
  %s4349 = sld [smem:[#allocation3 + $0x268]]
  %v4350 = vstv %s4349
  %v4351 = vmul.f32 %v4223, %v4350
  %v4352 = vmul.f32 %v4224, %v4350
  %v4353 = vadd.f32 %v4347, %v4351
  %v4354 = vadd.f32 %v4348, %v4352
  %s4355 = sld [smem:[#allocation3 + $0x269]]
  %v4356 = vstv %s4355
  %v4357 = vmul.f32 %v4231, %v4356
  %v4358 = vmul.f32 %v4232, %v4356
  %v4359 = vadd.f32 %v4353, %v4357
  %v4360 = vadd.f32 %v4354, %v4358
  %s4361 = sld [smem:[#allocation3 + $0x26a]]
  %v4362 = vstv %s4361
  %v4363 = vmul.f32 %v4239, %v4362
  %v4364 = vmul.f32 %v4240, %v4362
  %v4365 = vadd.f32 %v4359, %v4363
  %v4366 = vadd.f32 %v4360, %v4364
  %s4367 = sld [smem:[#allocation3 + $0x26b]]
  %v4368 = vstv %s4367
  %v4369 = vmul.f32 %v4247, %v4368
  %v4370 = vmul.f32 %v4248, %v4368
  %v4371 = vadd.f32 %v4365, %v4369
  %v4372 = vadd.f32 %v4366, %v4370
  %s4373 = sld [smem:[#allocation3 + $0x26c]]
  %v4374 = vstv %s4373
  %v4375 = vmul.f32 %v4175, %v4374
  %v4376 = vmul.f32 %v4176, %v4374
  %s4377 = sld [smem:[#allocation4 + $0x3e]]
  %v4378 = vstv %s4377
  %v4379 = vadd.f32 %v4375, %v4378
  %v4380 = vadd.f32 %v4376, %v4378
  %s4381 = sld [smem:[#allocation3 + $0x26d]]
  %v4382 = vstv %s4381
  %v4383 = vmul.f32 %v4183, %v4382
  %v4384 = vmul.f32 %v4184, %v4382
  %v4385 = vadd.f32 %v4379, %v4383
  %v4386 = vadd.f32 %v4380, %v4384
  %s4387 = sld [smem:[#allocation3 + $0x26e]]
  %v4388 = vstv %s4387
  %v4389 = vmul.f32 %v4191, %v4388
  %v4390 = vmul.f32 %v4192, %v4388
  %v4391 = vadd.f32 %v4385, %v4389
  %v4392 = vadd.f32 %v4386, %v4390
  %s4393 = sld [smem:[#allocation3 + $0x26f]]
  %v4394 = vstv %s4393
  %v4395 = vmul.f32 %v4199, %v4394
  %v4396 = vmul.f32 %v4200, %v4394
  %v4397 = vadd.f32 %v4391, %v4395
  %v4398 = vadd.f32 %v4392, %v4396
  %s4399 = sld [smem:[#allocation3 + $0x270]]
  %v4400 = vstv %s4399
  %v4401 = vmul.f32 %v4207, %v4400
  %v4402 = vmul.f32 %v4208, %v4400
  %v4403 = vadd.f32 %v4397, %v4401
  %v4404 = vadd.f32 %v4398, %v4402
  %s4405 = sld [smem:[#allocation3 + $0x271]]
  %v4406 = vstv %s4405
  %v4407 = vmul.f32 %v4215, %v4406
  %v4408 = vmul.f32 %v4216, %v4406
  %v4409 = vadd.f32 %v4403, %v4407
  %v4410 = vadd.f32 %v4404, %v4408
  %s4411 = sld [smem:[#allocation3 + $0x272]]
  %v4412 = vstv %s4411
  %v4413 = vmul.f32 %v4223, %v4412
  %v4414 = vmul.f32 %v4224, %v4412
  %v4415 = vadd.f32 %v4409, %v4413
  %v4416 = vadd.f32 %v4410, %v4414
  %s4417 = sld [smem:[#allocation3 + $0x273]]
  %v4418 = vstv %s4417
  %v4419 = vmul.f32 %v4231, %v4418
  %v4420 = vmul.f32 %v4232, %v4418
  %v4421 = vadd.f32 %v4415, %v4419
  %v4422 = vadd.f32 %v4416, %v4420
  %s4423 = sld [smem:[#allocation3 + $0x274]]
  %v4424 = vstv %s4423
  %v4425 = vmul.f32 %v4239, %v4424
  %v4426 = vmul.f32 %v4240, %v4424
  %v4427 = vadd.f32 %v4421, %v4425
  %v4428 = vadd.f32 %v4422, %v4426
  %s4429 = sld [smem:[#allocation3 + $0x275]]
  %v4430 = vstv %s4429
  %v4431 = vmul.f32 %v4247, %v4430
  %v4432 = vmul.f32 %v4248, %v4430
  %v4433 = vadd.f32 %v4427, %v4431
  %v4434 = vadd.f32 %v4428, %v4432
  %s4435 = sld [smem:[#allocation3 + $0x276]]
  %v4436 = vstv %s4435
  %v4437 = vmul.f32 %v4175, %v4436
  %v4438 = vmul.f32 %v4176, %v4436
  %s4439 = sld [smem:[#allocation4 + $0x3f]]
  %v4440 = vstv %s4439
  %v4441 = vadd.f32 %v4437, %v4440
  %v4442 = vadd.f32 %v4438, %v4440
  %s4443 = sld [smem:[#allocation3 + $0x277]]
  %v4444 = vstv %s4443
  %v4445 = vmul.f32 %v4183, %v4444
  %v4446 = vmul.f32 %v4184, %v4444
  %v4447 = vadd.f32 %v4441, %v4445
  %v4448 = vadd.f32 %v4442, %v4446
  %s4449 = sld [smem:[#allocation3 + $0x278]]
  %v4450 = vstv %s4449
  %v4451 = vmul.f32 %v4191, %v4450
  %v4452 = vmul.f32 %v4192, %v4450
  %v4453 = vadd.f32 %v4447, %v4451
  %v4454 = vadd.f32 %v4448, %v4452
  %s4455 = sld [smem:[#allocation3 + $0x279]]
  %v4456 = vstv %s4455
  %v4457 = vmul.f32 %v4199, %v4456
  %v4458 = vmul.f32 %v4200, %v4456
  %v4459 = vadd.f32 %v4453, %v4457
  %v4460 = vadd.f32 %v4454, %v4458
  %s4461 = sld [smem:[#allocation3 + $0x27a]]
  %v4462 = vstv %s4461
  %v4463 = vmul.f32 %v4207, %v4462
  %v4464 = vmul.f32 %v4208, %v4462
  %v4465 = vadd.f32 %v4459, %v4463
  %v4466 = vadd.f32 %v4460, %v4464
  %s4467 = sld [smem:[#allocation3 + $0x27b]]
  %v4468 = vstv %s4467
  %v4469 = vmul.f32 %v4215, %v4468
  %v4470 = vmul.f32 %v4216, %v4468
  %v4471 = vadd.f32 %v4465, %v4469
  %v4472 = vadd.f32 %v4466, %v4470
  %s4473 = sld [smem:[#allocation3 + $0x27c]]
  %v4474 = vstv %s4473
  %v4475 = vmul.f32 %v4223, %v4474
  %v4476 = vmul.f32 %v4224, %v4474
  %v4477 = vadd.f32 %v4471, %v4475
  %v4478 = vadd.f32 %v4472, %v4476
  %s4479 = sld [smem:[#allocation3 + $0x27d]]
  %v4480 = vstv %s4479
  %v4481 = vmul.f32 %v4231, %v4480
  %v4482 = vmul.f32 %v4232, %v4480
  %v4483 = vadd.f32 %v4477, %v4481
  %v4484 = vadd.f32 %v4478, %v4482
  %s4485 = sld [smem:[#allocation3 + $0x27e]]
  %v4486 = vstv %s4485
  %v4487 = vmul.f32 %v4239, %v4486
  %v4488 = vmul.f32 %v4240, %v4486
  %v4489 = vadd.f32 %v4483, %v4487
  %v4490 = vadd.f32 %v4484, %v4488
  %s4491 = sld [smem:[#allocation3 + $0x27f]]
  %v4492 = vstv %s4491
  %v4493 = vmul.f32 %v4247, %v4492
  %v4494 = vmul.f32 %v4248, %v4492
  %v4495 = vadd.f32 %v4489, %v4493
  %v4496 = vadd.f32 %v4490, %v4494
  %s4497 = sld [smem:[#allocation3 + $0x280]]
  %v4498 = vstv %s4497
  %v4499 = vmul.f32 %v4175, %v4498
  %v4500 = vmul.f32 %v4176, %v4498
  %s4501 = sld [smem:[#allocation4 + $0x40]]
  %v4502 = vstv %s4501
  %v4503 = vadd.f32 %v4499, %v4502
  %v4504 = vadd.f32 %v4500, %v4502
  %s4505 = sld [smem:[#allocation3 + $0x281]]
  %v4506 = vstv %s4505
  %v4507 = vmul.f32 %v4183, %v4506
  %v4508 = vmul.f32 %v4184, %v4506
  %v4509 = vadd.f32 %v4503, %v4507
  %v4510 = vadd.f32 %v4504, %v4508
  %s4511 = sld [smem:[#allocation3 + $0x282]]
  %v4512 = vstv %s4511
  %v4513 = vmul.f32 %v4191, %v4512
  %v4514 = vmul.f32 %v4192, %v4512
  %v4515 = vadd.f32 %v4509, %v4513
  %v4516 = vadd.f32 %v4510, %v4514
  %s4517 = sld [smem:[#allocation3 + $0x283]]
  %v4518 = vstv %s4517
  %v4519 = vmul.f32 %v4199, %v4518
  %v4520 = vmul.f32 %v4200, %v4518
  %v4521 = vadd.f32 %v4515, %v4519
  %v4522 = vadd.f32 %v4516, %v4520
  %s4523 = sld [smem:[#allocation3 + $0x284]]
  %v4524 = vstv %s4523
  %v4525 = vmul.f32 %v4207, %v4524
  %v4526 = vmul.f32 %v4208, %v4524
  %v4527 = vadd.f32 %v4521, %v4525
  %v4528 = vadd.f32 %v4522, %v4526
  %s4529 = sld [smem:[#allocation3 + $0x285]]
  %v4530 = vstv %s4529
  %v4531 = vmul.f32 %v4215, %v4530
  %v4532 = vmul.f32 %v4216, %v4530
  %v4533 = vadd.f32 %v4527, %v4531
  %v4534 = vadd.f32 %v4528, %v4532
  %s4535 = sld [smem:[#allocation3 + $0x286]]
  %v4536 = vstv %s4535
  %v4537 = vmul.f32 %v4223, %v4536
  %v4538 = vmul.f32 %v4224, %v4536
  %v4539 = vadd.f32 %v4533, %v4537
  %v4540 = vadd.f32 %v4534, %v4538
  %s4541 = sld [smem:[#allocation3 + $0x287]]
  %v4542 = vstv %s4541
  %v4543 = vmul.f32 %v4231, %v4542
  %v4544 = vmul.f32 %v4232, %v4542
  %v4545 = vadd.f32 %v4539, %v4543
  %v4546 = vadd.f32 %v4540, %v4544
  %s4547 = sld [smem:[#allocation3 + $0x288]]
  %v4548 = vstv %s4547
  %v4549 = vmul.f32 %v4239, %v4548
  %v4550 = vmul.f32 %v4240, %v4548
  %v4551 = vadd.f32 %v4545, %v4549
  %v4552 = vadd.f32 %v4546, %v4550
  %s4553 = sld [smem:[#allocation3 + $0x289]]
  %v4554 = vstv %s4553
  %v4555 = vmul.f32 %v4247, %v4554
  %v4556 = vmul.f32 %v4248, %v4554
  %v4557 = vadd.f32 %v4551, %v4555
  %v4558 = vadd.f32 %v4552, %v4556
  %s4559 = sld [smem:[#allocation3 + $0x28a]]
  %v4560 = vstv %s4559
  %v4561 = vmul.f32 %v4175, %v4560
  %v4562 = vmul.f32 %v4176, %v4560
  %s4563 = sld [smem:[#allocation4 + $0x41]]
  %v4564 = vstv %s4563
  %v4565 = vadd.f32 %v4561, %v4564
  %v4566 = vadd.f32 %v4562, %v4564
  %s4567 = sld [smem:[#allocation3 + $0x28b]]
  %v4568 = vstv %s4567
  %v4569 = vmul.f32 %v4183, %v4568
  %v4570 = vmul.f32 %v4184, %v4568
  %v4571 = vadd.f32 %v4565, %v4569
  %v4572 = vadd.f32 %v4566, %v4570
  %s4573 = sld [smem:[#allocation3 + $0x28c]]
  %v4574 = vstv %s4573
  %v4575 = vmul.f32 %v4191, %v4574
  %v4576 = vmul.f32 %v4192, %v4574
  %v4577 = vadd.f32 %v4571, %v4575
  %v4578 = vadd.f32 %v4572, %v4576
  %s4579 = sld [smem:[#allocation3 + $0x28d]]
  %v4580 = vstv %s4579
  %v4581 = vmul.f32 %v4199, %v4580
  %v4582 = vmul.f32 %v4200, %v4580
  %v4583 = vadd.f32 %v4577, %v4581
  %v4584 = vadd.f32 %v4578, %v4582
  %s4585 = sld [smem:[#allocation3 + $0x28e]]
  %v4586 = vstv %s4585
  %v4587 = vmul.f32 %v4207, %v4586
  %v4588 = vmul.f32 %v4208, %v4586
  %v4589 = vadd.f32 %v4583, %v4587
  %v4590 = vadd.f32 %v4584, %v4588
  %s4591 = sld [smem:[#allocation3 + $0x28f]]
  %v4592 = vstv %s4591
  %v4593 = vmul.f32 %v4215, %v4592
  %v4594 = vmul.f32 %v4216, %v4592
  %v4595 = vadd.f32 %v4589, %v4593
  %v4596 = vadd.f32 %v4590, %v4594
  %s4597 = sld [smem:[#allocation3 + $0x290]]
  %v4598 = vstv %s4597
  %v4599 = vmul.f32 %v4223, %v4598
  %v4600 = vmul.f32 %v4224, %v4598
  %v4601 = vadd.f32 %v4595, %v4599
  %v4602 = vadd.f32 %v4596, %v4600
  %s4603 = sld [smem:[#allocation3 + $0x291]]
  %v4604 = vstv %s4603
  %v4605 = vmul.f32 %v4231, %v4604
  %v4606 = vmul.f32 %v4232, %v4604
  %v4607 = vadd.f32 %v4601, %v4605
  %v4608 = vadd.f32 %v4602, %v4606
  %s4609 = sld [smem:[#allocation3 + $0x292]]
  %v4610 = vstv %s4609
  %v4611 = vmul.f32 %v4239, %v4610
  %v4612 = vmul.f32 %v4240, %v4610
  %v4613 = vadd.f32 %v4607, %v4611
  %v4614 = vadd.f32 %v4608, %v4612
  %s4615 = sld [smem:[#allocation3 + $0x293]]
  %v4616 = vstv %s4615
  %v4617 = vmul.f32 %v4247, %v4616
  %v4618 = vmul.f32 %v4248, %v4616
  %v4619 = vadd.f32 %v4613, %v4617
  %v4620 = vadd.f32 %v4614, %v4618
  %s4621 = sld [smem:[#allocation3 + $0x294]]
  %v4622 = vstv %s4621
  %v4623 = vmul.f32 %v4175, %v4622
  %v4624 = vmul.f32 %v4176, %v4622
  %s4625 = sld [smem:[#allocation4 + $0x42]]
  %v4626 = vstv %s4625
  %v4627 = vadd.f32 %v4623, %v4626
  %v4628 = vadd.f32 %v4624, %v4626
  %s4629 = sld [smem:[#allocation3 + $0x295]]
  %v4630 = vstv %s4629
  %v4631 = vmul.f32 %v4183, %v4630
  %v4632 = vmul.f32 %v4184, %v4630
  %v4633 = vadd.f32 %v4627, %v4631
  %v4634 = vadd.f32 %v4628, %v4632
  %s4635 = sld [smem:[#allocation3 + $0x296]]
  %v4636 = vstv %s4635
  %v4637 = vmul.f32 %v4191, %v4636
  %v4638 = vmul.f32 %v4192, %v4636
  %v4639 = vadd.f32 %v4633, %v4637
  %v4640 = vadd.f32 %v4634, %v4638
  %s4641 = sld [smem:[#allocation3 + $0x297]]
  %v4642 = vstv %s4641
  %v4643 = vmul.f32 %v4199, %v4642
  %v4644 = vmul.f32 %v4200, %v4642
  %v4645 = vadd.f32 %v4639, %v4643
  %v4646 = vadd.f32 %v4640, %v4644
  %s4647 = sld [smem:[#allocation3 + $0x298]]
  %v4648 = vstv %s4647
  %v4649 = vmul.f32 %v4207, %v4648
  %v4650 = vmul.f32 %v4208, %v4648
  %v4651 = vadd.f32 %v4645, %v4649
  %v4652 = vadd.f32 %v4646, %v4650
  %s4653 = sld [smem:[#allocation3 + $0x299]]
  %v4654 = vstv %s4653
  %v4655 = vmul.f32 %v4215, %v4654
  %v4656 = vmul.f32 %v4216, %v4654
  %v4657 = vadd.f32 %v4651, %v4655
  %v4658 = vadd.f32 %v4652, %v4656
  %s4659 = sld [smem:[#allocation3 + $0x29a]]
  %v4660 = vstv %s4659
  %v4661 = vmul.f32 %v4223, %v4660
  %v4662 = vmul.f32 %v4224, %v4660
  %v4663 = vadd.f32 %v4657, %v4661
  %v4664 = vadd.f32 %v4658, %v4662
  %s4665 = sld [smem:[#allocation3 + $0x29b]]
  %v4666 = vstv %s4665
  %v4667 = vmul.f32 %v4231, %v4666
  %v4668 = vmul.f32 %v4232, %v4666
  %v4669 = vadd.f32 %v4663, %v4667
  %v4670 = vadd.f32 %v4664, %v4668
  %s4671 = sld [smem:[#allocation3 + $0x29c]]
  %v4672 = vstv %s4671
  %v4673 = vmul.f32 %v4239, %v4672
  %v4674 = vmul.f32 %v4240, %v4672
  %v4675 = vadd.f32 %v4669, %v4673
  %v4676 = vadd.f32 %v4670, %v4674
  %s4677 = sld [smem:[#allocation3 + $0x29d]]
  %v4678 = vstv %s4677
  %v4679 = vmul.f32 %v4247, %v4678
  %v4680 = vmul.f32 %v4248, %v4678
  %v4681 = vadd.f32 %v4675, %v4679
  %v4682 = vadd.f32 %v4676, %v4680
  %s4683 = sld [smem:[#allocation3 + $0x29e]]
  %v4684 = vstv %s4683
  %v4685 = vmul.f32 %v4175, %v4684
  %v4686 = vmul.f32 %v4176, %v4684
  %s4687 = sld [smem:[#allocation4 + $0x43]]
  %v4688 = vstv %s4687
  %v4689 = vadd.f32 %v4685, %v4688
  %v4690 = vadd.f32 %v4686, %v4688
  %s4691 = sld [smem:[#allocation3 + $0x29f]]
  %v4692 = vstv %s4691
  %v4693 = vmul.f32 %v4183, %v4692
  %v4694 = vmul.f32 %v4184, %v4692
  %v4695 = vadd.f32 %v4689, %v4693
  %v4696 = vadd.f32 %v4690, %v4694
  %s4697 = sld [smem:[#allocation3 + $0x2a0]]
  %v4698 = vstv %s4697
  %v4699 = vmul.f32 %v4191, %v4698
  %v4700 = vmul.f32 %v4192, %v4698
  %v4701 = vadd.f32 %v4695, %v4699
  %v4702 = vadd.f32 %v4696, %v4700
  %s4703 = sld [smem:[#allocation3 + $0x2a1]]
  %v4704 = vstv %s4703
  %v4705 = vmul.f32 %v4199, %v4704
  %v4706 = vmul.f32 %v4200, %v4704
  %v4707 = vadd.f32 %v4701, %v4705
  %v4708 = vadd.f32 %v4702, %v4706
  %s4709 = sld [smem:[#allocation3 + $0x2a2]]
  %v4710 = vstv %s4709
  %v4711 = vmul.f32 %v4207, %v4710
  %v4712 = vmul.f32 %v4208, %v4710
  %v4713 = vadd.f32 %v4707, %v4711
  %v4714 = vadd.f32 %v4708, %v4712
  %s4715 = sld [smem:[#allocation3 + $0x2a3]]
  %v4716 = vstv %s4715
  %v4717 = vmul.f32 %v4215, %v4716
  %v4718 = vmul.f32 %v4216, %v4716
  %v4719 = vadd.f32 %v4713, %v4717
  %v4720 = vadd.f32 %v4714, %v4718
  %s4721 = sld [smem:[#allocation3 + $0x2a4]]
  %v4722 = vstv %s4721
  %v4723 = vmul.f32 %v4223, %v4722
  %v4724 = vmul.f32 %v4224, %v4722
  %v4725 = vadd.f32 %v4719, %v4723
  %v4726 = vadd.f32 %v4720, %v4724
  %s4727 = sld [smem:[#allocation3 + $0x2a5]]
  %v4728 = vstv %s4727
  %v4729 = vmul.f32 %v4231, %v4728
  %v4730 = vmul.f32 %v4232, %v4728
  %v4731 = vadd.f32 %v4725, %v4729
  %v4732 = vadd.f32 %v4726, %v4730
  %s4733 = sld [smem:[#allocation3 + $0x2a6]]
  %v4734 = vstv %s4733
  %v4735 = vmul.f32 %v4239, %v4734
  %v4736 = vmul.f32 %v4240, %v4734
  %v4737 = vadd.f32 %v4731, %v4735
  %v4738 = vadd.f32 %v4732, %v4736
  %s4739 = sld [smem:[#allocation3 + $0x2a7]]
  %v4740 = vstv %s4739
  %v4741 = vmul.f32 %v4247, %v4740
  %v4742 = vmul.f32 %v4248, %v4740
  %v4743 = vadd.f32 %v4737, %v4741
  %v4744 = vadd.f32 %v4738, %v4742
  %s4745 = sld [smem:[#allocation3 + $0x2a8]]
  %v4746 = vstv %s4745
  %v4747 = vmul.f32 %v4175, %v4746
  %v4748 = vmul.f32 %v4176, %v4746
  %s4749 = sld [smem:[#allocation4 + $0x44]]
  %v4750 = vstv %s4749
  %v4751 = vadd.f32 %v4747, %v4750
  %v4752 = vadd.f32 %v4748, %v4750
  %s4753 = sld [smem:[#allocation3 + $0x2a9]]
  %v4754 = vstv %s4753
  %v4755 = vmul.f32 %v4183, %v4754
  %v4756 = vmul.f32 %v4184, %v4754
  %v4757 = vadd.f32 %v4751, %v4755
  %v4758 = vadd.f32 %v4752, %v4756
  %s4759 = sld [smem:[#allocation3 + $0x2aa]]
  %v4760 = vstv %s4759
  %v4761 = vmul.f32 %v4191, %v4760
  %v4762 = vmul.f32 %v4192, %v4760
  %v4763 = vadd.f32 %v4757, %v4761
  %v4764 = vadd.f32 %v4758, %v4762
  %s4765 = sld [smem:[#allocation3 + $0x2ab]]
  %v4766 = vstv %s4765
  %v4767 = vmul.f32 %v4199, %v4766
  %v4768 = vmul.f32 %v4200, %v4766
  %v4769 = vadd.f32 %v4763, %v4767
  %v4770 = vadd.f32 %v4764, %v4768
  %s4771 = sld [smem:[#allocation3 + $0x2ac]]
  %v4772 = vstv %s4771
  %v4773 = vmul.f32 %v4207, %v4772
  %v4774 = vmul.f32 %v4208, %v4772
  %v4775 = vadd.f32 %v4769, %v4773
  %v4776 = vadd.f32 %v4770, %v4774
  %s4777 = sld [smem:[#allocation3 + $0x2ad]]
  %v4778 = vstv %s4777
  %v4779 = vmul.f32 %v4215, %v4778
  %v4780 = vmul.f32 %v4216, %v4778
  %v4781 = vadd.f32 %v4775, %v4779
  %v4782 = vadd.f32 %v4776, %v4780
  %s4783 = sld [smem:[#allocation3 + $0x2ae]]
  %v4784 = vstv %s4783
  %v4785 = vmul.f32 %v4223, %v4784
  %v4786 = vmul.f32 %v4224, %v4784
  %v4787 = vadd.f32 %v4781, %v4785
  %v4788 = vadd.f32 %v4782, %v4786
  %s4789 = sld [smem:[#allocation3 + $0x2af]]
  %v4790 = vstv %s4789
  %v4791 = vmul.f32 %v4231, %v4790
  %v4792 = vmul.f32 %v4232, %v4790
  %v4793 = vadd.f32 %v4787, %v4791
  %v4794 = vadd.f32 %v4788, %v4792
  %s4795 = sld [smem:[#allocation3 + $0x2b0]]
  %v4796 = vstv %s4795
  %v4797 = vmul.f32 %v4239, %v4796
  %v4798 = vmul.f32 %v4240, %v4796
  %v4799 = vadd.f32 %v4793, %v4797
  %v4800 = vadd.f32 %v4794, %v4798
  %s4801 = sld [smem:[#allocation3 + $0x2b1]]
  %v4802 = vstv %s4801
  %v4803 = vmul.f32 %v4247, %v4802
  %v4804 = vmul.f32 %v4248, %v4802
  %v4805 = vadd.f32 %v4799, %v4803
  %v4806 = vadd.f32 %v4800, %v4804
  %s4807 = sld [smem:[#allocation3 + $0x2b2]]
  %v4808 = vstv %s4807
  %v4809 = vmul.f32 %v4175, %v4808
  %v4810 = vmul.f32 %v4176, %v4808
  %s4811 = sld [smem:[#allocation4 + $0x45]]
  %v4812 = vstv %s4811
  %v4813 = vadd.f32 %v4809, %v4812
  %v4814 = vadd.f32 %v4810, %v4812
  %s4815 = sld [smem:[#allocation3 + $0x2b3]]
  %v4816 = vstv %s4815
  %v4817 = vmul.f32 %v4183, %v4816
  %v4818 = vmul.f32 %v4184, %v4816
  %v4819 = vadd.f32 %v4813, %v4817
  %v4820 = vadd.f32 %v4814, %v4818
  %s4821 = sld [smem:[#allocation3 + $0x2b4]]
  %v4822 = vstv %s4821
  %v4823 = vmul.f32 %v4191, %v4822
  %v4824 = vmul.f32 %v4192, %v4822
  %v4825 = vadd.f32 %v4819, %v4823
  %v4826 = vadd.f32 %v4820, %v4824
  %s4827 = sld [smem:[#allocation3 + $0x2b5]]
  %v4828 = vstv %s4827
  %v4829 = vmul.f32 %v4199, %v4828
  %v4830 = vmul.f32 %v4200, %v4828
  %v4831 = vadd.f32 %v4825, %v4829
  %v4832 = vadd.f32 %v4826, %v4830
  %s4833 = sld [smem:[#allocation3 + $0x2b6]]
  %v4834 = vstv %s4833
  %v4835 = vmul.f32 %v4207, %v4834
  %v4836 = vmul.f32 %v4208, %v4834
  %v4837 = vadd.f32 %v4831, %v4835
  %v4838 = vadd.f32 %v4832, %v4836
  %s4839 = sld [smem:[#allocation3 + $0x2b7]]
  %v4840 = vstv %s4839
  %v4841 = vmul.f32 %v4215, %v4840
  %v4842 = vmul.f32 %v4216, %v4840
  %v4843 = vadd.f32 %v4837, %v4841
  %v4844 = vadd.f32 %v4838, %v4842
  %s4845 = sld [smem:[#allocation3 + $0x2b8]]
  %v4846 = vstv %s4845
  %v4847 = vmul.f32 %v4223, %v4846
  %v4848 = vmul.f32 %v4224, %v4846
  %v4849 = vadd.f32 %v4843, %v4847
  %v4850 = vadd.f32 %v4844, %v4848
  %s4851 = sld [smem:[#allocation3 + $0x2b9]]
  %v4852 = vstv %s4851
  %v4853 = vmul.f32 %v4231, %v4852
  %v4854 = vmul.f32 %v4232, %v4852
  %v4855 = vadd.f32 %v4849, %v4853
  %v4856 = vadd.f32 %v4850, %v4854
  %s4857 = sld [smem:[#allocation3 + $0x2ba]]
  %v4858 = vstv %s4857
  %v4859 = vmul.f32 %v4239, %v4858
  %v4860 = vmul.f32 %v4240, %v4858
  %v4861 = vadd.f32 %v4855, %v4859
  %v4862 = vadd.f32 %v4856, %v4860
  %s4863 = sld [smem:[#allocation3 + $0x2bb]]
  %v4864 = vstv %s4863
  %v4865 = vmul.f32 %v4247, %v4864
  %v4866 = vmul.f32 %v4248, %v4864
  %v4867 = vadd.f32 %v4861, %v4865
  %v4868 = vadd.f32 %v4862, %v4866
  %v4869 = vmul.f32 %v4309, 0.5
  %v4870 = vmul.f32 %v4310, 0.5
  %v4871 = vtanh.pop %v4869
  %v4872 = vtanh.pop %v4870
  %v4873 = vmul.f32 %v4871, 0.5
  %v4874 = vmul.f32 %v4872, 0.5
  %v4875 = vadd.f32 %v4873, 0.5
  %v4876 = vadd.f32 %v4874, 0.5
  %v4877 = vmul.f32 %v4371, 0.5
  %v4878 = vmul.f32 %v4372, 0.5
  %v4879 = vtanh.pop %v4877
  %v4880 = vtanh.pop %v4878
  %v4881 = vmul.f32 %v4879, 0.5
  %v4882 = vmul.f32 %v4880, 0.5
  %v4883 = vadd.f32 %v4881, 0.5
  %v4884 = vadd.f32 %v4882, 0.5
  %v4885 = vmul.f32 %v4433, 0.5
  %v4886 = vmul.f32 %v4434, 0.5
  %v4887 = vtanh.pop %v4885
  %v4888 = vtanh.pop %v4886
  %v4889 = vmul.f32 %v4887, 0.5
  %v4890 = vmul.f32 %v4888, 0.5
  %v4891 = vadd.f32 %v4889, 0.5
  %v4892 = vadd.f32 %v4890, 0.5
  %v4893 = vmul.f32 %v4495, 0.5
  %v4894 = vmul.f32 %v4496, 0.5
  %v4895 = vtanh.pop %v4893
  %v4896 = vtanh.pop %v4894
  %v4897 = vmul.f32 %v4895, 0.5
  %v4898 = vmul.f32 %v4896, 0.5
  %v4899 = vadd.f32 %v4897, 0.5
  %v4900 = vadd.f32 %v4898, 0.5
  %v4901 = vmul.f32 %v4557, 0.5
  %v4902 = vmul.f32 %v4558, 0.5
  %v4903 = vtanh.pop %v4901
  %v4904 = vtanh.pop %v4902
  %v4905 = vmul.f32 %v4903, 0.5
  %v4906 = vmul.f32 %v4904, 0.5
  %v4907 = vadd.f32 %v4905, 0.5
  %v4908 = vadd.f32 %v4906, 0.5
  %v4909 = vmul.f32 %v4619, 0.5
  %v4910 = vmul.f32 %v4620, 0.5
  %v4911 = vtanh.pop %v4909
  %v4912 = vtanh.pop %v4910
  %v4913 = vmul.f32 %v4911, 0.5
  %v4914 = vmul.f32 %v4912, 0.5
  %v4915 = vadd.f32 %v4913, 0.5
  %v4916 = vadd.f32 %v4914, 0.5
  %v4917 = vmul.f32 %v4681, 0.5
  %v4918 = vmul.f32 %v4682, 0.5
  %v4919 = vtanh.pop %v4917
  %v4920 = vtanh.pop %v4918
  %v4921 = vmul.f32 %v4919, 0.5
  %v4922 = vmul.f32 %v4920, 0.5
  %v4923 = vadd.f32 %v4921, 0.5
  %v4924 = vadd.f32 %v4922, 0.5
  %v4925 = vmul.f32 %v4743, 0.5
  %v4926 = vmul.f32 %v4744, 0.5
  %v4927 = vtanh.pop %v4925
  %v4928 = vtanh.pop %v4926
  %v4929 = vmul.f32 %v4927, 0.5
  %v4930 = vmul.f32 %v4928, 0.5
  %v4931 = vadd.f32 %v4929, 0.5
  %v4932 = vadd.f32 %v4930, 0.5
  %v4933 = vmul.f32 %v4805, 0.5
  %v4934 = vmul.f32 %v4806, 0.5
  %v4935 = vtanh.pop %v4933
  %v4936 = vtanh.pop %v4934
  %v4937 = vmul.f32 %v4935, 0.5
  %v4938 = vmul.f32 %v4936, 0.5
  %v4939 = vadd.f32 %v4937, 0.5
  %v4940 = vadd.f32 %v4938, 0.5
  %v4941 = vmul.f32 %v4867, 0.5
  %v4942 = vmul.f32 %v4868, 0.5
  %v4943 = vtanh.pop %v4941
  %v4944 = vtanh.pop %v4942
  %v4945 = vmul.f32 %v4943, 0.5
  %v4946 = vmul.f32 %v4944, 0.5
  %v4947 = vadd.f32 %v4945, 0.5
  %v4948 = vadd.f32 %v4946, 0.5
  %4949 = vst [vmem:[%s3] sm:$0xff] %v4875
  %4950 = vst [vmem:[%s3 + $0x8] sm:$0xff] %v4876
  %s4951 = scalar_lea.vmem %s3, 16
  %4952 = vst [vmem:[%s4951] sm:$0xff] %v4883
  %4953 = vst [vmem:[%s4951 + $0x8] sm:$0xff] %v4884
  %s4954 = scalar_lea.vmem %s3, 32
  %4955 = vst [vmem:[%s4954] sm:$0xff] %v4891
  %4956 = vst [vmem:[%s4954 + $0x8] sm:$0xff] %v4892
  %s4957 = scalar_lea.vmem %s3, 48
  %4958 = vst [vmem:[%s4957] sm:$0xff] %v4899
  %4959 = vst [vmem:[%s4957 + $0x8] sm:$0xff] %v4900
  %s4960 = scalar_lea.vmem %s3, 64
  %4961 = vst [vmem:[%s4960] sm:$0xff] %v4907
  %4962 = vst [vmem:[%s4960 + $0x8] sm:$0xff] %v4908
  %s4963 = scalar_lea.vmem %s3, 80
  %4964 = vst [vmem:[%s4963] sm:$0xff] %v4915
  %4965 = vst [vmem:[%s4963 + $0x8] sm:$0xff] %v4916
  %s4966 = scalar_lea.vmem %s3, 96
  %4967 = vst [vmem:[%s4966] sm:$0xff] %v4923
  %4968 = vst [vmem:[%s4966 + $0x8] sm:$0xff] %v4924
  %s4969 = scalar_lea.vmem %s3, 112
  %4970 = vst [vmem:[%s4969] sm:$0xff] %v4931
  %4971 = vst [vmem:[%s4969 + $0x8] sm:$0xff] %v4932
  %s4972 = scalar_lea.vmem %s3, 128
  %4973 = vst [vmem:[%s4972] sm:$0xff] %v4939
  %4974 = vst [vmem:[%s4972 + $0x8] sm:$0xff] %v4940
  %s4975 = scalar_lea.vmem %s3, 144
  %4976 = vst [vmem:[%s4975] sm:$0xff] %v4947
  %4977 = vst [vmem:[%s4975 + $0x8] sm:$0xff] %v4948
  // Predicated region
  $region6: #{simple_nn_forward.1} parent=0 // pred_check
    _
  $region7: #{simple_nn_forward.1} parent=0 // pred_check_branch
    %4979 = sbr.rel (0) target = $region9
  $region8: #{simple_nn_forward.1} parent=0 // pred_region
    _
  $region9: #{simple_nn_forward.1} parent=0 // pred_fallthru
    _
  // Predicated region
  $region10: #{simple_nn_forward.1} parent=0 // pred_check
    _
  $region11: #{simple_nn_forward.1} parent=0 // pred_check_branch
    %4981 = sbr.rel (0) target = $region13
  $region12: #{simple_nn_forward.1} parent=0 // pred_region
    _
  $region13: #{simple_nn_forward.1} parent=0 // pred_fallthru
    _

</llo_original>
